<compile_context>
chip_gen: v5e
topology: v5e:2x2
jax: 0.10.0
libtpu: 0.0.40
codegen_flags: <defaults>
</compile_context>

<pallas_src>
import functools
import math

import jax
import jax.numpy as jnp
import numpy as np
from jax.experimental import pallas as pl
from jax.experimental.pallas import tpu as pltpu


# ----------------------------------------------------------------------------
# Tiling helpers
# ----------------------------------------------------------------------------
def _choose_l_tile(L, cap):
    """Largest multiple-of-8 tile <= cap that divides L (else the full L)."""
    if L <= cap:
        return L
    lt = (cap // 8) * 8
    while lt >= 8:
        if L % lt == 0:
            return lt
        lt -= 8
    return L


def _halo_in_specs(L, L_TILE, C):
    """BlockSpecs (x_main, x_left, x_right) over a (B, L, C) array.

    x_main : the (1, L_TILE, C) tile for grid point (b, t).
    x_left : an 8-row block whose last row is global row t*L_TILE - 1.
    x_right: an 8-row block whose first row is global row (t+1)*L_TILE.
    Edge tiles clamp the index; the kernel zeroes the invalid halo row.
    """
    if L_TILE % 8 == 0 and L % 8 == 0:
        hb = 8
    else:
        hb = L_TILE          # only reachable when L_TILE == L (single tile)
    n_hblk = L // hb
    lt_hb = L_TILE // hb

    x_main = pl.BlockSpec((1, L_TILE, C), lambda b, t: (b, t, 0))
    x_left = pl.BlockSpec(
        (1, hb, C), lambda b, t: (b, jnp.maximum(t * lt_hb - 1, 0), 0))
    x_right = pl.BlockSpec(
        (1, hb, C), lambda b, t: (b, jnp.minimum((t + 1) * lt_hb, n_hblk - 1), 0))
    return x_main, x_left, x_right, hb


def _fill_padded(pad_ref, center, xl_ref, xr_ref, L, HB, relu):
    """Build [left_halo ; center ; right_halo] (L+2 rows) in VMEM scratch."""
    t = pl.program_id(1)
    nt = pl.num_programs(1)
    C = pad_ref.shape[1]
    zrow = jnp.zeros((1, C), pad_ref.dtype)

    pad_ref[1:L + 1, :] = center
    pad_ref[0:1, :] = zrow
    pad_ref[L + 1:L + 2, :] = zrow

    @pl.when(t > 0)
    def _():
        v = xl_ref[0, HB - 1:HB, :]
        if relu:
            v = jnp.maximum(v, 0.0)
        pad_ref[0:1, :] = v

    @pl.when(t < nt - 1)
    def _():
        v = xr_ref[0, 0:1, :]
        if relu:
            v = jnp.maximum(v, 0.0)
        pad_ref[L + 1:L + 2, :] = v


# ----------------------------------------------------------------------------
# Pallas kernels
# ----------------------------------------------------------------------------
def _conv3_kernel(x_ref, xl_ref, xr_ref, w_ref, b_ref, out_ref, pad_ref, *, L, HB):
    """Conv1d(k=3, s=1, p=1) on one (1, L_TILE, Cin) tile."""
    _fill_padded(pad_ref, x_ref[0], xl_ref, xr_ref, L, HB, relu=False)
    xp = pad_ref[...]                                   # (L+2, Cin), native dtype
    acc = jnp.dot(xp[0:L], w_ref[0], preferred_element_type=jnp.float32)
    acc = acc + jnp.dot(xp[1:L + 1], w_ref[1], preferred_element_type=jnp.float32)
    acc = acc + jnp.dot(xp[2:L + 2], w_ref[2], preferred_element_type=jnp.float32)
    acc = acc + b_ref[...].astype(jnp.float32)
    out_ref[0] = acc.astype(out_ref.dtype)


def _resblock_kernel(x_ref, xl_ref, xr_ref, w3_ref, b3_ref, w1_ref, b1_ref,
                     out_ref, pad_ref, *, L, HB):
    """Fused ResConv1DBlock: x + Conv1x1(ReLU(Conv3(ReLU(x)))).

    The Conv3 intermediate lives only in VMEM/vregs (never written to HBM).
    ReLU(pad(x)) == pad(ReLU(x)) because the pad rows are zero.
    """
    x = x_ref[0]                                        # raw residual (L, W)
    _fill_padded(pad_ref, jnp.maximum(x, 0.0), xl_ref, xr_ref, L, HB, relu=True)
    xp = pad_ref[...]
    acc = jnp.dot(xp[0:L], w3_ref[0], preferred_element_type=jnp.float32)
    acc = acc + jnp.dot(xp[1:L + 1], w3_ref[1], preferred_element_type=jnp.float32)
    acc = acc + jnp.dot(xp[2:L + 2], w3_ref[2], preferred_element_type=jnp.float32)
    acc = acc + b3_ref[...].astype(jnp.float32)
    mid = jnp.maximum(acc, 0.0).astype(x.dtype)         # MXU operand in native dtype
    out = jnp.dot(mid, w1_ref[0], preferred_element_type=jnp.float32)
    out = out + b1_ref[...].astype(jnp.float32)
    out = out + x.astype(jnp.float32)                   # residual add in f32
    out_ref[0] = out.astype(out_ref.dtype)


def _convt_kernel(x_ref, xl_ref, xr_ref, w_ref, b_ref, out_ref, pad_ref,
                  *, L, HB, Cout):
    """ConvTranspose1d(k=4, s=2, p=1): lane-dense (L, 2*Cout) output tile.

    y[2m]   = x[m-1] @ W[3] + x[m]   @ W[1] + b    -> out[:, :Cout]
    y[2m+1] = x[m]   @ W[2] + x[m+1] @ W[0] + b    -> out[:, Cout:]
    The even/odd interleave is a free contiguous reshape in the wrapper.
    """
    _fill_padded(pad_ref, x_ref[0], xl_ref, xr_ref, L, HB, relu=False)
    xp = pad_ref[...]
    b = b_ref[...].astype(jnp.float32)
    even = (jnp.dot(xp[0:L], w_ref[3], preferred_element_type=jnp.float32)
            + jnp.dot(xp[1:L + 1], w_ref[1], preferred_element_type=jnp.float32) + b)
    odd = (jnp.dot(xp[1:L + 1], w_ref[2], preferred_element_type=jnp.float32)
           + jnp.dot(xp[2:L + 2], w_ref[0], preferred_element_type=jnp.float32) + b)
    out_ref[0, :, 0:Cout] = even.astype(out_ref.dtype)
    out_ref[0, :, Cout:2 * Cout] = odd.astype(out_ref.dtype)


# ----------------------------------------------------------------------------
# Pallas wrappers
# ----------------------------------------------------------------------------
_PARALLEL2 = pltpu.CompilerParams(dimension_semantics=("parallel", "parallel"))


def conv3_pallas(x, w, b, *, l_tile_cap=256):
    """x: (B, L, Cin), w: (3, Cin, Cout), b: (1, Cout) -> (B, L, Cout)."""
    B, L, Cin = x.shape
    K, _, Cout = w.shape
    assert K == 3
    L_TILE = _choose_l_tile(L, l_tile_cap)
    nt = L // L_TILE
    x_main, x_left, x_right, hb = _halo_in_specs(L, L_TILE, Cin)
    itemsize = jnp.dtype(x.dtype).itemsize
    cost = pl.CostEstimate(
        flops=2 * B * L * Cin * Cout * K, transcendentals=0,
        bytes_accessed=int((B * L * (Cin + Cout) + K * Cin * Cout + Cout) * itemsize))
    kernel = functools.partial(_conv3_kernel, L=L_TILE, HB=hb)
    return pl.pallas_call(
        kernel,
        out_shape=jax.ShapeDtypeStruct((B, L, Cout), x.dtype),
        grid=(B, nt),
        in_specs=[x_main, x_left, x_right,
                  pl.BlockSpec((K, Cin, Cout), lambda bi, ti: (0, 0, 0)),
                  pl.BlockSpec((1, Cout), lambda bi, ti: (0, 0))],
        out_specs=pl.BlockSpec((1, L_TILE, Cout), lambda bi, ti: (bi, ti, 0)),
        scratch_shapes=[pltpu.VMEM((L_TILE + 2, Cin), x.dtype)],
        compiler_params=_PARALLEL2,
        cost_estimate=cost,
    )(x, x, x, w, b)


def resblock_pallas(h, w3, b3, w1, b1, *, l_tile_cap=256):
    """Fused ResConv1DBlock: h + Conv1x1(ReLU(Conv3(ReLU(h)))). h: (B, L, W)."""
    B, L, W = h.shape
    L_TILE = _choose_l_tile(L, l_tile_cap)
    nt = L // L_TILE
    x_main, x_left, x_right, hb = _halo_in_specs(L, L_TILE, W)
    itemsize = jnp.dtype(h.dtype).itemsize
    cost = pl.CostEstimate(
        flops=2 * B * L * W * W * 4, transcendentals=0,
        bytes_accessed=int((2 * B * L * W + 4 * W * W + 2 * W) * itemsize))
    kernel = functools.partial(_resblock_kernel, L=L_TILE, HB=hb)
    return pl.pallas_call(
        kernel,
        out_shape=jax.ShapeDtypeStruct((B, L, W), h.dtype),
        grid=(B, nt),
        in_specs=[x_main, x_left, x_right,
                  pl.BlockSpec((3, W, W), lambda bi, ti: (0, 0, 0)),
                  pl.BlockSpec((1, W), lambda bi, ti: (0, 0)),
                  pl.BlockSpec((1, W, W), lambda bi, ti: (0, 0, 0)),
                  pl.BlockSpec((1, W), lambda bi, ti: (0, 0))],
        out_specs=pl.BlockSpec((1, L_TILE, W), lambda bi, ti: (bi, ti, 0)),
        scratch_shapes=[pltpu.VMEM((L_TILE + 2, W), h.dtype)],
        compiler_params=_PARALLEL2,
        cost_estimate=cost,
    )(h, h, h, w3, b3, w1, b1)


def convtranspose_pallas(x, w, b, *, l_tile_cap=256):
    """ConvTranspose1d k=4, s=2, p=1. x: (B, L, Cin) -> (B, 2L, Cout)."""
    B, L, Cin = x.shape
    K, _, Cout = w.shape
    assert K == 4
    L_TILE = _choose_l_tile(L, l_tile_cap)
    nt = L // L_TILE
    x_main, x_left, x_right, hb = _halo_in_specs(L, L_TILE, Cin)
    itemsize = jnp.dtype(x.dtype).itemsize
    cost = pl.CostEstimate(
        flops=2 * B * L * Cin * Cout * K, transcendentals=0,
        bytes_accessed=int((B * L * (Cin + 2 * Cout) + K * Cin * Cout + Cout) * itemsize))
    kernel = functools.partial(_convt_kernel, L=L_TILE, HB=hb, Cout=Cout)
    y = pl.pallas_call(
        kernel,
        out_shape=jax.ShapeDtypeStruct((B, L, 2 * Cout), x.dtype),
        grid=(B, nt),
        in_specs=[x_main, x_left, x_right,
                  pl.BlockSpec((K, Cin, Cout), lambda bi, ti: (0, 0, 0)),
                  pl.BlockSpec((1, Cout), lambda bi, ti: (0, 0))],
        out_specs=pl.BlockSpec((1, L_TILE, 2 * Cout), lambda bi, ti: (bi, ti, 0)),
        scratch_shapes=[pltpu.VMEM((L_TILE + 2, Cin), x.dtype)],
        compiler_params=_PARALLEL2,
        cost_estimate=cost,
    )(x, x, x, w, b)
    # (B, L, 2*Cout) -> (B, 2L, Cout): contiguous interleave, effectively free.
    return y.reshape(B, 2 * L, Cout)


# ----------------------------------------------------------------------------
# Decoder: params + forward
# ----------------------------------------------------------------------------
def init_params(key, c_in, c_out, width, depth, down_rate):
    """Deterministic synthetic init (torch-like uniform bound 1/sqrt(fan_in))."""
    def conv_init(k, K, cin, cout):
        k1, k2 = jax.random.split(k)
        bound = 1.0 / math.sqrt(cin * K)
        w = jax.random.uniform(k1, (K, cin, cout), jnp.float32, -bound, bound)
        b = jax.random.uniform(k2, (1, cout), jnp.float32, -bound, bound)
        return w, b

    n_layers = 1 + down_rate * (2 * depth + 1)
    keys = jax.random.split(key, n_layers)
    idx = 0
    params = {}
    params["conv0"] = conv_init(keys[idx], 3, c_in, width); idx += 1
    for i in range(down_rate):
        for d in range(depth):
            params[f"b{i}_r{d}_c3"] = conv_init(keys[idx], 3, width, width); idx += 1
            params[f"b{i}_r{d}_c1"] = conv_init(keys[idx], 1, width, width); idx += 1
        co = c_out if i == down_rate - 1 else width
        params[f"b{i}_ct"] = conv_init(keys[idx], 4, width, co); idx += 1
    return params


def decoder_forward(params, x, *, depth, down_rate, l_tile_cap=256):
    """x: (B, T, C_in) -> (B, T * 2**down_rate, C_out). Hot path in Pallas."""
    w0, b0 = params["conv0"]
    h = conv3_pallas(x, w0, b0, l_tile_cap=l_tile_cap)
    for i in range(down_rate):
        for d in range(depth):
            w3, b3 = params[f"b{i}_r{d}_c3"]
            w1, b1 = params[f"b{i}_r{d}_c1"]
            h = resblock_pallas(h, w3, b3, w1, b1, l_tile_cap=l_tile_cap)
        wt, bt = params[f"b{i}_ct"]
        h = convtranspose_pallas(h, wt, bt, l_tile_cap=l_tile_cap)
    return h


# ----------------------------------------------------------------------------
# Pure-JAX reference (independent: lax.conv_general_dilated) for verification
# ----------------------------------------------------------------------------
def _ref_conv1d(x, w, b, relu_in=False, residual=None):
    xin = jnp.maximum(x, 0.0) if relu_in else x
    dn = jax.lax.conv_dimension_numbers(x.shape, w.shape, ("NHC", "HIO", "NHC"))
    pad = (w.shape[0] - 1) // 2
    y = jax.lax.conv_general_dilated(xin, w, (1,), [(pad, pad)], dimension_numbers=dn)
    y = y + b
    if residual is not None:
        y = y + residual
    return y


def _ref_convtranspose(x, w, b):
    # ConvTranspose1d(k=4, s=2, p=1) == lhs-dilated correlation with flipped kernel.
    K = w.shape[0]
    dn = jax.lax.conv_dimension_numbers(x.shape, w.shape, ("NHC", "HIO", "NHC"))
    y = jax.lax.conv_general_dilated(x, w[::-1], (1,), [(K - 2, K - 2)],
                                     lhs_dilation=(2,), dimension_numbers=dn)
    return y + b


def ref_decoder_forward(params, x, *, depth, down_rate):
    w0, b0 = params["conv0"]
    h = _ref_conv1d(x, w0, b0)
    for i in range(down_rate):
        for d in range(depth):
            w3, b3 = params[f"b{i}_r{d}_c3"]
            w1, b1 = params[f"b{i}_r{d}_c1"]
            t = _ref_conv1d(h, w3, b3, relu_in=True)
            h = _ref_conv1d(t, w1, b1, relu_in=True, residual=h)
        wt, bt = params[f"b{i}_ct"]
        h = _ref_convtranspose(h, wt, bt)
    return h


# ----------------------------------------------------------------------------
if __name__ == "__main__":
    # Small shapes consistent with the module (module defaults are 512/512/512;
    # scaled down here for a fast synthetic run).
    B, T = 2, 8
    C_IN, C_OUT, WIDTH, DEPTH, DOWN_RATE = 32, 32, 32, 3, 3

    key = jax.random.PRNGKey(0)
    kp, kx = jax.random.split(key)
    params = init_params(kp, C_IN, C_OUT, WIDTH, DEPTH, DOWN_RATE)
    x = jax.random.normal(kx, (B, T, C_IN), jnp.float32)

    # Multi-tile path (exercises the halo BlockSpecs) and single-tile path.
    fwd_tiled = jax.jit(functools.partial(decoder_forward, depth=DEPTH,
                                          down_rate=DOWN_RATE, l_tile_cap=8))
    fwd_single = jax.jit(functools.partial(decoder_forward, depth=DEPTH,
                                           down_rate=DOWN_RATE, l_tile_cap=256))

    y_tiled = jax.block_until_ready(fwd_tiled(params, x))
    y_single = jax.block_until_ready(fwd_single(params, x))
    assert y_tiled.shape == (B, T * (2 ** DOWN_RATE), C_OUT), y_tiled.shape
    assert y_single.shape == y_tiled.shape

    y_ref = jax.block_until_ready(
        ref_decoder_forward(params, x, depth=DEPTH, down_rate=DOWN_RATE))
    np.testing.assert_allclose(np.asarray(y_tiled), np.asarray(y_ref),
                               atol=2e-4, rtol=2e-4)
    np.testing.assert_allclose(np.asarray(y_single), np.asarray(y_ref),
                               atol=2e-4, rtol=2e-4)

    print("KERNEL_OK")
</pallas_src>

<mosaic_0001>
module attributes {stable_mosaic.version = 11 : i64} {
  func.func @_convt_kernel(%arg0: i32, %arg1: i32, %arg2: memref<1x8x32xf32, #tpu.memory_space<vmem>>, %arg3: memref<1x8x32xf32, #tpu.memory_space<vmem>>, %arg4: memref<1x8x32xf32, #tpu.memory_space<vmem>>, %arg5: memref<4x32x32xf32, #tpu.memory_space<vmem>>, %arg6: memref<1x32xf32, #tpu.memory_space<vmem>>, %arg7: memref<1x8x64xf32, #tpu.memory_space<vmem>>, %arg8: memref<10x32xf32, #tpu.memory_space<vmem>>) attributes {dimension_semantics = [#tpu.dimension_semantics<parallel>, #tpu.dimension_semantics<parallel>], iteration_bounds = array<i64: 2, 1>, scalar_prefetch = 0 : i64, scratch_operands = 1 : i64, tpu.core_type = #tpu.core_type<tc>, window_params = [{transform_indices = @transform_0, window_bounds = array<i64: 1, 8, 32>}, {transform_indices = @transform_1, window_bounds = array<i64: 1, 8, 32>}, {transform_indices = @transform_2, window_bounds = array<i64: 1, 8, 32>}, {pipeline_mode = #tpu.pipeline_mode<synchronous>, transform_indices = @transform_3, window_bounds = array<i64: 4, 32, 32>}, {pipeline_mode = #tpu.pipeline_mode<synchronous>, transform_indices = @transform_4, window_bounds = array<i64: 1, 32>}, {transform_indices = @transform_5, window_bounds = array<i64: 1, 8, 64>}]} {
    %c0 = arith.constant 0 : index
    %c0_0 = arith.constant 0 : index
    %c0_1 = arith.constant 0 : index
    %0 = vector.load %arg2[%c0, %c0_0, %c0_1] : memref<1x8x32xf32, #tpu.memory_space<vmem>>, vector<1x8x32xf32>
    %1 = vector.shape_cast %0 : vector<1x8x32xf32> to vector<8x32xf32>
    %cst = arith.constant 0.000000e+00 : f32
    %2 = vector.broadcast %cst : f32 to vector<1x32xf32>
    %c1 = arith.constant 1 : index
    %c0_2 = arith.constant 0 : index
    %3 = vector.load %arg8[%c1, %c0_2] : memref<10x32xf32, #tpu.memory_space<vmem>>, vector<8x32xf32>
    tpu.vector_store %arg8[%c1, %c0_2], %1 {strides = array<i32>} : memref<10x32xf32, #tpu.memory_space<vmem>>, vector<8x32xf32>,
    %c0_3 = arith.constant 0 : index
    %c0_4 = arith.constant 0 : index
    %4 = vector.load %arg8[%c0_3, %c0_4] : memref<10x32xf32, #tpu.memory_space<vmem>>, vector<1x32xf32>
    tpu.vector_store %arg8[%c0_3, %c0_4], %2 {strides = array<i32>} : memref<10x32xf32, #tpu.memory_space<vmem>>, vector<1x32xf32>,
    %c9 = arith.constant 9 : index
    %c0_5 = arith.constant 0 : index
    %5 = vector.load %arg8[%c9, %c0_5] : memref<10x32xf32, #tpu.memory_space<vmem>>, vector<1x32xf32>
    tpu.vector_store %arg8[%c9, %c0_5], %2 {strides = array<i32>} : memref<10x32xf32, #tpu.memory_space<vmem>>, vector<1x32xf32>,
    %c0_i32 = arith.constant 0 : i32
    %6 = arith.cmpi sgt, %arg1, %c0_i32 : i32
    %7 = arith.extui %6 : i1 to i32
    %c0_i32_6 = arith.constant 0 : i32
    %8 = arith.cmpi ne, %7, %c0_i32_6 : i32
    scf.if %8 {
      %c0_32 = arith.constant 0 : index
      %c7 = arith.constant 7 : index
      %c0_33 = arith.constant 0 : index
      %42 = vector.load %arg3[%c0_32, %c7, %c0_33] : memref<1x8x32xf32, #tpu.memory_space<vmem>>, vector<1x1x32xf32>
      %43 = vector.shape_cast %42 : vector<1x1x32xf32> to vector<1x32xf32>
      %c0_34 = arith.constant 0 : index
      %c0_35 = arith.constant 0 : index
      %44 = vector.load %arg8[%c0_34, %c0_35] : memref<10x32xf32, #tpu.memory_space<vmem>>, vector<1x32xf32>
      tpu.vector_store %arg8[%c0_34, %c0_35], %43 {strides = array<i32>} : memref<10x32xf32, #tpu.memory_space<vmem>>, vector<1x32xf32>,
    } else {
    }
    %c0_i32_7 = arith.constant 0 : i32
    %9 = arith.cmpi slt, %arg1, %c0_i32_7 : i32
    %10 = arith.extui %9 : i1 to i32
    %c0_i32_8 = arith.constant 0 : i32
    %11 = arith.cmpi ne, %10, %c0_i32_8 : i32
    scf.if %11 {
      %c0_32 = arith.constant 0 : index
      %c0_33 = arith.constant 0 : index
      %c0_34 = arith.constant 0 : index
      %42 = vector.load %arg4[%c0_32, %c0_33, %c0_34] : memref<1x8x32xf32, #tpu.memory_space<vmem>>, vector<1x1x32xf32>
      %43 = vector.shape_cast %42 : vector<1x1x32xf32> to vector<1x32xf32>
      %c9_35 = arith.constant 9 : index
      %c0_36 = arith.constant 0 : index
      %44 = vector.load %arg8[%c9_35, %c0_36] : memref<10x32xf32, #tpu.memory_space<vmem>>, vector<1x32xf32>
      tpu.vector_store %arg8[%c9_35, %c0_36], %43 {strides = array<i32>} : memref<10x32xf32, #tpu.memory_space<vmem>>, vector<1x32xf32>,
    } else {
    }
    %c0_9 = arith.constant 0 : index
    %c0_10 = arith.constant 0 : index
    %12 = vector.load %arg8[%c0_9, %c0_10] : memref<10x32xf32, #tpu.memory_space<vmem>>, vector<10x32xf32>
    %c0_11 = arith.constant 0 : index
    %c0_12 = arith.constant 0 : index
    %13 = vector.load %arg6[%c0_11, %c0_12] : memref<1x32xf32, #tpu.memory_space<vmem>>, vector<1x32xf32>
    %14 = vector.extract_strided_slice %12 {offsets = [0, 0], sizes = [8, 32], strides = [1, 1]} : vector<10x32xf32> to vector<8x32xf32>
    %c3 = arith.constant 3 : index
    %c0_13 = arith.constant 0 : index
    %c0_14 = arith.constant 0 : index
    %15 = vector.load %arg5[%c3, %c0_13, %c0_14] : memref<4x32x32xf32, #tpu.memory_space<vmem>>, vector<1x32x32xf32>
    %16 = vector.shape_cast %15 : vector<1x32x32xf32> to vector<32x32xf32>
    %cst_15 = arith.constant dense<0.000000e+00> : vector<8x32xf32>
    %17 = tpu.matmul %14, %16, %cst_15 {dimension_numbers = #tpu.dot_dimension_numbers<[1], [0], [0], [1], [0, 0, 1, 1], [], []>} : vector<8x32xf32>, vector<32x32xf32>, vector<8x32xf32> -> vector<8x32xf32>
    %18 = vector.extract_strided_slice %12 {offsets = [1, 0], sizes = [8, 32], strides = [1, 1]} : vector<10x32xf32> to vector<8x32xf32>
    %c1_16 = arith.constant 1 : index
    %c0_17 = arith.constant 0 : index
    %c0_18 = arith.constant 0 : index
    %19 = vector.load %arg5[%c1_16, %c0_17, %c0_18] : memref<4x32x32xf32, #tpu.memory_space<vmem>>, vector<1x32x32xf32>
    %20 = vector.shape_cast %19 : vector<1x32x32xf32> to vector<32x32xf32>
    %cst_19 = arith.constant dense<0.000000e+00> : vector<8x32xf32>
    %21 = tpu.matmul %18, %20, %cst_19 {dimension_numbers = #tpu.dot_dimension_numbers<[1], [0], [0], [1], [0, 0, 1, 1], [], []>} : vector<8x32xf32>, vector<32x32xf32>, vector<8x32xf32> -> vector<8x32xf32>
    %22 = arith.addf %17, %21 : vector<8x32xf32>
    %23 = vector.broadcast %13 : vector<1x32xf32> to vector<8x32xf32>
    %24 = arith.addf %22, %23 : vector<8x32xf32>
    %25 = vector.extract_strided_slice %12 {offsets = [1, 0], sizes = [8, 32], strides = [1, 1]} : vector<10x32xf32> to vector<8x32xf32>
    %c2 = arith.constant 2 : index
    %c0_20 = arith.constant 0 : index
    %c0_21 = arith.constant 0 : index
    %26 = vector.load %arg5[%c2, %c0_20, %c0_21] : memref<4x32x32xf32, #tpu.memory_space<vmem>>, vector<1x32x32xf32>
    %27 = vector.shape_cast %26 : vector<1x32x32xf32> to vector<32x32xf32>
    %cst_22 = arith.constant dense<0.000000e+00> : vector<8x32xf32>
    %28 = tpu.matmul %25, %27, %cst_22 {dimension_numbers = #tpu.dot_dimension_numbers<[1], [0], [0], [1], [0, 0, 1, 1], [], []>} : vector<8x32xf32>, vector<32x32xf32>, vector<8x32xf32> -> vector<8x32xf32>
    %29 = vector.extract_strided_slice %12 {offsets = [2, 0], sizes = [8, 32], strides = [1, 1]} : vector<10x32xf32> to vector<8x32xf32>
    %c0_23 = arith.constant 0 : index
    %c0_24 = arith.constant 0 : index
    %c0_25 = arith.constant 0 : index
    %30 = vector.load %arg5[%c0_23, %c0_24, %c0_25] : memref<4x32x32xf32, #tpu.memory_space<vmem>>, vector<1x32x32xf32>
    %31 = vector.shape_cast %30 : vector<1x32x32xf32> to vector<32x32xf32>
    %cst_26 = arith.constant dense<0.000000e+00> : vector<8x32xf32>
    %32 = tpu.matmul %29, %31, %cst_26 {dimension_numbers = #tpu.dot_dimension_numbers<[1], [0], [0], [1], [0, 0, 1, 1], [], []>} : vector<8x32xf32>, vector<32x32xf32>, vector<8x32xf32> -> vector<8x32xf32>
    %33 = arith.addf %28, %32 : vector<8x32xf32>
    %34 = vector.broadcast %13 : vector<1x32xf32> to vector<8x32xf32>
    %35 = arith.addf %33, %34 : vector<8x32xf32>
    %c0_27 = arith.constant 0 : index
    %c0_28 = arith.constant 0 : index
    %c0_29 = arith.constant 0 : index
    %36 = vector.load %arg7[%c0_27, %c0_28, %c0_29] : memref<1x8x64xf32, #tpu.memory_space<vmem>>, vector<1x8x32xf32>
    %37 = vector.shape_cast %36 : vector<1x8x32xf32> to vector<8x32xf32>
    %38 = vector.shape_cast %24 : vector<8x32xf32> to vector<1x8x32xf32>
    tpu.vector_store %arg7[%c0_27, %c0_28, %c0_29], %38 {strides = array<i32>} : memref<1x8x64xf32, #tpu.memory_space<vmem>>, vector<1x8x32xf32>,
    %c0_30 = arith.constant 0 : index
    %c0_31 = arith.constant 0 : index
    %c32 = arith.constant 32 : index
    %39 = vector.load %arg7[%c0_30, %c0_31, %c32] : memref<1x8x64xf32, #tpu.memory_space<vmem>>, vector<1x8x32xf32>
    %40 = vector.shape_cast %39 : vector<1x8x32xf32> to vector<8x32xf32>
    %41 = vector.shape_cast %35 : vector<8x32xf32> to vector<1x8x32xf32>
    tpu.vector_store %arg7[%c0_30, %c0_31, %c32], %41 {strides = array<i32>} : memref<1x8x64xf32, #tpu.memory_space<vmem>>, vector<1x8x32xf32>,
    return
  }
  func.func @transform_0(%arg0: i32, %arg1: i32) -> (i32, i32, i32) {
    %c0_i32 = arith.constant 0 : i32
    %c0_i32_0 = arith.constant 0 : i32
    return %arg0, %arg1, %c0_i32 : i32, i32, i32
  }
  func.func @transform_1(%arg0: i32, %arg1: i32) -> (i32, i32, i32) {
    %c1_i32 = arith.constant 1 : i32
    %0 = arith.muli %arg1, %c1_i32 : i32
    %c1_i32_0 = arith.constant 1 : i32
    %1 = arith.subi %0, %c1_i32_0 : i32
    %c0_i32 = arith.constant 0 : i32
    %2 = arith.maxsi %1, %c0_i32 : i32
    %c0_i32_1 = arith.constant 0 : i32
    %c0_i32_2 = arith.constant 0 : i32
    return %arg0, %2, %c0_i32_1 : i32, i32, i32
  }
  func.func @transform_2(%arg0: i32, %arg1: i32) -> (i32, i32, i32) {
    %c1_i32 = arith.constant 1 : i32
    %0 = arith.addi %arg1, %c1_i32 : i32
    %c1_i32_0 = arith.constant 1 : i32
    %1 = arith.muli %0, %c1_i32_0 : i32
    %c0_i32 = arith.constant 0 : i32
    %2 = arith.minsi %1, %c0_i32 : i32
    %c0_i32_1 = arith.constant 0 : i32
    %c0_i32_2 = arith.constant 0 : i32
    return %arg0, %2, %c0_i32_1 : i32, i32, i32
  }
  func.func @transform_3(%arg0: i32, %arg1: i32) -> (i32, i32, i32) {
    %c0_i32 = arith.constant 0 : i32
    %c0_i32_0 = arith.constant 0 : i32
    %c0_i32_1 = arith.constant 0 : i32
    %c0_i32_2 = arith.constant 0 : i32
    return %c0_i32, %c0_i32_0, %c0_i32_1 : i32, i32, i32
  }
  func.func @transform_4(%arg0: i32, %arg1: i32) -> (i32, i32) {
    %c0_i32 = arith.constant 0 : i32
    %c0_i32_0 = arith.constant 0 : i32
    %c0_i32_1 = arith.constant 0 : i32
    return %c0_i32, %c0_i32_0 : i32, i32
  }
  func.func @transform_5(%arg0: i32, %arg1: i32) -> (i32, i32, i32) {
    %c0_i32 = arith.constant 0 : i32
    %c0_i32_0 = arith.constant 0 : i32
    return %arg0, %arg1, %c0_i32 : i32, i32, i32
  }
}

module attributes {stable_mosaic.version = 11 : i64} {
  func.func @_resblock_kernel(%arg0: i32, %arg1: i32, %arg2: memref<1x8x32xf32, #tpu.memory_space<vmem>>, %arg3: memref<1x8x32xf32, #tpu.memory_space<vmem>>, %arg4: memref<1x8x32xf32, #tpu.memory_space<vmem>>, %arg5: memref<3x32x32xf32, #tpu.memory_space<vmem>>, %arg6: memref<1x32xf32, #tpu.memory_space<vmem>>, %arg7: memref<1x32x32xf32, #tpu.memory_space<vmem>>, %arg8: memref<1x32xf32, #tpu.memory_space<vmem>>, %arg9: memref<1x8x32xf32, #tpu.memory_space<vmem>>, %arg10: memref<10x32xf32, #tpu.memory_space<vmem>>) attributes {dimension_semantics = [#tpu.dimension_semantics<parallel>, #tpu.dimension_semantics<parallel>], iteration_bounds = array<i64: 2, 1>, scalar_prefetch = 0 : i64, scratch_operands = 1 : i64, tpu.core_type = #tpu.core_type<tc>, window_params = [{transform_indices = @transform_0, window_bounds = array<i64: 1, 8, 32>}, {transform_indices = @transform_1, window_bounds = array<i64: 1, 8, 32>}, {transform_indices = @transform_2, window_bounds = array<i64: 1, 8, 32>}, {pipeline_mode = #tpu.pipeline_mode<synchronous>, transform_indices = @transform_3, window_bounds = array<i64: 3, 32, 32>}, {pipeline_mode = #tpu.pipeline_mode<synchronous>, transform_indices = @transform_4, window_bounds = array<i64: 1, 32>}, {pipeline_mode = #tpu.pipeline_mode<synchronous>, transform_indices = @transform_5, window_bounds = array<i64: 1, 32, 32>}, {pipeline_mode = #tpu.pipeline_mode<synchronous>, transform_indices = @transform_6, window_bounds = array<i64: 1, 32>}, {transform_indices = @transform_7, window_bounds = array<i64: 1, 8, 32>}]} {
    %c0 = arith.constant 0 : index
    %c0_0 = arith.constant 0 : index
    %c0_1 = arith.constant 0 : index
    %0 = vector.load %arg2[%c0, %c0_0, %c0_1] : memref<1x8x32xf32, #tpu.memory_space<vmem>>, vector<1x8x32xf32>
    %1 = vector.shape_cast %0 : vector<1x8x32xf32> to vector<8x32xf32>
    %cst = arith.constant 0.000000e+00 : f32
    %2 = vector.broadcast %cst : f32 to vector<8x32xf32>
    %3 = arith.maximumf %1, %2 : vector<8x32xf32>
    %cst_2 = arith.constant 0.000000e+00 : f32
    %4 = vector.broadcast %cst_2 : f32 to vector<1x32xf32>
    %c1 = arith.constant 1 : index
    %c0_3 = arith.constant 0 : index
    %5 = vector.load %arg10[%c1, %c0_3] : memref<10x32xf32, #tpu.memory_space<vmem>>, vector<8x32xf32>
    tpu.vector_store %arg10[%c1, %c0_3], %3 {strides = array<i32>} : memref<10x32xf32, #tpu.memory_space<vmem>>, vector<8x32xf32>,
    %c0_4 = arith.constant 0 : index
    %c0_5 = arith.constant 0 : index
    %6 = vector.load %arg10[%c0_4, %c0_5] : memref<10x32xf32, #tpu.memory_space<vmem>>, vector<1x32xf32>
    tpu.vector_store %arg10[%c0_4, %c0_5], %4 {strides = array<i32>} : memref<10x32xf32, #tpu.memory_space<vmem>>, vector<1x32xf32>,
    %c9 = arith.constant 9 : index
    %c0_6 = arith.constant 0 : index
    %7 = vector.load %arg10[%c9, %c0_6] : memref<10x32xf32, #tpu.memory_space<vmem>>, vector<1x32xf32>
    tpu.vector_store %arg10[%c9, %c0_6], %4 {strides = array<i32>} : memref<10x32xf32, #tpu.memory_space<vmem>>, vector<1x32xf32>,
    %c0_i32 = arith.constant 0 : i32
    %8 = arith.cmpi sgt, %arg1, %c0_i32 : i32
    %9 = arith.extui %8 : i1 to i32
    %c0_i32_7 = arith.constant 0 : i32
    %10 = arith.cmpi ne, %9, %c0_i32_7 : i32
    scf.if %10 {
      %c0_35 = arith.constant 0 : index
      %c7 = arith.constant 7 : index
      %c0_36 = arith.constant 0 : index
      %44 = vector.load %arg3[%c0_35, %c7, %c0_36] : memref<1x8x32xf32, #tpu.memory_space<vmem>>, vector<1x1x32xf32>
      %45 = vector.shape_cast %44 : vector<1x1x32xf32> to vector<1x32xf32>
      %cst_37 = arith.constant 0.000000e+00 : f32
      %46 = vector.broadcast %cst_37 : f32 to vector<1x32xf32>
      %47 = arith.maximumf %45, %46 : vector<1x32xf32>
      %c0_38 = arith.constant 0 : index
      %c0_39 = arith.constant 0 : index
      %48 = vector.load %arg10[%c0_38, %c0_39] : memref<10x32xf32, #tpu.memory_space<vmem>>, vector<1x32xf32>
      tpu.vector_store %arg10[%c0_38, %c0_39], %47 {strides = array<i32>} : memref<10x32xf32, #tpu.memory_space<vmem>>, vector<1x32xf32>,
    } else {
    }
    %c0_i32_8 = arith.constant 0 : i32
    %11 = arith.cmpi slt, %arg1, %c0_i32_8 : i32
    %12 = arith.extui %11 : i1 to i32
    %c0_i32_9 = arith.constant 0 : i32
    %13 = arith.cmpi ne, %12, %c0_i32_9 : i32
    scf.if %13 {
      %c0_35 = arith.constant 0 : index
      %c0_36 = arith.constant 0 : index
      %c0_37 = arith.constant 0 : index
      %44 = vector.load %arg4[%c0_35, %c0_36, %c0_37] : memref<1x8x32xf32, #tpu.memory_space<vmem>>, vector<1x1x32xf32>
      %45 = vector.shape_cast %44 : vector<1x1x32xf32> to vector<1x32xf32>
      %cst_38 = arith.constant 0.000000e+00 : f32
      %46 = vector.broadcast %cst_38 : f32 to vector<1x32xf32>
      %47 = arith.maximumf %45, %46 : vector<1x32xf32>
      %c9_39 = arith.constant 9 : index
      %c0_40 = arith.constant 0 : index
      %48 = vector.load %arg10[%c9_39, %c0_40] : memref<10x32xf32, #tpu.memory_space<vmem>>, vector<1x32xf32>
      tpu.vector_store %arg10[%c9_39, %c0_40], %47 {strides = array<i32>} : memref<10x32xf32, #tpu.memory_space<vmem>>, vector<1x32xf32>,
    } else {
    }
    %c0_10 = arith.constant 0 : index
    %c0_11 = arith.constant 0 : index
    %14 = vector.load %arg10[%c0_10, %c0_11] : memref<10x32xf32, #tpu.memory_space<vmem>>, vector<10x32xf32>
    %15 = vector.extract_strided_slice %14 {offsets = [0, 0], sizes = [8, 32], strides = [1, 1]} : vector<10x32xf32> to vector<8x32xf32>
    %c0_12 = arith.constant 0 : index
    %c0_13 = arith.constant 0 : index
    %c0_14 = arith.constant 0 : index
    %16 = vector.load %arg5[%c0_12, %c0_13, %c0_14] : memref<3x32x32xf32, #tpu.memory_space<vmem>>, vector<1x32x32xf32>
    %17 = vector.shape_cast %16 : vector<1x32x32xf32> to vector<32x32xf32>
    %cst_15 = arith.constant dense<0.000000e+00> : vector<8x32xf32>
    %18 = tpu.matmul %15, %17, %cst_15 {dimension_numbers = #tpu.dot_dimension_numbers<[1], [0], [0], [1], [0, 0, 1, 1], [], []>} : vector<8x32xf32>, vector<32x32xf32>, vector<8x32xf32> -> vector<8x32xf32>
    %19 = vector.extract_strided_slice %14 {offsets = [1, 0], sizes = [8, 32], strides = [1, 1]} : vector<10x32xf32> to vector<8x32xf32>
    %c1_16 = arith.constant 1 : index
    %c0_17 = arith.constant 0 : index
    %c0_18 = arith.constant 0 : index
    %20 = vector.load %arg5[%c1_16, %c0_17, %c0_18] : memref<3x32x32xf32, #tpu.memory_space<vmem>>, vector<1x32x32xf32>
    %21 = vector.shape_cast %20 : vector<1x32x32xf32> to vector<32x32xf32>
    %cst_19 = arith.constant dense<0.000000e+00> : vector<8x32xf32>
    %22 = tpu.matmul %19, %21, %cst_19 {dimension_numbers = #tpu.dot_dimension_numbers<[1], [0], [0], [1], [0, 0, 1, 1], [], []>} : vector<8x32xf32>, vector<32x32xf32>, vector<8x32xf32> -> vector<8x32xf32>
    %23 = arith.addf %18, %22 : vector<8x32xf32>
    %24 = vector.extract_strided_slice %14 {offsets = [2, 0], sizes = [8, 32], strides = [1, 1]} : vector<10x32xf32> to vector<8x32xf32>
    %c2 = arith.constant 2 : index
    %c0_20 = arith.constant 0 : index
    %c0_21 = arith.constant 0 : index
    %25 = vector.load %arg5[%c2, %c0_20, %c0_21] : memref<3x32x32xf32, #tpu.memory_space<vmem>>, vector<1x32x32xf32>
    %26 = vector.shape_cast %25 : vector<1x32x32xf32> to vector<32x32xf32>
    %cst_22 = arith.constant dense<0.000000e+00> : vector<8x32xf32>
    %27 = tpu.matmul %24, %26, %cst_22 {dimension_numbers = #tpu.dot_dimension_numbers<[1], [0], [0], [1], [0, 0, 1, 1], [], []>} : vector<8x32xf32>, vector<32x32xf32>, vector<8x32xf32> -> vector<8x32xf32>
    %28 = arith.addf %23, %27 : vector<8x32xf32>
    %c0_23 = arith.constant 0 : index
    %c0_24 = arith.constant 0 : index
    %29 = vector.load %arg6[%c0_23, %c0_24] : memref<1x32xf32, #tpu.memory_space<vmem>>, vector<1x32xf32>
    %30 = vector.broadcast %29 : vector<1x32xf32> to vector<8x32xf32>
    %31 = arith.addf %28, %30 : vector<8x32xf32>
    %cst_25 = arith.constant 0.000000e+00 : f32
    %32 = vector.broadcast %cst_25 : f32 to vector<8x32xf32>
    %33 = arith.maximumf %31, %32 : vector<8x32xf32>
    %c0_26 = arith.constant 0 : index
    %c0_27 = arith.constant 0 : index
    %c0_28 = arith.constant 0 : index
    %34 = vector.load %arg7[%c0_26, %c0_27, %c0_28] : memref<1x32x32xf32, #tpu.memory_space<vmem>>, vector<1x32x32xf32>
    %35 = vector.shape_cast %34 : vector<1x32x32xf32> to vector<32x32xf32>
    %cst_29 = arith.constant dense<0.000000e+00> : vector<8x32xf32>
    %36 = tpu.matmul %33, %35, %cst_29 {dimension_numbers = #tpu.dot_dimension_numbers<[1], [0], [0], [1], [0, 0, 1, 1], [], []>} : vector<8x32xf32>, vector<32x32xf32>, vector<8x32xf32> -> vector<8x32xf32>
    %c0_30 = arith.constant 0 : index
    %c0_31 = arith.constant 0 : index
    %37 = vector.load %arg8[%c0_30, %c0_31] : memref<1x32xf32, #tpu.memory_space<vmem>>, vector<1x32xf32>
    %38 = vector.broadcast %37 : vector<1x32xf32> to vector<8x32xf32>
    %39 = arith.addf %36, %38 : vector<8x32xf32>
    %40 = arith.addf %39, %1 : vector<8x32xf32>
    %c0_32 = arith.constant 0 : index
    %c0_33 = arith.constant 0 : index
    %c0_34 = arith.constant 0 : index
    %41 = vector.load %arg9[%c0_32, %c0_33, %c0_34] : memref<1x8x32xf32, #tpu.memory_space<vmem>>, vector<1x8x32xf32>
    %42 = vector.shape_cast %41 : vector<1x8x32xf32> to vector<8x32xf32>
    %43 = vector.shape_cast %40 : vector<8x32xf32> to vector<1x8x32xf32>
    tpu.vector_store %arg9[%c0_32, %c0_33, %c0_34], %43 {strides = array<i32>} : memref<1x8x32xf32, #tpu.memory_space<vmem>>, vector<1x8x32xf32>,
    return
  }
  func.func @transform_0(%arg0: i32, %arg1: i32) -> (i32, i32, i32) {
    %c0_i32 = arith.constant 0 : i32
    %c0_i32_0 = arith.constant 0 : i32
    return %arg0, %arg1, %c0_i32 : i32, i32, i32
  }
  func.func @transform_1(%arg0: i32, %arg1: i32) -> (i32, i32, i32) {
    %c1_i32 = arith.constant 1 : i32
    %0 = arith.muli %arg1, %c1_i32 : i32
    %c1_i32_0 = arith.constant 1 : i32
    %1 = arith.subi %0, %c1_i32_0 : i32
    %c0_i32 = arith.constant 0 : i32
    %2 = arith.maxsi %1, %c0_i32 : i32
    %c0_i32_1 = arith.constant 0 : i32
    %c0_i32_2 = arith.constant 0 : i32
    return %arg0, %2, %c0_i32_1 : i32, i32, i32
  }
  func.func @transform_2(%arg0: i32, %arg1: i32) -> (i32, i32, i32) {
    %c1_i32 = arith.constant 1 : i32
    %0 = arith.addi %arg1, %c1_i32 : i32
    %c1_i32_0 = arith.constant 1 : i32
    %1 = arith.muli %0, %c1_i32_0 : i32
    %c0_i32 = arith.constant 0 : i32
    %2 = arith.minsi %1, %c0_i32 : i32
    %c0_i32_1 = arith.constant 0 : i32
    %c0_i32_2 = arith.constant 0 : i32
    return %arg0, %2, %c0_i32_1 : i32, i32, i32
  }
  func.func @transform_3(%arg0: i32, %arg1: i32) -> (i32, i32, i32) {
    %c0_i32 = arith.constant 0 : i32
    %c0_i32_0 = arith.constant 0 : i32
    %c0_i32_1 = arith.constant 0 : i32
    %c0_i32_2 = arith.constant 0 : i32
    return %c0_i32, %c0_i32_0, %c0_i32_1 : i32, i32, i32
  }
  func.func @transform_4(%arg0: i32, %arg1: i32) -> (i32, i32) {
    %c0_i32 = arith.constant 0 : i32
    %c0_i32_0 = arith.constant 0 : i32
    %c0_i32_1 = arith.constant 0 : i32
    return %c0_i32, %c0_i32_0 : i32, i32
  }
  func.func @transform_5(%arg0: i32, %arg1: i32) -> (i32, i32, i32) {
    %c0_i32 = arith.constant 0 : i32
    %c0_i32_0 = arith.constant 0 : i32
    %c0_i32_1 = arith.constant 0 : i32
    %c0_i32_2 = arith.constant 0 : i32
    return %c0_i32, %c0_i32_0, %c0_i32_1 : i32, i32, i32
  }
  func.func @transform_6(%arg0: i32, %arg1: i32) -> (i32, i32) {
    %c0_i32 = arith.constant 0 : i32
    %c0_i32_0 = arith.constant 0 : i32
    %c0_i32_1 = arith.constant 0 : i32
    return %c0_i32, %c0_i32_0 : i32, i32
  }
  func.func @transform_7(%arg0: i32, %arg1: i32) -> (i32, i32, i32) {
    %c0_i32 = arith.constant 0 : i32
    %c0_i32_0 = arith.constant 0 : i32
    return %arg0, %arg1, %c0_i32 : i32, i32, i32
  }
}

module attributes {stable_mosaic.version = 11 : i64} {
  func.func @_resblock_kernel(%arg0: i32, %arg1: i32, %arg2: memref<1x8x32xf32, #tpu.memory_space<vmem>>, %arg3: memref<1x8x32xf32, #tpu.memory_space<vmem>>, %arg4: memref<1x8x32xf32, #tpu.memory_space<vmem>>, %arg5: memref<3x32x32xf32, #tpu.memory_space<vmem>>, %arg6: memref<1x32xf32, #tpu.memory_space<vmem>>, %arg7: memref<1x32x32xf32, #tpu.memory_space<vmem>>, %arg8: memref<1x32xf32, #tpu.memory_space<vmem>>, %arg9: memref<1x8x32xf32, #tpu.memory_space<vmem>>, %arg10: memref<10x32xf32, #tpu.memory_space<vmem>>) attributes {dimension_semantics = [#tpu.dimension_semantics<parallel>, #tpu.dimension_semantics<parallel>], iteration_bounds = array<i64: 2, 1>, scalar_prefetch = 0 : i64, scratch_operands = 1 : i64, tpu.core_type = #tpu.core_type<tc>, window_params = [{transform_indices = @transform_0, window_bounds = array<i64: 1, 8, 32>}, {transform_indices = @transform_1, window_bounds = array<i64: 1, 8, 32>}, {transform_indices = @transform_2, window_bounds = array<i64: 1, 8, 32>}, {pipeline_mode = #tpu.pipeline_mode<synchronous>, transform_indices = @transform_3, window_bounds = array<i64: 3, 32, 32>}, {pipeline_mode = #tpu.pipeline_mode<synchronous>, transform_indices = @transform_4, window_bounds = array<i64: 1, 32>}, {pipeline_mode = #tpu.pipeline_mode<synchronous>, transform_indices = @transform_5, window_bounds = array<i64: 1, 32, 32>}, {pipeline_mode = #tpu.pipeline_mode<synchronous>, transform_indices = @transform_6, window_bounds = array<i64: 1, 32>}, {transform_indices = @transform_7, window_bounds = array<i64: 1, 8, 32>}]} {
    %c0 = arith.constant 0 : index
    %c0_0 = arith.constant 0 : index
    %c0_1 = arith.constant 0 : index
    %0 = vector.load %arg2[%c0, %c0_0, %c0_1] : memref<1x8x32xf32, #tpu.memory_space<vmem>>, vector<1x8x32xf32>
    %1 = vector.shape_cast %0 : vector<1x8x32xf32> to vector<8x32xf32>
    %cst = arith.constant 0.000000e+00 : f32
    %2 = vector.broadcast %cst : f32 to vector<8x32xf32>
    %3 = arith.maximumf %1, %2 : vector<8x32xf32>
    %cst_2 = arith.constant 0.000000e+00 : f32
    %4 = vector.broadcast %cst_2 : f32 to vector<1x32xf32>
    %c1 = arith.constant 1 : index
    %c0_3 = arith.constant 0 : index
    %5 = vector.load %arg10[%c1, %c0_3] : memref<10x32xf32, #tpu.memory_space<vmem>>, vector<8x32xf32>
    tpu.vector_store %arg10[%c1, %c0_3], %3 {strides = array<i32>} : memref<10x32xf32, #tpu.memory_space<vmem>>, vector<8x32xf32>,
    %c0_4 = arith.constant 0 : index
    %c0_5 = arith.constant 0 : index
    %6 = vector.load %arg10[%c0_4, %c0_5] : memref<10x32xf32, #tpu.memory_space<vmem>>, vector<1x32xf32>
    tpu.vector_store %arg10[%c0_4, %c0_5], %4 {strides = array<i32>} : memref<10x32xf32, #tpu.memory_space<vmem>>, vector<1x32xf32>,
    %c9 = arith.constant 9 : index
    %c0_6 = arith.constant 0 : index
    %7 = vector.load %arg10[%c9, %c0_6] : memref<10x32xf32, #tpu.memory_space<vmem>>, vector<1x32xf32>
    tpu.vector_store %arg10[%c9, %c0_6], %4 {strides = array<i32>} : memref<10x32xf32, #tpu.memory_space<vmem>>, vector<1x32xf32>,
    %c0_i32 = arith.constant 0 : i32
    %8 = arith.cmpi sgt, %arg1, %c0_i32 : i32
    %9 = arith.extui %8 : i1 to i32
    %c0_i32_7 = arith.constant 0 : i32
    %10 = arith.cmpi ne, %9, %c0_i32_7 : i32
    scf.if %10 {
      %c0_35 = arith.constant 0 : index
      %c7 = arith.constant 7 : index
      %c0_36 = arith.constant 0 : index
      %44 = vector.load %arg3[%c0_35, %c7, %c0_36] : memref<1x8x32xf32, #tpu.memory_space<vmem>>, vector<1x1x32xf32>
      %45 = vector.shape_cast %44 : vector<1x1x32xf32> to vector<1x32xf32>
      %cst_37 = arith.constant 0.000000e+00 : f32
      %46 = vector.broadcast %cst_37 : f32 to vector<1x32xf32>
      %47 = arith.maximumf %45, %46 : vector<1x32xf32>
      %c0_38 = arith.constant 0 : index
      %c0_39 = arith.constant 0 : index
      %48 = vector.load %arg10[%c0_38, %c0_39] : memref<10x32xf32, #tpu.memory_space<vmem>>, vector<1x32xf32>
      tpu.vector_store %arg10[%c0_38, %c0_39], %47 {strides = array<i32>} : memref<10x32xf32, #tpu.memory_space<vmem>>, vector<1x32xf32>,
    } else {
    }
    %c0_i32_8 = arith.constant 0 : i32
    %11 = arith.cmpi slt, %arg1, %c0_i32_8 : i32
    %12 = arith.extui %11 : i1 to i32
    %c0_i32_9 = arith.constant 0 : i32
    %13 = arith.cmpi ne, %12, %c0_i32_9 : i32
    scf.if %13 {
      %c0_35 = arith.constant 0 : index
      %c0_36 = arith.constant 0 : index
      %c0_37 = arith.constant 0 : index
      %44 = vector.load %arg4[%c0_35, %c0_36, %c0_37] : memref<1x8x32xf32, #tpu.memory_space<vmem>>, vector<1x1x32xf32>
      %45 = vector.shape_cast %44 : vector<1x1x32xf32> to vector<1x32xf32>
      %cst_38 = arith.constant 0.000000e+00 : f32
      %46 = vector.broadcast %cst_38 : f32 to vector<1x32xf32>
      %47 = arith.maximumf %45, %46 : vector<1x32xf32>
      %c9_39 = arith.constant 9 : index
      %c0_40 = arith.constant 0 : index
      %48 = vector.load %arg10[%c9_39, %c0_40] : memref<10x32xf32, #tpu.memory_space<vmem>>, vector<1x32xf32>
      tpu.vector_store %arg10[%c9_39, %c0_40], %47 {strides = array<i32>} : memref<10x32xf32, #tpu.memory_space<vmem>>, vector<1x32xf32>,
    } else {
    }
    %c0_10 = arith.constant 0 : index
    %c0_11 = arith.constant 0 : index
    %14 = vector.load %arg10[%c0_10, %c0_11] : memref<10x32xf32, #tpu.memory_space<vmem>>, vector<10x32xf32>
    %15 = vector.extract_strided_slice %14 {offsets = [0, 0], sizes = [8, 32], strides = [1, 1]} : vector<10x32xf32> to vector<8x32xf32>
    %c0_12 = arith.constant 0 : index
    %c0_13 = arith.constant 0 : index
    %c0_14 = arith.constant 0 : index
    %16 = vector.load %arg5[%c0_12, %c0_13, %c0_14] : memref<3x32x32xf32, #tpu.memory_space<vmem>>, vector<1x32x32xf32>
    %17 = vector.shape_cast %16 : vector<1x32x32xf32> to vector<32x32xf32>
    %cst_15 = arith.constant dense<0.000000e+00> : vector<8x32xf32>
    %18 = tpu.matmul %15, %17, %cst_15 {dimension_numbers = #tpu.dot_dimension_numbers<[1], [0], [0], [1], [0, 0, 1, 1], [], []>} : vector<8x32xf32>, vector<32x32xf32>, vector<8x32xf32> -> vector<8x32xf32>
    %19 = vector.extract_strided_slice %14 {offsets = [1, 0], sizes = [8, 32], strides = [1, 1]} : vector<10x32xf32> to vector<8x32xf32>
    %c1_16 = arith.constant 1 : index
    %c0_17 = arith.constant 0 : index
    %c0_18 = arith.constant 0 : index
    %20 = vector.load %arg5[%c1_16, %c0_17, %c0_18] : memref<3x32x32xf32, #tpu.memory_space<vmem>>, vector<1x32x32xf32>
    %21 = vector.shape_cast %20 : vector<1x32x32xf32> to vector<32x32xf32>
    %cst_19 = arith.constant dense<0.000000e+00> : vector<8x32xf32>
    %22 = tpu.matmul %19, %21, %cst_19 {dimension_numbers = #tpu.dot_dimension_numbers<[1], [0], [0], [1], [0, 0, 1, 1], [], []>} : vector<8x32xf32>, vector<32x32xf32>, vector<8x32xf32> -> vector<8x32xf32>
    %23 = arith.addf %18, %22 : vector<8x32xf32>
    %24 = vector.extract_strided_slice %14 {offsets = [2, 0], sizes = [8, 32], strides = [1, 1]} : vector<10x32xf32> to vector<8x32xf32>
    %c2 = arith.constant 2 : index
    %c0_20 = arith.constant 0 : index
    %c0_21 = arith.constant 0 : index
    %25 = vector.load %arg5[%c2, %c0_20, %c0_21] : memref<3x32x32xf32, #tpu.memory_space<vmem>>, vector<1x32x32xf32>
    %26 = vector.shape_cast %25 : vector<1x32x32xf32> to vector<32x32xf32>
    %cst_22 = arith.constant dense<0.000000e+00> : vector<8x32xf32>
    %27 = tpu.matmul %24, %26, %cst_22 {dimension_numbers = #tpu.dot_dimension_numbers<[1], [0], [0], [1], [0, 0, 1, 1], [], []>} : vector<8x32xf32>, vector<32x32xf32>, vector<8x32xf32> -> vector<8x32xf32>
    %28 = arith.addf %23, %27 : vector<8x32xf32>
    %c0_23 = arith.constant 0 : index
    %c0_24 = arith.constant 0 : index
    %29 = vector.load %arg6[%c0_23, %c0_24] : memref<1x32xf32, #tpu.memory_space<vmem>>, vector<1x32xf32>
    %30 = vector.broadcast %29 : vector<1x32xf32> to vector<8x32xf32>
    %31 = arith.addf %28, %30 : vector<8x32xf32>
    %cst_25 = arith.constant 0.000000e+00 : f32
    %32 = vector.broadcast %cst_25 : f32 to vector<8x32xf32>
    %33 = arith.maximumf %31, %32 : vector<8x32xf32>
    %c0_26 = arith.constant 0 : index
    %c0_27 = arith.constant 0 : index
    %c0_28 = arith.constant 0 : index
    %34 = vector.load %arg7[%c0_26, %c0_27, %c0_28] : memref<1x32x32xf32, #tpu.memory_space<vmem>>, vector<1x32x32xf32>
    %35 = vector.shape_cast %34 : vector<1x32x32xf32> to vector<32x32xf32>
    %cst_29 = arith.constant dense<0.000000e+00> : vector<8x32xf32>
    %36 = tpu.matmul %33, %35, %cst_29 {dimension_numbers = #tpu.dot_dimension_numbers<[1], [0], [0], [1], [0, 0, 1, 1], [], []>} : vector<8x32xf32>, vector<32x32xf32>, vector<8x32xf32> -> vector<8x32xf32>
    %c0_30 = arith.constant 0 : index
    %c0_31 = arith.constant 0 : index
    %37 = vector.load %arg8[%c0_30, %c0_31] : memref<1x32xf32, #tpu.memory_space<vmem>>, vector<1x32xf32>
    %38 = vector.broadcast %37 : vector<1x32xf32> to vector<8x32xf32>
    %39 = arith.addf %36, %38 : vector<8x32xf32>
    %40 = arith.addf %39, %1 : vector<8x32xf32>
    %c0_32 = arith.constant 0 : index
    %c0_33 = arith.constant 0 : index
    %c0_34 = arith.constant 0 : index
    %41 = vector.load %arg9[%c0_32, %c0_33, %c0_34] : memref<1x8x32xf32, #tpu.memory_space<vmem>>, vector<1x8x32xf32>
    %42 = vector.shape_cast %41 : vector<1x8x32xf32> to vector<8x32xf32>
    %43 = vector.shape_cast %40 : vector<8x32xf32> to vector<1x8x32xf32>
    tpu.vector_store %arg9[%c0_32, %c0_33, %c0_34], %43 {strides = array<i32>} : memref<1x8x32xf32, #tpu.memory_space<vmem>>, vector<1x8x32xf32>,
    return
  }
  func.func @transform_0(%arg0: i32, %arg1: i32) -> (i32, i32, i32) {
    %c0_i32 = arith.constant 0 : i32
    %c0_i32_0 = arith.constant 0 : i32
    return %arg0, %arg1, %c0_i32 : i32, i32, i32
  }
  func.func @transform_1(%arg0: i32, %arg1: i32) -> (i32, i32, i32) {
    %c1_i32 = arith.constant 1 : i32
    %0 = arith.muli %arg1, %c1_i32 : i32
    %c1_i32_0 = arith.constant 1 : i32
    %1 = arith.subi %0, %c1_i32_0 : i32
    %c0_i32 = arith.constant 0 : i32
    %2 = arith.maxsi %1, %c0_i32 : i32
    %c0_i32_1 = arith.constant 0 : i32
    %c0_i32_2 = arith.constant 0 : i32
    return %arg0, %2, %c0_i32_1 : i32, i32, i32
  }
  func.func @transform_2(%arg0: i32, %arg1: i32) -> (i32, i32, i32) {
    %c1_i32 = arith.constant 1 : i32
    %0 = arith.addi %arg1, %c1_i32 : i32
    %c1_i32_0 = arith.constant 1 : i32
    %1 = arith.muli %0, %c1_i32_0 : i32
    %c0_i32 = arith.constant 0 : i32
    %2 = arith.minsi %1, %c0_i32 : i32
    %c0_i32_1 = arith.constant 0 : i32
    %c0_i32_2 = arith.constant 0 : i32
    return %arg0, %2, %c0_i32_1 : i32, i32, i32
  }
  func.func @transform_3(%arg0: i32, %arg1: i32) -> (i32, i32, i32) {
    %c0_i32 = arith.constant 0 : i32
    %c0_i32_0 = arith.constant 0 : i32
    %c0_i32_1 = arith.constant 0 : i32
    %c0_i32_2 = arith.constant 0 : i32
    return %c0_i32, %c0_i32_0, %c0_i32_1 : i32, i32, i32
  }
  func.func @transform_4(%arg0: i32, %arg1: i32) -> (i32, i32) {
    %c0_i32 = arith.constant 0 : i32
    %c0_i32_0 = arith.constant 0 : i32
    %c0_i32_1 = arith.constant 0 : i32
    return %c0_i32, %c0_i32_0 : i32, i32
  }
  func.func @transform_5(%arg0: i32, %arg1: i32) -> (i32, i32, i32) {
    %c0_i32 = arith.constant 0 : i32
    %c0_i32_0 = arith.constant 0 : i32
    %c0_i32_1 = arith.constant 0 : i32
    %c0_i32_2 = arith.constant 0 : i32
    return %c0_i32, %c0_i32_0, %c0_i32_1 : i32, i32, i32
  }
  func.func @transform_6(%arg0: i32, %arg1: i32) -> (i32, i32) {
    %c0_i32 = arith.constant 0 : i32
    %c0_i32_0 = arith.constant 0 : i32
    %c0_i32_1 = arith.constant 0 : i32
    return %c0_i32, %c0_i32_0 : i32, i32
  }
  func.func @transform_7(%arg0: i32, %arg1: i32) -> (i32, i32, i32) {
    %c0_i32 = arith.constant 0 : i32
    %c0_i32_0 = arith.constant 0 : i32
    return %arg0, %arg1, %c0_i32 : i32, i32, i32
  }
}

module attributes {stable_mosaic.version = 11 : i64} {
  func.func @_conv3_kernel(%arg0: i32, %arg1: i32, %arg2: memref<1x8x32xf32, #tpu.memory_space<vmem>>, %arg3: memref<1x8x32xf32, #tpu.memory_space<vmem>>, %arg4: memref<1x8x32xf32, #tpu.memory_space<vmem>>, %arg5: memref<3x32x32xf32, #tpu.memory_space<vmem>>, %arg6: memref<1x32xf32, #tpu.memory_space<vmem>>, %arg7: memref<1x8x32xf32, #tpu.memory_space<vmem>>, %arg8: memref<10x32xf32, #tpu.memory_space<vmem>>) attributes {dimension_semantics = [#tpu.dimension_semantics<parallel>, #tpu.dimension_semantics<parallel>], iteration_bounds = array<i64: 2, 1>, scalar_prefetch = 0 : i64, scratch_operands = 1 : i64, tpu.core_type = #tpu.core_type<tc>, window_params = [{transform_indices = @transform_0, window_bounds = array<i64: 1, 8, 32>}, {transform_indices = @transform_1, window_bounds = array<i64: 1, 8, 32>}, {transform_indices = @transform_2, window_bounds = array<i64: 1, 8, 32>}, {pipeline_mode = #tpu.pipeline_mode<synchronous>, transform_indices = @transform_3, window_bounds = array<i64: 3, 32, 32>}, {pipeline_mode = #tpu.pipeline_mode<synchronous>, transform_indices = @transform_4, window_bounds = array<i64: 1, 32>}, {transform_indices = @transform_5, window_bounds = array<i64: 1, 8, 32>}]} {
    %c0 = arith.constant 0 : index
    %c0_0 = arith.constant 0 : index
    %c0_1 = arith.constant 0 : index
    %0 = vector.load %arg2[%c0, %c0_0, %c0_1] : memref<1x8x32xf32, #tpu.memory_space<vmem>>, vector<1x8x32xf32>
    %1 = vector.shape_cast %0 : vector<1x8x32xf32> to vector<8x32xf32>
    %cst = arith.constant 0.000000e+00 : f32
    %2 = vector.broadcast %cst : f32 to vector<1x32xf32>
    %c1 = arith.constant 1 : index
    %c0_2 = arith.constant 0 : index
    %3 = vector.load %arg8[%c1, %c0_2] : memref<10x32xf32, #tpu.memory_space<vmem>>, vector<8x32xf32>
    tpu.vector_store %arg8[%c1, %c0_2], %1 {strides = array<i32>} : memref<10x32xf32, #tpu.memory_space<vmem>>, vector<8x32xf32>,
    %c0_3 = arith.constant 0 : index
    %c0_4 = arith.constant 0 : index
    %4 = vector.load %arg8[%c0_3, %c0_4] : memref<10x32xf32, #tpu.memory_space<vmem>>, vector<1x32xf32>
    tpu.vector_store %arg8[%c0_3, %c0_4], %2 {strides = array<i32>} : memref<10x32xf32, #tpu.memory_space<vmem>>, vector<1x32xf32>,
    %c9 = arith.constant 9 : index
    %c0_5 = arith.constant 0 : index
    %5 = vector.load %arg8[%c9, %c0_5] : memref<10x32xf32, #tpu.memory_space<vmem>>, vector<1x32xf32>
    tpu.vector_store %arg8[%c9, %c0_5], %2 {strides = array<i32>} : memref<10x32xf32, #tpu.memory_space<vmem>>, vector<1x32xf32>,
    %c0_i32 = arith.constant 0 : i32
    %6 = arith.cmpi sgt, %arg1, %c0_i32 : i32
    %7 = arith.extui %6 : i1 to i32
    %c0_i32_6 = arith.constant 0 : i32
    %8 = arith.cmpi ne, %7, %c0_i32_6 : i32
    scf.if %8 {
      %c0_27 = arith.constant 0 : index
      %c7 = arith.constant 7 : index
      %c0_28 = arith.constant 0 : index
      %33 = vector.load %arg3[%c0_27, %c7, %c0_28] : memref<1x8x32xf32, #tpu.memory_space<vmem>>, vector<1x1x32xf32>
      %34 = vector.shape_cast %33 : vector<1x1x32xf32> to vector<1x32xf32>
      %c0_29 = arith.constant 0 : index
      %c0_30 = arith.constant 0 : index
      %35 = vector.load %arg8[%c0_29, %c0_30] : memref<10x32xf32, #tpu.memory_space<vmem>>, vector<1x32xf32>
      tpu.vector_store %arg8[%c0_29, %c0_30], %34 {strides = array<i32>} : memref<10x32xf32, #tpu.memory_space<vmem>>, vector<1x32xf32>,
    } else {
    }
    %c0_i32_7 = arith.constant 0 : i32
    %9 = arith.cmpi slt, %arg1, %c0_i32_7 : i32
    %10 = arith.extui %9 : i1 to i32
    %c0_i32_8 = arith.constant 0 : i32
    %11 = arith.cmpi ne, %10, %c0_i32_8 : i32
    scf.if %11 {
      %c0_27 = arith.constant 0 : index
      %c0_28 = arith.constant 0 : index
      %c0_29 = arith.constant 0 : index
      %33 = vector.load %arg4[%c0_27, %c0_28, %c0_29] : memref<1x8x32xf32, #tpu.memory_space<vmem>>, vector<1x1x32xf32>
      %34 = vector.shape_cast %33 : vector<1x1x32xf32> to vector<1x32xf32>
      %c9_30 = arith.constant 9 : index
      %c0_31 = arith.constant 0 : index
      %35 = vector.load %arg8[%c9_30, %c0_31] : memref<10x32xf32, #tpu.memory_space<vmem>>, vector<1x32xf32>
      tpu.vector_store %arg8[%c9_30, %c0_31], %34 {strides = array<i32>} : memref<10x32xf32, #tpu.memory_space<vmem>>, vector<1x32xf32>,
    } else {
    }
    %c0_9 = arith.constant 0 : index
    %c0_10 = arith.constant 0 : index
    %12 = vector.load %arg8[%c0_9, %c0_10] : memref<10x32xf32, #tpu.memory_space<vmem>>, vector<10x32xf32>
    %13 = vector.extract_strided_slice %12 {offsets = [0, 0], sizes = [8, 32], strides = [1, 1]} : vector<10x32xf32> to vector<8x32xf32>
    %c0_11 = arith.constant 0 : index
    %c0_12 = arith.constant 0 : index
    %c0_13 = arith.constant 0 : index
    %14 = vector.load %arg5[%c0_11, %c0_12, %c0_13] : memref<3x32x32xf32, #tpu.memory_space<vmem>>, vector<1x32x32xf32>
    %15 = vector.shape_cast %14 : vector<1x32x32xf32> to vector<32x32xf32>
    %cst_14 = arith.constant dense<0.000000e+00> : vector<8x32xf32>
    %16 = tpu.matmul %13, %15, %cst_14 {dimension_numbers = #tpu.dot_dimension_numbers<[1], [0], [0], [1], [0, 0, 1, 1], [], []>} : vector<8x32xf32>, vector<32x32xf32>, vector<8x32xf32> -> vector<8x32xf32>
    %17 = vector.extract_strided_slice %12 {offsets = [1, 0], sizes = [8, 32], strides = [1, 1]} : vector<10x32xf32> to vector<8x32xf32>
    %c1_15 = arith.constant 1 : index
    %c0_16 = arith.constant 0 : index
    %c0_17 = arith.constant 0 : index
    %18 = vector.load %arg5[%c1_15, %c0_16, %c0_17] : memref<3x32x32xf32, #tpu.memory_space<vmem>>, vector<1x32x32xf32>
    %19 = vector.shape_cast %18 : vector<1x32x32xf32> to vector<32x32xf32>
    %cst_18 = arith.constant dense<0.000000e+00> : vector<8x32xf32>
    %20 = tpu.matmul %17, %19, %cst_18 {dimension_numbers = #tpu.dot_dimension_numbers<[1], [0], [0], [1], [0, 0, 1, 1], [], []>} : vector<8x32xf32>, vector<32x32xf32>, vector<8x32xf32> -> vector<8x32xf32>
    %21 = arith.addf %16, %20 : vector<8x32xf32>
    %22 = vector.extract_strided_slice %12 {offsets = [2, 0], sizes = [8, 32], strides = [1, 1]} : vector<10x32xf32> to vector<8x32xf32>
    %c2 = arith.constant 2 : index
    %c0_19 = arith.constant 0 : index
    %c0_20 = arith.constant 0 : index
    %23 = vector.load %arg5[%c2, %c0_19, %c0_20] : memref<3x32x32xf32, #tpu.memory_space<vmem>>, vector<1x32x32xf32>
    %24 = vector.shape_cast %23 : vector<1x32x32xf32> to vector<32x32xf32>
    %cst_21 = arith.constant dense<0.000000e+00> : vector<8x32xf32>
    %25 = tpu.matmul %22, %24, %cst_21 {dimension_numbers = #tpu.dot_dimension_numbers<[1], [0], [0], [1], [0, 0, 1, 1], [], []>} : vector<8x32xf32>, vector<32x32xf32>, vector<8x32xf32> -> vector<8x32xf32>
    %26 = arith.addf %21, %25 : vector<8x32xf32>
    %c0_22 = arith.constant 0 : index
    %c0_23 = arith.constant 0 : index
    %27 = vector.load %arg6[%c0_22, %c0_23] : memref<1x32xf32, #tpu.memory_space<vmem>>, vector<1x32xf32>
    %28 = vector.broadcast %27 : vector<1x32xf32> to vector<8x32xf32>
    %29 = arith.addf %26, %28 : vector<8x32xf32>
    %c0_24 = arith.constant 0 : index
    %c0_25 = arith.constant 0 : index
    %c0_26 = arith.constant 0 : index
    %30 = vector.load %arg7[%c0_24, %c0_25, %c0_26] : memref<1x8x32xf32, #tpu.memory_space<vmem>>, vector<1x8x32xf32>
    %31 = vector.shape_cast %30 : vector<1x8x32xf32> to vector<8x32xf32>
    %32 = vector.shape_cast %29 : vector<8x32xf32> to vector<1x8x32xf32>
    tpu.vector_store %arg7[%c0_24, %c0_25, %c0_26], %32 {strides = array<i32>} : memref<1x8x32xf32, #tpu.memory_space<vmem>>, vector<1x8x32xf32>,
    return
  }
  func.func @transform_0(%arg0: i32, %arg1: i32) -> (i32, i32, i32) {
    %c0_i32 = arith.constant 0 : i32
    %c0_i32_0 = arith.constant 0 : i32
    return %arg0, %arg1, %c0_i32 : i32, i32, i32
  }
  func.func @transform_1(%arg0: i32, %arg1: i32) -> (i32, i32, i32) {
    %c1_i32 = arith.constant 1 : i32
    %0 = arith.muli %arg1, %c1_i32 : i32
    %c1_i32_0 = arith.constant 1 : i32
    %1 = arith.subi %0, %c1_i32_0 : i32
    %c0_i32 = arith.constant 0 : i32
    %2 = arith.maxsi %1, %c0_i32 : i32
    %c0_i32_1 = arith.constant 0 : i32
    %c0_i32_2 = arith.constant 0 : i32
    return %arg0, %2, %c0_i32_1 : i32, i32, i32
  }
  func.func @transform_2(%arg0: i32, %arg1: i32) -> (i32, i32, i32) {
    %c1_i32 = arith.constant 1 : i32
    %0 = arith.addi %arg1, %c1_i32 : i32
    %c1_i32_0 = arith.constant 1 : i32
    %1 = arith.muli %0, %c1_i32_0 : i32
    %c0_i32 = arith.constant 0 : i32
    %2 = arith.minsi %1, %c0_i32 : i32
    %c0_i32_1 = arith.constant 0 : i32
    %c0_i32_2 = arith.constant 0 : i32
    return %arg0, %2, %c0_i32_1 : i32, i32, i32
  }
  func.func @transform_3(%arg0: i32, %arg1: i32) -> (i32, i32, i32) {
    %c0_i32 = arith.constant 0 : i32
    %c0_i32_0 = arith.constant 0 : i32
    %c0_i32_1 = arith.constant 0 : i32
    %c0_i32_2 = arith.constant 0 : i32
    return %c0_i32, %c0_i32_0, %c0_i32_1 : i32, i32, i32
  }
  func.func @transform_4(%arg0: i32, %arg1: i32) -> (i32, i32) {
    %c0_i32 = arith.constant 0 : i32
    %c0_i32_0 = arith.constant 0 : i32
    %c0_i32_1 = arith.constant 0 : i32
    return %c0_i32, %c0_i32_0 : i32, i32
  }
  func.func @transform_5(%arg0: i32, %arg1: i32) -> (i32, i32, i32) {
    %c0_i32 = arith.constant 0 : i32
    %c0_i32_0 = arith.constant 0 : i32
    return %arg0, %arg1, %c0_i32 : i32, i32, i32
  }
}

module attributes {stable_mosaic.version = 11 : i64} {
  func.func @_resblock_kernel(%arg0: i32, %arg1: i32, %arg2: memref<1x8x32xf32, #tpu.memory_space<vmem>>, %arg3: memref<1x8x32xf32, #tpu.memory_space<vmem>>, %arg4: memref<1x8x32xf32, #tpu.memory_space<vmem>>, %arg5: memref<3x32x32xf32, #tpu.memory_space<vmem>>, %arg6: memref<1x32xf32, #tpu.memory_space<vmem>>, %arg7: memref<1x32x32xf32, #tpu.memory_space<vmem>>, %arg8: memref<1x32xf32, #tpu.memory_space<vmem>>, %arg9: memref<1x8x32xf32, #tpu.memory_space<vmem>>, %arg10: memref<10x32xf32, #tpu.memory_space<vmem>>) attributes {dimension_semantics = [#tpu.dimension_semantics<parallel>, #tpu.dimension_semantics<parallel>], iteration_bounds = array<i64: 2, 2>, scalar_prefetch = 0 : i64, scratch_operands = 1 : i64, tpu.core_type = #tpu.core_type<tc>, window_params = [{transform_indices = @transform_0, window_bounds = array<i64: 1, 8, 32>}, {transform_indices = @transform_1, window_bounds = array<i64: 1, 8, 32>}, {transform_indices = @transform_2, window_bounds = array<i64: 1, 8, 32>}, {pipeline_mode = #tpu.pipeline_mode<synchronous>, transform_indices = @transform_3, window_bounds = array<i64: 3, 32, 32>}, {pipeline_mode = #tpu.pipeline_mode<synchronous>, transform_indices = @transform_4, window_bounds = array<i64: 1, 32>}, {pipeline_mode = #tpu.pipeline_mode<synchronous>, transform_indices = @transform_5, window_bounds = array<i64: 1, 32, 32>}, {pipeline_mode = #tpu.pipeline_mode<synchronous>, transform_indices = @transform_6, window_bounds = array<i64: 1, 32>}, {transform_indices = @transform_7, window_bounds = array<i64: 1, 8, 32>}]} {
    %c0 = arith.constant 0 : index
    %c0_0 = arith.constant 0 : index
    %c0_1 = arith.constant 0 : index
    %0 = vector.load %arg2[%c0, %c0_0, %c0_1] : memref<1x8x32xf32, #tpu.memory_space<vmem>>, vector<1x8x32xf32>
    %1 = vector.shape_cast %0 : vector<1x8x32xf32> to vector<8x32xf32>
    %cst = arith.constant 0.000000e+00 : f32
    %2 = vector.broadcast %cst : f32 to vector<8x32xf32>
    %3 = arith.maximumf %1, %2 : vector<8x32xf32>
    %cst_2 = arith.constant 0.000000e+00 : f32
    %4 = vector.broadcast %cst_2 : f32 to vector<1x32xf32>
    %c1 = arith.constant 1 : index
    %c0_3 = arith.constant 0 : index
    %5 = vector.load %arg10[%c1, %c0_3] : memref<10x32xf32, #tpu.memory_space<vmem>>, vector<8x32xf32>
    tpu.vector_store %arg10[%c1, %c0_3], %3 {strides = array<i32>} : memref<10x32xf32, #tpu.memory_space<vmem>>, vector<8x32xf32>,
    %c0_4 = arith.constant 0 : index
    %c0_5 = arith.constant 0 : index
    %6 = vector.load %arg10[%c0_4, %c0_5] : memref<10x32xf32, #tpu.memory_space<vmem>>, vector<1x32xf32>
    tpu.vector_store %arg10[%c0_4, %c0_5], %4 {strides = array<i32>} : memref<10x32xf32, #tpu.memory_space<vmem>>, vector<1x32xf32>,
    %c9 = arith.constant 9 : index
    %c0_6 = arith.constant 0 : index
    %7 = vector.load %arg10[%c9, %c0_6] : memref<10x32xf32, #tpu.memory_space<vmem>>, vector<1x32xf32>
    tpu.vector_store %arg10[%c9, %c0_6], %4 {strides = array<i32>} : memref<10x32xf32, #tpu.memory_space<vmem>>, vector<1x32xf32>,
    %c0_i32 = arith.constant 0 : i32
    %8 = arith.cmpi sgt, %arg1, %c0_i32 : i32
    %9 = arith.extui %8 : i1 to i32
    %c0_i32_7 = arith.constant 0 : i32
    %10 = arith.cmpi ne, %9, %c0_i32_7 : i32
    scf.if %10 {
      %c0_34 = arith.constant 0 : index
      %c7 = arith.constant 7 : index
      %c0_35 = arith.constant 0 : index
      %44 = vector.load %arg3[%c0_34, %c7, %c0_35] : memref<1x8x32xf32, #tpu.memory_space<vmem>>, vector<1x1x32xf32>
      %45 = vector.shape_cast %44 : vector<1x1x32xf32> to vector<1x32xf32>
      %cst_36 = arith.constant 0.000000e+00 : f32
      %46 = vector.broadcast %cst_36 : f32 to vector<1x32xf32>
      %47 = arith.maximumf %45, %46 : vector<1x32xf32>
      %c0_37 = arith.constant 0 : index
      %c0_38 = arith.constant 0 : index
      %48 = vector.load %arg10[%c0_37, %c0_38] : memref<10x32xf32, #tpu.memory_space<vmem>>, vector<1x32xf32>
      tpu.vector_store %arg10[%c0_37, %c0_38], %47 {strides = array<i32>} : memref<10x32xf32, #tpu.memory_space<vmem>>, vector<1x32xf32>,
    } else {
    }
    %c1_i32 = arith.constant 1 : i32
    %11 = arith.cmpi slt, %arg1, %c1_i32 : i32
    %12 = arith.extui %11 : i1 to i32
    %c0_i32_8 = arith.constant 0 : i32
    %13 = arith.cmpi ne, %12, %c0_i32_8 : i32
    scf.if %13 {
      %c0_34 = arith.constant 0 : index
      %c0_35 = arith.constant 0 : index
      %c0_36 = arith.constant 0 : index
      %44 = vector.load %arg4[%c0_34, %c0_35, %c0_36] : memref<1x8x32xf32, #tpu.memory_space<vmem>>, vector<1x1x32xf32>
      %45 = vector.shape_cast %44 : vector<1x1x32xf32> to vector<1x32xf32>
      %cst_37 = arith.constant 0.000000e+00 : f32
      %46 = vector.broadcast %cst_37 : f32 to vector<1x32xf32>
      %47 = arith.maximumf %45, %46 : vector<1x32xf32>
      %c9_38 = arith.constant 9 : index
      %c0_39 = arith.constant 0 : index
      %48 = vector.load %arg10[%c9_38, %c0_39] : memref<10x32xf32, #tpu.memory_space<vmem>>, vector<1x32xf32>
      tpu.vector_store %arg10[%c9_38, %c0_39], %47 {strides = array<i32>} : memref<10x32xf32, #tpu.memory_space<vmem>>, vector<1x32xf32>,
    } else {
    }
    %c0_9 = arith.constant 0 : index
    %c0_10 = arith.constant 0 : index
    %14 = vector.load %arg10[%c0_9, %c0_10] : memref<10x32xf32, #tpu.memory_space<vmem>>, vector<10x32xf32>
    %15 = vector.extract_strided_slice %14 {offsets = [0, 0], sizes = [8, 32], strides = [1, 1]} : vector<10x32xf32> to vector<8x32xf32>
    %c0_11 = arith.constant 0 : index
    %c0_12 = arith.constant 0 : index
    %c0_13 = arith.constant 0 : index
    %16 = vector.load %arg5[%c0_11, %c0_12, %c0_13] : memref<3x32x32xf32, #tpu.memory_space<vmem>>, vector<1x32x32xf32>
    %17 = vector.shape_cast %16 : vector<1x32x32xf32> to vector<32x32xf32>
    %cst_14 = arith.constant dense<0.000000e+00> : vector<8x32xf32>
    %18 = tpu.matmul %15, %17, %cst_14 {dimension_numbers = #tpu.dot_dimension_numbers<[1], [0], [0], [1], [0, 0, 1, 1], [], []>} : vector<8x32xf32>, vector<32x32xf32>, vector<8x32xf32> -> vector<8x32xf32>
    %19 = vector.extract_strided_slice %14 {offsets = [1, 0], sizes = [8, 32], strides = [1, 1]} : vector<10x32xf32> to vector<8x32xf32>
    %c1_15 = arith.constant 1 : index
    %c0_16 = arith.constant 0 : index
    %c0_17 = arith.constant 0 : index
    %20 = vector.load %arg5[%c1_15, %c0_16, %c0_17] : memref<3x32x32xf32, #tpu.memory_space<vmem>>, vector<1x32x32xf32>
    %21 = vector.shape_cast %20 : vector<1x32x32xf32> to vector<32x32xf32>
    %cst_18 = arith.constant dense<0.000000e+00> : vector<8x32xf32>
    %22 = tpu.matmul %19, %21, %cst_18 {dimension_numbers = #tpu.dot_dimension_numbers<[1], [0], [0], [1], [0, 0, 1, 1], [], []>} : vector<8x32xf32>, vector<32x32xf32>, vector<8x32xf32> -> vector<8x32xf32>
    %23 = arith.addf %18, %22 : vector<8x32xf32>
    %24 = vector.extract_strided_slice %14 {offsets = [2, 0], sizes = [8, 32], strides = [1, 1]} : vector<10x32xf32> to vector<8x32xf32>
    %c2 = arith.constant 2 : index
    %c0_19 = arith.constant 0 : index
    %c0_20 = arith.constant 0 : index
    %25 = vector.load %arg5[%c2, %c0_19, %c0_20] : memref<3x32x32xf32, #tpu.memory_space<vmem>>, vector<1x32x32xf32>
    %26 = vector.shape_cast %25 : vector<1x32x32xf32> to vector<32x32xf32>
    %cst_21 = arith.constant dense<0.000000e+00> : vector<8x32xf32>
    %27 = tpu.matmul %24, %26, %cst_21 {dimension_numbers = #tpu.dot_dimension_numbers<[1], [0], [0], [1], [0, 0, 1, 1], [], []>} : vector<8x32xf32>, vector<32x32xf32>, vector<8x32xf32> -> vector<8x32xf32>
    %28 = arith.addf %23, %27 : vector<8x32xf32>
    %c0_22 = arith.constant 0 : index
    %c0_23 = arith.constant 0 : index
    %29 = vector.load %arg6[%c0_22, %c0_23] : memref<1x32xf32, #tpu.memory_space<vmem>>, vector<1x32xf32>
    %30 = vector.broadcast %29 : vector<1x32xf32> to vector<8x32xf32>
    %31 = arith.addf %28, %30 : vector<8x32xf32>
    %cst_24 = arith.constant 0.000000e+00 : f32
    %32 = vector.broadcast %cst_24 : f32 to vector<8x32xf32>
    %33 = arith.maximumf %31, %32 : vector<8x32xf32>
    %c0_25 = arith.constant 0 : index
    %c0_26 = arith.constant 0 : index
    %c0_27 = arith.constant 0 : index
    %34 = vector.load %arg7[%c0_25, %c0_26, %c0_27] : memref<1x32x32xf32, #tpu.memory_space<vmem>>, vector<1x32x32xf32>
    %35 = vector.shape_cast %34 : vector<1x32x32xf32> to vector<32x32xf32>
    %cst_28 = arith.constant dense<0.000000e+00> : vector<8x32xf32>
    %36 = tpu.matmul %33, %35, %cst_28 {dimension_numbers = #tpu.dot_dimension_numbers<[1], [0], [0], [1], [0, 0, 1, 1], [], []>} : vector<8x32xf32>, vector<32x32xf32>, vector<8x32xf32> -> vector<8x32xf32>
    %c0_29 = arith.constant 0 : index
    %c0_30 = arith.constant 0 : index
    %37 = vector.load %arg8[%c0_29, %c0_30] : memref<1x32xf32, #tpu.memory_space<vmem>>, vector<1x32xf32>
    %38 = vector.broadcast %37 : vector<1x32xf32> to vector<8x32xf32>
    %39 = arith.addf %36, %38 : vector<8x32xf32>
    %40 = arith.addf %39, %1 : vector<8x32xf32>
    %c0_31 = arith.constant 0 : index
    %c0_32 = arith.constant 0 : index
    %c0_33 = arith.constant 0 : index
    %41 = vector.load %arg9[%c0_31, %c0_32, %c0_33] : memref<1x8x32xf32, #tpu.memory_space<vmem>>, vector<1x8x32xf32>
    %42 = vector.shape_cast %41 : vector<1x8x32xf32> to vector<8x32xf32>
    %43 = vector.shape_cast %40 : vector<8x32xf32> to vector<1x8x32xf32>
    tpu.vector_store %arg9[%c0_31, %c0_32, %c0_33], %43 {strides = array<i32>} : memref<1x8x32xf32, #tpu.memory_space<vmem>>, vector<1x8x32xf32>,
    return
  }
  func.func @transform_0(%arg0: i32, %arg1: i32) -> (i32, i32, i32) {
    %c0_i32 = arith.constant 0 : i32
    %c0_i32_0 = arith.constant 0 : i32
    return %arg0, %arg1, %c0_i32 : i32, i32, i32
  }
  func.func @transform_1(%arg0: i32, %arg1: i32) -> (i32, i32, i32) {
    %c1_i32 = arith.constant 1 : i32
    %0 = arith.muli %arg1, %c1_i32 : i32
    %c1_i32_0 = arith.constant 1 : i32
    %1 = arith.subi %0, %c1_i32_0 : i32
    %c0_i32 = arith.constant 0 : i32
    %2 = arith.maxsi %1, %c0_i32 : i32
    %c0_i32_1 = arith.constant 0 : i32
    %c0_i32_2 = arith.constant 0 : i32
    return %arg0, %2, %c0_i32_1 : i32, i32, i32
  }
  func.func @transform_2(%arg0: i32, %arg1: i32) -> (i32, i32, i32) {
    %c1_i32 = arith.constant 1 : i32
    %0 = arith.addi %arg1, %c1_i32 : i32
    %c1_i32_0 = arith.constant 1 : i32
    %1 = arith.muli %0, %c1_i32_0 : i32
    %c1_i32_1 = arith.constant 1 : i32
    %2 = arith.minsi %1, %c1_i32_1 : i32
    %c0_i32 = arith.constant 0 : i32
    %c0_i32_2 = arith.constant 0 : i32
    return %arg0, %2, %c0_i32 : i32, i32, i32
  }
  func.func @transform_3(%arg0: i32, %arg1: i32) -> (i32, i32, i32) {
    %c0_i32 = arith.constant 0 : i32
    %c0_i32_0 = arith.constant 0 : i32
    %c0_i32_1 = arith.constant 0 : i32
    %c0_i32_2 = arith.constant 0 : i32
    return %c0_i32, %c0_i32_0, %c0_i32_1 : i32, i32, i32
  }
  func.func @transform_4(%arg0: i32, %arg1: i32) -> (i32, i32) {
    %c0_i32 = arith.constant 0 : i32
    %c0_i32_0 = arith.constant 0 : i32
    %c0_i32_1 = arith.constant 0 : i32
    return %c0_i32, %c0_i32_0 : i32, i32
  }
  func.func @transform_5(%arg0: i32, %arg1: i32) -> (i32, i32, i32) {
    %c0_i32 = arith.constant 0 : i32
    %c0_i32_0 = arith.constant 0 : i32
    %c0_i32_1 = arith.constant 0 : i32
    %c0_i32_2 = arith.constant 0 : i32
    return %c0_i32, %c0_i32_0, %c0_i32_1 : i32, i32, i32
  }
  func.func @transform_6(%arg0: i32, %arg1: i32) -> (i32, i32) {
    %c0_i32 = arith.constant 0 : i32
    %c0_i32_0 = arith.constant 0 : i32
    %c0_i32_1 = arith.constant 0 : i32
    return %c0_i32, %c0_i32_0 : i32, i32
  }
  func.func @transform_7(%arg0: i32, %arg1: i32) -> (i32, i32, i32) {
    %c0_i32 = arith.constant 0 : i32
    %c0_i32_0 = arith.constant 0 : i32
    return %arg0, %arg1, %c0_i32 : i32, i32, i32
  }
}

module attributes {stable_mosaic.version = 11 : i64} {
  func.func @_convt_kernel(%arg0: i32, %arg1: i32, %arg2: memref<1x8x32xf32, #tpu.memory_space<vmem>>, %arg3: memref<1x8x32xf32, #tpu.memory_space<vmem>>, %arg4: memref<1x8x32xf32, #tpu.memory_space<vmem>>, %arg5: memref<4x32x32xf32, #tpu.memory_space<vmem>>, %arg6: memref<1x32xf32, #tpu.memory_space<vmem>>, %arg7: memref<1x8x64xf32, #tpu.memory_space<vmem>>, %arg8: memref<10x32xf32, #tpu.memory_space<vmem>>) attributes {dimension_semantics = [#tpu.dimension_semantics<parallel>, #tpu.dimension_semantics<parallel>], iteration_bounds = array<i64: 2, 2>, scalar_prefetch = 0 : i64, scratch_operands = 1 : i64, tpu.core_type = #tpu.core_type<tc>, window_params = [{transform_indices = @transform_0, window_bounds = array<i64: 1, 8, 32>}, {transform_indices = @transform_1, window_bounds = array<i64: 1, 8, 32>}, {transform_indices = @transform_2, window_bounds = array<i64: 1, 8, 32>}, {pipeline_mode = #tpu.pipeline_mode<synchronous>, transform_indices = @transform_3, window_bounds = array<i64: 4, 32, 32>}, {pipeline_mode = #tpu.pipeline_mode<synchronous>, transform_indices = @transform_4, window_bounds = array<i64: 1, 32>}, {transform_indices = @transform_5, window_bounds = array<i64: 1, 8, 64>}]} {
    %c0 = arith.constant 0 : index
    %c0_0 = arith.constant 0 : index
    %c0_1 = arith.constant 0 : index
    %0 = vector.load %arg2[%c0, %c0_0, %c0_1] : memref<1x8x32xf32, #tpu.memory_space<vmem>>, vector<1x8x32xf32>
    %1 = vector.shape_cast %0 : vector<1x8x32xf32> to vector<8x32xf32>
    %cst = arith.constant 0.000000e+00 : f32
    %2 = vector.broadcast %cst : f32 to vector<1x32xf32>
    %c1 = arith.constant 1 : index
    %c0_2 = arith.constant 0 : index
    %3 = vector.load %arg8[%c1, %c0_2] : memref<10x32xf32, #tpu.memory_space<vmem>>, vector<8x32xf32>
    tpu.vector_store %arg8[%c1, %c0_2], %1 {strides = array<i32>} : memref<10x32xf32, #tpu.memory_space<vmem>>, vector<8x32xf32>,
    %c0_3 = arith.constant 0 : index
    %c0_4 = arith.constant 0 : index
    %4 = vector.load %arg8[%c0_3, %c0_4] : memref<10x32xf32, #tpu.memory_space<vmem>>, vector<1x32xf32>
    tpu.vector_store %arg8[%c0_3, %c0_4], %2 {strides = array<i32>} : memref<10x32xf32, #tpu.memory_space<vmem>>, vector<1x32xf32>,
    %c9 = arith.constant 9 : index
    %c0_5 = arith.constant 0 : index
    %5 = vector.load %arg8[%c9, %c0_5] : memref<10x32xf32, #tpu.memory_space<vmem>>, vector<1x32xf32>
    tpu.vector_store %arg8[%c9, %c0_5], %2 {strides = array<i32>} : memref<10x32xf32, #tpu.memory_space<vmem>>, vector<1x32xf32>,
    %c0_i32 = arith.constant 0 : i32
    %6 = arith.cmpi sgt, %arg1, %c0_i32 : i32
    %7 = arith.extui %6 : i1 to i32
    %c0_i32_6 = arith.constant 0 : i32
    %8 = arith.cmpi ne, %7, %c0_i32_6 : i32
    scf.if %8 {
      %c0_31 = arith.constant 0 : index
      %c7 = arith.constant 7 : index
      %c0_32 = arith.constant 0 : index
      %42 = vector.load %arg3[%c0_31, %c7, %c0_32] : memref<1x8x32xf32, #tpu.memory_space<vmem>>, vector<1x1x32xf32>
      %43 = vector.shape_cast %42 : vector<1x1x32xf32> to vector<1x32xf32>
      %c0_33 = arith.constant 0 : index
      %c0_34 = arith.constant 0 : index
      %44 = vector.load %arg8[%c0_33, %c0_34] : memref<10x32xf32, #tpu.memory_space<vmem>>, vector<1x32xf32>
      tpu.vector_store %arg8[%c0_33, %c0_34], %43 {strides = array<i32>} : memref<10x32xf32, #tpu.memory_space<vmem>>, vector<1x32xf32>,
    } else {
    }
    %c1_i32 = arith.constant 1 : i32
    %9 = arith.cmpi slt, %arg1, %c1_i32 : i32
    %10 = arith.extui %9 : i1 to i32
    %c0_i32_7 = arith.constant 0 : i32
    %11 = arith.cmpi ne, %10, %c0_i32_7 : i32
    scf.if %11 {
      %c0_31 = arith.constant 0 : index
      %c0_32 = arith.constant 0 : index
      %c0_33 = arith.constant 0 : index
      %42 = vector.load %arg4[%c0_31, %c0_32, %c0_33] : memref<1x8x32xf32, #tpu.memory_space<vmem>>, vector<1x1x32xf32>
      %43 = vector.shape_cast %42 : vector<1x1x32xf32> to vector<1x32xf32>
      %c9_34 = arith.constant 9 : index
      %c0_35 = arith.constant 0 : index
      %44 = vector.load %arg8[%c9_34, %c0_35] : memref<10x32xf32, #tpu.memory_space<vmem>>, vector<1x32xf32>
      tpu.vector_store %arg8[%c9_34, %c0_35], %43 {strides = array<i32>} : memref<10x32xf32, #tpu.memory_space<vmem>>, vector<1x32xf32>,
    } else {
    }
    %c0_8 = arith.constant 0 : index
    %c0_9 = arith.constant 0 : index
    %12 = vector.load %arg8[%c0_8, %c0_9] : memref<10x32xf32, #tpu.memory_space<vmem>>, vector<10x32xf32>
    %c0_10 = arith.constant 0 : index
    %c0_11 = arith.constant 0 : index
    %13 = vector.load %arg6[%c0_10, %c0_11] : memref<1x32xf32, #tpu.memory_space<vmem>>, vector<1x32xf32>
    %14 = vector.extract_strided_slice %12 {offsets = [0, 0], sizes = [8, 32], strides = [1, 1]} : vector<10x32xf32> to vector<8x32xf32>
    %c3 = arith.constant 3 : index
    %c0_12 = arith.constant 0 : index
    %c0_13 = arith.constant 0 : index
    %15 = vector.load %arg5[%c3, %c0_12, %c0_13] : memref<4x32x32xf32, #tpu.memory_space<vmem>>, vector<1x32x32xf32>
    %16 = vector.shape_cast %15 : vector<1x32x32xf32> to vector<32x32xf32>
    %cst_14 = arith.constant dense<0.000000e+00> : vector<8x32xf32>
    %17 = tpu.matmul %14, %16, %cst_14 {dimension_numbers = #tpu.dot_dimension_numbers<[1], [0], [0], [1], [0, 0, 1, 1], [], []>} : vector<8x32xf32>, vector<32x32xf32>, vector<8x32xf32> -> vector<8x32xf32>
    %18 = vector.extract_strided_slice %12 {offsets = [1, 0], sizes = [8, 32], strides = [1, 1]} : vector<10x32xf32> to vector<8x32xf32>
    %c1_15 = arith.constant 1 : index
    %c0_16 = arith.constant 0 : index
    %c0_17 = arith.constant 0 : index
    %19 = vector.load %arg5[%c1_15, %c0_16, %c0_17] : memref<4x32x32xf32, #tpu.memory_space<vmem>>, vector<1x32x32xf32>
    %20 = vector.shape_cast %19 : vector<1x32x32xf32> to vector<32x32xf32>
    %cst_18 = arith.constant dense<0.000000e+00> : vector<8x32xf32>
    %21 = tpu.matmul %18, %20, %cst_18 {dimension_numbers = #tpu.dot_dimension_numbers<[1], [0], [0], [1], [0, 0, 1, 1], [], []>} : vector<8x32xf32>, vector<32x32xf32>, vector<8x32xf32> -> vector<8x32xf32>
    %22 = arith.addf %17, %21 : vector<8x32xf32>
    %23 = vector.broadcast %13 : vector<1x32xf32> to vector<8x32xf32>
    %24 = arith.addf %22, %23 : vector<8x32xf32>
    %25 = vector.extract_strided_slice %12 {offsets = [1, 0], sizes = [8, 32], strides = [1, 1]} : vector<10x32xf32> to vector<8x32xf32>
    %c2 = arith.constant 2 : index
    %c0_19 = arith.constant 0 : index
    %c0_20 = arith.constant 0 : index
    %26 = vector.load %arg5[%c2, %c0_19, %c0_20] : memref<4x32x32xf32, #tpu.memory_space<vmem>>, vector<1x32x32xf32>
    %27 = vector.shape_cast %26 : vector<1x32x32xf32> to vector<32x32xf32>
    %cst_21 = arith.constant dense<0.000000e+00> : vector<8x32xf32>
    %28 = tpu.matmul %25, %27, %cst_21 {dimension_numbers = #tpu.dot_dimension_numbers<[1], [0], [0], [1], [0, 0, 1, 1], [], []>} : vector<8x32xf32>, vector<32x32xf32>, vector<8x32xf32> -> vector<8x32xf32>
    %29 = vector.extract_strided_slice %12 {offsets = [2, 0], sizes = [8, 32], strides = [1, 1]} : vector<10x32xf32> to vector<8x32xf32>
    %c0_22 = arith.constant 0 : index
    %c0_23 = arith.constant 0 : index
    %c0_24 = arith.constant 0 : index
    %30 = vector.load %arg5[%c0_22, %c0_23, %c0_24] : memref<4x32x32xf32, #tpu.memory_space<vmem>>, vector<1x32x32xf32>
    %31 = vector.shape_cast %30 : vector<1x32x32xf32> to vector<32x32xf32>
    %cst_25 = arith.constant dense<0.000000e+00> : vector<8x32xf32>
    %32 = tpu.matmul %29, %31, %cst_25 {dimension_numbers = #tpu.dot_dimension_numbers<[1], [0], [0], [1], [0, 0, 1, 1], [], []>} : vector<8x32xf32>, vector<32x32xf32>, vector<8x32xf32> -> vector<8x32xf32>
    %33 = arith.addf %28, %32 : vector<8x32xf32>
    %34 = vector.broadcast %13 : vector<1x32xf32> to vector<8x32xf32>
    %35 = arith.addf %33, %34 : vector<8x32xf32>
    %c0_26 = arith.constant 0 : index
    %c0_27 = arith.constant 0 : index
    %c0_28 = arith.constant 0 : index
    %36 = vector.load %arg7[%c0_26, %c0_27, %c0_28] : memref<1x8x64xf32, #tpu.memory_space<vmem>>, vector<1x8x32xf32>
    %37 = vector.shape_cast %36 : vector<1x8x32xf32> to vector<8x32xf32>
    %38 = vector.shape_cast %24 : vector<8x32xf32> to vector<1x8x32xf32>
    tpu.vector_store %arg7[%c0_26, %c0_27, %c0_28], %38 {strides = array<i32>} : memref<1x8x64xf32, #tpu.memory_space<vmem>>, vector<1x8x32xf32>,
    %c0_29 = arith.constant 0 : index
    %c0_30 = arith.constant 0 : index
    %c32 = arith.constant 32 : index
    %39 = vector.load %arg7[%c0_29, %c0_30, %c32] : memref<1x8x64xf32, #tpu.memory_space<vmem>>, vector<1x8x32xf32>
    %40 = vector.shape_cast %39 : vector<1x8x32xf32> to vector<8x32xf32>
    %41 = vector.shape_cast %35 : vector<8x32xf32> to vector<1x8x32xf32>
    tpu.vector_store %arg7[%c0_29, %c0_30, %c32], %41 {strides = array<i32>} : memref<1x8x64xf32, #tpu.memory_space<vmem>>, vector<1x8x32xf32>,
    return
  }
  func.func @transform_0(%arg0: i32, %arg1: i32) -> (i32, i32, i32) {
    %c0_i32 = arith.constant 0 : i32
    %c0_i32_0 = arith.constant 0 : i32
    return %arg0, %arg1, %c0_i32 : i32, i32, i32
  }
  func.func @transform_1(%arg0: i32, %arg1: i32) -> (i32, i32, i32) {
    %c1_i32 = arith.constant 1 : i32
    %0 = arith.muli %arg1, %c1_i32 : i32
    %c1_i32_0 = arith.constant 1 : i32
    %1 = arith.subi %0, %c1_i32_0 : i32
    %c0_i32 = arith.constant 0 : i32
    %2 = arith.maxsi %1, %c0_i32 : i32
    %c0_i32_1 = arith.constant 0 : i32
    %c0_i32_2 = arith.constant 0 : i32
    return %arg0, %2, %c0_i32_1 : i32, i32, i32
  }
  func.func @transform_2(%arg0: i32, %arg1: i32) -> (i32, i32, i32) {
    %c1_i32 = arith.constant 1 : i32
    %0 = arith.addi %arg1, %c1_i32 : i32
    %c1_i32_0 = arith.constant 1 : i32
    %1 = arith.muli %0, %c1_i32_0 : i32
    %c1_i32_1 = arith.constant 1 : i32
    %2 = arith.minsi %1, %c1_i32_1 : i32
    %c0_i32 = arith.constant 0 : i32
    %c0_i32_2 = arith.constant 0 : i32
    return %arg0, %2, %c0_i32 : i32, i32, i32
  }
  func.func @transform_3(%arg0: i32, %arg1: i32) -> (i32, i32, i32) {
    %c0_i32 = arith.constant 0 : i32
    %c0_i32_0 = arith.constant 0 : i32
    %c0_i32_1 = arith.constant 0 : i32
    %c0_i32_2 = arith.constant 0 : i32
    return %c0_i32, %c0_i32_0, %c0_i32_1 : i32, i32, i32
  }
  func.func @transform_4(%arg0: i32, %arg1: i32) -> (i32, i32) {
    %c0_i32 = arith.constant 0 : i32
    %c0_i32_0 = arith.constant 0 : i32
    %c0_i32_1 = arith.constant 0 : i32
    return %c0_i32, %c0_i32_0 : i32, i32
  }
  func.func @transform_5(%arg0: i32, %arg1: i32) -> (i32, i32, i32) {
    %c0_i32 = arith.constant 0 : i32
    %c0_i32_0 = arith.constant 0 : i32
    return %arg0, %arg1, %c0_i32 : i32, i32, i32
  }
}

module attributes {stable_mosaic.version = 11 : i64} {
  func.func @_resblock_kernel(%arg0: i32, %arg1: i32, %arg2: memref<1x8x32xf32, #tpu.memory_space<vmem>>, %arg3: memref<1x8x32xf32, #tpu.memory_space<vmem>>, %arg4: memref<1x8x32xf32, #tpu.memory_space<vmem>>, %arg5: memref<3x32x32xf32, #tpu.memory_space<vmem>>, %arg6: memref<1x32xf32, #tpu.memory_space<vmem>>, %arg7: memref<1x32x32xf32, #tpu.memory_space<vmem>>, %arg8: memref<1x32xf32, #tpu.memory_space<vmem>>, %arg9: memref<1x8x32xf32, #tpu.memory_space<vmem>>, %arg10: memref<10x32xf32, #tpu.memory_space<vmem>>) attributes {dimension_semantics = [#tpu.dimension_semantics<parallel>, #tpu.dimension_semantics<parallel>], iteration_bounds = array<i64: 2, 2>, scalar_prefetch = 0 : i64, scratch_operands = 1 : i64, tpu.core_type = #tpu.core_type<tc>, window_params = [{transform_indices = @transform_0, window_bounds = array<i64: 1, 8, 32>}, {transform_indices = @transform_1, window_bounds = array<i64: 1, 8, 32>}, {transform_indices = @transform_2, window_bounds = array<i64: 1, 8, 32>}, {pipeline_mode = #tpu.pipeline_mode<synchronous>, transform_indices = @transform_3, window_bounds = array<i64: 3, 32, 32>}, {pipeline_mode = #tpu.pipeline_mode<synchronous>, transform_indices = @transform_4, window_bounds = array<i64: 1, 32>}, {pipeline_mode = #tpu.pipeline_mode<synchronous>, transform_indices = @transform_5, window_bounds = array<i64: 1, 32, 32>}, {pipeline_mode = #tpu.pipeline_mode<synchronous>, transform_indices = @transform_6, window_bounds = array<i64: 1, 32>}, {transform_indices = @transform_7, window_bounds = array<i64: 1, 8, 32>}]} {
    %c0 = arith.constant 0 : index
    %c0_0 = arith.constant 0 : index
    %c0_1 = arith.constant 0 : index
    %0 = vector.load %arg2[%c0, %c0_0, %c0_1] : memref<1x8x32xf32, #tpu.memory_space<vmem>>, vector<1x8x32xf32>
    %1 = vector.shape_cast %0 : vector<1x8x32xf32> to vector<8x32xf32>
    %cst = arith.constant 0.000000e+00 : f32
    %2 = vector.broadcast %cst : f32 to vector<8x32xf32>
    %3 = arith.maximumf %1, %2 : vector<8x32xf32>
    %cst_2 = arith.constant 0.000000e+00 : f32
    %4 = vector.broadcast %cst_2 : f32 to vector<1x32xf32>
    %c1 = arith.constant 1 : index
    %c0_3 = arith.constant 0 : index
    %5 = vector.load %arg10[%c1, %c0_3] : memref<10x32xf32, #tpu.memory_space<vmem>>, vector<8x32xf32>
    tpu.vector_store %arg10[%c1, %c0_3], %3 {strides = array<i32>} : memref<10x32xf32, #tpu.memory_space<vmem>>, vector<8x32xf32>,
    %c0_4 = arith.constant 0 : index
    %c0_5 = arith.constant 0 : index
    %6 = vector.load %arg10[%c0_4, %c0_5] : memref<10x32xf32, #tpu.memory_space<vmem>>, vector<1x32xf32>
    tpu.vector_store %arg10[%c0_4, %c0_5], %4 {strides = array<i32>} : memref<10x32xf32, #tpu.memory_space<vmem>>, vector<1x32xf32>,
    %c9 = arith.constant 9 : index
    %c0_6 = arith.constant 0 : index
    %7 = vector.load %arg10[%c9, %c0_6] : memref<10x32xf32, #tpu.memory_space<vmem>>, vector<1x32xf32>
    tpu.vector_store %arg10[%c9, %c0_6], %4 {strides = array<i32>} : memref<10x32xf32, #tpu.memory_space<vmem>>, vector<1x32xf32>,
    %c0_i32 = arith.constant 0 : i32
    %8 = arith.cmpi sgt, %arg1, %c0_i32 : i32
    %9 = arith.extui %8 : i1 to i32
    %c0_i32_7 = arith.constant 0 : i32
    %10 = arith.cmpi ne, %9, %c0_i32_7 : i32
    scf.if %10 {
      %c0_34 = arith.constant 0 : index
      %c7 = arith.constant 7 : index
      %c0_35 = arith.constant 0 : index
      %44 = vector.load %arg3[%c0_34, %c7, %c0_35] : memref<1x8x32xf32, #tpu.memory_space<vmem>>, vector<1x1x32xf32>
      %45 = vector.shape_cast %44 : vector<1x1x32xf32> to vector<1x32xf32>
      %cst_36 = arith.constant 0.000000e+00 : f32
      %46 = vector.broadcast %cst_36 : f32 to vector<1x32xf32>
      %47 = arith.maximumf %45, %46 : vector<1x32xf32>
      %c0_37 = arith.constant 0 : index
      %c0_38 = arith.constant 0 : index
      %48 = vector.load %arg10[%c0_37, %c0_38] : memref<10x32xf32, #tpu.memory_space<vmem>>, vector<1x32xf32>
      tpu.vector_store %arg10[%c0_37, %c0_38], %47 {strides = array<i32>} : memref<10x32xf32, #tpu.memory_space<vmem>>, vector<1x32xf32>,
    } else {
    }
    %c1_i32 = arith.constant 1 : i32
    %11 = arith.cmpi slt, %arg1, %c1_i32 : i32
    %12 = arith.extui %11 : i1 to i32
    %c0_i32_8 = arith.constant 0 : i32
    %13 = arith.cmpi ne, %12, %c0_i32_8 : i32
    scf.if %13 {
      %c0_34 = arith.constant 0 : index
      %c0_35 = arith.constant 0 : index
      %c0_36 = arith.constant 0 : index
      %44 = vector.load %arg4[%c0_34, %c0_35, %c0_36] : memref<1x8x32xf32, #tpu.memory_space<vmem>>, vector<1x1x32xf32>
      %45 = vector.shape_cast %44 : vector<1x1x32xf32> to vector<1x32xf32>
      %cst_37 = arith.constant 0.000000e+00 : f32
      %46 = vector.broadcast %cst_37 : f32 to vector<1x32xf32>
      %47 = arith.maximumf %45, %46 : vector<1x32xf32>
      %c9_38 = arith.constant 9 : index
      %c0_39 = arith.constant 0 : index
      %48 = vector.load %arg10[%c9_38, %c0_39] : memref<10x32xf32, #tpu.memory_space<vmem>>, vector<1x32xf32>
      tpu.vector_store %arg10[%c9_38, %c0_39], %47 {strides = array<i32>} : memref<10x32xf32, #tpu.memory_space<vmem>>, vector<1x32xf32>,
    } else {
    }
    %c0_9 = arith.constant 0 : index
    %c0_10 = arith.constant 0 : index
    %14 = vector.load %arg10[%c0_9, %c0_10] : memref<10x32xf32, #tpu.memory_space<vmem>>, vector<10x32xf32>
    %15 = vector.extract_strided_slice %14 {offsets = [0, 0], sizes = [8, 32], strides = [1, 1]} : vector<10x32xf32> to vector<8x32xf32>
    %c0_11 = arith.constant 0 : index
    %c0_12 = arith.constant 0 : index
    %c0_13 = arith.constant 0 : index
    %16 = vector.load %arg5[%c0_11, %c0_12, %c0_13] : memref<3x32x32xf32, #tpu.memory_space<vmem>>, vector<1x32x32xf32>
    %17 = vector.shape_cast %16 : vector<1x32x32xf32> to vector<32x32xf32>
    %cst_14 = arith.constant dense<0.000000e+00> : vector<8x32xf32>
    %18 = tpu.matmul %15, %17, %cst_14 {dimension_numbers = #tpu.dot_dimension_numbers<[1], [0], [0], [1], [0, 0, 1, 1], [], []>} : vector<8x32xf32>, vector<32x32xf32>, vector<8x32xf32> -> vector<8x32xf32>
    %19 = vector.extract_strided_slice %14 {offsets = [1, 0], sizes = [8, 32], strides = [1, 1]} : vector<10x32xf32> to vector<8x32xf32>
    %c1_15 = arith.constant 1 : index
    %c0_16 = arith.constant 0 : index
    %c0_17 = arith.constant 0 : index
    %20 = vector.load %arg5[%c1_15, %c0_16, %c0_17] : memref<3x32x32xf32, #tpu.memory_space<vmem>>, vector<1x32x32xf32>
    %21 = vector.shape_cast %20 : vector<1x32x32xf32> to vector<32x32xf32>
    %cst_18 = arith.constant dense<0.000000e+00> : vector<8x32xf32>
    %22 = tpu.matmul %19, %21, %cst_18 {dimension_numbers = #tpu.dot_dimension_numbers<[1], [0], [0], [1], [0, 0, 1, 1], [], []>} : vector<8x32xf32>, vector<32x32xf32>, vector<8x32xf32> -> vector<8x32xf32>
    %23 = arith.addf %18, %22 : vector<8x32xf32>
    %24 = vector.extract_strided_slice %14 {offsets = [2, 0], sizes = [8, 32], strides = [1, 1]} : vector<10x32xf32> to vector<8x32xf32>
    %c2 = arith.constant 2 : index
    %c0_19 = arith.constant 0 : index
    %c0_20 = arith.constant 0 : index
    %25 = vector.load %arg5[%c2, %c0_19, %c0_20] : memref<3x32x32xf32, #tpu.memory_space<vmem>>, vector<1x32x32xf32>
    %26 = vector.shape_cast %25 : vector<1x32x32xf32> to vector<32x32xf32>
    %cst_21 = arith.constant dense<0.000000e+00> : vector<8x32xf32>
    %27 = tpu.matmul %24, %26, %cst_21 {dimension_numbers = #tpu.dot_dimension_numbers<[1], [0], [0], [1], [0, 0, 1, 1], [], []>} : vector<8x32xf32>, vector<32x32xf32>, vector<8x32xf32> -> vector<8x32xf32>
    %28 = arith.addf %23, %27 : vector<8x32xf32>
    %c0_22 = arith.constant 0 : index
    %c0_23 = arith.constant 0 : index
    %29 = vector.load %arg6[%c0_22, %c0_23] : memref<1x32xf32, #tpu.memory_space<vmem>>, vector<1x32xf32>
    %30 = vector.broadcast %29 : vector<1x32xf32> to vector<8x32xf32>
    %31 = arith.addf %28, %30 : vector<8x32xf32>
    %cst_24 = arith.constant 0.000000e+00 : f32
    %32 = vector.broadcast %cst_24 : f32 to vector<8x32xf32>
    %33 = arith.maximumf %31, %32 : vector<8x32xf32>
    %c0_25 = arith.constant 0 : index
    %c0_26 = arith.constant 0 : index
    %c0_27 = arith.constant 0 : index
    %34 = vector.load %arg7[%c0_25, %c0_26, %c0_27] : memref<1x32x32xf32, #tpu.memory_space<vmem>>, vector<1x32x32xf32>
    %35 = vector.shape_cast %34 : vector<1x32x32xf32> to vector<32x32xf32>
    %cst_28 = arith.constant dense<0.000000e+00> : vector<8x32xf32>
    %36 = tpu.matmul %33, %35, %cst_28 {dimension_numbers = #tpu.dot_dimension_numbers<[1], [0], [0], [1], [0, 0, 1, 1], [], []>} : vector<8x32xf32>, vector<32x32xf32>, vector<8x32xf32> -> vector<8x32xf32>
    %c0_29 = arith.constant 0 : index
    %c0_30 = arith.constant 0 : index
    %37 = vector.load %arg8[%c0_29, %c0_30] : memref<1x32xf32, #tpu.memory_space<vmem>>, vector<1x32xf32>
    %38 = vector.broadcast %37 : vector<1x32xf32> to vector<8x32xf32>
    %39 = arith.addf %36, %38 : vector<8x32xf32>
    %40 = arith.addf %39, %1 : vector<8x32xf32>
    %c0_31 = arith.constant 0 : index
    %c0_32 = arith.constant 0 : index
    %c0_33 = arith.constant 0 : index
    %41 = vector.load %arg9[%c0_31, %c0_32, %c0_33] : memref<1x8x32xf32, #tpu.memory_space<vmem>>, vector<1x8x32xf32>
    %42 = vector.shape_cast %41 : vector<1x8x32xf32> to vector<8x32xf32>
    %43 = vector.shape_cast %40 : vector<8x32xf32> to vector<1x8x32xf32>
    tpu.vector_store %arg9[%c0_31, %c0_32, %c0_33], %43 {strides = array<i32>} : memref<1x8x32xf32, #tpu.memory_space<vmem>>, vector<1x8x32xf32>,
    return
  }
  func.func @transform_0(%arg0: i32, %arg1: i32) -> (i32, i32, i32) {
    %c0_i32 = arith.constant 0 : i32
    %c0_i32_0 = arith.constant 0 : i32
    return %arg0, %arg1, %c0_i32 : i32, i32, i32
  }
  func.func @transform_1(%arg0: i32, %arg1: i32) -> (i32, i32, i32) {
    %c1_i32 = arith.constant 1 : i32
    %0 = arith.muli %arg1, %c1_i32 : i32
    %c1_i32_0 = arith.constant 1 : i32
    %1 = arith.subi %0, %c1_i32_0 : i32
    %c0_i32 = arith.constant 0 : i32
    %2 = arith.maxsi %1, %c0_i32 : i32
    %c0_i32_1 = arith.constant 0 : i32
    %c0_i32_2 = arith.constant 0 : i32
    return %arg0, %2, %c0_i32_1 : i32, i32, i32
  }
  func.func @transform_2(%arg0: i32, %arg1: i32) -> (i32, i32, i32) {
    %c1_i32 = arith.constant 1 : i32
    %0 = arith.addi %arg1, %c1_i32 : i32
    %c1_i32_0 = arith.constant 1 : i32
    %1 = arith.muli %0, %c1_i32_0 : i32
    %c1_i32_1 = arith.constant 1 : i32
    %2 = arith.minsi %1, %c1_i32_1 : i32
    %c0_i32 = arith.constant 0 : i32
    %c0_i32_2 = arith.constant 0 : i32
    return %arg0, %2, %c0_i32 : i32, i32, i32
  }
  func.func @transform_3(%arg0: i32, %arg1: i32) -> (i32, i32, i32) {
    %c0_i32 = arith.constant 0 : i32
    %c0_i32_0 = arith.constant 0 : i32
    %c0_i32_1 = arith.constant 0 : i32
    %c0_i32_2 = arith.constant 0 : i32
    return %c0_i32, %c0_i32_0, %c0_i32_1 : i32, i32, i32
  }
  func.func @transform_4(%arg0: i32, %arg1: i32) -> (i32, i32) {
    %c0_i32 = arith.constant 0 : i32
    %c0_i32_0 = arith.constant 0 : i32
    %c0_i32_1 = arith.constant 0 : i32
    return %c0_i32, %c0_i32_0 : i32, i32
  }
  func.func @transform_5(%arg0: i32, %arg1: i32) -> (i32, i32, i32) {
    %c0_i32 = arith.constant 0 : i32
    %c0_i32_0 = arith.constant 0 : i32
    %c0_i32_1 = arith.constant 0 : i32
    %c0_i32_2 = arith.constant 0 : i32
    return %c0_i32, %c0_i32_0, %c0_i32_1 : i32, i32, i32
  }
  func.func @transform_6(%arg0: i32, %arg1: i32) -> (i32, i32) {
    %c0_i32 = arith.constant 0 : i32
    %c0_i32_0 = arith.constant 0 : i32
    %c0_i32_1 = arith.constant 0 : i32
    return %c0_i32, %c0_i32_0 : i32, i32
  }
  func.func @transform_7(%arg0: i32, %arg1: i32) -> (i32, i32, i32) {
    %c0_i32 = arith.constant 0 : i32
    %c0_i32_0 = arith.constant 0 : i32
    return %arg0, %arg1, %c0_i32 : i32, i32, i32
  }
}

module attributes {stable_mosaic.version = 11 : i64} {
  func.func @_resblock_kernel(%arg0: i32, %arg1: i32, %arg2: memref<1x8x32xf32, #tpu.memory_space<vmem>>, %arg3: memref<1x8x32xf32, #tpu.memory_space<vmem>>, %arg4: memref<1x8x32xf32, #tpu.memory_space<vmem>>, %arg5: memref<3x32x32xf32, #tpu.memory_space<vmem>>, %arg6: memref<1x32xf32, #tpu.memory_space<vmem>>, %arg7: memref<1x32x32xf32, #tpu.memory_space<vmem>>, %arg8: memref<1x32xf32, #tpu.memory_space<vmem>>, %arg9: memref<1x8x32xf32, #tpu.memory_space<vmem>>, %arg10: memref<10x32xf32, #tpu.memory_space<vmem>>) attributes {dimension_semantics = [#tpu.dimension_semantics<parallel>, #tpu.dimension_semantics<parallel>], iteration_bounds = array<i64: 2, 4>, scalar_prefetch = 0 : i64, scratch_operands = 1 : i64, tpu.core_type = #tpu.core_type<tc>, window_params = [{transform_indices = @transform_0, window_bounds = array<i64: 1, 8, 32>}, {transform_indices = @transform_1, window_bounds = array<i64: 1, 8, 32>}, {transform_indices = @transform_2, window_bounds = array<i64: 1, 8, 32>}, {pipeline_mode = #tpu.pipeline_mode<synchronous>, transform_indices = @transform_3, window_bounds = array<i64: 3, 32, 32>}, {pipeline_mode = #tpu.pipeline_mode<synchronous>, transform_indices = @transform_4, window_bounds = array<i64: 1, 32>}, {pipeline_mode = #tpu.pipeline_mode<synchronous>, transform_indices = @transform_5, window_bounds = array<i64: 1, 32, 32>}, {pipeline_mode = #tpu.pipeline_mode<synchronous>, transform_indices = @transform_6, window_bounds = array<i64: 1, 32>}, {transform_indices = @transform_7, window_bounds = array<i64: 1, 8, 32>}]} {
    %c0 = arith.constant 0 : index
    %c0_0 = arith.constant 0 : index
    %c0_1 = arith.constant 0 : index
    %0 = vector.load %arg2[%c0, %c0_0, %c0_1] : memref<1x8x32xf32, #tpu.memory_space<vmem>>, vector<1x8x32xf32>
    %1 = vector.shape_cast %0 : vector<1x8x32xf32> to vector<8x32xf32>
    %cst = arith.constant 0.000000e+00 : f32
    %2 = vector.broadcast %cst : f32 to vector<8x32xf32>
    %3 = arith.maximumf %1, %2 : vector<8x32xf32>
    %cst_2 = arith.constant 0.000000e+00 : f32
    %4 = vector.broadcast %cst_2 : f32 to vector<1x32xf32>
    %c1 = arith.constant 1 : index
    %c0_3 = arith.constant 0 : index
    %5 = vector.load %arg10[%c1, %c0_3] : memref<10x32xf32, #tpu.memory_space<vmem>>, vector<8x32xf32>
    tpu.vector_store %arg10[%c1, %c0_3], %3 {strides = array<i32>} : memref<10x32xf32, #tpu.memory_space<vmem>>, vector<8x32xf32>,
    %c0_4 = arith.constant 0 : index
    %c0_5 = arith.constant 0 : index
    %6 = vector.load %arg10[%c0_4, %c0_5] : memref<10x32xf32, #tpu.memory_space<vmem>>, vector<1x32xf32>
    tpu.vector_store %arg10[%c0_4, %c0_5], %4 {strides = array<i32>} : memref<10x32xf32, #tpu.memory_space<vmem>>, vector<1x32xf32>,
    %c9 = arith.constant 9 : index
    %c0_6 = arith.constant 0 : index
    %7 = vector.load %arg10[%c9, %c0_6] : memref<10x32xf32, #tpu.memory_space<vmem>>, vector<1x32xf32>
    tpu.vector_store %arg10[%c9, %c0_6], %4 {strides = array<i32>} : memref<10x32xf32, #tpu.memory_space<vmem>>, vector<1x32xf32>,
    %c0_i32 = arith.constant 0 : i32
    %8 = arith.cmpi sgt, %arg1, %c0_i32 : i32
    %9 = arith.extui %8 : i1 to i32
    %c0_i32_7 = arith.constant 0 : i32
    %10 = arith.cmpi ne, %9, %c0_i32_7 : i32
    scf.if %10 {
      %c0_34 = arith.constant 0 : index
      %c7 = arith.constant 7 : index
      %c0_35 = arith.constant 0 : index
      %44 = vector.load %arg3[%c0_34, %c7, %c0_35] : memref<1x8x32xf32, #tpu.memory_space<vmem>>, vector<1x1x32xf32>
      %45 = vector.shape_cast %44 : vector<1x1x32xf32> to vector<1x32xf32>
      %cst_36 = arith.constant 0.000000e+00 : f32
      %46 = vector.broadcast %cst_36 : f32 to vector<1x32xf32>
      %47 = arith.maximumf %45, %46 : vector<1x32xf32>
      %c0_37 = arith.constant 0 : index
      %c0_38 = arith.constant 0 : index
      %48 = vector.load %arg10[%c0_37, %c0_38] : memref<10x32xf32, #tpu.memory_space<vmem>>, vector<1x32xf32>
      tpu.vector_store %arg10[%c0_37, %c0_38], %47 {strides = array<i32>} : memref<10x32xf32, #tpu.memory_space<vmem>>, vector<1x32xf32>,
    } else {
    }
    %c3_i32 = arith.constant 3 : i32
    %11 = arith.cmpi slt, %arg1, %c3_i32 : i32
    %12 = arith.extui %11 : i1 to i32
    %c0_i32_8 = arith.constant 0 : i32
    %13 = arith.cmpi ne, %12, %c0_i32_8 : i32
    scf.if %13 {
      %c0_34 = arith.constant 0 : index
      %c0_35 = arith.constant 0 : index
      %c0_36 = arith.constant 0 : index
      %44 = vector.load %arg4[%c0_34, %c0_35, %c0_36] : memref<1x8x32xf32, #tpu.memory_space<vmem>>, vector<1x1x32xf32>
      %45 = vector.shape_cast %44 : vector<1x1x32xf32> to vector<1x32xf32>
      %cst_37 = arith.constant 0.000000e+00 : f32
      %46 = vector.broadcast %cst_37 : f32 to vector<1x32xf32>
      %47 = arith.maximumf %45, %46 : vector<1x32xf32>
      %c9_38 = arith.constant 9 : index
      %c0_39 = arith.constant 0 : index
      %48 = vector.load %arg10[%c9_38, %c0_39] : memref<10x32xf32, #tpu.memory_space<vmem>>, vector<1x32xf32>
      tpu.vector_store %arg10[%c9_38, %c0_39], %47 {strides = array<i32>} : memref<10x32xf32, #tpu.memory_space<vmem>>, vector<1x32xf32>,
    } else {
    }
    %c0_9 = arith.constant 0 : index
    %c0_10 = arith.constant 0 : index
    %14 = vector.load %arg10[%c0_9, %c0_10] : memref<10x32xf32, #tpu.memory_space<vmem>>, vector<10x32xf32>
    %15 = vector.extract_strided_slice %14 {offsets = [0, 0], sizes = [8, 32], strides = [1, 1]} : vector<10x32xf32> to vector<8x32xf32>
    %c0_11 = arith.constant 0 : index
    %c0_12 = arith.constant 0 : index
    %c0_13 = arith.constant 0 : index
    %16 = vector.load %arg5[%c0_11, %c0_12, %c0_13] : memref<3x32x32xf32, #tpu.memory_space<vmem>>, vector<1x32x32xf32>
    %17 = vector.shape_cast %16 : vector<1x32x32xf32> to vector<32x32xf32>
    %cst_14 = arith.constant dense<0.000000e+00> : vector<8x32xf32>
    %18 = tpu.matmul %15, %17, %cst_14 {dimension_numbers = #tpu.dot_dimension_numbers<[1], [0], [0], [1], [0, 0, 1, 1], [], []>} : vector<8x32xf32>, vector<32x32xf32>, vector<8x32xf32> -> vector<8x32xf32>
    %19 = vector.extract_strided_slice %14 {offsets = [1, 0], sizes = [8, 32], strides = [1, 1]} : vector<10x32xf32> to vector<8x32xf32>
    %c1_15 = arith.constant 1 : index
    %c0_16 = arith.constant 0 : index
    %c0_17 = arith.constant 0 : index
    %20 = vector.load %arg5[%c1_15, %c0_16, %c0_17] : memref<3x32x32xf32, #tpu.memory_space<vmem>>, vector<1x32x32xf32>
    %21 = vector.shape_cast %20 : vector<1x32x32xf32> to vector<32x32xf32>
    %cst_18 = arith.constant dense<0.000000e+00> : vector<8x32xf32>
    %22 = tpu.matmul %19, %21, %cst_18 {dimension_numbers = #tpu.dot_dimension_numbers<[1], [0], [0], [1], [0, 0, 1, 1], [], []>} : vector<8x32xf32>, vector<32x32xf32>, vector<8x32xf32> -> vector<8x32xf32>
    %23 = arith.addf %18, %22 : vector<8x32xf32>
    %24 = vector.extract_strided_slice %14 {offsets = [2, 0], sizes = [8, 32], strides = [1, 1]} : vector<10x32xf32> to vector<8x32xf32>
    %c2 = arith.constant 2 : index
    %c0_19 = arith.constant 0 : index
    %c0_20 = arith.constant 0 : index
    %25 = vector.load %arg5[%c2, %c0_19, %c0_20] : memref<3x32x32xf32, #tpu.memory_space<vmem>>, vector<1x32x32xf32>
    %26 = vector.shape_cast %25 : vector<1x32x32xf32> to vector<32x32xf32>
    %cst_21 = arith.constant dense<0.000000e+00> : vector<8x32xf32>
    %27 = tpu.matmul %24, %26, %cst_21 {dimension_numbers = #tpu.dot_dimension_numbers<[1], [0], [0], [1], [0, 0, 1, 1], [], []>} : vector<8x32xf32>, vector<32x32xf32>, vector<8x32xf32> -> vector<8x32xf32>
    %28 = arith.addf %23, %27 : vector<8x32xf32>
    %c0_22 = arith.constant 0 : index
    %c0_23 = arith.constant 0 : index
    %29 = vector.load %arg6[%c0_22, %c0_23] : memref<1x32xf32, #tpu.memory_space<vmem>>, vector<1x32xf32>
    %30 = vector.broadcast %29 : vector<1x32xf32> to vector<8x32xf32>
    %31 = arith.addf %28, %30 : vector<8x32xf32>
    %cst_24 = arith.constant 0.000000e+00 : f32
    %32 = vector.broadcast %cst_24 : f32 to vector<8x32xf32>
    %33 = arith.maximumf %31, %32 : vector<8x32xf32>
    %c0_25 = arith.constant 0 : index
    %c0_26 = arith.constant 0 : index
    %c0_27 = arith.constant 0 : index
    %34 = vector.load %arg7[%c0_25, %c0_26, %c0_27] : memref<1x32x32xf32, #tpu.memory_space<vmem>>, vector<1x32x32xf32>
    %35 = vector.shape_cast %34 : vector<1x32x32xf32> to vector<32x32xf32>
    %cst_28 = arith.constant dense<0.000000e+00> : vector<8x32xf32>
    %36 = tpu.matmul %33, %35, %cst_28 {dimension_numbers = #tpu.dot_dimension_numbers<[1], [0], [0], [1], [0, 0, 1, 1], [], []>} : vector<8x32xf32>, vector<32x32xf32>, vector<8x32xf32> -> vector<8x32xf32>
    %c0_29 = arith.constant 0 : index
    %c0_30 = arith.constant 0 : index
    %37 = vector.load %arg8[%c0_29, %c0_30] : memref<1x32xf32, #tpu.memory_space<vmem>>, vector<1x32xf32>
    %38 = vector.broadcast %37 : vector<1x32xf32> to vector<8x32xf32>
    %39 = arith.addf %36, %38 : vector<8x32xf32>
    %40 = arith.addf %39, %1 : vector<8x32xf32>
    %c0_31 = arith.constant 0 : index
    %c0_32 = arith.constant 0 : index
    %c0_33 = arith.constant 0 : index
    %41 = vector.load %arg9[%c0_31, %c0_32, %c0_33] : memref<1x8x32xf32, #tpu.memory_space<vmem>>, vector<1x8x32xf32>
    %42 = vector.shape_cast %41 : vector<1x8x32xf32> to vector<8x32xf32>
    %43 = vector.shape_cast %40 : vector<8x32xf32> to vector<1x8x32xf32>
    tpu.vector_store %arg9[%c0_31, %c0_32, %c0_33], %43 {strides = array<i32>} : memref<1x8x32xf32, #tpu.memory_space<vmem>>, vector<1x8x32xf32>,
    return
  }
  func.func @transform_0(%arg0: i32, %arg1: i32) -> (i32, i32, i32) {
    %c0_i32 = arith.constant 0 : i32
    %c0_i32_0 = arith.constant 0 : i32
    return %arg0, %arg1, %c0_i32 : i32, i32, i32
  }
  func.func @transform_1(%arg0: i32, %arg1: i32) -> (i32, i32, i32) {
    %c1_i32 = arith.constant 1 : i32
    %0 = arith.muli %arg1, %c1_i32 : i32
    %c1_i32_0 = arith.constant 1 : i32
    %1 = arith.subi %0, %c1_i32_0 : i32
    %c0_i32 = arith.constant 0 : i32
    %2 = arith.maxsi %1, %c0_i32 : i32
    %c0_i32_1 = arith.constant 0 : i32
    %c0_i32_2 = arith.constant 0 : i32
    return %arg0, %2, %c0_i32_1 : i32, i32, i32
  }
  func.func @transform_2(%arg0: i32, %arg1: i32) -> (i32, i32, i32) {
    %c1_i32 = arith.constant 1 : i32
    %0 = arith.addi %arg1, %c1_i32 : i32
    %c1_i32_0 = arith.constant 1 : i32
    %1 = arith.muli %0, %c1_i32_0 : i32
    %c3_i32 = arith.constant 3 : i32
    %2 = arith.minsi %1, %c3_i32 : i32
    %c0_i32 = arith.constant 0 : i32
    %c0_i32_1 = arith.constant 0 : i32
    return %arg0, %2, %c0_i32 : i32, i32, i32
  }
  func.func @transform_3(%arg0: i32, %arg1: i32) -> (i32, i32, i32) {
    %c0_i32 = arith.constant 0 : i32
    %c0_i32_0 = arith.constant 0 : i32
    %c0_i32_1 = arith.constant 0 : i32
    %c0_i32_2 = arith.constant 0 : i32
    return %c0_i32, %c0_i32_0, %c0_i32_1 : i32, i32, i32
  }
  func.func @transform_4(%arg0: i32, %arg1: i32) -> (i32, i32) {
    %c0_i32 = arith.constant 0 : i32
    %c0_i32_0 = arith.constant 0 : i32
    %c0_i32_1 = arith.constant 0 : i32
    return %c0_i32, %c0_i32_0 : i32, i32
  }
  func.func @transform_5(%arg0: i32, %arg1: i32) -> (i32, i32, i32) {
    %c0_i32 = arith.constant 0 : i32
    %c0_i32_0 = arith.constant 0 : i32
    %c0_i32_1 = arith.constant 0 : i32
    %c0_i32_2 = arith.constant 0 : i32
    return %c0_i32, %c0_i32_0, %c0_i32_1 : i32, i32, i32
  }
  func.func @transform_6(%arg0: i32, %arg1: i32) -> (i32, i32) {
    %c0_i32 = arith.constant 0 : i32
    %c0_i32_0 = arith.constant 0 : i32
    %c0_i32_1 = arith.constant 0 : i32
    return %c0_i32, %c0_i32_0 : i32, i32
  }
  func.func @transform_7(%arg0: i32, %arg1: i32) -> (i32, i32, i32) {
    %c0_i32 = arith.constant 0 : i32
    %c0_i32_0 = arith.constant 0 : i32
    return %arg0, %arg1, %c0_i32 : i32, i32, i32
  }
}

module attributes {stable_mosaic.version = 11 : i64} {
  func.func @_resblock_kernel(%arg0: i32, %arg1: i32, %arg2: memref<1x8x32xf32, #tpu.memory_space<vmem>>, %arg3: memref<1x8x32xf32, #tpu.memory_space<vmem>>, %arg4: memref<1x8x32xf32, #tpu.memory_space<vmem>>, %arg5: memref<3x32x32xf32, #tpu.memory_space<vmem>>, %arg6: memref<1x32xf32, #tpu.memory_space<vmem>>, %arg7: memref<1x32x32xf32, #tpu.memory_space<vmem>>, %arg8: memref<1x32xf32, #tpu.memory_space<vmem>>, %arg9: memref<1x8x32xf32, #tpu.memory_space<vmem>>, %arg10: memref<10x32xf32, #tpu.memory_space<vmem>>) attributes {dimension_semantics = [#tpu.dimension_semantics<parallel>, #tpu.dimension_semantics<parallel>], iteration_bounds = array<i64: 2, 4>, scalar_prefetch = 0 : i64, scratch_operands = 1 : i64, tpu.core_type = #tpu.core_type<tc>, window_params = [{transform_indices = @transform_0, window_bounds = array<i64: 1, 8, 32>}, {transform_indices = @transform_1, window_bounds = array<i64: 1, 8, 32>}, {transform_indices = @transform_2, window_bounds = array<i64: 1, 8, 32>}, {pipeline_mode = #tpu.pipeline_mode<synchronous>, transform_indices = @transform_3, window_bounds = array<i64: 3, 32, 32>}, {pipeline_mode = #tpu.pipeline_mode<synchronous>, transform_indices = @transform_4, window_bounds = array<i64: 1, 32>}, {pipeline_mode = #tpu.pipeline_mode<synchronous>, transform_indices = @transform_5, window_bounds = array<i64: 1, 32, 32>}, {pipeline_mode = #tpu.pipeline_mode<synchronous>, transform_indices = @transform_6, window_bounds = array<i64: 1, 32>}, {transform_indices = @transform_7, window_bounds = array<i64: 1, 8, 32>}]} {
    %c0 = arith.constant 0 : index
    %c0_0 = arith.constant 0 : index
    %c0_1 = arith.constant 0 : index
    %0 = vector.load %arg2[%c0, %c0_0, %c0_1] : memref<1x8x32xf32, #tpu.memory_space<vmem>>, vector<1x8x32xf32>
    %1 = vector.shape_cast %0 : vector<1x8x32xf32> to vector<8x32xf32>
    %cst = arith.constant 0.000000e+00 : f32
    %2 = vector.broadcast %cst : f32 to vector<8x32xf32>
    %3 = arith.maximumf %1, %2 : vector<8x32xf32>
    %cst_2 = arith.constant 0.000000e+00 : f32
    %4 = vector.broadcast %cst_2 : f32 to vector<1x32xf32>
    %c1 = arith.constant 1 : index
    %c0_3 = arith.constant 0 : index
    %5 = vector.load %arg10[%c1, %c0_3] : memref<10x32xf32, #tpu.memory_space<vmem>>, vector<8x32xf32>
    tpu.vector_store %arg10[%c1, %c0_3], %3 {strides = array<i32>} : memref<10x32xf32, #tpu.memory_space<vmem>>, vector<8x32xf32>,
    %c0_4 = arith.constant 0 : index
    %c0_5 = arith.constant 0 : index
    %6 = vector.load %arg10[%c0_4, %c0_5] : memref<10x32xf32, #tpu.memory_space<vmem>>, vector<1x32xf32>
    tpu.vector_store %arg10[%c0_4, %c0_5], %4 {strides = array<i32>} : memref<10x32xf32, #tpu.memory_space<vmem>>, vector<1x32xf32>,
    %c9 = arith.constant 9 : index
    %c0_6 = arith.constant 0 : index
    %7 = vector.load %arg10[%c9, %c0_6] : memref<10x32xf32, #tpu.memory_space<vmem>>, vector<1x32xf32>
    tpu.vector_store %arg10[%c9, %c0_6], %4 {strides = array<i32>} : memref<10x32xf32, #tpu.memory_space<vmem>>, vector<1x32xf32>,
    %c0_i32 = arith.constant 0 : i32
    %8 = arith.cmpi sgt, %arg1, %c0_i32 : i32
    %9 = arith.extui %8 : i1 to i32
    %c0_i32_7 = arith.constant 0 : i32
    %10 = arith.cmpi ne, %9, %c0_i32_7 : i32
    scf.if %10 {
      %c0_34 = arith.constant 0 : index
      %c7 = arith.constant 7 : index
      %c0_35 = arith.constant 0 : index
      %44 = vector.load %arg3[%c0_34, %c7, %c0_35] : memref<1x8x32xf32, #tpu.memory_space<vmem>>, vector<1x1x32xf32>
      %45 = vector.shape_cast %44 : vector<1x1x32xf32> to vector<1x32xf32>
      %cst_36 = arith.constant 0.000000e+00 : f32
      %46 = vector.broadcast %cst_36 : f32 to vector<1x32xf32>
      %47 = arith.maximumf %45, %46 : vector<1x32xf32>
      %c0_37 = arith.constant 0 : index
      %c0_38 = arith.constant 0 : index
      %48 = vector.load %arg10[%c0_37, %c0_38] : memref<10x32xf32, #tpu.memory_space<vmem>>, vector<1x32xf32>
      tpu.vector_store %arg10[%c0_37, %c0_38], %47 {strides = array<i32>} : memref<10x32xf32, #tpu.memory_space<vmem>>, vector<1x32xf32>,
    } else {
    }
    %c3_i32 = arith.constant 3 : i32
    %11 = arith.cmpi slt, %arg1, %c3_i32 : i32
    %12 = arith.extui %11 : i1 to i32
    %c0_i32_8 = arith.constant 0 : i32
    %13 = arith.cmpi ne, %12, %c0_i32_8 : i32
    scf.if %13 {
      %c0_34 = arith.constant 0 : index
      %c0_35 = arith.constant 0 : index
      %c0_36 = arith.constant 0 : index
      %44 = vector.load %arg4[%c0_34, %c0_35, %c0_36] : memref<1x8x32xf32, #tpu.memory_space<vmem>>, vector<1x1x32xf32>
      %45 = vector.shape_cast %44 : vector<1x1x32xf32> to vector<1x32xf32>
      %cst_37 = arith.constant 0.000000e+00 : f32
      %46 = vector.broadcast %cst_37 : f32 to vector<1x32xf32>
      %47 = arith.maximumf %45, %46 : vector<1x32xf32>
      %c9_38 = arith.constant 9 : index
      %c0_39 = arith.constant 0 : index
      %48 = vector.load %arg10[%c9_38, %c0_39] : memref<10x32xf32, #tpu.memory_space<vmem>>, vector<1x32xf32>
      tpu.vector_store %arg10[%c9_38, %c0_39], %47 {strides = array<i32>} : memref<10x32xf32, #tpu.memory_space<vmem>>, vector<1x32xf32>,
    } else {
    }
    %c0_9 = arith.constant 0 : index
    %c0_10 = arith.constant 0 : index
    %14 = vector.load %arg10[%c0_9, %c0_10] : memref<10x32xf32, #tpu.memory_space<vmem>>, vector<10x32xf32>
    %15 = vector.extract_strided_slice %14 {offsets = [0, 0], sizes = [8, 32], strides = [1, 1]} : vector<10x32xf32> to vector<8x32xf32>
    %c0_11 = arith.constant 0 : index
    %c0_12 = arith.constant 0 : index
    %c0_13 = arith.constant 0 : index
    %16 = vector.load %arg5[%c0_11, %c0_12, %c0_13] : memref<3x32x32xf32, #tpu.memory_space<vmem>>, vector<1x32x32xf32>
    %17 = vector.shape_cast %16 : vector<1x32x32xf32> to vector<32x32xf32>
    %cst_14 = arith.constant dense<0.000000e+00> : vector<8x32xf32>
    %18 = tpu.matmul %15, %17, %cst_14 {dimension_numbers = #tpu.dot_dimension_numbers<[1], [0], [0], [1], [0, 0, 1, 1], [], []>} : vector<8x32xf32>, vector<32x32xf32>, vector<8x32xf32> -> vector<8x32xf32>
    %19 = vector.extract_strided_slice %14 {offsets = [1, 0], sizes = [8, 32], strides = [1, 1]} : vector<10x32xf32> to vector<8x32xf32>
    %c1_15 = arith.constant 1 : index
    %c0_16 = arith.constant 0 : index
    %c0_17 = arith.constant 0 : index
    %20 = vector.load %arg5[%c1_15, %c0_16, %c0_17] : memref<3x32x32xf32, #tpu.memory_space<vmem>>, vector<1x32x32xf32>
    %21 = vector.shape_cast %20 : vector<1x32x32xf32> to vector<32x32xf32>
    %cst_18 = arith.constant dense<0.000000e+00> : vector<8x32xf32>
    %22 = tpu.matmul %19, %21, %cst_18 {dimension_numbers = #tpu.dot_dimension_numbers<[1], [0], [0], [1], [0, 0, 1, 1], [], []>} : vector<8x32xf32>, vector<32x32xf32>, vector<8x32xf32> -> vector<8x32xf32>
    %23 = arith.addf %18, %22 : vector<8x32xf32>
    %24 = vector.extract_strided_slice %14 {offsets = [2, 0], sizes = [8, 32], strides = [1, 1]} : vector<10x32xf32> to vector<8x32xf32>
    %c2 = arith.constant 2 : index
    %c0_19 = arith.constant 0 : index
    %c0_20 = arith.constant 0 : index
    %25 = vector.load %arg5[%c2, %c0_19, %c0_20] : memref<3x32x32xf32, #tpu.memory_space<vmem>>, vector<1x32x32xf32>
    %26 = vector.shape_cast %25 : vector<1x32x32xf32> to vector<32x32xf32>
    %cst_21 = arith.constant dense<0.000000e+00> : vector<8x32xf32>
    %27 = tpu.matmul %24, %26, %cst_21 {dimension_numbers = #tpu.dot_dimension_numbers<[1], [0], [0], [1], [0, 0, 1, 1], [], []>} : vector<8x32xf32>, vector<32x32xf32>, vector<8x32xf32> -> vector<8x32xf32>
    %28 = arith.addf %23, %27 : vector<8x32xf32>
    %c0_22 = arith.constant 0 : index
    %c0_23 = arith.constant 0 : index
    %29 = vector.load %arg6[%c0_22, %c0_23] : memref<1x32xf32, #tpu.memory_space<vmem>>, vector<1x32xf32>
    %30 = vector.broadcast %29 : vector<1x32xf32> to vector<8x32xf32>
    %31 = arith.addf %28, %30 : vector<8x32xf32>
    %cst_24 = arith.constant 0.000000e+00 : f32
    %32 = vector.broadcast %cst_24 : f32 to vector<8x32xf32>
    %33 = arith.maximumf %31, %32 : vector<8x32xf32>
    %c0_25 = arith.constant 0 : index
    %c0_26 = arith.constant 0 : index
    %c0_27 = arith.constant 0 : index
    %34 = vector.load %arg7[%c0_25, %c0_26, %c0_27] : memref<1x32x32xf32, #tpu.memory_space<vmem>>, vector<1x32x32xf32>
    %35 = vector.shape_cast %34 : vector<1x32x32xf32> to vector<32x32xf32>
    %cst_28 = arith.constant dense<0.000000e+00> : vector<8x32xf32>
    %36 = tpu.matmul %33, %35, %cst_28 {dimension_numbers = #tpu.dot_dimension_numbers<[1], [0], [0], [1], [0, 0, 1, 1], [], []>} : vector<8x32xf32>, vector<32x32xf32>, vector<8x32xf32> -> vector<8x32xf32>
    %c0_29 = arith.constant 0 : index
    %c0_30 = arith.constant 0 : index
    %37 = vector.load %arg8[%c0_29, %c0_30] : memref<1x32xf32, #tpu.memory_space<vmem>>, vector<1x32xf32>
    %38 = vector.broadcast %37 : vector<1x32xf32> to vector<8x32xf32>
    %39 = arith.addf %36, %38 : vector<8x32xf32>
    %40 = arith.addf %39, %1 : vector<8x32xf32>
    %c0_31 = arith.constant 0 : index
    %c0_32 = arith.constant 0 : index
    %c0_33 = arith.constant 0 : index
    %41 = vector.load %arg9[%c0_31, %c0_32, %c0_33] : memref<1x8x32xf32, #tpu.memory_space<vmem>>, vector<1x8x32xf32>
    %42 = vector.shape_cast %41 : vector<1x8x32xf32> to vector<8x32xf32>
    %43 = vector.shape_cast %40 : vector<8x32xf32> to vector<1x8x32xf32>
    tpu.vector_store %arg9[%c0_31, %c0_32, %c0_33], %43 {strides = array<i32>} : memref<1x8x32xf32, #tpu.memory_space<vmem>>, vector<1x8x32xf32>,
    return
  }
  func.func @transform_0(%arg0: i32, %arg1: i32) -> (i32, i32, i32) {
    %c0_i32 = arith.constant 0 : i32
    %c0_i32_0 = arith.constant 0 : i32
    return %arg0, %arg1, %c0_i32 : i32, i32, i32
  }
  func.func @transform_1(%arg0: i32, %arg1: i32) -> (i32, i32, i32) {
    %c1_i32 = arith.constant 1 : i32
    %0 = arith.muli %arg1, %c1_i32 : i32
    %c1_i32_0 = arith.constant 1 : i32
    %1 = arith.subi %0, %c1_i32_0 : i32
    %c0_i32 = arith.constant 0 : i32
    %2 = arith.maxsi %1, %c0_i32 : i32
    %c0_i32_1 = arith.constant 0 : i32
    %c0_i32_2 = arith.constant 0 : i32
    return %arg0, %2, %c0_i32_1 : i32, i32, i32
  }
  func.func @transform_2(%arg0: i32, %arg1: i32) -> (i32, i32, i32) {
    %c1_i32 = arith.constant 1 : i32
    %0 = arith.addi %arg1, %c1_i32 : i32
    %c1_i32_0 = arith.constant 1 : i32
    %1 = arith.muli %0, %c1_i32_0 : i32
    %c3_i32 = arith.constant 3 : i32
    %2 = arith.minsi %1, %c3_i32 : i32
    %c0_i32 = arith.constant 0 : i32
    %c0_i32_1 = arith.constant 0 : i32
    return %arg0, %2, %c0_i32 : i32, i32, i32
  }
  func.func @transform_3(%arg0: i32, %arg1: i32) -> (i32, i32, i32) {
    %c0_i32 = arith.constant 0 : i32
    %c0_i32_0 = arith.constant 0 : i32
    %c0_i32_1 = arith.constant 0 : i32
    %c0_i32_2 = arith.constant 0 : i32
    return %c0_i32, %c0_i32_0, %c0_i32_1 : i32, i32, i32
  }
  func.func @transform_4(%arg0: i32, %arg1: i32) -> (i32, i32) {
    %c0_i32 = arith.constant 0 : i32
    %c0_i32_0 = arith.constant 0 : i32
    %c0_i32_1 = arith.constant 0 : i32
    return %c0_i32, %c0_i32_0 : i32, i32
  }
  func.func @transform_5(%arg0: i32, %arg1: i32) -> (i32, i32, i32) {
    %c0_i32 = arith.constant 0 : i32
    %c0_i32_0 = arith.constant 0 : i32
    %c0_i32_1 = arith.constant 0 : i32
    %c0_i32_2 = arith.constant 0 : i32
    return %c0_i32, %c0_i32_0, %c0_i32_1 : i32, i32, i32
  }
  func.func @transform_6(%arg0: i32, %arg1: i32) -> (i32, i32) {
    %c0_i32 = arith.constant 0 : i32
    %c0_i32_0 = arith.constant 0 : i32
    %c0_i32_1 = arith.constant 0 : i32
    return %c0_i32, %c0_i32_0 : i32, i32
  }
  func.func @transform_7(%arg0: i32, %arg1: i32) -> (i32, i32, i32) {
    %c0_i32 = arith.constant 0 : i32
    %c0_i32_0 = arith.constant 0 : i32
    return %arg0, %arg1, %c0_i32 : i32, i32, i32
  }
}

module attributes {stable_mosaic.version = 11 : i64} {
  func.func @_resblock_kernel(%arg0: i32, %arg1: i32, %arg2: memref<1x8x32xf32, #tpu.memory_space<vmem>>, %arg3: memref<1x8x32xf32, #tpu.memory_space<vmem>>, %arg4: memref<1x8x32xf32, #tpu.memory_space<vmem>>, %arg5: memref<3x32x32xf32, #tpu.memory_space<vmem>>, %arg6: memref<1x32xf32, #tpu.memory_space<vmem>>, %arg7: memref<1x32x32xf32, #tpu.memory_space<vmem>>, %arg8: memref<1x32xf32, #tpu.memory_space<vmem>>, %arg9: memref<1x8x32xf32, #tpu.memory_space<vmem>>, %arg10: memref<10x32xf32, #tpu.memory_space<vmem>>) attributes {dimension_semantics = [#tpu.dimension_semantics<parallel>, #tpu.dimension_semantics<parallel>], iteration_bounds = array<i64: 2, 4>, scalar_prefetch = 0 : i64, scratch_operands = 1 : i64, tpu.core_type = #tpu.core_type<tc>, window_params = [{transform_indices = @transform_0, window_bounds = array<i64: 1, 8, 32>}, {transform_indices = @transform_1, window_bounds = array<i64: 1, 8, 32>}, {transform_indices = @transform_2, window_bounds = array<i64: 1, 8, 32>}, {pipeline_mode = #tpu.pipeline_mode<synchronous>, transform_indices = @transform_3, window_bounds = array<i64: 3, 32, 32>}, {pipeline_mode = #tpu.pipeline_mode<synchronous>, transform_indices = @transform_4, window_bounds = array<i64: 1, 32>}, {pipeline_mode = #tpu.pipeline_mode<synchronous>, transform_indices = @transform_5, window_bounds = array<i64: 1, 32, 32>}, {pipeline_mode = #tpu.pipeline_mode<synchronous>, transform_indices = @transform_6, window_bounds = array<i64: 1, 32>}, {transform_indices = @transform_7, window_bounds = array<i64: 1, 8, 32>}]} {
    %c0 = arith.constant 0 : index
    %c0_0 = arith.constant 0 : index
    %c0_1 = arith.constant 0 : index
    %0 = vector.load %arg2[%c0, %c0_0, %c0_1] : memref<1x8x32xf32, #tpu.memory_space<vmem>>, vector<1x8x32xf32>
    %1 = vector.shape_cast %0 : vector<1x8x32xf32> to vector<8x32xf32>
    %cst = arith.constant 0.000000e+00 : f32
    %2 = vector.broadcast %cst : f32 to vector<8x32xf32>
    %3 = arith.maximumf %1, %2 : vector<8x32xf32>
    %cst_2 = arith.constant 0.000000e+00 : f32
    %4 = vector.broadcast %cst_2 : f32 to vector<1x32xf32>
    %c1 = arith.constant 1 : index
    %c0_3 = arith.constant 0 : index
    %5 = vector.load %arg10[%c1, %c0_3] : memref<10x32xf32, #tpu.memory_space<vmem>>, vector<8x32xf32>
    tpu.vector_store %arg10[%c1, %c0_3], %3 {strides = array<i32>} : memref<10x32xf32, #tpu.memory_space<vmem>>, vector<8x32xf32>,
    %c0_4 = arith.constant 0 : index
    %c0_5 = arith.constant 0 : index
    %6 = vector.load %arg10[%c0_4, %c0_5] : memref<10x32xf32, #tpu.memory_space<vmem>>, vector<1x32xf32>
    tpu.vector_store %arg10[%c0_4, %c0_5], %4 {strides = array<i32>} : memref<10x32xf32, #tpu.memory_space<vmem>>, vector<1x32xf32>,
    %c9 = arith.constant 9 : index
    %c0_6 = arith.constant 0 : index
    %7 = vector.load %arg10[%c9, %c0_6] : memref<10x32xf32, #tpu.memory_space<vmem>>, vector<1x32xf32>
    tpu.vector_store %arg10[%c9, %c0_6], %4 {strides = array<i32>} : memref<10x32xf32, #tpu.memory_space<vmem>>, vector<1x32xf32>,
    %c0_i32 = arith.constant 0 : i32
    %8 = arith.cmpi sgt, %arg1, %c0_i32 : i32
    %9 = arith.extui %8 : i1 to i32
    %c0_i32_7 = arith.constant 0 : i32
    %10 = arith.cmpi ne, %9, %c0_i32_7 : i32
    scf.if %10 {
      %c0_34 = arith.constant 0 : index
      %c7 = arith.constant 7 : index
      %c0_35 = arith.constant 0 : index
      %44 = vector.load %arg3[%c0_34, %c7, %c0_35] : memref<1x8x32xf32, #tpu.memory_space<vmem>>, vector<1x1x32xf32>
      %45 = vector.shape_cast %44 : vector<1x1x32xf32> to vector<1x32xf32>
      %cst_36 = arith.constant 0.000000e+00 : f32
      %46 = vector.broadcast %cst_36 : f32 to vector<1x32xf32>
      %47 = arith.maximumf %45, %46 : vector<1x32xf32>
      %c0_37 = arith.constant 0 : index
      %c0_38 = arith.constant 0 : index
      %48 = vector.load %arg10[%c0_37, %c0_38] : memref<10x32xf32, #tpu.memory_space<vmem>>, vector<1x32xf32>
      tpu.vector_store %arg10[%c0_37, %c0_38], %47 {strides = array<i32>} : memref<10x32xf32, #tpu.memory_space<vmem>>, vector<1x32xf32>,
    } else {
    }
    %c3_i32 = arith.constant 3 : i32
    %11 = arith.cmpi slt, %arg1, %c3_i32 : i32
    %12 = arith.extui %11 : i1 to i32
    %c0_i32_8 = arith.constant 0 : i32
    %13 = arith.cmpi ne, %12, %c0_i32_8 : i32
    scf.if %13 {
      %c0_34 = arith.constant 0 : index
      %c0_35 = arith.constant 0 : index
      %c0_36 = arith.constant 0 : index
      %44 = vector.load %arg4[%c0_34, %c0_35, %c0_36] : memref<1x8x32xf32, #tpu.memory_space<vmem>>, vector<1x1x32xf32>
      %45 = vector.shape_cast %44 : vector<1x1x32xf32> to vector<1x32xf32>
      %cst_37 = arith.constant 0.000000e+00 : f32
      %46 = vector.broadcast %cst_37 : f32 to vector<1x32xf32>
      %47 = arith.maximumf %45, %46 : vector<1x32xf32>
      %c9_38 = arith.constant 9 : index
      %c0_39 = arith.constant 0 : index
      %48 = vector.load %arg10[%c9_38, %c0_39] : memref<10x32xf32, #tpu.memory_space<vmem>>, vector<1x32xf32>
      tpu.vector_store %arg10[%c9_38, %c0_39], %47 {strides = array<i32>} : memref<10x32xf32, #tpu.memory_space<vmem>>, vector<1x32xf32>,
    } else {
    }
    %c0_9 = arith.constant 0 : index
    %c0_10 = arith.constant 0 : index
    %14 = vector.load %arg10[%c0_9, %c0_10] : memref<10x32xf32, #tpu.memory_space<vmem>>, vector<10x32xf32>
    %15 = vector.extract_strided_slice %14 {offsets = [0, 0], sizes = [8, 32], strides = [1, 1]} : vector<10x32xf32> to vector<8x32xf32>
    %c0_11 = arith.constant 0 : index
    %c0_12 = arith.constant 0 : index
    %c0_13 = arith.constant 0 : index
    %16 = vector.load %arg5[%c0_11, %c0_12, %c0_13] : memref<3x32x32xf32, #tpu.memory_space<vmem>>, vector<1x32x32xf32>
    %17 = vector.shape_cast %16 : vector<1x32x32xf32> to vector<32x32xf32>
    %cst_14 = arith.constant dense<0.000000e+00> : vector<8x32xf32>
    %18 = tpu.matmul %15, %17, %cst_14 {dimension_numbers = #tpu.dot_dimension_numbers<[1], [0], [0], [1], [0, 0, 1, 1], [], []>} : vector<8x32xf32>, vector<32x32xf32>, vector<8x32xf32> -> vector<8x32xf32>
    %19 = vector.extract_strided_slice %14 {offsets = [1, 0], sizes = [8, 32], strides = [1, 1]} : vector<10x32xf32> to vector<8x32xf32>
    %c1_15 = arith.constant 1 : index
    %c0_16 = arith.constant 0 : index
    %c0_17 = arith.constant 0 : index
    %20 = vector.load %arg5[%c1_15, %c0_16, %c0_17] : memref<3x32x32xf32, #tpu.memory_space<vmem>>, vector<1x32x32xf32>
    %21 = vector.shape_cast %20 : vector<1x32x32xf32> to vector<32x32xf32>
    %cst_18 = arith.constant dense<0.000000e+00> : vector<8x32xf32>
    %22 = tpu.matmul %19, %21, %cst_18 {dimension_numbers = #tpu.dot_dimension_numbers<[1], [0], [0], [1], [0, 0, 1, 1], [], []>} : vector<8x32xf32>, vector<32x32xf32>, vector<8x32xf32> -> vector<8x32xf32>
    %23 = arith.addf %18, %22 : vector<8x32xf32>
    %24 = vector.extract_strided_slice %14 {offsets = [2, 0], sizes = [8, 32], strides = [1, 1]} : vector<10x32xf32> to vector<8x32xf32>
    %c2 = arith.constant 2 : index
    %c0_19 = arith.constant 0 : index
    %c0_20 = arith.constant 0 : index
    %25 = vector.load %arg5[%c2, %c0_19, %c0_20] : memref<3x32x32xf32, #tpu.memory_space<vmem>>, vector<1x32x32xf32>
    %26 = vector.shape_cast %25 : vector<1x32x32xf32> to vector<32x32xf32>
    %cst_21 = arith.constant dense<0.000000e+00> : vector<8x32xf32>
    %27 = tpu.matmul %24, %26, %cst_21 {dimension_numbers = #tpu.dot_dimension_numbers<[1], [0], [0], [1], [0, 0, 1, 1], [], []>} : vector<8x32xf32>, vector<32x32xf32>, vector<8x32xf32> -> vector<8x32xf32>
    %28 = arith.addf %23, %27 : vector<8x32xf32>
    %c0_22 = arith.constant 0 : index
    %c0_23 = arith.constant 0 : index
    %29 = vector.load %arg6[%c0_22, %c0_23] : memref<1x32xf32, #tpu.memory_space<vmem>>, vector<1x32xf32>
    %30 = vector.broadcast %29 : vector<1x32xf32> to vector<8x32xf32>
    %31 = arith.addf %28, %30 : vector<8x32xf32>
    %cst_24 = arith.constant 0.000000e+00 : f32
    %32 = vector.broadcast %cst_24 : f32 to vector<8x32xf32>
    %33 = arith.maximumf %31, %32 : vector<8x32xf32>
    %c0_25 = arith.constant 0 : index
    %c0_26 = arith.constant 0 : index
    %c0_27 = arith.constant 0 : index
    %34 = vector.load %arg7[%c0_25, %c0_26, %c0_27] : memref<1x32x32xf32, #tpu.memory_space<vmem>>, vector<1x32x32xf32>
    %35 = vector.shape_cast %34 : vector<1x32x32xf32> to vector<32x32xf32>
    %cst_28 = arith.constant dense<0.000000e+00> : vector<8x32xf32>
    %36 = tpu.matmul %33, %35, %cst_28 {dimension_numbers = #tpu.dot_dimension_numbers<[1], [0], [0], [1], [0, 0, 1, 1], [], []>} : vector<8x32xf32>, vector<32x32xf32>, vector<8x32xf32> -> vector<8x32xf32>
    %c0_29 = arith.constant 0 : index
    %c0_30 = arith.constant 0 : index
    %37 = vector.load %arg8[%c0_29, %c0_30] : memref<1x32xf32, #tpu.memory_space<vmem>>, vector<1x32xf32>
    %38 = vector.broadcast %37 : vector<1x32xf32> to vector<8x32xf32>
    %39 = arith.addf %36, %38 : vector<8x32xf32>
    %40 = arith.addf %39, %1 : vector<8x32xf32>
    %c0_31 = arith.constant 0 : index
    %c0_32 = arith.constant 0 : index
    %c0_33 = arith.constant 0 : index
    %41 = vector.load %arg9[%c0_31, %c0_32, %c0_33] : memref<1x8x32xf32, #tpu.memory_space<vmem>>, vector<1x8x32xf32>
    %42 = vector.shape_cast %41 : vector<1x8x32xf32> to vector<8x32xf32>
    %43 = vector.shape_cast %40 : vector<8x32xf32> to vector<1x8x32xf32>
    tpu.vector_store %arg9[%c0_31, %c0_32, %c0_33], %43 {strides = array<i32>} : memref<1x8x32xf32, #tpu.memory_space<vmem>>, vector<1x8x32xf32>,
    return
  }
  func.func @transform_0(%arg0: i32, %arg1: i32) -> (i32, i32, i32) {
    %c0_i32 = arith.constant 0 : i32
    %c0_i32_0 = arith.constant 0 : i32
    return %arg0, %arg1, %c0_i32 : i32, i32, i32
  }
  func.func @transform_1(%arg0: i32, %arg1: i32) -> (i32, i32, i32) {
    %c1_i32 = arith.constant 1 : i32
    %0 = arith.muli %arg1, %c1_i32 : i32
    %c1_i32_0 = arith.constant 1 : i32
    %1 = arith.subi %0, %c1_i32_0 : i32
    %c0_i32 = arith.constant 0 : i32
    %2 = arith.maxsi %1, %c0_i32 : i32
    %c0_i32_1 = arith.constant 0 : i32
    %c0_i32_2 = arith.constant 0 : i32
    return %arg0, %2, %c0_i32_1 : i32, i32, i32
  }
  func.func @transform_2(%arg0: i32, %arg1: i32) -> (i32, i32, i32) {
    %c1_i32 = arith.constant 1 : i32
    %0 = arith.addi %arg1, %c1_i32 : i32
    %c1_i32_0 = arith.constant 1 : i32
    %1 = arith.muli %0, %c1_i32_0 : i32
    %c3_i32 = arith.constant 3 : i32
    %2 = arith.minsi %1, %c3_i32 : i32
    %c0_i32 = arith.constant 0 : i32
    %c0_i32_1 = arith.constant 0 : i32
    return %arg0, %2, %c0_i32 : i32, i32, i32
  }
  func.func @transform_3(%arg0: i32, %arg1: i32) -> (i32, i32, i32) {
    %c0_i32 = arith.constant 0 : i32
    %c0_i32_0 = arith.constant 0 : i32
    %c0_i32_1 = arith.constant 0 : i32
    %c0_i32_2 = arith.constant 0 : i32
    return %c0_i32, %c0_i32_0, %c0_i32_1 : i32, i32, i32
  }
  func.func @transform_4(%arg0: i32, %arg1: i32) -> (i32, i32) {
    %c0_i32 = arith.constant 0 : i32
    %c0_i32_0 = arith.constant 0 : i32
    %c0_i32_1 = arith.constant 0 : i32
    return %c0_i32, %c0_i32_0 : i32, i32
  }
  func.func @transform_5(%arg0: i32, %arg1: i32) -> (i32, i32, i32) {
    %c0_i32 = arith.constant 0 : i32
    %c0_i32_0 = arith.constant 0 : i32
    %c0_i32_1 = arith.constant 0 : i32
    %c0_i32_2 = arith.constant 0 : i32
    return %c0_i32, %c0_i32_0, %c0_i32_1 : i32, i32, i32
  }
  func.func @transform_6(%arg0: i32, %arg1: i32) -> (i32, i32) {
    %c0_i32 = arith.constant 0 : i32
    %c0_i32_0 = arith.constant 0 : i32
    %c0_i32_1 = arith.constant 0 : i32
    return %c0_i32, %c0_i32_0 : i32, i32
  }
  func.func @transform_7(%arg0: i32, %arg1: i32) -> (i32, i32, i32) {
    %c0_i32 = arith.constant 0 : i32
    %c0_i32_0 = arith.constant 0 : i32
    return %arg0, %arg1, %c0_i32 : i32, i32, i32
  }
}

module attributes {stable_mosaic.version = 11 : i64} {
  func.func @_convt_kernel(%arg0: i32, %arg1: i32, %arg2: memref<1x8x32xf32, #tpu.memory_space<vmem>>, %arg3: memref<1x8x32xf32, #tpu.memory_space<vmem>>, %arg4: memref<1x8x32xf32, #tpu.memory_space<vmem>>, %arg5: memref<4x32x32xf32, #tpu.memory_space<vmem>>, %arg6: memref<1x32xf32, #tpu.memory_space<vmem>>, %arg7: memref<1x8x64xf32, #tpu.memory_space<vmem>>, %arg8: memref<10x32xf32, #tpu.memory_space<vmem>>) attributes {dimension_semantics = [#tpu.dimension_semantics<parallel>, #tpu.dimension_semantics<parallel>], iteration_bounds = array<i64: 2, 4>, scalar_prefetch = 0 : i64, scratch_operands = 1 : i64, tpu.core_type = #tpu.core_type<tc>, window_params = [{transform_indices = @transform_0, window_bounds = array<i64: 1, 8, 32>}, {transform_indices = @transform_1, window_bounds = array<i64: 1, 8, 32>}, {transform_indices = @transform_2, window_bounds = array<i64: 1, 8, 32>}, {pipeline_mode = #tpu.pipeline_mode<synchronous>, transform_indices = @transform_3, window_bounds = array<i64: 4, 32, 32>}, {pipeline_mode = #tpu.pipeline_mode<synchronous>, transform_indices = @transform_4, window_bounds = array<i64: 1, 32>}, {transform_indices = @transform_5, window_bounds = array<i64: 1, 8, 64>}]} {
    %c0 = arith.constant 0 : index
    %c0_0 = arith.constant 0 : index
    %c0_1 = arith.constant 0 : index
    %0 = vector.load %arg2[%c0, %c0_0, %c0_1] : memref<1x8x32xf32, #tpu.memory_space<vmem>>, vector<1x8x32xf32>
    %1 = vector.shape_cast %0 : vector<1x8x32xf32> to vector<8x32xf32>
    %cst = arith.constant 0.000000e+00 : f32
    %2 = vector.broadcast %cst : f32 to vector<1x32xf32>
    %c1 = arith.constant 1 : index
    %c0_2 = arith.constant 0 : index
    %3 = vector.load %arg8[%c1, %c0_2] : memref<10x32xf32, #tpu.memory_space<vmem>>, vector<8x32xf32>
    tpu.vector_store %arg8[%c1, %c0_2], %1 {strides = array<i32>} : memref<10x32xf32, #tpu.memory_space<vmem>>, vector<8x32xf32>,
    %c0_3 = arith.constant 0 : index
    %c0_4 = arith.constant 0 : index
    %4 = vector.load %arg8[%c0_3, %c0_4] : memref<10x32xf32, #tpu.memory_space<vmem>>, vector<1x32xf32>
    tpu.vector_store %arg8[%c0_3, %c0_4], %2 {strides = array<i32>} : memref<10x32xf32, #tpu.memory_space<vmem>>, vector<1x32xf32>,
    %c9 = arith.constant 9 : index
    %c0_5 = arith.constant 0 : index
    %5 = vector.load %arg8[%c9, %c0_5] : memref<10x32xf32, #tpu.memory_space<vmem>>, vector<1x32xf32>
    tpu.vector_store %arg8[%c9, %c0_5], %2 {strides = array<i32>} : memref<10x32xf32, #tpu.memory_space<vmem>>, vector<1x32xf32>,
    %c0_i32 = arith.constant 0 : i32
    %6 = arith.cmpi sgt, %arg1, %c0_i32 : i32
    %7 = arith.extui %6 : i1 to i32
    %c0_i32_6 = arith.constant 0 : i32
    %8 = arith.cmpi ne, %7, %c0_i32_6 : i32
    scf.if %8 {
      %c0_31 = arith.constant 0 : index
      %c7 = arith.constant 7 : index
      %c0_32 = arith.constant 0 : index
      %42 = vector.load %arg3[%c0_31, %c7, %c0_32] : memref<1x8x32xf32, #tpu.memory_space<vmem>>, vector<1x1x32xf32>
      %43 = vector.shape_cast %42 : vector<1x1x32xf32> to vector<1x32xf32>
      %c0_33 = arith.constant 0 : index
      %c0_34 = arith.constant 0 : index
      %44 = vector.load %arg8[%c0_33, %c0_34] : memref<10x32xf32, #tpu.memory_space<vmem>>, vector<1x32xf32>
      tpu.vector_store %arg8[%c0_33, %c0_34], %43 {strides = array<i32>} : memref<10x32xf32, #tpu.memory_space<vmem>>, vector<1x32xf32>,
    } else {
    }
    %c3_i32 = arith.constant 3 : i32
    %9 = arith.cmpi slt, %arg1, %c3_i32 : i32
    %10 = arith.extui %9 : i1 to i32
    %c0_i32_7 = arith.constant 0 : i32
    %11 = arith.cmpi ne, %10, %c0_i32_7 : i32
    scf.if %11 {
      %c0_31 = arith.constant 0 : index
      %c0_32 = arith.constant 0 : index
      %c0_33 = arith.constant 0 : index
      %42 = vector.load %arg4[%c0_31, %c0_32, %c0_33] : memref<1x8x32xf32, #tpu.memory_space<vmem>>, vector<1x1x32xf32>
      %43 = vector.shape_cast %42 : vector<1x1x32xf32> to vector<1x32xf32>
      %c9_34 = arith.constant 9 : index
      %c0_35 = arith.constant 0 : index
      %44 = vector.load %arg8[%c9_34, %c0_35] : memref<10x32xf32, #tpu.memory_space<vmem>>, vector<1x32xf32>
      tpu.vector_store %arg8[%c9_34, %c0_35], %43 {strides = array<i32>} : memref<10x32xf32, #tpu.memory_space<vmem>>, vector<1x32xf32>,
    } else {
    }
    %c0_8 = arith.constant 0 : index
    %c0_9 = arith.constant 0 : index
    %12 = vector.load %arg8[%c0_8, %c0_9] : memref<10x32xf32, #tpu.memory_space<vmem>>, vector<10x32xf32>
    %c0_10 = arith.constant 0 : index
    %c0_11 = arith.constant 0 : index
    %13 = vector.load %arg6[%c0_10, %c0_11] : memref<1x32xf32, #tpu.memory_space<vmem>>, vector<1x32xf32>
    %14 = vector.extract_strided_slice %12 {offsets = [0, 0], sizes = [8, 32], strides = [1, 1]} : vector<10x32xf32> to vector<8x32xf32>
    %c3 = arith.constant 3 : index
    %c0_12 = arith.constant 0 : index
    %c0_13 = arith.constant 0 : index
    %15 = vector.load %arg5[%c3, %c0_12, %c0_13] : memref<4x32x32xf32, #tpu.memory_space<vmem>>, vector<1x32x32xf32>
    %16 = vector.shape_cast %15 : vector<1x32x32xf32> to vector<32x32xf32>
    %cst_14 = arith.constant dense<0.000000e+00> : vector<8x32xf32>
    %17 = tpu.matmul %14, %16, %cst_14 {dimension_numbers = #tpu.dot_dimension_numbers<[1], [0], [0], [1], [0, 0, 1, 1], [], []>} : vector<8x32xf32>, vector<32x32xf32>, vector<8x32xf32> -> vector<8x32xf32>
    %18 = vector.extract_strided_slice %12 {offsets = [1, 0], sizes = [8, 32], strides = [1, 1]} : vector<10x32xf32> to vector<8x32xf32>
    %c1_15 = arith.constant 1 : index
    %c0_16 = arith.constant 0 : index
    %c0_17 = arith.constant 0 : index
    %19 = vector.load %arg5[%c1_15, %c0_16, %c0_17] : memref<4x32x32xf32, #tpu.memory_space<vmem>>, vector<1x32x32xf32>
    %20 = vector.shape_cast %19 : vector<1x32x32xf32> to vector<32x32xf32>
    %cst_18 = arith.constant dense<0.000000e+00> : vector<8x32xf32>
    %21 = tpu.matmul %18, %20, %cst_18 {dimension_numbers = #tpu.dot_dimension_numbers<[1], [0], [0], [1], [0, 0, 1, 1], [], []>} : vector<8x32xf32>, vector<32x32xf32>, vector<8x32xf32> -> vector<8x32xf32>
    %22 = arith.addf %17, %21 : vector<8x32xf32>
    %23 = vector.broadcast %13 : vector<1x32xf32> to vector<8x32xf32>
    %24 = arith.addf %22, %23 : vector<8x32xf32>
    %25 = vector.extract_strided_slice %12 {offsets = [1, 0], sizes = [8, 32], strides = [1, 1]} : vector<10x32xf32> to vector<8x32xf32>
    %c2 = arith.constant 2 : index
    %c0_19 = arith.constant 0 : index
    %c0_20 = arith.constant 0 : index
    %26 = vector.load %arg5[%c2, %c0_19, %c0_20] : memref<4x32x32xf32, #tpu.memory_space<vmem>>, vector<1x32x32xf32>
    %27 = vector.shape_cast %26 : vector<1x32x32xf32> to vector<32x32xf32>
    %cst_21 = arith.constant dense<0.000000e+00> : vector<8x32xf32>
    %28 = tpu.matmul %25, %27, %cst_21 {dimension_numbers = #tpu.dot_dimension_numbers<[1], [0], [0], [1], [0, 0, 1, 1], [], []>} : vector<8x32xf32>, vector<32x32xf32>, vector<8x32xf32> -> vector<8x32xf32>
    %29 = vector.extract_strided_slice %12 {offsets = [2, 0], sizes = [8, 32], strides = [1, 1]} : vector<10x32xf32> to vector<8x32xf32>
    %c0_22 = arith.constant 0 : index
    %c0_23 = arith.constant 0 : index
    %c0_24 = arith.constant 0 : index
    %30 = vector.load %arg5[%c0_22, %c0_23, %c0_24] : memref<4x32x32xf32, #tpu.memory_space<vmem>>, vector<1x32x32xf32>
    %31 = vector.shape_cast %30 : vector<1x32x32xf32> to vector<32x32xf32>
    %cst_25 = arith.constant dense<0.000000e+00> : vector<8x32xf32>
    %32 = tpu.matmul %29, %31, %cst_25 {dimension_numbers = #tpu.dot_dimension_numbers<[1], [0], [0], [1], [0, 0, 1, 1], [], []>} : vector<8x32xf32>, vector<32x32xf32>, vector<8x32xf32> -> vector<8x32xf32>
    %33 = arith.addf %28, %32 : vector<8x32xf32>
    %34 = vector.broadcast %13 : vector<1x32xf32> to vector<8x32xf32>
    %35 = arith.addf %33, %34 : vector<8x32xf32>
    %c0_26 = arith.constant 0 : index
    %c0_27 = arith.constant 0 : index
    %c0_28 = arith.constant 0 : index
    %36 = vector.load %arg7[%c0_26, %c0_27, %c0_28] : memref<1x8x64xf32, #tpu.memory_space<vmem>>, vector<1x8x32xf32>
    %37 = vector.shape_cast %36 : vector<1x8x32xf32> to vector<8x32xf32>
    %38 = vector.shape_cast %24 : vector<8x32xf32> to vector<1x8x32xf32>
    tpu.vector_store %arg7[%c0_26, %c0_27, %c0_28], %38 {strides = array<i32>} : memref<1x8x64xf32, #tpu.memory_space<vmem>>, vector<1x8x32xf32>,
    %c0_29 = arith.constant 0 : index
    %c0_30 = arith.constant 0 : index
    %c32 = arith.constant 32 : index
    %39 = vector.load %arg7[%c0_29, %c0_30, %c32] : memref<1x8x64xf32, #tpu.memory_space<vmem>>, vector<1x8x32xf32>
    %40 = vector.shape_cast %39 : vector<1x8x32xf32> to vector<8x32xf32>
    %41 = vector.shape_cast %35 : vector<8x32xf32> to vector<1x8x32xf32>
    tpu.vector_store %arg7[%c0_29, %c0_30, %c32], %41 {strides = array<i32>} : memref<1x8x64xf32, #tpu.memory_space<vmem>>, vector<1x8x32xf32>,
    return
  }
  func.func @transform_0(%arg0: i32, %arg1: i32) -> (i32, i32, i32) {
    %c0_i32 = arith.constant 0 : i32
    %c0_i32_0 = arith.constant 0 : i32
    return %arg0, %arg1, %c0_i32 : i32, i32, i32
  }
  func.func @transform_1(%arg0: i32, %arg1: i32) -> (i32, i32, i32) {
    %c1_i32 = arith.constant 1 : i32
    %0 = arith.muli %arg1, %c1_i32 : i32
    %c1_i32_0 = arith.constant 1 : i32
    %1 = arith.subi %0, %c1_i32_0 : i32
    %c0_i32 = arith.constant 0 : i32
    %2 = arith.maxsi %1, %c0_i32 : i32
    %c0_i32_1 = arith.constant 0 : i32
    %c0_i32_2 = arith.constant 0 : i32
    return %arg0, %2, %c0_i32_1 : i32, i32, i32
  }
  func.func @transform_2(%arg0: i32, %arg1: i32) -> (i32, i32, i32) {
    %c1_i32 = arith.constant 1 : i32
    %0 = arith.addi %arg1, %c1_i32 : i32
    %c1_i32_0 = arith.constant 1 : i32
    %1 = arith.muli %0, %c1_i32_0 : i32
    %c3_i32 = arith.constant 3 : i32
    %2 = arith.minsi %1, %c3_i32 : i32
    %c0_i32 = arith.constant 0 : i32
    %c0_i32_1 = arith.constant 0 : i32
    return %arg0, %2, %c0_i32 : i32, i32, i32
  }
  func.func @transform_3(%arg0: i32, %arg1: i32) -> (i32, i32, i32) {
    %c0_i32 = arith.constant 0 : i32
    %c0_i32_0 = arith.constant 0 : i32
    %c0_i32_1 = arith.constant 0 : i32
    %c0_i32_2 = arith.constant 0 : i32
    return %c0_i32, %c0_i32_0, %c0_i32_1 : i32, i32, i32
  }
  func.func @transform_4(%arg0: i32, %arg1: i32) -> (i32, i32) {
    %c0_i32 = arith.constant 0 : i32
    %c0_i32_0 = arith.constant 0 : i32
    %c0_i32_1 = arith.constant 0 : i32
    return %c0_i32, %c0_i32_0 : i32, i32
  }
  func.func @transform_5(%arg0: i32, %arg1: i32) -> (i32, i32, i32) {
    %c0_i32 = arith.constant 0 : i32
    %c0_i32_0 = arith.constant 0 : i32
    return %arg0, %arg1, %c0_i32 : i32, i32, i32
  }
}

</mosaic_0001>

<llo_original>
// kernel: decoder_forward.15
$region0: #{decoder_forward.15}
  #allocation0 [shape = 'u32[]', space=smem, size = 0x4, offset = 0x4, fixed_abs, tag = 'smem constant byte address 0x4 - core index']
  #allocation1 [shape = 'u32[72,128]{1,0:T(1,128)}', space=vmem, size = 0x9000, scoped, tag = 'internal scratch']
  #allocation2 [shape = 'f32[10,32]{1,0:T(8,128)}', space=vmem, size = 0x2000, scoped, tag = 'scratch operand']
  %s0 = inlined_call_operand.vmem [shape: f32[2,8,32], index: 0, kind: input, shape index: {}, may-alias: {0,1,2}]
  %s1 = inlined_call_operand.vmem [shape: f32[2,8,32], index: 1, kind: input, shape index: {}, may-alias: {0,1,2}]
  %s2 = inlined_call_operand.vmem [shape: f32[2,8,32], index: 2, kind: input, shape index: {}, may-alias: {0,1,2}]
  %s3 = inlined_call_operand.hbm [shape: f32[3,32,32], index: 3, kind: input, shape index: {}]
  %s4 = inlined_call_operand.hbm [shape: f32[1,32], index: 4, kind: input, shape index: {}]
  %s5 = inlined_call_operand.hbm [shape: f32[1,32,32], index: 5, kind: input, shape index: {}]
  %s6 = inlined_call_operand.hbm [shape: f32[1,32], index: 6, kind: input, shape index: {}]
  %s7 = inlined_call_operand.vmem [shape: f32[2,8,32], index: 7, kind: output, shape index: {}]
  %s8 = sld [smem:[#allocation0]]
  $region85: #{decoder_forward.15} parent=0
    _
  %s10 = ssub.s32 1, %s8
  %s11 = scalar_select 0, %s10, %s8
  $region1: #{decoder_forward.15} parent=0
    #allocation3 [shape = 'u8[49152]{0}', space=vmem, size = 0xc000, scoped, tag = 'input window, operand 3, single buffered']
    #allocation4 [shape = 's32[2]{0}', space=sflag, size = 0x8, scoped, tag = 'scoped memory for decoder_forward.15']
    #allocation5 [shape = 'u8[512]{0}', space=vmem, size = 0x400, scoped, tag = 'input window, operand 4, single buffered']
    #allocation6 [shape = 's32[1]{0}', space=sflag, size = 0x4, scoped, tag = 'scoped memory for decoder_forward.15']
    #allocation7 [shape = 'u8[16384]{0}', space=vmem, size = 0x4000, scoped, tag = 'input window, operand 5, single buffered']
    #allocation8 [shape = 'u8[512]{0}', space=vmem, size = 0x400, scoped, tag = 'input window, operand 6, single buffered']
    #allocation9 [shape = 's32[1]{0}', space=sflag, size = 0x4, scoped, tag = 'scoped memory for decoder_forward.15']
    %12 = vsyncpa [#allocation4], 0
    %13 = vsyncpa [#allocation6], 0
    %14 = vsyncpa [#allocation9], 0
    loop: start=0, step=1, limit=4
    $region2: #{decoder_forward.15} parent=1 // loop_pre_header
      _
    $region3: #{decoder_forward.15} parent=1 // loop_header
      %s16 = sphi 0, %s20
      %p17 = scmp.ge.s32.totalorder %s16, 4
      %s23 = sphi 0, %s35
      %s24 = sphi 0, %s31
      %s25 = sphi 0, %s23
      %s26 = sphi 0, %s24
      %s27 = sphi 0, %s25
      %s28 = sphi 0, %s26
      %s40 = sphi 0, %s42
      %s43 = sphi 0, %s40
      %s44 = sphi 0, %s43
      %s60 = sphi 0, %s44
      %s74 = sphi 0, %s76
      %s77 = sphi 0, %s74
      %s78 = sphi 0, %s77
      %s94 = sphi 0, %s78
      %s108 = sphi 0, %s110
      %s111 = sphi 0, %s108
      %s112 = sphi 0, %s111
      %s128 = sphi 0, %s112
      %s132 = sphi 0, %s132
      %s134 = sphi 0, %s132
      %s135 = sphi 0, %s134
      %s149 = sphi 0, %s135
      %s153 = sphi 0, %s153
      %s155 = sphi 0, %s153
      %s156 = sphi 0, %s155
      %s170 = sphi 0, %s156
      %s174 = sphi 0, %s174
      %s176 = sphi 0, %s174
      %s177 = sphi 0, %s176
      %s191 = sphi 0, %s177
      %s195 = sphi 0, %s195
      %s197 = sphi 0, %s195
      %s198 = sphi 0, %s197
      %s212 = sphi 0, %s198
      %s220 = sphi 0, %s222
      %s223 = sphi 0, %s220
      %s224 = sphi 0, %s223
      %s240 = sphi 0, %s224
    $region4: #{decoder_forward.15} parent=1 // loop_header_branch
      %19 = sbr.rel (%p17) target = $region8
    $region5: #{decoder_forward.15} parent=1 // loop_body
      %s21 = ssub.s32 %s16, 1
      %s22 = ssub.s32 %s16, 2
      %s29 = sadd.s32 1, %s24
      %p30 = scmp.ge.s32.totalorder %s29, 1
      %s31 = scalar_select %p30, 0, %s29
      %s32 = sadd.s32 1, %s23
      %s33 = scalar_select %p30, %s32, %s23
      %p34 = scmp.ge.s32.totalorder %s33, 2
      %s35 = scalar_select %p34, 0, %s33
      %s36 = ssub.s32 %s23, %s35
      %s37 = ssub.s32 %s24, %s31
      %s38 = sor.u32 %s36, %s37
      %p39 = scmp.eq.s32.totalorder %s38, 0
      %s41 = sadd.s32 %s40, 1
      %s42 = scalar_select %p39, %s40, %s41
      %p45 = pneg %p39
      %p46 = scmp.eq.s32.totalorder %s16, 1
      %p47 = por %p45, %p46
      %p48 = scmp.ne.s32.totalorder %s40, %s43
      %p49 = scmp.eq.s32.totalorder %s16, 0
      %p50 = por %p48, %p49
      %p51 = scmp.ne.s32.totalorder %s40, %s43
      %p52 = scmp.eq.s32.totalorder %s21, 1
      %p53 = por %p51, %p52
      %p54 = scmp.ne.s32.totalorder %s43, %s44
      %p55 = scmp.eq.s32.totalorder %s21, 0
      %p56 = por %p54, %p55
      %p57 = scmp.ne.s32.totalorder %s43, %s44
      %p58 = scmp.eq.s32.totalorder %s22, 1
      %p59 = por %p57, %p58
      %p61 = scmp.ne.s32.totalorder %s44, %s60
      %p62 = scmp.eq.s32.totalorder %s22, 0
      %p63 = por %p61, %p62
      %s64 = ssub.s32 %s24, 1
      %p65 = scmp.gt.s32.totalorder %s64, 0
      %s66 = scalar_select %p65, %s64, 0
      %s67 = ssub.s32 %s31, 1
      %p68 = scmp.gt.s32.totalorder %s67, 0
      %s69 = scalar_select %p68, %s67, 0
      %s70 = ssub.s32 %s23, %s35
      %s71 = ssub.s32 %s66, %s69
      %s72 = sor.u32 %s70, %s71
      %p73 = scmp.eq.s32.totalorder %s72, 0
      %s75 = sadd.s32 %s74, 1
      %s76 = scalar_select %p73, %s74, %s75
      %p79 = pneg %p73
      %p80 = scmp.eq.s32.totalorder %s16, 1
      %p81 = por %p79, %p80
      %p82 = scmp.ne.s32.totalorder %s74, %s77
      %p83 = scmp.eq.s32.totalorder %s16, 0
      %p84 = por %p82, %p83
      %p85 = scmp.ne.s32.totalorder %s74, %s77
      %p86 = scmp.eq.s32.totalorder %s21, 1
      %p87 = por %p85, %p86
      %p88 = scmp.ne.s32.totalorder %s77, %s78
      %p89 = scmp.eq.s32.totalorder %s21, 0
      %p90 = por %p88, %p89
      %p91 = scmp.ne.s32.totalorder %s77, %s78
      %p92 = scmp.eq.s32.totalorder %s22, 1
      %p93 = por %p91, %p92
      %p95 = scmp.ne.s32.totalorder %s78, %s94
      %p96 = scmp.eq.s32.totalorder %s22, 0
      %p97 = por %p95, %p96
      %s98 = sadd.s32 %s24, 1
      %p99 = scmp.lt.s32.totalorder %s98, 0
      %s100 = scalar_select %p99, %s98, 0
      %s101 = sadd.s32 %s31, 1
      %p102 = scmp.lt.s32.totalorder %s101, 0
      %s103 = scalar_select %p102, %s101, 0
      %s104 = ssub.s32 %s23, %s35
      %s105 = ssub.s32 %s100, %s103
      %s106 = sor.u32 %s104, %s105
      %p107 = scmp.eq.s32.totalorder %s106, 0
      %s109 = sadd.s32 %s108, 1
      %s110 = scalar_select %p107, %s108, %s109
      %p113 = pneg %p107
      %p114 = scmp.eq.s32.totalorder %s16, 1
      %p115 = por %p113, %p114
      %p116 = scmp.ne.s32.totalorder %s108, %s111
      %p117 = scmp.eq.s32.totalorder %s16, 0
      %p118 = por %p116, %p117
      %p119 = scmp.ne.s32.totalorder %s108, %s111
      %p120 = scmp.eq.s32.totalorder %s21, 1
      %p121 = por %p119, %p120
      %p122 = scmp.ne.s32.totalorder %s111, %s112
      %p123 = scmp.eq.s32.totalorder %s21, 0
      %p124 = por %p122, %p123
      %p125 = scmp.ne.s32.totalorder %s111, %s112
      %p126 = scmp.eq.s32.totalorder %s22, 1
      %p127 = por %p125, %p126
      %p129 = scmp.ne.s32.totalorder %s112, %s128
      %p130 = scmp.eq.s32.totalorder %s22, 0
      %p131 = por %p129, %p130
      %s133 = sadd.s32 %s132, 1
      %p136 = scmp.eq.s32.totalorder %s16, 1
      %p137 = scmp.ne.s32.totalorder %s132, %s134
      %p138 = scmp.eq.s32.totalorder %s16, 0
      %p139 = por %p137, %p138
      %p140 = scmp.ne.s32.totalorder %s132, %s134
      %p141 = scmp.eq.s32.totalorder %s21, 1
      %p142 = por %p140, %p141
      %p143 = scmp.ne.s32.totalorder %s134, %s135
      %p144 = scmp.eq.s32.totalorder %s21, 0
      %p145 = por %p143, %p144
      %p146 = scmp.ne.s32.totalorder %s134, %s135
      %p147 = scmp.eq.s32.totalorder %s22, 1
      %p148 = por %p146, %p147
      %p150 = scmp.ne.s32.totalorder %s135, %s149
      %p151 = scmp.eq.s32.totalorder %s22, 0
      %p152 = por %p150, %p151
      %s154 = sadd.s32 %s153, 1
      %p157 = scmp.eq.s32.totalorder %s16, 1
      %p158 = scmp.ne.s32.totalorder %s153, %s155
      %p159 = scmp.eq.s32.totalorder %s16, 0
      %p160 = por %p158, %p159
      %p161 = scmp.ne.s32.totalorder %s153, %s155
      %p162 = scmp.eq.s32.totalorder %s21, 1
      %p163 = por %p161, %p162
      %p164 = scmp.ne.s32.totalorder %s155, %s156
      %p165 = scmp.eq.s32.totalorder %s21, 0
      %p166 = por %p164, %p165
      %p167 = scmp.ne.s32.totalorder %s155, %s156
      %p168 = scmp.eq.s32.totalorder %s22, 1
      %p169 = por %p167, %p168
      %p171 = scmp.ne.s32.totalorder %s156, %s170
      %p172 = scmp.eq.s32.totalorder %s22, 0
      %p173 = por %p171, %p172
      %s175 = sadd.s32 %s174, 1
      %p178 = scmp.eq.s32.totalorder %s16, 1
      %p179 = scmp.ne.s32.totalorder %s174, %s176
      %p180 = scmp.eq.s32.totalorder %s16, 0
      %p181 = por %p179, %p180
      %p182 = scmp.ne.s32.totalorder %s174, %s176
      %p183 = scmp.eq.s32.totalorder %s21, 1
      %p184 = por %p182, %p183
      %p185 = scmp.ne.s32.totalorder %s176, %s177
      %p186 = scmp.eq.s32.totalorder %s21, 0
      %p187 = por %p185, %p186
      %p188 = scmp.ne.s32.totalorder %s176, %s177
      %p189 = scmp.eq.s32.totalorder %s22, 1
      %p190 = por %p188, %p189
      %p192 = scmp.ne.s32.totalorder %s177, %s191
      %p193 = scmp.eq.s32.totalorder %s22, 0
      %p194 = por %p192, %p193
      %s196 = sadd.s32 %s195, 1
      %p199 = scmp.eq.s32.totalorder %s16, 1
      %p200 = scmp.ne.s32.totalorder %s195, %s197
      %p201 = scmp.eq.s32.totalorder %s16, 0
      %p202 = por %p200, %p201
      %p203 = scmp.ne.s32.totalorder %s195, %s197
      %p204 = scmp.eq.s32.totalorder %s21, 1
      %p205 = por %p203, %p204
      %p206 = scmp.ne.s32.totalorder %s197, %s198
      %p207 = scmp.eq.s32.totalorder %s21, 0
      %p208 = por %p206, %p207
      %p209 = scmp.ne.s32.totalorder %s197, %s198
      %p210 = scmp.eq.s32.totalorder %s22, 1
      %p211 = por %p209, %p210
      %p213 = scmp.ne.s32.totalorder %s198, %s212
      %p214 = scmp.eq.s32.totalorder %s22, 0
      %p215 = por %p213, %p214
      %s216 = ssub.s32 %s23, %s35
      %s217 = ssub.s32 %s24, %s31
      %s218 = sor.u32 %s216, %s217
      %p219 = scmp.eq.s32.totalorder %s218, 0
      %s221 = sadd.s32 %s220, 1
      %s222 = scalar_select %p219, %s220, %s221
      %p225 = pneg %p219
      %p226 = scmp.eq.s32.totalorder %s16, 1
      %p227 = por %p225, %p226
      %p228 = scmp.ne.s32.totalorder %s220, %s223
      %p229 = scmp.eq.s32.totalorder %s16, 0
      %p230 = por %p228, %p229
      %p231 = scmp.ne.s32.totalorder %s220, %s223
      %p232 = scmp.eq.s32.totalorder %s21, 1
      %p233 = por %p231, %p232
      %p234 = scmp.ne.s32.totalorder %s223, %s224
      %p235 = scmp.eq.s32.totalorder %s21, 0
      %p236 = por %p234, %p235
      %p237 = scmp.ne.s32.totalorder %s223, %s224
      %p238 = scmp.eq.s32.totalorder %s22, 1
      %p239 = por %p237, %p238
      %p241 = scmp.ne.s32.totalorder %s224, %s240
      %p242 = scmp.eq.s32.totalorder %s22, 0
      %p243 = por %p241, %p242
      %p244 = scmp.le.s32.totalorder 1, %s16
      %p245 = scmp.lt.s32.totalorder %s16, 3
      %p246 = pnand %p244, %p245
      %p247 = pneg %p246
      // Predicated region
      $region9: #{decoder_forward.15} parent=5 // pred_check
        _
      $region10: #{decoder_forward.15} parent=5 // pred_check_branch
        %249 = sbr.rel (%p246) target = $region12
      $region11: #{decoder_forward.15} parent=5 // pred_region
        %s250 = ssub.s32 %s16, 1
        // Predicated region
        $region13: #{decoder_forward.15} parent=11 // pred_check
          %p251 = pneg %p145
        $region14: #{decoder_forward.15} parent=11 // pred_check_branch
          %253 = sbr.rel (%p251) target = $region16
        $region15: #{decoder_forward.15} parent=11 // pred_region
          %255 = vsyncadd [#allocation4], 0
          %s256 = sshll.u32 %s3, 4
          %s257 = int_to_ptr.hbm [resolvable:$true] %s256
          %s258 = sshll.u32 [#allocation3], 4
          %s259 = int_to_ptr.vmem [resolvable:$true] %s258
          %264 = dma.hbm_to_vmem [thread:$0]  %s257, 1536, %s259, [#allocation4], 128, 128, 8
        $region16: #{decoder_forward.15} parent=11 // pred_fallthru
          _
        // Predicated region
        $region17: #{decoder_forward.15} parent=11 // pred_check
          %p265 = pneg %p166
        $region18: #{decoder_forward.15} parent=11 // pred_check_branch
          %267 = sbr.rel (%p265) target = $region20
        $region19: #{decoder_forward.15} parent=11 // pred_region
          %269 = vsyncadd [#allocation6], 0
          %s271 = sshll.u32 %s4, 4
          %s272 = int_to_ptr.hbm [resolvable:$true] %s271
          %s273 = sshll.u32 [#allocation5], 4
          %s274 = int_to_ptr.vmem [resolvable:$true] %s273
          %276 = dma.hbm_to_vmem [thread:$0]  %s272, 16, %s274, [#allocation6]
        $region20: #{decoder_forward.15} parent=11 // pred_fallthru
          _
        // Predicated region
        $region21: #{decoder_forward.15} parent=11 // pred_check
          %p277 = pneg %p187
        $region22: #{decoder_forward.15} parent=11 // pred_check_branch
          %279 = sbr.rel (%p277) target = $region24
        $region23: #{decoder_forward.15} parent=11 // pred_region
          %281 = vsyncadd [#allocation6], 0
          %s282 = sshll.u32 %s5, 4
          %s283 = int_to_ptr.hbm [resolvable:$true] %s282
          %s284 = sshll.u32 [#allocation7], 4
          %s285 = int_to_ptr.vmem [resolvable:$true] %s284
          %290 = dma.hbm_to_vmem [thread:$0]  %s283, 512, %s285, [#allocation6], 128, 128, 8
        $region24: #{decoder_forward.15} parent=11 // pred_fallthru
          _
        // Predicated region
        $region25: #{decoder_forward.15} parent=11 // pred_check
          %p291 = pneg %p208
        $region26: #{decoder_forward.15} parent=11 // pred_check_branch
          %293 = sbr.rel (%p291) target = $region28
        $region27: #{decoder_forward.15} parent=11 // pred_region
          %295 = vsyncadd [#allocation9], 0
          %s297 = sshll.u32 %s6, 4
          %s298 = int_to_ptr.hbm [resolvable:$true] %s297
          %s299 = sshll.u32 [#allocation8], 4
          %s300 = int_to_ptr.vmem [resolvable:$true] %s299
          %302 = dma.hbm_to_vmem [thread:$0]  %s298, 16, %s300, [#allocation9]
        $region28: #{decoder_forward.15} parent=11 // pred_fallthru
          _
      $region12: #{decoder_forward.15} parent=5 // pred_fallthru
        _
      %p303 = scmp.lt.s32.totalorder %s16, 2
      // Predicated region
      $region29: #{decoder_forward.15} parent=5 // pred_check
        %p304 = pneg %p303
      $region30: #{decoder_forward.15} parent=5 // pred_check_branch
        %306 = sbr.rel (%p304) target = $region32
      $region31: #{decoder_forward.15} parent=5 // pred_region
        // Predicated region
        $region33: #{decoder_forward.15} parent=31 // pred_check
          %p307 = pneg %p50
        $region34: #{decoder_forward.15} parent=31 // pred_check_branch
          %309 = sbr.rel (%p307) target = $region36
        $region35: #{decoder_forward.15} parent=31 // pred_region
          %p310 = scmp.lt.s32.totalorder %s23, 1
          %s311 = scalar_select %p310, %s23, 1
          %p312 = scmp.lt.s32.totalorder %s24, 0
          %s313 = scalar_select %p312, %s24, 0
          %s314 = sadd.s32 %s313, %s311
          %s315 = smul.addr %s314, 8
          %s316 = scalar_lea.vmem %s0, %s315
        $region36: #{decoder_forward.15} parent=31 // pred_fallthru
          _
        // Predicated region
        $region37: #{decoder_forward.15} parent=31 // pred_check
          %p317 = pneg %p84
        $region38: #{decoder_forward.15} parent=31 // pred_check_branch
          %319 = sbr.rel (%p317) target = $region40
        $region39: #{decoder_forward.15} parent=31 // pred_region
          %s320 = ssub.s32 %s24, 1
          %p321 = scmp.gt.s32.totalorder %s320, 0
          %s322 = scalar_select %p321, %s320, 0
          %p323 = scmp.lt.s32.totalorder %s23, 1
          %s324 = scalar_select %p323, %s23, 1
          %p325 = scmp.lt.s32.totalorder %s322, 0
          %s326 = scalar_select %p325, %s322, 0
          %s327 = sadd.s32 %s326, %s324
          %s328 = smul.addr %s327, 8
          %s329 = scalar_lea.vmem %s1, %s328
          %s330 = ssub.s32 %s24, 1
          %p331 = scmp.gt.s32.totalorder %s330, 0
          %s332 = scalar_select %p331, %s330, 0
        $region40: #{decoder_forward.15} parent=31 // pred_fallthru
          _
        // Predicated region
        $region41: #{decoder_forward.15} parent=31 // pred_check
          %p333 = pneg %p118
        $region42: #{decoder_forward.15} parent=31 // pred_check_branch
          %335 = sbr.rel (%p333) target = $region44
        $region43: #{decoder_forward.15} parent=31 // pred_region
          %s336 = sadd.s32 %s24, 1
          %p337 = scmp.lt.s32.totalorder %s336, 0
          %s338 = scalar_select %p337, %s336, 0
          %p339 = scmp.lt.s32.totalorder %s23, 1
          %s340 = scalar_select %p339, %s23, 1
          %p341 = scmp.lt.s32.totalorder %s338, 0
          %s342 = scalar_select %p341, %s338, 0
          %s343 = sadd.s32 %s342, %s340
          %s344 = smul.addr %s343, 8
          %s345 = scalar_lea.vmem %s2, %s344
          %s346 = sadd.s32 %s24, 1
          %p347 = scmp.lt.s32.totalorder %s346, 0
          %s348 = scalar_select %p347, %s346, 0
        $region44: #{decoder_forward.15} parent=31 // pred_fallthru
          _
      $region32: #{decoder_forward.15} parent=5 // pred_fallthru
        _
      %p349 = scmp.le.s32.totalorder 1, %s16
      %p350 = scmp.lt.s32.totalorder %s16, 3
      %p351 = pnand %p349, %p350
      %p352 = pneg %p351
      // Predicated region
      $region45: #{decoder_forward.15} parent=5 // pred_check
        _
      $region46: #{decoder_forward.15} parent=5 // pred_check_branch
        %354 = sbr.rel (%p351) target = $region48
      $region47: #{decoder_forward.15} parent=5 // pred_region
        %s355 = ssub.s32 %s16, 1
        // Predicated region
        $region49: #{decoder_forward.15} parent=47 // pred_check
          %p356 = pneg %p145
        $region50: #{decoder_forward.15} parent=47 // pred_check_branch
          %358 = sbr.rel (%p356) target = $region52
        $region51: #{decoder_forward.15} parent=47 // pred_region
          %360 = dma.done [#allocation4], 1536
        $region52: #{decoder_forward.15} parent=47 // pred_fallthru
          _
        // Predicated region
        $region53: #{decoder_forward.15} parent=47 // pred_check
          %p361 = pneg %p166
        $region54: #{decoder_forward.15} parent=47 // pred_check_branch
          %363 = sbr.rel (%p361) target = $region56
        $region55: #{decoder_forward.15} parent=47 // pred_region
          %365 = dma.done [#allocation6], 16
        $region56: #{decoder_forward.15} parent=47 // pred_fallthru
          _
        // Predicated region
        $region57: #{decoder_forward.15} parent=47 // pred_check
          %p366 = pneg %p187
        $region58: #{decoder_forward.15} parent=47 // pred_check_branch
          %368 = sbr.rel (%p366) target = $region60
        $region59: #{decoder_forward.15} parent=47 // pred_region
          %370 = dma.done [#allocation6], 512
        $region60: #{decoder_forward.15} parent=47 // pred_fallthru
          _
        // Predicated region
        $region61: #{decoder_forward.15} parent=47 // pred_check
          %p371 = pneg %p208
        $region62: #{decoder_forward.15} parent=47 // pred_check_branch
          %373 = sbr.rel (%p371) target = $region64
        $region63: #{decoder_forward.15} parent=47 // pred_region
          %375 = dma.done [#allocation9], 16
        $region64: #{decoder_forward.15} parent=47 // pred_fallthru
          _
        %p376 = scmp.lt.s32.totalorder %s25, 1
        %s377 = scalar_select %p376, %s25, 1
        %p378 = scmp.lt.s32.totalorder %s26, 0
        %s379 = scalar_select %p378, %s26, 0
        %s380 = sadd.s32 %s379, %s377
        %s381 = smul.addr %s380, 8
        %s382 = scalar_lea.vmem %s0, %s381
        %p383 = pneg %p56
        %p384 = pneg %p53
        %s385 = ssub.s32 %s26, 1
        %p386 = scmp.gt.s32.totalorder %s385, 0
        %s387 = scalar_select %p386, %s385, 0
        %p388 = scmp.lt.s32.totalorder %s25, 1
        %s389 = scalar_select %p388, %s25, 1
        %p390 = scmp.lt.s32.totalorder %s387, 0
        %s391 = scalar_select %p390, %s387, 0
        %s392 = sadd.s32 %s391, %s389
        %s393 = smul.addr %s392, 8
        %s394 = scalar_lea.vmem %s1, %s393
        %p395 = pneg %p90
        %p396 = pneg %p87
        %s397 = sadd.s32 %s26, 1
        %p398 = scmp.lt.s32.totalorder %s397, 0
        %s399 = scalar_select %p398, %s397, 0
        %p400 = scmp.lt.s32.totalorder %s25, 1
        %s401 = scalar_select %p400, %s25, 1
        %p402 = scmp.lt.s32.totalorder %s399, 0
        %s403 = scalar_select %p402, %s399, 0
        %s404 = sadd.s32 %s403, %s401
        %s405 = smul.addr %s404, 8
        %s406 = scalar_lea.vmem %s2, %s405
        %p407 = pneg %p124
        %p408 = pneg %p121
        %p409 = pneg %p145
        %p410 = pneg %p142
        %p411 = pneg %p166
        %p412 = pneg %p163
        %p413 = pneg %p187
        %p414 = pneg %p184
        %p415 = pneg %p208
        %p416 = pneg %p205
        %p417 = pneg %p236
        %p418 = pneg %p233
        %p419 = scmp.lt.s32.totalorder %s25, 1
        %s420 = scalar_select %p419, %s25, 1
        %p421 = scmp.lt.s32.totalorder %s26, 0
        %s422 = scalar_select %p421, %s26, 0
        %s423 = sadd.s32 %s422, %s420
        %s424 = smul.addr %s423, 8
        %s425 = scalar_lea.vmem %s7, %s424
        %p426 = scmp.lt.s32.totalorder %s25, 1
        %s427 = scalar_select %p426, %s25, 1
        %p428 = scmp.lt.s32.totalorder %s26, 0
        %s429 = scalar_select %p428, %s26, 0
        %s430 = sadd.s32 %s429, %s427
        %s431 = smul.addr %s430, 8
        %s432 = scalar_lea.vmem %s0, %s431
        %s433 = ssub.s32 %s26, 1
        %p434 = scmp.gt.s32.totalorder %s433, 0
        %s435 = scalar_select %p434, %s433, 0
        %p436 = scmp.lt.s32.totalorder %s25, 1
        %s437 = scalar_select %p436, %s25, 1
        %p438 = scmp.lt.s32.totalorder %s435, 0
        %s439 = scalar_select %p438, %s435, 0
        %s440 = sadd.s32 %s439, %s437
        %s441 = smul.addr %s440, 8
        %s442 = scalar_lea.vmem %s1, %s441
        %s443 = ssub.s32 %s26, 1
        %p444 = scmp.gt.s32.totalorder %s443, 0
        %s445 = scalar_select %p444, %s443, 0
        %s446 = sadd.s32 %s26, 1
        %p447 = scmp.lt.s32.totalorder %s446, 0
        %s448 = scalar_select %p447, %s446, 0
        %p449 = scmp.lt.s32.totalorder %s25, 1
        %s450 = scalar_select %p449, %s25, 1
        %p451 = scmp.lt.s32.totalorder %s448, 0
        %s452 = scalar_select %p451, %s448, 0
        %s453 = sadd.s32 %s452, %s450
        %s454 = smul.addr %s453, 8
        %s455 = scalar_lea.vmem %s2, %s454
        %s456 = sadd.s32 %s26, 1
        %p457 = scmp.lt.s32.totalorder %s456, 0
        %s458 = scalar_select %p457, %s456, 0
        %p459 = scmp.lt.s32.totalorder %s25, 1
        %s460 = scalar_select %p459, %s25, 1
        %p461 = scmp.lt.s32.totalorder %s26, 0
        %s462 = scalar_select %p461, %s26, 0
        %s463 = sadd.s32 %s462, %s460
        %s464 = smul.addr %s463, 8
        %s465 = scalar_lea.vmem %s7, %s464
        %v466 = vld [vmem:[%s432] sm:$0xff]
        %v467 = vmax.f32 %v466, 0.0
        %vm468 = vcmask 261120
        %469 = vst.msk [vmem:[#allocation2 + $0x1] sm:$0xff] %vm468, %v467
        %vm470 = vcmask 253952
        %471 = vst.msk [vmem:[#allocation2] sm:$0x1] %vm470, 0.0
        %472 = vst.msk [vmem:[#allocation2 + $0x9] sm:$0x1] %vm470, 0.0
        %p473 = scmp.gt.s32.totalorder %s26, 0
        // Predicated region
        $region65: #{decoder_forward.15} parent=47 // pred_check
          %p474 = pneg %p473
        $region66: #{decoder_forward.15} parent=47 // pred_check_branch
          %476 = sbr.rel (%p474) target = $region68
        $region67: #{decoder_forward.15} parent=47 // pred_region
          %v477 = vld [vmem:[%s442 + $0x7] sm:$0x1]
          %v478 = vmax.f32 %v477, 0.0
          %479 = vst.msk [vmem:[#allocation2] sm:$0x1] %vm470, %v478
        $region68: #{decoder_forward.15} parent=47 // pred_fallthru
          _
        %p480 = scmp.lt.s32.totalorder %s26, 0
        // Predicated region
        $region69: #{decoder_forward.15} parent=47 // pred_check
          %p481 = pneg %p480
        $region70: #{decoder_forward.15} parent=47 // pred_check_branch
          %483 = sbr.rel (%p481) target = $region72
        $region71: #{decoder_forward.15} parent=47 // pred_region
          %v484 = vld [vmem:[%s455] sm:$0x1]
          %v485 = vmax.f32 %v484, 0.0
          %486 = vst.msk [vmem:[#allocation2 + $0x9] sm:$0x1] %vm470, %v485
        $region72: #{decoder_forward.15} parent=47 // pred_fallthru
          _
        %v487 = vld [vmem:[#allocation2] sm:$0xff]
        %v488 = vld [vmem:[#allocation2 + $0x8] sm:$0x3]
        %v489 = vld [vmem:[#allocation3] sm:$0xff]
        %v490 = vld [vmem:[#allocation3 + $0x8] sm:$0xff]
        %v491 = vld [vmem:[#allocation3 + $0x10] sm:$0xff]
        %v492 = vld [vmem:[#allocation3 + $0x18] sm:$0xff]
        %s493 = scalar_lea.vmem [#allocation3], 32
        %v494 = vld [vmem:[%s493] sm:$0xff]
        %v495 = vld [vmem:[%s493 + $0x8] sm:$0xff]
        %v496 = vld [vmem:[%s493 + $0x10] sm:$0xff]
        %v497 = vld [vmem:[%s493 + $0x18] sm:$0xff]
        %vm500 = vcmask 1046528
        %v501 = vrot.slane %v487, 1
        %v502 = vrot.slane %v488, 1
        %v503 = vsel %vm500, %v501, %v502
        %v504 = vsel %vm468, %v503, 0
        %506 = vmatpush.msra.mxu0 0.0
        %507 = vmatpush.msra.mxu0 0.0
        %508 = vmatpush.msra.mxu0 0.0
        %509 = vmatpush.msra.mxu0 0.0
        %510 = vmatpush.msra.mxu0 0.0
        %511 = vmatpush.msra.mxu0 0.0
        %512 = vmatpush.msra.mxu0 0.0
        %513 = vmatpush.msra.mxu0 0.0
        %514 = vmatpush.msra.mxu0 0.0
        %515 = vmatpush.msra.mxu0 0.0
        %516 = vmatpush.msra.mxu0 0.0
        %517 = vmatpush.msra.mxu0 0.0
        %518 = vmatpush.msra.mxu0 %v497
        %519 = vmatpush.msra.mxu0 %v496
        %520 = vmatpush.msra.mxu0 %v495
        %521 = vmatpush.msra.mxu0 %v494
        %522 = vmatmul.f32.gmra.mxu0 %v504
        %v523 = vpop.f32.mrf.mxu0
        %v524 = vadd.f32 0.0, %v523
        %525 = vdwg.mxu0
        %v526 = vsel %vm468, %v487, 0
        %528 = vmatpush.msra.mxu0 0.0
        %529 = vmatpush.msra.mxu0 0.0
        %530 = vmatpush.msra.mxu0 0.0
        %531 = vmatpush.msra.mxu0 0.0
        %532 = vmatpush.msra.mxu0 0.0
        %533 = vmatpush.msra.mxu0 0.0
        %534 = vmatpush.msra.mxu0 0.0
        %535 = vmatpush.msra.mxu0 0.0
        %536 = vmatpush.msra.mxu0 0.0
        %537 = vmatpush.msra.mxu0 0.0
        %538 = vmatpush.msra.mxu0 0.0
        %539 = vmatpush.msra.mxu0 0.0
        %540 = vmatpush.msra.mxu0 %v492
        %541 = vmatpush.msra.mxu0 %v491
        %542 = vmatpush.msra.mxu0 %v490
        %543 = vmatpush.msra.mxu0 %v489
        %544 = vmatmul.f32.gmra.mxu0 %v526
        %v545 = vpop.f32.mrf.mxu0
        %v546 = vadd.f32 %v524, %v545
        %547 = vdwg.mxu0
        %s548 = scalar_lea.vmem [#allocation3], 64
        %v549 = vld [vmem:[%s548] sm:$0xff]
        %v550 = vld [vmem:[%s548 + $0x8] sm:$0xff]
        %v551 = vld [vmem:[%s548 + $0x10] sm:$0xff]
        %v552 = vld [vmem:[%s548 + $0x18] sm:$0xff]
        %vm553 = vcmask 1045504
        %v554 = vrot.slane %v487, 2
        %v555 = vrot.slane %v488, 2
        %v556 = vsel %vm553, %v554, %v555
        %v557 = vsel %vm468, %v556, 0
        %559 = vmatpush.msra.mxu0 0.0
        %560 = vmatpush.msra.mxu0 0.0
        %561 = vmatpush.msra.mxu0 0.0
        %562 = vmatpush.msra.mxu0 0.0
        %563 = vmatpush.msra.mxu0 0.0
        %564 = vmatpush.msra.mxu0 0.0
        %565 = vmatpush.msra.mxu0 0.0
        %566 = vmatpush.msra.mxu0 0.0
        %567 = vmatpush.msra.mxu0 0.0
        %568 = vmatpush.msra.mxu0 0.0
        %569 = vmatpush.msra.mxu0 0.0
        %570 = vmatpush.msra.mxu0 0.0
        %571 = vmatpush.msra.mxu0 %v552
        %572 = vmatpush.msra.mxu0 %v551
        %573 = vmatpush.msra.mxu0 %v550
        %574 = vmatpush.msra.mxu0 %v549
        %575 = vmatmul.f32.gmra.mxu0 %v557
        %v576 = vpop.f32.mrf.mxu0
        %v577 = vadd.f32 0.0, %v576
        %578 = vdwg.mxu0
        %v579 = vadd.f32 %v546, %v577
        %v580 = vld [vmem:[#allocation5] sm:$0x1]
        %v582 = vperm.slane %v580, 0
        %v584 = vadd.f32 %v579, %v582
        %v585 = vmax.f32 %v584, 0.0
        %v586 = vld [vmem:[#allocation7] sm:$0xff]
        %v587 = vld [vmem:[#allocation7 + $0x8] sm:$0xff]
        %v588 = vld [vmem:[#allocation7 + $0x10] sm:$0xff]
        %v589 = vld [vmem:[#allocation7 + $0x18] sm:$0xff]
        %v590 = vld [vmem:[#allocation8] sm:$0x1]
        %v592 = vperm.slane %v590, 0
        %v595 = vsel %vm468, %v585, 0
        %597 = vmatpush.msra.mxu0 0.0
        %598 = vmatpush.msra.mxu0 0.0
        %599 = vmatpush.msra.mxu0 0.0
        %600 = vmatpush.msra.mxu0 0.0
        %601 = vmatpush.msra.mxu0 0.0
        %602 = vmatpush.msra.mxu0 0.0
        %603 = vmatpush.msra.mxu0 0.0
        %604 = vmatpush.msra.mxu0 0.0
        %605 = vmatpush.msra.mxu0 0.0
        %606 = vmatpush.msra.mxu0 0.0
        %607 = vmatpush.msra.mxu0 0.0
        %608 = vmatpush.msra.mxu0 0.0
        %609 = vmatpush.msra.mxu0 %v589
        %610 = vmatpush.msra.mxu0 %v588
        %611 = vmatpush.msra.mxu0 %v587
        %612 = vmatpush.msra.mxu0 %v586
        %613 = vmatmul.f32.gmra.mxu0 %v595
        %v614 = vpop.f32.mrf.mxu0
        %v615 = vadd.f32 %v592, %v614
        %616 = vdwg.mxu0
        %v617 = vadd.f32 %v615, %v466
        %618 = vst.msk [vmem:[%s465] sm:$0xff] %vm468, %v617
        %p619 = scmp.lt.s32.totalorder %s25, 1
        %s620 = scalar_select %p619, %s25, 1
        %p621 = scmp.lt.s32.totalorder %s26, 0
        %s622 = scalar_select %p621, %s26, 0
        %s623 = sadd.s32 %s622, %s620
        %s624 = smul.addr %s623, 8
        %s625 = scalar_lea.vmem %s7, %s624
        // Predicated region
        $region73: #{decoder_forward.15} parent=47 // pred_check
          %p626 = pneg %p233
        $region74: #{decoder_forward.15} parent=47 // pred_check_branch
          %628 = sbr.rel (%p626) target = $region76
        $region75: #{decoder_forward.15} parent=47 // pred_region
          _
        $region76: #{decoder_forward.15} parent=47 // pred_fallthru
          _
      $region48: #{decoder_forward.15} parent=5 // pred_fallthru
        _
      %p629 = scmp.le.s32.totalorder 2, %s16
      // Predicated region
      $region77: #{decoder_forward.15} parent=5 // pred_check
        %p630 = pneg %p629
      $region78: #{decoder_forward.15} parent=5 // pred_check_branch
        %632 = sbr.rel (%p630) target = $region80
      $region79: #{decoder_forward.15} parent=5 // pred_region
        %s633 = ssub.s32 %s16, 2
        // Predicated region
        $region81: #{decoder_forward.15} parent=79 // pred_check
          %p634 = pneg %p239
        $region82: #{decoder_forward.15} parent=79 // pred_check_branch
          %636 = sbr.rel (%p634) target = $region84
        $region83: #{decoder_forward.15} parent=79 // pred_region
          %p637 = scmp.lt.s32.totalorder %s27, 1
          %s638 = scalar_select %p637, %s27, 1
          %p639 = scmp.lt.s32.totalorder %s28, 0
          %s640 = scalar_select %p639, %s28, 0
          %s641 = sadd.s32 %s640, %s638
          %s642 = smul.addr %s641, 8
          %s643 = scalar_lea.vmem %s7, %s642
        $region84: #{decoder_forward.15} parent=79 // pred_fallthru
          _
      $region80: #{decoder_forward.15} parent=5 // pred_fallthru
        _
    $region6: #{decoder_forward.15} parent=1 // loop_footer
      %s20 = sadd.s32 1, %s16
    $region7: #{decoder_forward.15} parent=1 // loop_footer_branch
      %15 = sbr.rel target = $region3
    $region8: #{decoder_forward.15} parent=1 // loop_exit
      _
    %644 = vsyncpa [#allocation4], 1
    %s645 = scalar_lea.sflag [#allocation4], 1
    %646 = vsyncpa %s645, 1
    %647 = vsyncpa [#allocation6], 1
    %648 = vsyncpa [#allocation9], 1

// kernel: decoder_forward.13
$region0: #{decoder_forward.13}
  #allocation0 [shape = 'u32[]', space=smem, size = 0x4, offset = 0x4, fixed_abs, tag = 'smem constant byte address 0x4 - core index']
  #allocation1 [shape = 'u32[72,128]{1,0:T(1,128)}', space=vmem, size = 0x9000, scoped, tag = 'internal scratch']
  #allocation2 [shape = 'f32[10,32]{1,0:T(8,128)}', space=vmem, size = 0x2000, scoped, tag = 'scratch operand']
  %s0 = inlined_call_operand.vmem [shape: f32[2,8,32], index: 0, kind: input, shape index: {}, may-alias: {0,1,2}]
  %s1 = inlined_call_operand.vmem [shape: f32[2,8,32], index: 1, kind: input, shape index: {}, may-alias: {0,1,2}]
  %s2 = inlined_call_operand.vmem [shape: f32[2,8,32], index: 2, kind: input, shape index: {}, may-alias: {0,1,2}]
  %s3 = inlined_call_operand.hbm [shape: f32[3,32,32], index: 3, kind: input, shape index: {}]
  %s4 = inlined_call_operand.vmem [shape: f32[1,32], index: 4, kind: input, shape index: {}]
  %s5 = inlined_call_operand.vmem [shape: f32[2,8,32], index: 5, kind: output, shape index: {}]
  %s6 = sld [smem:[#allocation0]]
  $region65: #{decoder_forward.13} parent=0
    _
  %s8 = ssub.s32 1, %s6
  %s9 = scalar_select 0, %s8, %s6
  $region1: #{decoder_forward.13} parent=0
    #allocation3 [shape = 'u8[49152]{0}', space=vmem, size = 0xc000, scoped, tag = 'input window, operand 3, single buffered']
    #allocation4 [shape = 's32[2]{0}', space=sflag, size = 0x8, scoped, tag = 'scoped memory for decoder_forward.13']
    %10 = vsyncpa [#allocation4], 0
    loop: start=0, step=1, limit=4
    $region2: #{decoder_forward.13} parent=1 // loop_pre_header
      _
    $region3: #{decoder_forward.13} parent=1 // loop_header
      %s12 = sphi 0, %s16
      %p13 = scmp.ge.s32.totalorder %s12, 4
      %s19 = sphi 0, %s31
      %s20 = sphi 0, %s27
      %s21 = sphi 0, %s19
      %s22 = sphi 0, %s20
      %s23 = sphi 0, %s21
      %s24 = sphi 0, %s22
      %s36 = sphi 0, %s38
      %s39 = sphi 0, %s36
      %s40 = sphi 0, %s39
      %s56 = sphi 0, %s40
      %s70 = sphi 0, %s72
      %s73 = sphi 0, %s70
      %s74 = sphi 0, %s73
      %s90 = sphi 0, %s74
      %s104 = sphi 0, %s106
      %s107 = sphi 0, %s104
      %s108 = sphi 0, %s107
      %s124 = sphi 0, %s108
      %s128 = sphi 0, %s128
      %s130 = sphi 0, %s128
      %s131 = sphi 0, %s130
      %s145 = sphi 0, %s131
      %s149 = sphi 0, %s149
      %s151 = sphi 0, %s149
      %s152 = sphi 0, %s151
      %s166 = sphi 0, %s152
      %s174 = sphi 0, %s176
      %s177 = sphi 0, %s174
      %s178 = sphi 0, %s177
      %s194 = sphi 0, %s178
    $region4: #{decoder_forward.13} parent=1 // loop_header_branch
      %15 = sbr.rel (%p13) target = $region8
    $region5: #{decoder_forward.13} parent=1 // loop_body
      %s17 = ssub.s32 %s12, 1
      %s18 = ssub.s32 %s12, 2
      %s25 = sadd.s32 1, %s20
      %p26 = scmp.ge.s32.totalorder %s25, 1
      %s27 = scalar_select %p26, 0, %s25
      %s28 = sadd.s32 1, %s19
      %s29 = scalar_select %p26, %s28, %s19
      %p30 = scmp.ge.s32.totalorder %s29, 2
      %s31 = scalar_select %p30, 0, %s29
      %s32 = ssub.s32 %s19, %s31
      %s33 = ssub.s32 %s20, %s27
      %s34 = sor.u32 %s32, %s33
      %p35 = scmp.eq.s32.totalorder %s34, 0
      %s37 = sadd.s32 %s36, 1
      %s38 = scalar_select %p35, %s36, %s37
      %p41 = pneg %p35
      %p42 = scmp.eq.s32.totalorder %s12, 1
      %p43 = por %p41, %p42
      %p44 = scmp.ne.s32.totalorder %s36, %s39
      %p45 = scmp.eq.s32.totalorder %s12, 0
      %p46 = por %p44, %p45
      %p47 = scmp.ne.s32.totalorder %s36, %s39
      %p48 = scmp.eq.s32.totalorder %s17, 1
      %p49 = por %p47, %p48
      %p50 = scmp.ne.s32.totalorder %s39, %s40
      %p51 = scmp.eq.s32.totalorder %s17, 0
      %p52 = por %p50, %p51
      %p53 = scmp.ne.s32.totalorder %s39, %s40
      %p54 = scmp.eq.s32.totalorder %s18, 1
      %p55 = por %p53, %p54
      %p57 = scmp.ne.s32.totalorder %s40, %s56
      %p58 = scmp.eq.s32.totalorder %s18, 0
      %p59 = por %p57, %p58
      %s60 = ssub.s32 %s20, 1
      %p61 = scmp.gt.s32.totalorder %s60, 0
      %s62 = scalar_select %p61, %s60, 0
      %s63 = ssub.s32 %s27, 1
      %p64 = scmp.gt.s32.totalorder %s63, 0
      %s65 = scalar_select %p64, %s63, 0
      %s66 = ssub.s32 %s19, %s31
      %s67 = ssub.s32 %s62, %s65
      %s68 = sor.u32 %s66, %s67
      %p69 = scmp.eq.s32.totalorder %s68, 0
      %s71 = sadd.s32 %s70, 1
      %s72 = scalar_select %p69, %s70, %s71
      %p75 = pneg %p69
      %p76 = scmp.eq.s32.totalorder %s12, 1
      %p77 = por %p75, %p76
      %p78 = scmp.ne.s32.totalorder %s70, %s73
      %p79 = scmp.eq.s32.totalorder %s12, 0
      %p80 = por %p78, %p79
      %p81 = scmp.ne.s32.totalorder %s70, %s73
      %p82 = scmp.eq.s32.totalorder %s17, 1
      %p83 = por %p81, %p82
      %p84 = scmp.ne.s32.totalorder %s73, %s74
      %p85 = scmp.eq.s32.totalorder %s17, 0
      %p86 = por %p84, %p85
      %p87 = scmp.ne.s32.totalorder %s73, %s74
      %p88 = scmp.eq.s32.totalorder %s18, 1
      %p89 = por %p87, %p88
      %p91 = scmp.ne.s32.totalorder %s74, %s90
      %p92 = scmp.eq.s32.totalorder %s18, 0
      %p93 = por %p91, %p92
      %s94 = sadd.s32 %s20, 1
      %p95 = scmp.lt.s32.totalorder %s94, 0
      %s96 = scalar_select %p95, %s94, 0
      %s97 = sadd.s32 %s27, 1
      %p98 = scmp.lt.s32.totalorder %s97, 0
      %s99 = scalar_select %p98, %s97, 0
      %s100 = ssub.s32 %s19, %s31
      %s101 = ssub.s32 %s96, %s99
      %s102 = sor.u32 %s100, %s101
      %p103 = scmp.eq.s32.totalorder %s102, 0
      %s105 = sadd.s32 %s104, 1
      %s106 = scalar_select %p103, %s104, %s105
      %p109 = pneg %p103
      %p110 = scmp.eq.s32.totalorder %s12, 1
      %p111 = por %p109, %p110
      %p112 = scmp.ne.s32.totalorder %s104, %s107
      %p113 = scmp.eq.s32.totalorder %s12, 0
      %p114 = por %p112, %p113
      %p115 = scmp.ne.s32.totalorder %s104, %s107
      %p116 = scmp.eq.s32.totalorder %s17, 1
      %p117 = por %p115, %p116
      %p118 = scmp.ne.s32.totalorder %s107, %s108
      %p119 = scmp.eq.s32.totalorder %s17, 0
      %p120 = por %p118, %p119
      %p121 = scmp.ne.s32.totalorder %s107, %s108
      %p122 = scmp.eq.s32.totalorder %s18, 1
      %p123 = por %p121, %p122
      %p125 = scmp.ne.s32.totalorder %s108, %s124
      %p126 = scmp.eq.s32.totalorder %s18, 0
      %p127 = por %p125, %p126
      %s129 = sadd.s32 %s128, 1
      %p132 = scmp.eq.s32.totalorder %s12, 1
      %p133 = scmp.ne.s32.totalorder %s128, %s130
      %p134 = scmp.eq.s32.totalorder %s12, 0
      %p135 = por %p133, %p134
      %p136 = scmp.ne.s32.totalorder %s128, %s130
      %p137 = scmp.eq.s32.totalorder %s17, 1
      %p138 = por %p136, %p137
      %p139 = scmp.ne.s32.totalorder %s130, %s131
      %p140 = scmp.eq.s32.totalorder %s17, 0
      %p141 = por %p139, %p140
      %p142 = scmp.ne.s32.totalorder %s130, %s131
      %p143 = scmp.eq.s32.totalorder %s18, 1
      %p144 = por %p142, %p143
      %p146 = scmp.ne.s32.totalorder %s131, %s145
      %p147 = scmp.eq.s32.totalorder %s18, 0
      %p148 = por %p146, %p147
      %s150 = sadd.s32 %s149, 1
      %p153 = scmp.eq.s32.totalorder %s12, 1
      %p154 = scmp.ne.s32.totalorder %s149, %s151
      %p155 = scmp.eq.s32.totalorder %s12, 0
      %p156 = por %p154, %p155
      %p157 = scmp.ne.s32.totalorder %s149, %s151
      %p158 = scmp.eq.s32.totalorder %s17, 1
      %p159 = por %p157, %p158
      %p160 = scmp.ne.s32.totalorder %s151, %s152
      %p161 = scmp.eq.s32.totalorder %s17, 0
      %p162 = por %p160, %p161
      %p163 = scmp.ne.s32.totalorder %s151, %s152
      %p164 = scmp.eq.s32.totalorder %s18, 1
      %p165 = por %p163, %p164
      %p167 = scmp.ne.s32.totalorder %s152, %s166
      %p168 = scmp.eq.s32.totalorder %s18, 0
      %p169 = por %p167, %p168
      %s170 = ssub.s32 %s19, %s31
      %s171 = ssub.s32 %s20, %s27
      %s172 = sor.u32 %s170, %s171
      %p173 = scmp.eq.s32.totalorder %s172, 0
      %s175 = sadd.s32 %s174, 1
      %s176 = scalar_select %p173, %s174, %s175
      %p179 = pneg %p173
      %p180 = scmp.eq.s32.totalorder %s12, 1
      %p181 = por %p179, %p180
      %p182 = scmp.ne.s32.totalorder %s174, %s177
      %p183 = scmp.eq.s32.totalorder %s12, 0
      %p184 = por %p182, %p183
      %p185 = scmp.ne.s32.totalorder %s174, %s177
      %p186 = scmp.eq.s32.totalorder %s17, 1
      %p187 = por %p185, %p186
      %p188 = scmp.ne.s32.totalorder %s177, %s178
      %p189 = scmp.eq.s32.totalorder %s17, 0
      %p190 = por %p188, %p189
      %p191 = scmp.ne.s32.totalorder %s177, %s178
      %p192 = scmp.eq.s32.totalorder %s18, 1
      %p193 = por %p191, %p192
      %p195 = scmp.ne.s32.totalorder %s178, %s194
      %p196 = scmp.eq.s32.totalorder %s18, 0
      %p197 = por %p195, %p196
      %p198 = scmp.le.s32.totalorder 1, %s12
      %p199 = scmp.lt.s32.totalorder %s12, 3
      %p200 = pnand %p198, %p199
      %p201 = pneg %p200
      // Predicated region
      $region9: #{decoder_forward.13} parent=5 // pred_check
        _
      $region10: #{decoder_forward.13} parent=5 // pred_check_branch
        %203 = sbr.rel (%p200) target = $region12
      $region11: #{decoder_forward.13} parent=5 // pred_region
        %s204 = ssub.s32 %s12, 1
        // Predicated region
        $region13: #{decoder_forward.13} parent=11 // pred_check
          %p205 = pneg %p141
        $region14: #{decoder_forward.13} parent=11 // pred_check_branch
          %207 = sbr.rel (%p205) target = $region16
        $region15: #{decoder_forward.13} parent=11 // pred_region
          %209 = vsyncadd [#allocation4], 0
          %s210 = sshll.u32 %s3, 4
          %s211 = int_to_ptr.hbm [resolvable:$true] %s210
          %s212 = sshll.u32 [#allocation3], 4
          %s213 = int_to_ptr.vmem [resolvable:$true] %s212
          %218 = dma.hbm_to_vmem [thread:$0]  %s211, 1536, %s213, [#allocation4], 128, 128, 8
        $region16: #{decoder_forward.13} parent=11 // pred_fallthru
          _
        // Predicated region
        $region17: #{decoder_forward.13} parent=11 // pred_check
          %p219 = pneg %p162
        $region18: #{decoder_forward.13} parent=11 // pred_check_branch
          %221 = sbr.rel (%p219) target = $region20
        $region19: #{decoder_forward.13} parent=11 // pred_region
          _
        $region20: #{decoder_forward.13} parent=11 // pred_fallthru
          _
      $region12: #{decoder_forward.13} parent=5 // pred_fallthru
        _
      %p222 = scmp.lt.s32.totalorder %s12, 2
      // Predicated region
      $region21: #{decoder_forward.13} parent=5 // pred_check
        %p223 = pneg %p222
      $region22: #{decoder_forward.13} parent=5 // pred_check_branch
        %225 = sbr.rel (%p223) target = $region24
      $region23: #{decoder_forward.13} parent=5 // pred_region
        // Predicated region
        $region25: #{decoder_forward.13} parent=23 // pred_check
          %p226 = pneg %p46
        $region26: #{decoder_forward.13} parent=23 // pred_check_branch
          %228 = sbr.rel (%p226) target = $region28
        $region27: #{decoder_forward.13} parent=23 // pred_region
          %p229 = scmp.lt.s32.totalorder %s19, 1
          %s230 = scalar_select %p229, %s19, 1
          %p231 = scmp.lt.s32.totalorder %s20, 0
          %s232 = scalar_select %p231, %s20, 0
          %s233 = sadd.s32 %s232, %s230
          %s234 = smul.addr %s233, 8
          %s235 = scalar_lea.vmem %s0, %s234
        $region28: #{decoder_forward.13} parent=23 // pred_fallthru
          _
        // Predicated region
        $region29: #{decoder_forward.13} parent=23 // pred_check
          %p236 = pneg %p80
        $region30: #{decoder_forward.13} parent=23 // pred_check_branch
          %238 = sbr.rel (%p236) target = $region32
        $region31: #{decoder_forward.13} parent=23 // pred_region
          %s239 = ssub.s32 %s20, 1
          %p240 = scmp.gt.s32.totalorder %s239, 0
          %s241 = scalar_select %p240, %s239, 0
          %p242 = scmp.lt.s32.totalorder %s19, 1
          %s243 = scalar_select %p242, %s19, 1
          %p244 = scmp.lt.s32.totalorder %s241, 0
          %s245 = scalar_select %p244, %s241, 0
          %s246 = sadd.s32 %s245, %s243
          %s247 = smul.addr %s246, 8
          %s248 = scalar_lea.vmem %s1, %s247
          %s249 = ssub.s32 %s20, 1
          %p250 = scmp.gt.s32.totalorder %s249, 0
          %s251 = scalar_select %p250, %s249, 0
        $region32: #{decoder_forward.13} parent=23 // pred_fallthru
          _
        // Predicated region
        $region33: #{decoder_forward.13} parent=23 // pred_check
          %p252 = pneg %p114
        $region34: #{decoder_forward.13} parent=23 // pred_check_branch
          %254 = sbr.rel (%p252) target = $region36
        $region35: #{decoder_forward.13} parent=23 // pred_region
          %s255 = sadd.s32 %s20, 1
          %p256 = scmp.lt.s32.totalorder %s255, 0
          %s257 = scalar_select %p256, %s255, 0
          %p258 = scmp.lt.s32.totalorder %s19, 1
          %s259 = scalar_select %p258, %s19, 1
          %p260 = scmp.lt.s32.totalorder %s257, 0
          %s261 = scalar_select %p260, %s257, 0
          %s262 = sadd.s32 %s261, %s259
          %s263 = smul.addr %s262, 8
          %s264 = scalar_lea.vmem %s2, %s263
          %s265 = sadd.s32 %s20, 1
          %p266 = scmp.lt.s32.totalorder %s265, 0
          %s267 = scalar_select %p266, %s265, 0
        $region36: #{decoder_forward.13} parent=23 // pred_fallthru
          _
      $region24: #{decoder_forward.13} parent=5 // pred_fallthru
        _
      %p268 = scmp.le.s32.totalorder 1, %s12
      %p269 = scmp.lt.s32.totalorder %s12, 3
      %p270 = pnand %p268, %p269
      %p271 = pneg %p270
      // Predicated region
      $region37: #{decoder_forward.13} parent=5 // pred_check
        _
      $region38: #{decoder_forward.13} parent=5 // pred_check_branch
        %273 = sbr.rel (%p270) target = $region40
      $region39: #{decoder_forward.13} parent=5 // pred_region
        %s274 = ssub.s32 %s12, 1
        // Predicated region
        $region41: #{decoder_forward.13} parent=39 // pred_check
          %p275 = pneg %p141
        $region42: #{decoder_forward.13} parent=39 // pred_check_branch
          %277 = sbr.rel (%p275) target = $region44
        $region43: #{decoder_forward.13} parent=39 // pred_region
          %279 = dma.done [#allocation4], 1536
        $region44: #{decoder_forward.13} parent=39 // pred_fallthru
          _
        %p280 = scmp.lt.s32.totalorder %s21, 1
        %s281 = scalar_select %p280, %s21, 1
        %p282 = scmp.lt.s32.totalorder %s22, 0
        %s283 = scalar_select %p282, %s22, 0
        %s284 = sadd.s32 %s283, %s281
        %s285 = smul.addr %s284, 8
        %s286 = scalar_lea.vmem %s0, %s285
        %p287 = pneg %p52
        %p288 = pneg %p49
        %s289 = ssub.s32 %s22, 1
        %p290 = scmp.gt.s32.totalorder %s289, 0
        %s291 = scalar_select %p290, %s289, 0
        %p292 = scmp.lt.s32.totalorder %s21, 1
        %s293 = scalar_select %p292, %s21, 1
        %p294 = scmp.lt.s32.totalorder %s291, 0
        %s295 = scalar_select %p294, %s291, 0
        %s296 = sadd.s32 %s295, %s293
        %s297 = smul.addr %s296, 8
        %s298 = scalar_lea.vmem %s1, %s297
        %p299 = pneg %p86
        %p300 = pneg %p83
        %s301 = sadd.s32 %s22, 1
        %p302 = scmp.lt.s32.totalorder %s301, 0
        %s303 = scalar_select %p302, %s301, 0
        %p304 = scmp.lt.s32.totalorder %s21, 1
        %s305 = scalar_select %p304, %s21, 1
        %p306 = scmp.lt.s32.totalorder %s303, 0
        %s307 = scalar_select %p306, %s303, 0
        %s308 = sadd.s32 %s307, %s305
        %s309 = smul.addr %s308, 8
        %s310 = scalar_lea.vmem %s2, %s309
        %p311 = pneg %p120
        %p312 = pneg %p117
        %p313 = pneg %p141
        %p314 = pneg %p138
        %p315 = pneg %p162
        %p316 = pneg %p159
        %p317 = pneg %p190
        %p318 = pneg %p187
        %p319 = scmp.lt.s32.totalorder %s21, 1
        %s320 = scalar_select %p319, %s21, 1
        %p321 = scmp.lt.s32.totalorder %s22, 0
        %s322 = scalar_select %p321, %s22, 0
        %s323 = sadd.s32 %s322, %s320
        %s324 = smul.addr %s323, 8
        %s325 = scalar_lea.vmem %s5, %s324
        %p326 = scmp.lt.s32.totalorder %s21, 1
        %s327 = scalar_select %p326, %s21, 1
        %p328 = scmp.lt.s32.totalorder %s22, 0
        %s329 = scalar_select %p328, %s22, 0
        %s330 = sadd.s32 %s329, %s327
        %s331 = smul.addr %s330, 8
        %s332 = scalar_lea.vmem %s0, %s331
        %s333 = ssub.s32 %s22, 1
        %p334 = scmp.gt.s32.totalorder %s333, 0
        %s335 = scalar_select %p334, %s333, 0
        %p336 = scmp.lt.s32.totalorder %s21, 1
        %s337 = scalar_select %p336, %s21, 1
        %p338 = scmp.lt.s32.totalorder %s335, 0
        %s339 = scalar_select %p338, %s335, 0
        %s340 = sadd.s32 %s339, %s337
        %s341 = smul.addr %s340, 8
        %s342 = scalar_lea.vmem %s1, %s341
        %s343 = ssub.s32 %s22, 1
        %p344 = scmp.gt.s32.totalorder %s343, 0
        %s345 = scalar_select %p344, %s343, 0
        %s346 = sadd.s32 %s22, 1
        %p347 = scmp.lt.s32.totalorder %s346, 0
        %s348 = scalar_select %p347, %s346, 0
        %p349 = scmp.lt.s32.totalorder %s21, 1
        %s350 = scalar_select %p349, %s21, 1
        %p351 = scmp.lt.s32.totalorder %s348, 0
        %s352 = scalar_select %p351, %s348, 0
        %s353 = sadd.s32 %s352, %s350
        %s354 = smul.addr %s353, 8
        %s355 = scalar_lea.vmem %s2, %s354
        %s356 = sadd.s32 %s22, 1
        %p357 = scmp.lt.s32.totalorder %s356, 0
        %s358 = scalar_select %p357, %s356, 0
        %p359 = scmp.lt.s32.totalorder %s21, 1
        %s360 = scalar_select %p359, %s21, 1
        %p361 = scmp.lt.s32.totalorder %s22, 0
        %s362 = scalar_select %p361, %s22, 0
        %s363 = sadd.s32 %s362, %s360
        %s364 = smul.addr %s363, 8
        %s365 = scalar_lea.vmem %s5, %s364
        %v366 = vld [vmem:[%s332] sm:$0xff]
        %vm367 = vcmask 261120
        %368 = vst.msk [vmem:[#allocation2 + $0x1] sm:$0xff] %vm367, %v366
        %vm369 = vcmask 253952
        %370 = vst.msk [vmem:[#allocation2] sm:$0x1] %vm369, 0.0
        %371 = vst.msk [vmem:[#allocation2 + $0x9] sm:$0x1] %vm369, 0.0
        %p372 = scmp.gt.s32.totalorder %s22, 0
        // Predicated region
        $region45: #{decoder_forward.13} parent=39 // pred_check
          %p373 = pneg %p372
        $region46: #{decoder_forward.13} parent=39 // pred_check_branch
          %375 = sbr.rel (%p373) target = $region48
        $region47: #{decoder_forward.13} parent=39 // pred_region
          %v376 = vld [vmem:[%s342 + $0x7] sm:$0x1]
          %377 = vst.msk [vmem:[#allocation2] sm:$0x1] %vm369, %v376
        $region48: #{decoder_forward.13} parent=39 // pred_fallthru
          _
        %p378 = scmp.lt.s32.totalorder %s22, 0
        // Predicated region
        $region49: #{decoder_forward.13} parent=39 // pred_check
          %p379 = pneg %p378
        $region50: #{decoder_forward.13} parent=39 // pred_check_branch
          %381 = sbr.rel (%p379) target = $region52
        $region51: #{decoder_forward.13} parent=39 // pred_region
          %v382 = vld [vmem:[%s355] sm:$0x1]
          %383 = vst.msk [vmem:[#allocation2 + $0x9] sm:$0x1] %vm369, %v382
        $region52: #{decoder_forward.13} parent=39 // pred_fallthru
          _
        %v384 = vld [vmem:[#allocation2] sm:$0xff]
        %v385 = vld [vmem:[#allocation2 + $0x8] sm:$0x3]
        %v386 = vld [vmem:[#allocation3] sm:$0xff]
        %v387 = vld [vmem:[#allocation3 + $0x8] sm:$0xff]
        %v388 = vld [vmem:[#allocation3 + $0x10] sm:$0xff]
        %v389 = vld [vmem:[#allocation3 + $0x18] sm:$0xff]
        %s390 = scalar_lea.vmem [#allocation3], 32
        %v391 = vld [vmem:[%s390] sm:$0xff]
        %v392 = vld [vmem:[%s390 + $0x8] sm:$0xff]
        %v393 = vld [vmem:[%s390 + $0x10] sm:$0xff]
        %v394 = vld [vmem:[%s390 + $0x18] sm:$0xff]
        %vm397 = vcmask 1046528
        %v398 = vrot.slane %v384, 1
        %v399 = vrot.slane %v385, 1
        %v400 = vsel %vm397, %v398, %v399
        %v401 = vsel %vm367, %v400, 0
        %403 = vmatpush.msra.mxu0 0.0
        %404 = vmatpush.msra.mxu0 0.0
        %405 = vmatpush.msra.mxu0 0.0
        %406 = vmatpush.msra.mxu0 0.0
        %407 = vmatpush.msra.mxu0 0.0
        %408 = vmatpush.msra.mxu0 0.0
        %409 = vmatpush.msra.mxu0 0.0
        %410 = vmatpush.msra.mxu0 0.0
        %411 = vmatpush.msra.mxu0 0.0
        %412 = vmatpush.msra.mxu0 0.0
        %413 = vmatpush.msra.mxu0 0.0
        %414 = vmatpush.msra.mxu0 0.0
        %415 = vmatpush.msra.mxu0 %v394
        %416 = vmatpush.msra.mxu0 %v393
        %417 = vmatpush.msra.mxu0 %v392
        %418 = vmatpush.msra.mxu0 %v391
        %419 = vmatmul.f32.gmra.mxu0 %v401
        %v420 = vpop.f32.mrf.mxu0
        %v421 = vadd.f32 0.0, %v420
        %422 = vdwg.mxu0
        %v423 = vsel %vm367, %v384, 0
        %425 = vmatpush.msra.mxu0 0.0
        %426 = vmatpush.msra.mxu0 0.0
        %427 = vmatpush.msra.mxu0 0.0
        %428 = vmatpush.msra.mxu0 0.0
        %429 = vmatpush.msra.mxu0 0.0
        %430 = vmatpush.msra.mxu0 0.0
        %431 = vmatpush.msra.mxu0 0.0
        %432 = vmatpush.msra.mxu0 0.0
        %433 = vmatpush.msra.mxu0 0.0
        %434 = vmatpush.msra.mxu0 0.0
        %435 = vmatpush.msra.mxu0 0.0
        %436 = vmatpush.msra.mxu0 0.0
        %437 = vmatpush.msra.mxu0 %v389
        %438 = vmatpush.msra.mxu0 %v388
        %439 = vmatpush.msra.mxu0 %v387
        %440 = vmatpush.msra.mxu0 %v386
        %441 = vmatmul.f32.gmra.mxu0 %v423
        %v442 = vpop.f32.mrf.mxu0
        %v443 = vadd.f32 %v421, %v442
        %444 = vdwg.mxu0
        %s445 = scalar_lea.vmem [#allocation3], 64
        %v446 = vld [vmem:[%s445] sm:$0xff]
        %v447 = vld [vmem:[%s445 + $0x8] sm:$0xff]
        %v448 = vld [vmem:[%s445 + $0x10] sm:$0xff]
        %v449 = vld [vmem:[%s445 + $0x18] sm:$0xff]
        %vm450 = vcmask 1045504
        %v451 = vrot.slane %v384, 2
        %v452 = vrot.slane %v385, 2
        %v453 = vsel %vm450, %v451, %v452
        %v454 = vsel %vm367, %v453, 0
        %456 = vmatpush.msra.mxu0 0.0
        %457 = vmatpush.msra.mxu0 0.0
        %458 = vmatpush.msra.mxu0 0.0
        %459 = vmatpush.msra.mxu0 0.0
        %460 = vmatpush.msra.mxu0 0.0
        %461 = vmatpush.msra.mxu0 0.0
        %462 = vmatpush.msra.mxu0 0.0
        %463 = vmatpush.msra.mxu0 0.0
        %464 = vmatpush.msra.mxu0 0.0
        %465 = vmatpush.msra.mxu0 0.0
        %466 = vmatpush.msra.mxu0 0.0
        %467 = vmatpush.msra.mxu0 0.0
        %468 = vmatpush.msra.mxu0 %v449
        %469 = vmatpush.msra.mxu0 %v448
        %470 = vmatpush.msra.mxu0 %v447
        %471 = vmatpush.msra.mxu0 %v446
        %472 = vmatmul.f32.gmra.mxu0 %v454
        %v473 = vpop.f32.mrf.mxu0
        %v474 = vadd.f32 0.0, %v473
        %475 = vdwg.mxu0
        %v476 = vadd.f32 %v443, %v474
        %v477 = vld [vmem:[%s4] sm:$0x1]
        %v479 = vperm.slane %v477, 0
        %v481 = vadd.f32 %v476, %v479
        %482 = vst.msk [vmem:[%s365] sm:$0xff] %vm367, %v481
        %p483 = scmp.lt.s32.totalorder %s21, 1
        %s484 = scalar_select %p483, %s21, 1
        %p485 = scmp.lt.s32.totalorder %s22, 0
        %s486 = scalar_select %p485, %s22, 0
        %s487 = sadd.s32 %s486, %s484
        %s488 = smul.addr %s487, 8
        %s489 = scalar_lea.vmem %s5, %s488
        // Predicated region
        $region53: #{decoder_forward.13} parent=39 // pred_check
          %p490 = pneg %p187
        $region54: #{decoder_forward.13} parent=39 // pred_check_branch
          %492 = sbr.rel (%p490) target = $region56
        $region55: #{decoder_forward.13} parent=39 // pred_region
          _
        $region56: #{decoder_forward.13} parent=39 // pred_fallthru
          _
      $region40: #{decoder_forward.13} parent=5 // pred_fallthru
        _
      %p493 = scmp.le.s32.totalorder 2, %s12
      // Predicated region
      $region57: #{decoder_forward.13} parent=5 // pred_check
        %p494 = pneg %p493
      $region58: #{decoder_forward.13} parent=5 // pred_check_branch
        %496 = sbr.rel (%p494) target = $region60
      $region59: #{decoder_forward.13} parent=5 // pred_region
        %s497 = ssub.s32 %s12, 2
        // Predicated region
        $region61: #{decoder_forward.13} parent=59 // pred_check
          %p498 = pneg %p193
        $region62: #{decoder_forward.13} parent=59 // pred_check_branch
          %500 = sbr.rel (%p498) target = $region64
        $region63: #{decoder_forward.13} parent=59 // pred_region
          %p501 = scmp.lt.s32.totalorder %s23, 1
          %s502 = scalar_select %p501, %s23, 1
          %p503 = scmp.lt.s32.totalorder %s24, 0
          %s504 = scalar_select %p503, %s24, 0
          %s505 = sadd.s32 %s504, %s502
          %s506 = smul.addr %s505, 8
          %s507 = scalar_lea.vmem %s5, %s506
        $region64: #{decoder_forward.13} parent=59 // pred_fallthru
          _
      $region60: #{decoder_forward.13} parent=5 // pred_fallthru
        _
    $region6: #{decoder_forward.13} parent=1 // loop_footer
      %s16 = sadd.s32 1, %s12
    $region7: #{decoder_forward.13} parent=1 // loop_footer_branch
      %11 = sbr.rel target = $region3
    $region8: #{decoder_forward.13} parent=1 // loop_exit
      _
    %508 = vsyncpa [#allocation4], 1
    %s509 = scalar_lea.sflag [#allocation4], 1
    %510 = vsyncpa %s509, 1

// kernel: decoder_forward.17
$region0: #{decoder_forward.17}
  #allocation0 [shape = 'u32[]', space=smem, size = 0x4, offset = 0x4, fixed_abs, tag = 'smem constant byte address 0x4 - core index']
  #allocation1 [shape = 'u32[72,128]{1,0:T(1,128)}', space=vmem, size = 0x9000, scoped, tag = 'internal scratch']
  #allocation2 [shape = 'f32[10,32]{1,0:T(8,128)}', space=vmem, size = 0x2000, scoped, tag = 'scratch operand']
  %s0 = inlined_call_operand.vmem [shape: f32[2,8,32], index: 0, kind: input, shape index: {}, may-alias: {0,1,2}]
  %s1 = inlined_call_operand.vmem [shape: f32[2,8,32], index: 1, kind: input, shape index: {}, may-alias: {0,1,2}]
  %s2 = inlined_call_operand.vmem [shape: f32[2,8,32], index: 2, kind: input, shape index: {}, may-alias: {0,1,2}]
  %s3 = inlined_call_operand.vmem [shape: f32[4,32,32], index: 3, kind: input, shape index: {}]
  %s4 = inlined_call_operand.hbm [shape: f32[1,32], index: 4, kind: input, shape index: {}]
  %s5 = inlined_call_operand.vmem [shape: f32[2,8,64], index: 5, kind: output, shape index: {}]
  %s6 = sld [smem:[#allocation0]]
  $region65: #{decoder_forward.17} parent=0
    _
  %s8 = ssub.s32 1, %s6
  %s9 = scalar_select 0, %s8, %s6
  $region1: #{decoder_forward.17} parent=0
    #allocation3 [shape = 'u8[512]{0}', space=vmem, size = 0x400, scoped, tag = 'input window, operand 4, single buffered']
    #allocation4 [shape = 's32[2]{0}', space=sflag, size = 0x8, scoped, tag = 'scoped memory for decoder_forward.17']
    %10 = vsyncpa [#allocation4], 0
    loop: start=0, step=1, limit=4
    $region2: #{decoder_forward.17} parent=1 // loop_pre_header
      _
    $region3: #{decoder_forward.17} parent=1 // loop_header
      %s12 = sphi 0, %s16
      %p13 = scmp.ge.s32.totalorder %s12, 4
      %s19 = sphi 0, %s31
      %s20 = sphi 0, %s27
      %s21 = sphi 0, %s19
      %s22 = sphi 0, %s20
      %s23 = sphi 0, %s21
      %s24 = sphi 0, %s22
      %s36 = sphi 0, %s38
      %s39 = sphi 0, %s36
      %s40 = sphi 0, %s39
      %s56 = sphi 0, %s40
      %s70 = sphi 0, %s72
      %s73 = sphi 0, %s70
      %s74 = sphi 0, %s73
      %s90 = sphi 0, %s74
      %s104 = sphi 0, %s106
      %s107 = sphi 0, %s104
      %s108 = sphi 0, %s107
      %s124 = sphi 0, %s108
      %s128 = sphi 0, %s128
      %s130 = sphi 0, %s128
      %s131 = sphi 0, %s130
      %s145 = sphi 0, %s131
      %s149 = sphi 0, %s149
      %s151 = sphi 0, %s149
      %s152 = sphi 0, %s151
      %s166 = sphi 0, %s152
      %s174 = sphi 0, %s176
      %s177 = sphi 0, %s174
      %s178 = sphi 0, %s177
      %s194 = sphi 0, %s178
    $region4: #{decoder_forward.17} parent=1 // loop_header_branch
      %15 = sbr.rel (%p13) target = $region8
    $region5: #{decoder_forward.17} parent=1 // loop_body
      %s17 = ssub.s32 %s12, 1
      %s18 = ssub.s32 %s12, 2
      %s25 = sadd.s32 1, %s20
      %p26 = scmp.ge.s32.totalorder %s25, 1
      %s27 = scalar_select %p26, 0, %s25
      %s28 = sadd.s32 1, %s19
      %s29 = scalar_select %p26, %s28, %s19
      %p30 = scmp.ge.s32.totalorder %s29, 2
      %s31 = scalar_select %p30, 0, %s29
      %s32 = ssub.s32 %s19, %s31
      %s33 = ssub.s32 %s20, %s27
      %s34 = sor.u32 %s32, %s33
      %p35 = scmp.eq.s32.totalorder %s34, 0
      %s37 = sadd.s32 %s36, 1
      %s38 = scalar_select %p35, %s36, %s37
      %p41 = pneg %p35
      %p42 = scmp.eq.s32.totalorder %s12, 1
      %p43 = por %p41, %p42
      %p44 = scmp.ne.s32.totalorder %s36, %s39
      %p45 = scmp.eq.s32.totalorder %s12, 0
      %p46 = por %p44, %p45
      %p47 = scmp.ne.s32.totalorder %s36, %s39
      %p48 = scmp.eq.s32.totalorder %s17, 1
      %p49 = por %p47, %p48
      %p50 = scmp.ne.s32.totalorder %s39, %s40
      %p51 = scmp.eq.s32.totalorder %s17, 0
      %p52 = por %p50, %p51
      %p53 = scmp.ne.s32.totalorder %s39, %s40
      %p54 = scmp.eq.s32.totalorder %s18, 1
      %p55 = por %p53, %p54
      %p57 = scmp.ne.s32.totalorder %s40, %s56
      %p58 = scmp.eq.s32.totalorder %s18, 0
      %p59 = por %p57, %p58
      %s60 = ssub.s32 %s20, 1
      %p61 = scmp.gt.s32.totalorder %s60, 0
      %s62 = scalar_select %p61, %s60, 0
      %s63 = ssub.s32 %s27, 1
      %p64 = scmp.gt.s32.totalorder %s63, 0
      %s65 = scalar_select %p64, %s63, 0
      %s66 = ssub.s32 %s19, %s31
      %s67 = ssub.s32 %s62, %s65
      %s68 = sor.u32 %s66, %s67
      %p69 = scmp.eq.s32.totalorder %s68, 0
      %s71 = sadd.s32 %s70, 1
      %s72 = scalar_select %p69, %s70, %s71
      %p75 = pneg %p69
      %p76 = scmp.eq.s32.totalorder %s12, 1
      %p77 = por %p75, %p76
      %p78 = scmp.ne.s32.totalorder %s70, %s73
      %p79 = scmp.eq.s32.totalorder %s12, 0
      %p80 = por %p78, %p79
      %p81 = scmp.ne.s32.totalorder %s70, %s73
      %p82 = scmp.eq.s32.totalorder %s17, 1
      %p83 = por %p81, %p82
      %p84 = scmp.ne.s32.totalorder %s73, %s74
      %p85 = scmp.eq.s32.totalorder %s17, 0
      %p86 = por %p84, %p85
      %p87 = scmp.ne.s32.totalorder %s73, %s74
      %p88 = scmp.eq.s32.totalorder %s18, 1
      %p89 = por %p87, %p88
      %p91 = scmp.ne.s32.totalorder %s74, %s90
      %p92 = scmp.eq.s32.totalorder %s18, 0
      %p93 = por %p91, %p92
      %s94 = sadd.s32 %s20, 1
      %p95 = scmp.lt.s32.totalorder %s94, 0
      %s96 = scalar_select %p95, %s94, 0
      %s97 = sadd.s32 %s27, 1
      %p98 = scmp.lt.s32.totalorder %s97, 0
      %s99 = scalar_select %p98, %s97, 0
      %s100 = ssub.s32 %s19, %s31
      %s101 = ssub.s32 %s96, %s99
      %s102 = sor.u32 %s100, %s101
      %p103 = scmp.eq.s32.totalorder %s102, 0
      %s105 = sadd.s32 %s104, 1
      %s106 = scalar_select %p103, %s104, %s105
      %p109 = pneg %p103
      %p110 = scmp.eq.s32.totalorder %s12, 1
      %p111 = por %p109, %p110
      %p112 = scmp.ne.s32.totalorder %s104, %s107
      %p113 = scmp.eq.s32.totalorder %s12, 0
      %p114 = por %p112, %p113
      %p115 = scmp.ne.s32.totalorder %s104, %s107
      %p116 = scmp.eq.s32.totalorder %s17, 1
      %p117 = por %p115, %p116
      %p118 = scmp.ne.s32.totalorder %s107, %s108
      %p119 = scmp.eq.s32.totalorder %s17, 0
      %p120 = por %p118, %p119
      %p121 = scmp.ne.s32.totalorder %s107, %s108
      %p122 = scmp.eq.s32.totalorder %s18, 1
      %p123 = por %p121, %p122
      %p125 = scmp.ne.s32.totalorder %s108, %s124
      %p126 = scmp.eq.s32.totalorder %s18, 0
      %p127 = por %p125, %p126
      %s129 = sadd.s32 %s128, 1
      %p132 = scmp.eq.s32.totalorder %s12, 1
      %p133 = scmp.ne.s32.totalorder %s128, %s130
      %p134 = scmp.eq.s32.totalorder %s12, 0
      %p135 = por %p133, %p134
      %p136 = scmp.ne.s32.totalorder %s128, %s130
      %p137 = scmp.eq.s32.totalorder %s17, 1
      %p138 = por %p136, %p137
      %p139 = scmp.ne.s32.totalorder %s130, %s131
      %p140 = scmp.eq.s32.totalorder %s17, 0
      %p141 = por %p139, %p140
      %p142 = scmp.ne.s32.totalorder %s130, %s131
      %p143 = scmp.eq.s32.totalorder %s18, 1
      %p144 = por %p142, %p143
      %p146 = scmp.ne.s32.totalorder %s131, %s145
      %p147 = scmp.eq.s32.totalorder %s18, 0
      %p148 = por %p146, %p147
      %s150 = sadd.s32 %s149, 1
      %p153 = scmp.eq.s32.totalorder %s12, 1
      %p154 = scmp.ne.s32.totalorder %s149, %s151
      %p155 = scmp.eq.s32.totalorder %s12, 0
      %p156 = por %p154, %p155
      %p157 = scmp.ne.s32.totalorder %s149, %s151
      %p158 = scmp.eq.s32.totalorder %s17, 1
      %p159 = por %p157, %p158
      %p160 = scmp.ne.s32.totalorder %s151, %s152
      %p161 = scmp.eq.s32.totalorder %s17, 0
      %p162 = por %p160, %p161
      %p163 = scmp.ne.s32.totalorder %s151, %s152
      %p164 = scmp.eq.s32.totalorder %s18, 1
      %p165 = por %p163, %p164
      %p167 = scmp.ne.s32.totalorder %s152, %s166
      %p168 = scmp.eq.s32.totalorder %s18, 0
      %p169 = por %p167, %p168
      %s170 = ssub.s32 %s19, %s31
      %s171 = ssub.s32 %s20, %s27
      %s172 = sor.u32 %s170, %s171
      %p173 = scmp.eq.s32.totalorder %s172, 0
      %s175 = sadd.s32 %s174, 1
      %s176 = scalar_select %p173, %s174, %s175
      %p179 = pneg %p173
      %p180 = scmp.eq.s32.totalorder %s12, 1
      %p181 = por %p179, %p180
      %p182 = scmp.ne.s32.totalorder %s174, %s177
      %p183 = scmp.eq.s32.totalorder %s12, 0
      %p184 = por %p182, %p183
      %p185 = scmp.ne.s32.totalorder %s174, %s177
      %p186 = scmp.eq.s32.totalorder %s17, 1
      %p187 = por %p185, %p186
      %p188 = scmp.ne.s32.totalorder %s177, %s178
      %p189 = scmp.eq.s32.totalorder %s17, 0
      %p190 = por %p188, %p189
      %p191 = scmp.ne.s32.totalorder %s177, %s178
      %p192 = scmp.eq.s32.totalorder %s18, 1
      %p193 = por %p191, %p192
      %p195 = scmp.ne.s32.totalorder %s178, %s194
      %p196 = scmp.eq.s32.totalorder %s18, 0
      %p197 = por %p195, %p196
      %p198 = scmp.le.s32.totalorder 1, %s12
      %p199 = scmp.lt.s32.totalorder %s12, 3
      %p200 = pnand %p198, %p199
      %p201 = pneg %p200
      // Predicated region
      $region9: #{decoder_forward.17} parent=5 // pred_check
        _
      $region10: #{decoder_forward.17} parent=5 // pred_check_branch
        %203 = sbr.rel (%p200) target = $region12
      $region11: #{decoder_forward.17} parent=5 // pred_region
        %s204 = ssub.s32 %s12, 1
        // Predicated region
        $region13: #{decoder_forward.17} parent=11 // pred_check
          %p205 = pneg %p141
        $region14: #{decoder_forward.17} parent=11 // pred_check_branch
          %207 = sbr.rel (%p205) target = $region16
        $region15: #{decoder_forward.17} parent=11 // pred_region
          _
        $region16: #{decoder_forward.17} parent=11 // pred_fallthru
          _
        // Predicated region
        $region17: #{decoder_forward.17} parent=11 // pred_check
          %p208 = pneg %p162
        $region18: #{decoder_forward.17} parent=11 // pred_check_branch
          %210 = sbr.rel (%p208) target = $region20
        $region19: #{decoder_forward.17} parent=11 // pred_region
          %212 = vsyncadd [#allocation4], 0
          %s214 = sshll.u32 %s4, 4
          %s215 = int_to_ptr.hbm [resolvable:$true] %s214
          %s216 = sshll.u32 [#allocation3], 4
          %s217 = int_to_ptr.vmem [resolvable:$true] %s216
          %219 = dma.hbm_to_vmem [thread:$0]  %s215, 16, %s217, [#allocation4]
        $region20: #{decoder_forward.17} parent=11 // pred_fallthru
          _
      $region12: #{decoder_forward.17} parent=5 // pred_fallthru
        _
      %p220 = scmp.lt.s32.totalorder %s12, 2
      // Predicated region
      $region21: #{decoder_forward.17} parent=5 // pred_check
        %p221 = pneg %p220
      $region22: #{decoder_forward.17} parent=5 // pred_check_branch
        %223 = sbr.rel (%p221) target = $region24
      $region23: #{decoder_forward.17} parent=5 // pred_region
        // Predicated region
        $region25: #{decoder_forward.17} parent=23 // pred_check
          %p224 = pneg %p46
        $region26: #{decoder_forward.17} parent=23 // pred_check_branch
          %226 = sbr.rel (%p224) target = $region28
        $region27: #{decoder_forward.17} parent=23 // pred_region
          %p227 = scmp.lt.s32.totalorder %s19, 1
          %s228 = scalar_select %p227, %s19, 1
          %p229 = scmp.lt.s32.totalorder %s20, 0
          %s230 = scalar_select %p229, %s20, 0
          %s231 = sadd.s32 %s230, %s228
          %s232 = smul.addr %s231, 8
          %s233 = scalar_lea.vmem %s0, %s232
        $region28: #{decoder_forward.17} parent=23 // pred_fallthru
          _
        // Predicated region
        $region29: #{decoder_forward.17} parent=23 // pred_check
          %p234 = pneg %p80
        $region30: #{decoder_forward.17} parent=23 // pred_check_branch
          %236 = sbr.rel (%p234) target = $region32
        $region31: #{decoder_forward.17} parent=23 // pred_region
          %s237 = ssub.s32 %s20, 1
          %p238 = scmp.gt.s32.totalorder %s237, 0
          %s239 = scalar_select %p238, %s237, 0
          %p240 = scmp.lt.s32.totalorder %s19, 1
          %s241 = scalar_select %p240, %s19, 1
          %p242 = scmp.lt.s32.totalorder %s239, 0
          %s243 = scalar_select %p242, %s239, 0
          %s244 = sadd.s32 %s243, %s241
          %s245 = smul.addr %s244, 8
          %s246 = scalar_lea.vmem %s1, %s245
          %s247 = ssub.s32 %s20, 1
          %p248 = scmp.gt.s32.totalorder %s247, 0
          %s249 = scalar_select %p248, %s247, 0
        $region32: #{decoder_forward.17} parent=23 // pred_fallthru
          _
        // Predicated region
        $region33: #{decoder_forward.17} parent=23 // pred_check
          %p250 = pneg %p114
        $region34: #{decoder_forward.17} parent=23 // pred_check_branch
          %252 = sbr.rel (%p250) target = $region36
        $region35: #{decoder_forward.17} parent=23 // pred_region
          %s253 = sadd.s32 %s20, 1
          %p254 = scmp.lt.s32.totalorder %s253, 0
          %s255 = scalar_select %p254, %s253, 0
          %p256 = scmp.lt.s32.totalorder %s19, 1
          %s257 = scalar_select %p256, %s19, 1
          %p258 = scmp.lt.s32.totalorder %s255, 0
          %s259 = scalar_select %p258, %s255, 0
          %s260 = sadd.s32 %s259, %s257
          %s261 = smul.addr %s260, 8
          %s262 = scalar_lea.vmem %s2, %s261
          %s263 = sadd.s32 %s20, 1
          %p264 = scmp.lt.s32.totalorder %s263, 0
          %s265 = scalar_select %p264, %s263, 0
        $region36: #{decoder_forward.17} parent=23 // pred_fallthru
          _
      $region24: #{decoder_forward.17} parent=5 // pred_fallthru
        _
      %p266 = scmp.le.s32.totalorder 1, %s12
      %p267 = scmp.lt.s32.totalorder %s12, 3
      %p268 = pnand %p266, %p267
      %p269 = pneg %p268
      // Predicated region
      $region37: #{decoder_forward.17} parent=5 // pred_check
        _
      $region38: #{decoder_forward.17} parent=5 // pred_check_branch
        %271 = sbr.rel (%p268) target = $region40
      $region39: #{decoder_forward.17} parent=5 // pred_region
        %s272 = ssub.s32 %s12, 1
        // Predicated region
        $region41: #{decoder_forward.17} parent=39 // pred_check
          %p273 = pneg %p162
        $region42: #{decoder_forward.17} parent=39 // pred_check_branch
          %275 = sbr.rel (%p273) target = $region44
        $region43: #{decoder_forward.17} parent=39 // pred_region
          %277 = dma.done [#allocation4], 16
        $region44: #{decoder_forward.17} parent=39 // pred_fallthru
          _
        %p278 = scmp.lt.s32.totalorder %s21, 1
        %s279 = scalar_select %p278, %s21, 1
        %p280 = scmp.lt.s32.totalorder %s22, 0
        %s281 = scalar_select %p280, %s22, 0
        %s282 = sadd.s32 %s281, %s279
        %s283 = smul.addr %s282, 8
        %s284 = scalar_lea.vmem %s0, %s283
        %p285 = pneg %p52
        %p286 = pneg %p49
        %s287 = ssub.s32 %s22, 1
        %p288 = scmp.gt.s32.totalorder %s287, 0
        %s289 = scalar_select %p288, %s287, 0
        %p290 = scmp.lt.s32.totalorder %s21, 1
        %s291 = scalar_select %p290, %s21, 1
        %p292 = scmp.lt.s32.totalorder %s289, 0
        %s293 = scalar_select %p292, %s289, 0
        %s294 = sadd.s32 %s293, %s291
        %s295 = smul.addr %s294, 8
        %s296 = scalar_lea.vmem %s1, %s295
        %p297 = pneg %p86
        %p298 = pneg %p83
        %s299 = sadd.s32 %s22, 1
        %p300 = scmp.lt.s32.totalorder %s299, 0
        %s301 = scalar_select %p300, %s299, 0
        %p302 = scmp.lt.s32.totalorder %s21, 1
        %s303 = scalar_select %p302, %s21, 1
        %p304 = scmp.lt.s32.totalorder %s301, 0
        %s305 = scalar_select %p304, %s301, 0
        %s306 = sadd.s32 %s305, %s303
        %s307 = smul.addr %s306, 8
        %s308 = scalar_lea.vmem %s2, %s307
        %p309 = pneg %p120
        %p310 = pneg %p117
        %p311 = pneg %p141
        %p312 = pneg %p138
        %p313 = pneg %p162
        %p314 = pneg %p159
        %p315 = pneg %p190
        %p316 = pneg %p187
        %p317 = scmp.lt.s32.totalorder %s21, 1
        %s318 = scalar_select %p317, %s21, 1
        %p319 = scmp.lt.s32.totalorder %s22, 0
        %s320 = scalar_select %p319, %s22, 0
        %s321 = sadd.s32 %s320, %s318
        %s322 = smul.addr %s321, 8
        %s323 = scalar_lea.vmem %s5, %s322
        %p324 = scmp.lt.s32.totalorder %s21, 1
        %s325 = scalar_select %p324, %s21, 1
        %p326 = scmp.lt.s32.totalorder %s22, 0
        %s327 = scalar_select %p326, %s22, 0
        %s328 = sadd.s32 %s327, %s325
        %s329 = smul.addr %s328, 8
        %s330 = scalar_lea.vmem %s0, %s329
        %s331 = ssub.s32 %s22, 1
        %p332 = scmp.gt.s32.totalorder %s331, 0
        %s333 = scalar_select %p332, %s331, 0
        %p334 = scmp.lt.s32.totalorder %s21, 1
        %s335 = scalar_select %p334, %s21, 1
        %p336 = scmp.lt.s32.totalorder %s333, 0
        %s337 = scalar_select %p336, %s333, 0
        %s338 = sadd.s32 %s337, %s335
        %s339 = smul.addr %s338, 8
        %s340 = scalar_lea.vmem %s1, %s339
        %s341 = ssub.s32 %s22, 1
        %p342 = scmp.gt.s32.totalorder %s341, 0
        %s343 = scalar_select %p342, %s341, 0
        %s344 = sadd.s32 %s22, 1
        %p345 = scmp.lt.s32.totalorder %s344, 0
        %s346 = scalar_select %p345, %s344, 0
        %p347 = scmp.lt.s32.totalorder %s21, 1
        %s348 = scalar_select %p347, %s21, 1
        %p349 = scmp.lt.s32.totalorder %s346, 0
        %s350 = scalar_select %p349, %s346, 0
        %s351 = sadd.s32 %s350, %s348
        %s352 = smul.addr %s351, 8
        %s353 = scalar_lea.vmem %s2, %s352
        %s354 = sadd.s32 %s22, 1
        %p355 = scmp.lt.s32.totalorder %s354, 0
        %s356 = scalar_select %p355, %s354, 0
        %p357 = scmp.lt.s32.totalorder %s21, 1
        %s358 = scalar_select %p357, %s21, 1
        %p359 = scmp.lt.s32.totalorder %s22, 0
        %s360 = scalar_select %p359, %s22, 0
        %s361 = sadd.s32 %s360, %s358
        %s362 = smul.addr %s361, 8
        %s363 = scalar_lea.vmem %s5, %s362
        %v364 = vld [vmem:[%s330] sm:$0xff]
        %vm365 = vcmask 261120
        %366 = vst.msk [vmem:[#allocation2 + $0x1] sm:$0xff] %vm365, %v364
        %vm367 = vcmask 253952
        %368 = vst.msk [vmem:[#allocation2] sm:$0x1] %vm367, 0.0
        %369 = vst.msk [vmem:[#allocation2 + $0x9] sm:$0x1] %vm367, 0.0
        %p370 = scmp.gt.s32.totalorder %s22, 0
        // Predicated region
        $region45: #{decoder_forward.17} parent=39 // pred_check
          %p371 = pneg %p370
        $region46: #{decoder_forward.17} parent=39 // pred_check_branch
          %373 = sbr.rel (%p371) target = $region48
        $region47: #{decoder_forward.17} parent=39 // pred_region
          %v374 = vld [vmem:[%s340 + $0x7] sm:$0x1]
          %375 = vst.msk [vmem:[#allocation2] sm:$0x1] %vm367, %v374
        $region48: #{decoder_forward.17} parent=39 // pred_fallthru
          _
        %p376 = scmp.lt.s32.totalorder %s22, 0
        // Predicated region
        $region49: #{decoder_forward.17} parent=39 // pred_check
          %p377 = pneg %p376
        $region50: #{decoder_forward.17} parent=39 // pred_check_branch
          %379 = sbr.rel (%p377) target = $region52
        $region51: #{decoder_forward.17} parent=39 // pred_region
          %v380 = vld [vmem:[%s353] sm:$0x1]
          %381 = vst.msk [vmem:[#allocation2 + $0x9] sm:$0x1] %vm367, %v380
        $region52: #{decoder_forward.17} parent=39 // pred_fallthru
          _
        %v382 = vld [vmem:[#allocation2] sm:$0xff]
        %v383 = vld [vmem:[#allocation2 + $0x8] sm:$0x3]
        %v384 = vld [vmem:[#allocation3] sm:$0x1]
        %s385 = scalar_lea.vmem %s3, 96
        %v386 = vld [vmem:[%s385] sm:$0xff]
        %v387 = vld [vmem:[%s385 + $0x8] sm:$0xff]
        %v388 = vld [vmem:[%s385 + $0x10] sm:$0xff]
        %v389 = vld [vmem:[%s385 + $0x18] sm:$0xff]
        %s390 = scalar_lea.vmem %s3, 32
        %v391 = vld [vmem:[%s390] sm:$0xff]
        %v392 = vld [vmem:[%s390 + $0x8] sm:$0xff]
        %v393 = vld [vmem:[%s390 + $0x10] sm:$0xff]
        %v394 = vld [vmem:[%s390 + $0x18] sm:$0xff]
        %vm397 = vcmask 1046528
        %v398 = vrot.slane %v382, 1
        %v399 = vrot.slane %v383, 1
        %v400 = vsel %vm397, %v398, %v399
        %v401 = vsel %vm365, %v400, 0
        %403 = vmatpush.msra.mxu0 0.0
        %404 = vmatpush.msra.mxu0 0.0
        %405 = vmatpush.msra.mxu0 0.0
        %406 = vmatpush.msra.mxu0 0.0
        %407 = vmatpush.msra.mxu0 0.0
        %408 = vmatpush.msra.mxu0 0.0
        %409 = vmatpush.msra.mxu0 0.0
        %410 = vmatpush.msra.mxu0 0.0
        %411 = vmatpush.msra.mxu0 0.0
        %412 = vmatpush.msra.mxu0 0.0
        %413 = vmatpush.msra.mxu0 0.0
        %414 = vmatpush.msra.mxu0 0.0
        %415 = vmatpush.msra.mxu0 %v394
        %416 = vmatpush.msra.mxu0 %v393
        %417 = vmatpush.msra.mxu0 %v392
        %418 = vmatpush.msra.mxu0 %v391
        %419 = vmatmul.f32.gmra.mxu0 %v401
        %v420 = vpop.f32.mrf.mxu0
        %v421 = vadd.f32 0.0, %v420
        %422 = vdwg.mxu0
        %v423 = vsel %vm365, %v382, 0
        %425 = vmatpush.msra.mxu0 0.0
        %426 = vmatpush.msra.mxu0 0.0
        %427 = vmatpush.msra.mxu0 0.0
        %428 = vmatpush.msra.mxu0 0.0
        %429 = vmatpush.msra.mxu0 0.0
        %430 = vmatpush.msra.mxu0 0.0
        %431 = vmatpush.msra.mxu0 0.0
        %432 = vmatpush.msra.mxu0 0.0
        %433 = vmatpush.msra.mxu0 0.0
        %434 = vmatpush.msra.mxu0 0.0
        %435 = vmatpush.msra.mxu0 0.0
        %436 = vmatpush.msra.mxu0 0.0
        %437 = vmatpush.msra.mxu0 %v389
        %438 = vmatpush.msra.mxu0 %v388
        %439 = vmatpush.msra.mxu0 %v387
        %440 = vmatpush.msra.mxu0 %v386
        %441 = vmatmul.f32.gmra.mxu0 %v423
        %v442 = vpop.f32.mrf.mxu0
        %v443 = vadd.f32 %v421, %v442
        %444 = vdwg.mxu0
        %v446 = vperm.slane %v384, 0
        %v448 = vadd.f32 %v443, %v446
        %s449 = scalar_lea.vmem %s3, 64
        %v450 = vld [vmem:[%s449] sm:$0xff]
        %v451 = vld [vmem:[%s449 + $0x8] sm:$0xff]
        %v452 = vld [vmem:[%s449 + $0x10] sm:$0xff]
        %v453 = vld [vmem:[%s449 + $0x18] sm:$0xff]
        %v454 = vld [vmem:[%s3] sm:$0xff]
        %v455 = vld [vmem:[%s3 + $0x8] sm:$0xff]
        %v456 = vld [vmem:[%s3 + $0x10] sm:$0xff]
        %v457 = vld [vmem:[%s3 + $0x18] sm:$0xff]
        %vm458 = vcmask 1045504
        %v459 = vrot.slane %v382, 2
        %v460 = vrot.slane %v383, 2
        %v461 = vsel %vm458, %v459, %v460
        %v462 = vsel %vm365, %v461, 0
        %464 = vmatpush.msra.mxu0 0.0
        %465 = vmatpush.msra.mxu0 0.0
        %466 = vmatpush.msra.mxu0 0.0
        %467 = vmatpush.msra.mxu0 0.0
        %468 = vmatpush.msra.mxu0 0.0
        %469 = vmatpush.msra.mxu0 0.0
        %470 = vmatpush.msra.mxu0 0.0
        %471 = vmatpush.msra.mxu0 0.0
        %472 = vmatpush.msra.mxu0 0.0
        %473 = vmatpush.msra.mxu0 0.0
        %474 = vmatpush.msra.mxu0 0.0
        %475 = vmatpush.msra.mxu0 0.0
        %476 = vmatpush.msra.mxu0 %v457
        %477 = vmatpush.msra.mxu0 %v456
        %478 = vmatpush.msra.mxu0 %v455
        %479 = vmatpush.msra.mxu0 %v454
        %480 = vmatmul.f32.gmra.mxu0 %v462
        %v481 = vpop.f32.mrf.mxu0
        %v482 = vadd.f32 0.0, %v481
        %483 = vdwg.mxu0
        %484 = vmatpush.msra.mxu0 0.0
        %485 = vmatpush.msra.mxu0 0.0
        %486 = vmatpush.msra.mxu0 0.0
        %487 = vmatpush.msra.mxu0 0.0
        %488 = vmatpush.msra.mxu0 0.0
        %489 = vmatpush.msra.mxu0 0.0
        %490 = vmatpush.msra.mxu0 0.0
        %491 = vmatpush.msra.mxu0 0.0
        %492 = vmatpush.msra.mxu0 0.0
        %493 = vmatpush.msra.mxu0 0.0
        %494 = vmatpush.msra.mxu0 0.0
        %495 = vmatpush.msra.mxu0 0.0
        %496 = vmatpush.msra.mxu0 %v453
        %497 = vmatpush.msra.mxu0 %v452
        %498 = vmatpush.msra.mxu0 %v451
        %499 = vmatpush.msra.mxu0 %v450
        %500 = vmatmul.f32.gmra.mxu0 %v401
        %v501 = vpop.f32.mrf.mxu0
        %v502 = vadd.f32 %v482, %v501
        %503 = vdwg.mxu0
        %v504 = vadd.f32 %v502, %v446
        %505 = vst.msk [vmem:[%s363] sm:$0xff] %vm365, %v448
        %507 = vrot.lane.b32.xlu0 %v504, 32
        %v508 = vpop.permute.xlu0 %507
        %vm510 = vcmask 523520
        %511 = vst.msk [vmem:[%s363] sm:$0xff] %vm510, %v508
        %p512 = scmp.lt.s32.totalorder %s21, 1
        %s513 = scalar_select %p512, %s21, 1
        %p514 = scmp.lt.s32.totalorder %s22, 0
        %s515 = scalar_select %p514, %s22, 0
        %s516 = sadd.s32 %s515, %s513
        %s517 = smul.addr %s516, 8
        %s518 = scalar_lea.vmem %s5, %s517
        // Predicated region
        $region53: #{decoder_forward.17} parent=39 // pred_check
          %p519 = pneg %p187
        $region54: #{decoder_forward.17} parent=39 // pred_check_branch
          %521 = sbr.rel (%p519) target = $region56
        $region55: #{decoder_forward.17} parent=39 // pred_region
          _
        $region56: #{decoder_forward.17} parent=39 // pred_fallthru
          _
      $region40: #{decoder_forward.17} parent=5 // pred_fallthru
        _
      %p522 = scmp.le.s32.totalorder 2, %s12
      // Predicated region
      $region57: #{decoder_forward.17} parent=5 // pred_check
        %p523 = pneg %p522
      $region58: #{decoder_forward.17} parent=5 // pred_check_branch
        %525 = sbr.rel (%p523) target = $region60
      $region59: #{decoder_forward.17} parent=5 // pred_region
        %s526 = ssub.s32 %s12, 2
        // Predicated region
        $region61: #{decoder_forward.17} parent=59 // pred_check
          %p527 = pneg %p193
        $region62: #{decoder_forward.17} parent=59 // pred_check_branch
          %529 = sbr.rel (%p527) target = $region64
        $region63: #{decoder_forward.17} parent=59 // pred_region
          %p530 = scmp.lt.s32.totalorder %s23, 1
          %s531 = scalar_select %p530, %s23, 1
          %p532 = scmp.lt.s32.totalorder %s24, 0
          %s533 = scalar_select %p532, %s24, 0
          %s534 = sadd.s32 %s533, %s531
          %s535 = smul.addr %s534, 8
          %s536 = scalar_lea.vmem %s5, %s535
        $region64: #{decoder_forward.17} parent=59 // pred_fallthru
          _
      $region60: #{decoder_forward.17} parent=5 // pred_fallthru
        _
    $region6: #{decoder_forward.17} parent=1 // loop_footer
      %s16 = sadd.s32 1, %s12
    $region7: #{decoder_forward.17} parent=1 // loop_footer_branch
      %11 = sbr.rel target = $region3
    $region8: #{decoder_forward.17} parent=1 // loop_exit
      _
    %537 = vsyncpa [#allocation4], 1
    %s538 = scalar_lea.sflag [#allocation4], 1
    %539 = vsyncpa %s538, 1

// kernel: decoder_forward.14
$region0: #{decoder_forward.14}
  #allocation0 [shape = 'u32[]', space=smem, size = 0x4, offset = 0x4, fixed_abs, tag = 'smem constant byte address 0x4 - core index']
  #allocation1 [shape = 'u32[72,128]{1,0:T(1,128)}', space=vmem, size = 0x9000, scoped, tag = 'internal scratch']
  #allocation2 [shape = 'f32[10,32]{1,0:T(8,128)}', space=vmem, size = 0x2000, scoped, tag = 'scratch operand']
  %s0 = inlined_call_operand.vmem [shape: f32[2,8,32], index: 0, kind: input, shape index: {}, may-alias: {0,1,2}]
  %s1 = inlined_call_operand.vmem [shape: f32[2,8,32], index: 1, kind: input, shape index: {}, may-alias: {0,1,2}]
  %s2 = inlined_call_operand.vmem [shape: f32[2,8,32], index: 2, kind: input, shape index: {}, may-alias: {0,1,2}]
  %s3 = inlined_call_operand.hbm [shape: f32[3,32,32], index: 3, kind: input, shape index: {}]
  %s4 = inlined_call_operand.vmem [shape: f32[1,32], index: 4, kind: input, shape index: {}]
  %s5 = inlined_call_operand.hbm [shape: f32[1,32,32], index: 5, kind: input, shape index: {}]
  %s6 = inlined_call_operand.hbm [shape: f32[1,32], index: 6, kind: input, shape index: {}]
  %s7 = inlined_call_operand.vmem [shape: f32[2,8,32], index: 7, kind: output, shape index: {}]
  %s8 = sld [smem:[#allocation0]]
  $region81: #{decoder_forward.14} parent=0
    _
  %s10 = ssub.s32 1, %s8
  %s11 = scalar_select 0, %s10, %s8
  $region1: #{decoder_forward.14} parent=0
    #allocation3 [shape = 'u8[49152]{0}', space=vmem, size = 0xc000, scoped, tag = 'input window, operand 3, single buffered']
    #allocation4 [shape = 's32[2]{0}', space=sflag, size = 0x8, scoped, tag = 'scoped memory for decoder_forward.14']
    #allocation5 [shape = 'u8[16384]{0}', space=vmem, size = 0x4000, scoped, tag = 'input window, operand 5, single buffered']
    #allocation6 [shape = 's32[1]{0}', space=sflag, size = 0x4, scoped, tag = 'scoped memory for decoder_forward.14']
    #allocation7 [shape = 'u8[512]{0}', space=vmem, size = 0x400, scoped, tag = 'input window, operand 6, single buffered']
    %12 = vsyncpa [#allocation4], 0
    %13 = vsyncpa [#allocation6], 0
    loop: start=0, step=1, limit=4
    $region2: #{decoder_forward.14} parent=1 // loop_pre_header
      _
    $region3: #{decoder_forward.14} parent=1 // loop_header
      %s15 = sphi 0, %s19
      %p16 = scmp.ge.s32.totalorder %s15, 4
      %s22 = sphi 0, %s34
      %s23 = sphi 0, %s30
      %s24 = sphi 0, %s22
      %s25 = sphi 0, %s23
      %s26 = sphi 0, %s24
      %s27 = sphi 0, %s25
      %s39 = sphi 0, %s41
      %s42 = sphi 0, %s39
      %s43 = sphi 0, %s42
      %s59 = sphi 0, %s43
      %s73 = sphi 0, %s75
      %s76 = sphi 0, %s73
      %s77 = sphi 0, %s76
      %s93 = sphi 0, %s77
      %s107 = sphi 0, %s109
      %s110 = sphi 0, %s107
      %s111 = sphi 0, %s110
      %s127 = sphi 0, %s111
      %s131 = sphi 0, %s131
      %s133 = sphi 0, %s131
      %s134 = sphi 0, %s133
      %s148 = sphi 0, %s134
      %s152 = sphi 0, %s152
      %s154 = sphi 0, %s152
      %s155 = sphi 0, %s154
      %s169 = sphi 0, %s155
      %s173 = sphi 0, %s173
      %s175 = sphi 0, %s173
      %s176 = sphi 0, %s175
      %s190 = sphi 0, %s176
      %s194 = sphi 0, %s194
      %s196 = sphi 0, %s194
      %s197 = sphi 0, %s196
      %s211 = sphi 0, %s197
      %s219 = sphi 0, %s221
      %s222 = sphi 0, %s219
      %s223 = sphi 0, %s222
      %s239 = sphi 0, %s223
    $region4: #{decoder_forward.14} parent=1 // loop_header_branch
      %18 = sbr.rel (%p16) target = $region8
    $region5: #{decoder_forward.14} parent=1 // loop_body
      %s20 = ssub.s32 %s15, 1
      %s21 = ssub.s32 %s15, 2
      %s28 = sadd.s32 1, %s23
      %p29 = scmp.ge.s32.totalorder %s28, 1
      %s30 = scalar_select %p29, 0, %s28
      %s31 = sadd.s32 1, %s22
      %s32 = scalar_select %p29, %s31, %s22
      %p33 = scmp.ge.s32.totalorder %s32, 2
      %s34 = scalar_select %p33, 0, %s32
      %s35 = ssub.s32 %s22, %s34
      %s36 = ssub.s32 %s23, %s30
      %s37 = sor.u32 %s35, %s36
      %p38 = scmp.eq.s32.totalorder %s37, 0
      %s40 = sadd.s32 %s39, 1
      %s41 = scalar_select %p38, %s39, %s40
      %p44 = pneg %p38
      %p45 = scmp.eq.s32.totalorder %s15, 1
      %p46 = por %p44, %p45
      %p47 = scmp.ne.s32.totalorder %s39, %s42
      %p48 = scmp.eq.s32.totalorder %s15, 0
      %p49 = por %p47, %p48
      %p50 = scmp.ne.s32.totalorder %s39, %s42
      %p51 = scmp.eq.s32.totalorder %s20, 1
      %p52 = por %p50, %p51
      %p53 = scmp.ne.s32.totalorder %s42, %s43
      %p54 = scmp.eq.s32.totalorder %s20, 0
      %p55 = por %p53, %p54
      %p56 = scmp.ne.s32.totalorder %s42, %s43
      %p57 = scmp.eq.s32.totalorder %s21, 1
      %p58 = por %p56, %p57
      %p60 = scmp.ne.s32.totalorder %s43, %s59
      %p61 = scmp.eq.s32.totalorder %s21, 0
      %p62 = por %p60, %p61
      %s63 = ssub.s32 %s23, 1
      %p64 = scmp.gt.s32.totalorder %s63, 0
      %s65 = scalar_select %p64, %s63, 0
      %s66 = ssub.s32 %s30, 1
      %p67 = scmp.gt.s32.totalorder %s66, 0
      %s68 = scalar_select %p67, %s66, 0
      %s69 = ssub.s32 %s22, %s34
      %s70 = ssub.s32 %s65, %s68
      %s71 = sor.u32 %s69, %s70
      %p72 = scmp.eq.s32.totalorder %s71, 0
      %s74 = sadd.s32 %s73, 1
      %s75 = scalar_select %p72, %s73, %s74
      %p78 = pneg %p72
      %p79 = scmp.eq.s32.totalorder %s15, 1
      %p80 = por %p78, %p79
      %p81 = scmp.ne.s32.totalorder %s73, %s76
      %p82 = scmp.eq.s32.totalorder %s15, 0
      %p83 = por %p81, %p82
      %p84 = scmp.ne.s32.totalorder %s73, %s76
      %p85 = scmp.eq.s32.totalorder %s20, 1
      %p86 = por %p84, %p85
      %p87 = scmp.ne.s32.totalorder %s76, %s77
      %p88 = scmp.eq.s32.totalorder %s20, 0
      %p89 = por %p87, %p88
      %p90 = scmp.ne.s32.totalorder %s76, %s77
      %p91 = scmp.eq.s32.totalorder %s21, 1
      %p92 = por %p90, %p91
      %p94 = scmp.ne.s32.totalorder %s77, %s93
      %p95 = scmp.eq.s32.totalorder %s21, 0
      %p96 = por %p94, %p95
      %s97 = sadd.s32 %s23, 1
      %p98 = scmp.lt.s32.totalorder %s97, 0
      %s99 = scalar_select %p98, %s97, 0
      %s100 = sadd.s32 %s30, 1
      %p101 = scmp.lt.s32.totalorder %s100, 0
      %s102 = scalar_select %p101, %s100, 0
      %s103 = ssub.s32 %s22, %s34
      %s104 = ssub.s32 %s99, %s102
      %s105 = sor.u32 %s103, %s104
      %p106 = scmp.eq.s32.totalorder %s105, 0
      %s108 = sadd.s32 %s107, 1
      %s109 = scalar_select %p106, %s107, %s108
      %p112 = pneg %p106
      %p113 = scmp.eq.s32.totalorder %s15, 1
      %p114 = por %p112, %p113
      %p115 = scmp.ne.s32.totalorder %s107, %s110
      %p116 = scmp.eq.s32.totalorder %s15, 0
      %p117 = por %p115, %p116
      %p118 = scmp.ne.s32.totalorder %s107, %s110
      %p119 = scmp.eq.s32.totalorder %s20, 1
      %p120 = por %p118, %p119
      %p121 = scmp.ne.s32.totalorder %s110, %s111
      %p122 = scmp.eq.s32.totalorder %s20, 0
      %p123 = por %p121, %p122
      %p124 = scmp.ne.s32.totalorder %s110, %s111
      %p125 = scmp.eq.s32.totalorder %s21, 1
      %p126 = por %p124, %p125
      %p128 = scmp.ne.s32.totalorder %s111, %s127
      %p129 = scmp.eq.s32.totalorder %s21, 0
      %p130 = por %p128, %p129
      %s132 = sadd.s32 %s131, 1
      %p135 = scmp.eq.s32.totalorder %s15, 1
      %p136 = scmp.ne.s32.totalorder %s131, %s133
      %p137 = scmp.eq.s32.totalorder %s15, 0
      %p138 = por %p136, %p137
      %p139 = scmp.ne.s32.totalorder %s131, %s133
      %p140 = scmp.eq.s32.totalorder %s20, 1
      %p141 = por %p139, %p140
      %p142 = scmp.ne.s32.totalorder %s133, %s134
      %p143 = scmp.eq.s32.totalorder %s20, 0
      %p144 = por %p142, %p143
      %p145 = scmp.ne.s32.totalorder %s133, %s134
      %p146 = scmp.eq.s32.totalorder %s21, 1
      %p147 = por %p145, %p146
      %p149 = scmp.ne.s32.totalorder %s134, %s148
      %p150 = scmp.eq.s32.totalorder %s21, 0
      %p151 = por %p149, %p150
      %s153 = sadd.s32 %s152, 1
      %p156 = scmp.eq.s32.totalorder %s15, 1
      %p157 = scmp.ne.s32.totalorder %s152, %s154
      %p158 = scmp.eq.s32.totalorder %s15, 0
      %p159 = por %p157, %p158
      %p160 = scmp.ne.s32.totalorder %s152, %s154
      %p161 = scmp.eq.s32.totalorder %s20, 1
      %p162 = por %p160, %p161
      %p163 = scmp.ne.s32.totalorder %s154, %s155
      %p164 = scmp.eq.s32.totalorder %s20, 0
      %p165 = por %p163, %p164
      %p166 = scmp.ne.s32.totalorder %s154, %s155
      %p167 = scmp.eq.s32.totalorder %s21, 1
      %p168 = por %p166, %p167
      %p170 = scmp.ne.s32.totalorder %s155, %s169
      %p171 = scmp.eq.s32.totalorder %s21, 0
      %p172 = por %p170, %p171
      %s174 = sadd.s32 %s173, 1
      %p177 = scmp.eq.s32.totalorder %s15, 1
      %p178 = scmp.ne.s32.totalorder %s173, %s175
      %p179 = scmp.eq.s32.totalorder %s15, 0
      %p180 = por %p178, %p179
      %p181 = scmp.ne.s32.totalorder %s173, %s175
      %p182 = scmp.eq.s32.totalorder %s20, 1
      %p183 = por %p181, %p182
      %p184 = scmp.ne.s32.totalorder %s175, %s176
      %p185 = scmp.eq.s32.totalorder %s20, 0
      %p186 = por %p184, %p185
      %p187 = scmp.ne.s32.totalorder %s175, %s176
      %p188 = scmp.eq.s32.totalorder %s21, 1
      %p189 = por %p187, %p188
      %p191 = scmp.ne.s32.totalorder %s176, %s190
      %p192 = scmp.eq.s32.totalorder %s21, 0
      %p193 = por %p191, %p192
      %s195 = sadd.s32 %s194, 1
      %p198 = scmp.eq.s32.totalorder %s15, 1
      %p199 = scmp.ne.s32.totalorder %s194, %s196
      %p200 = scmp.eq.s32.totalorder %s15, 0
      %p201 = por %p199, %p200
      %p202 = scmp.ne.s32.totalorder %s194, %s196
      %p203 = scmp.eq.s32.totalorder %s20, 1
      %p204 = por %p202, %p203
      %p205 = scmp.ne.s32.totalorder %s196, %s197
      %p206 = scmp.eq.s32.totalorder %s20, 0
      %p207 = por %p205, %p206
      %p208 = scmp.ne.s32.totalorder %s196, %s197
      %p209 = scmp.eq.s32.totalorder %s21, 1
      %p210 = por %p208, %p209
      %p212 = scmp.ne.s32.totalorder %s197, %s211
      %p213 = scmp.eq.s32.totalorder %s21, 0
      %p214 = por %p212, %p213
      %s215 = ssub.s32 %s22, %s34
      %s216 = ssub.s32 %s23, %s30
      %s217 = sor.u32 %s215, %s216
      %p218 = scmp.eq.s32.totalorder %s217, 0
      %s220 = sadd.s32 %s219, 1
      %s221 = scalar_select %p218, %s219, %s220
      %p224 = pneg %p218
      %p225 = scmp.eq.s32.totalorder %s15, 1
      %p226 = por %p224, %p225
      %p227 = scmp.ne.s32.totalorder %s219, %s222
      %p228 = scmp.eq.s32.totalorder %s15, 0
      %p229 = por %p227, %p228
      %p230 = scmp.ne.s32.totalorder %s219, %s222
      %p231 = scmp.eq.s32.totalorder %s20, 1
      %p232 = por %p230, %p231
      %p233 = scmp.ne.s32.totalorder %s222, %s223
      %p234 = scmp.eq.s32.totalorder %s20, 0
      %p235 = por %p233, %p234
      %p236 = scmp.ne.s32.totalorder %s222, %s223
      %p237 = scmp.eq.s32.totalorder %s21, 1
      %p238 = por %p236, %p237
      %p240 = scmp.ne.s32.totalorder %s223, %s239
      %p241 = scmp.eq.s32.totalorder %s21, 0
      %p242 = por %p240, %p241
      %p243 = scmp.le.s32.totalorder 1, %s15
      %p244 = scmp.lt.s32.totalorder %s15, 3
      %p245 = pnand %p243, %p244
      %p246 = pneg %p245
      // Predicated region
      $region9: #{decoder_forward.14} parent=5 // pred_check
        _
      $region10: #{decoder_forward.14} parent=5 // pred_check_branch
        %248 = sbr.rel (%p245) target = $region12
      $region11: #{decoder_forward.14} parent=5 // pred_region
        %s249 = ssub.s32 %s15, 1
        // Predicated region
        $region13: #{decoder_forward.14} parent=11 // pred_check
          %p250 = pneg %p144
        $region14: #{decoder_forward.14} parent=11 // pred_check_branch
          %252 = sbr.rel (%p250) target = $region16
        $region15: #{decoder_forward.14} parent=11 // pred_region
          %254 = vsyncadd [#allocation4], 0
          %s255 = sshll.u32 %s3, 4
          %s256 = int_to_ptr.hbm [resolvable:$true] %s255
          %s257 = sshll.u32 [#allocation3], 4
          %s258 = int_to_ptr.vmem [resolvable:$true] %s257
          %263 = dma.hbm_to_vmem [thread:$0]  %s256, 1536, %s258, [#allocation4], 128, 128, 8
        $region16: #{decoder_forward.14} parent=11 // pred_fallthru
          _
        // Predicated region
        $region17: #{decoder_forward.14} parent=11 // pred_check
          %p264 = pneg %p165
        $region18: #{decoder_forward.14} parent=11 // pred_check_branch
          %266 = sbr.rel (%p264) target = $region20
        $region19: #{decoder_forward.14} parent=11 // pred_region
          _
        $region20: #{decoder_forward.14} parent=11 // pred_fallthru
          _
        // Predicated region
        $region21: #{decoder_forward.14} parent=11 // pred_check
          %p267 = pneg %p186
        $region22: #{decoder_forward.14} parent=11 // pred_check_branch
          %269 = sbr.rel (%p267) target = $region24
        $region23: #{decoder_forward.14} parent=11 // pred_region
          %271 = vsyncadd [#allocation6], 0
          %s272 = sshll.u32 %s5, 4
          %s273 = int_to_ptr.hbm [resolvable:$true] %s272
          %s274 = sshll.u32 [#allocation5], 4
          %s275 = int_to_ptr.vmem [resolvable:$true] %s274
          %280 = dma.hbm_to_vmem [thread:$0]  %s273, 512, %s275, [#allocation6], 128, 128, 8
        $region24: #{decoder_forward.14} parent=11 // pred_fallthru
          _
        // Predicated region
        $region25: #{decoder_forward.14} parent=11 // pred_check
          %p281 = pneg %p207
        $region26: #{decoder_forward.14} parent=11 // pred_check_branch
          %283 = sbr.rel (%p281) target = $region28
        $region27: #{decoder_forward.14} parent=11 // pred_region
          %285 = vsyncadd [#allocation6], 0
          %s287 = sshll.u32 %s6, 4
          %s288 = int_to_ptr.hbm [resolvable:$true] %s287
          %s289 = sshll.u32 [#allocation7], 4
          %s290 = int_to_ptr.vmem [resolvable:$true] %s289
          %292 = dma.hbm_to_vmem [thread:$0]  %s288, 16, %s290, [#allocation6]
        $region28: #{decoder_forward.14} parent=11 // pred_fallthru
          _
      $region12: #{decoder_forward.14} parent=5 // pred_fallthru
        _
      %p293 = scmp.lt.s32.totalorder %s15, 2
      // Predicated region
      $region29: #{decoder_forward.14} parent=5 // pred_check
        %p294 = pneg %p293
      $region30: #{decoder_forward.14} parent=5 // pred_check_branch
        %296 = sbr.rel (%p294) target = $region32
      $region31: #{decoder_forward.14} parent=5 // pred_region
        // Predicated region
        $region33: #{decoder_forward.14} parent=31 // pred_check
          %p297 = pneg %p49
        $region34: #{decoder_forward.14} parent=31 // pred_check_branch
          %299 = sbr.rel (%p297) target = $region36
        $region35: #{decoder_forward.14} parent=31 // pred_region
          %p300 = scmp.lt.s32.totalorder %s22, 1
          %s301 = scalar_select %p300, %s22, 1
          %p302 = scmp.lt.s32.totalorder %s23, 0
          %s303 = scalar_select %p302, %s23, 0
          %s304 = sadd.s32 %s303, %s301
          %s305 = smul.addr %s304, 8
          %s306 = scalar_lea.vmem %s0, %s305
        $region36: #{decoder_forward.14} parent=31 // pred_fallthru
          _
        // Predicated region
        $region37: #{decoder_forward.14} parent=31 // pred_check
          %p307 = pneg %p83
        $region38: #{decoder_forward.14} parent=31 // pred_check_branch
          %309 = sbr.rel (%p307) target = $region40
        $region39: #{decoder_forward.14} parent=31 // pred_region
          %s310 = ssub.s32 %s23, 1
          %p311 = scmp.gt.s32.totalorder %s310, 0
          %s312 = scalar_select %p311, %s310, 0
          %p313 = scmp.lt.s32.totalorder %s22, 1
          %s314 = scalar_select %p313, %s22, 1
          %p315 = scmp.lt.s32.totalorder %s312, 0
          %s316 = scalar_select %p315, %s312, 0
          %s317 = sadd.s32 %s316, %s314
          %s318 = smul.addr %s317, 8
          %s319 = scalar_lea.vmem %s1, %s318
          %s320 = ssub.s32 %s23, 1
          %p321 = scmp.gt.s32.totalorder %s320, 0
          %s322 = scalar_select %p321, %s320, 0
        $region40: #{decoder_forward.14} parent=31 // pred_fallthru
          _
        // Predicated region
        $region41: #{decoder_forward.14} parent=31 // pred_check
          %p323 = pneg %p117
        $region42: #{decoder_forward.14} parent=31 // pred_check_branch
          %325 = sbr.rel (%p323) target = $region44
        $region43: #{decoder_forward.14} parent=31 // pred_region
          %s326 = sadd.s32 %s23, 1
          %p327 = scmp.lt.s32.totalorder %s326, 0
          %s328 = scalar_select %p327, %s326, 0
          %p329 = scmp.lt.s32.totalorder %s22, 1
          %s330 = scalar_select %p329, %s22, 1
          %p331 = scmp.lt.s32.totalorder %s328, 0
          %s332 = scalar_select %p331, %s328, 0
          %s333 = sadd.s32 %s332, %s330
          %s334 = smul.addr %s333, 8
          %s335 = scalar_lea.vmem %s2, %s334
          %s336 = sadd.s32 %s23, 1
          %p337 = scmp.lt.s32.totalorder %s336, 0
          %s338 = scalar_select %p337, %s336, 0
        $region44: #{decoder_forward.14} parent=31 // pred_fallthru
          _
      $region32: #{decoder_forward.14} parent=5 // pred_fallthru
        _
      %p339 = scmp.le.s32.totalorder 1, %s15
      %p340 = scmp.lt.s32.totalorder %s15, 3
      %p341 = pnand %p339, %p340
      %p342 = pneg %p341
      // Predicated region
      $region45: #{decoder_forward.14} parent=5 // pred_check
        _
      $region46: #{decoder_forward.14} parent=5 // pred_check_branch
        %344 = sbr.rel (%p341) target = $region48
      $region47: #{decoder_forward.14} parent=5 // pred_region
        %s345 = ssub.s32 %s15, 1
        // Predicated region
        $region49: #{decoder_forward.14} parent=47 // pred_check
          %p346 = pneg %p144
        $region50: #{decoder_forward.14} parent=47 // pred_check_branch
          %348 = sbr.rel (%p346) target = $region52
        $region51: #{decoder_forward.14} parent=47 // pred_region
          %350 = dma.done [#allocation4], 1536
        $region52: #{decoder_forward.14} parent=47 // pred_fallthru
          _
        // Predicated region
        $region53: #{decoder_forward.14} parent=47 // pred_check
          %p351 = pneg %p186
        $region54: #{decoder_forward.14} parent=47 // pred_check_branch
          %353 = sbr.rel (%p351) target = $region56
        $region55: #{decoder_forward.14} parent=47 // pred_region
          %355 = dma.done [#allocation6], 512
        $region56: #{decoder_forward.14} parent=47 // pred_fallthru
          _
        // Predicated region
        $region57: #{decoder_forward.14} parent=47 // pred_check
          %p356 = pneg %p207
        $region58: #{decoder_forward.14} parent=47 // pred_check_branch
          %358 = sbr.rel (%p356) target = $region60
        $region59: #{decoder_forward.14} parent=47 // pred_region
          %360 = dma.done [#allocation6], 16
        $region60: #{decoder_forward.14} parent=47 // pred_fallthru
          _
        %p361 = scmp.lt.s32.totalorder %s24, 1
        %s362 = scalar_select %p361, %s24, 1
        %p363 = scmp.lt.s32.totalorder %s25, 0
        %s364 = scalar_select %p363, %s25, 0
        %s365 = sadd.s32 %s364, %s362
        %s366 = smul.addr %s365, 8
        %s367 = scalar_lea.vmem %s0, %s366
        %p368 = pneg %p55
        %p369 = pneg %p52
        %s370 = ssub.s32 %s25, 1
        %p371 = scmp.gt.s32.totalorder %s370, 0
        %s372 = scalar_select %p371, %s370, 0
        %p373 = scmp.lt.s32.totalorder %s24, 1
        %s374 = scalar_select %p373, %s24, 1
        %p375 = scmp.lt.s32.totalorder %s372, 0
        %s376 = scalar_select %p375, %s372, 0
        %s377 = sadd.s32 %s376, %s374
        %s378 = smul.addr %s377, 8
        %s379 = scalar_lea.vmem %s1, %s378
        %p380 = pneg %p89
        %p381 = pneg %p86
        %s382 = sadd.s32 %s25, 1
        %p383 = scmp.lt.s32.totalorder %s382, 0
        %s384 = scalar_select %p383, %s382, 0
        %p385 = scmp.lt.s32.totalorder %s24, 1
        %s386 = scalar_select %p385, %s24, 1
        %p387 = scmp.lt.s32.totalorder %s384, 0
        %s388 = scalar_select %p387, %s384, 0
        %s389 = sadd.s32 %s388, %s386
        %s390 = smul.addr %s389, 8
        %s391 = scalar_lea.vmem %s2, %s390
        %p392 = pneg %p123
        %p393 = pneg %p120
        %p394 = pneg %p144
        %p395 = pneg %p141
        %p396 = pneg %p165
        %p397 = pneg %p162
        %p398 = pneg %p186
        %p399 = pneg %p183
        %p400 = pneg %p207
        %p401 = pneg %p204
        %p402 = pneg %p235
        %p403 = pneg %p232
        %p404 = scmp.lt.s32.totalorder %s24, 1
        %s405 = scalar_select %p404, %s24, 1
        %p406 = scmp.lt.s32.totalorder %s25, 0
        %s407 = scalar_select %p406, %s25, 0
        %s408 = sadd.s32 %s407, %s405
        %s409 = smul.addr %s408, 8
        %s410 = scalar_lea.vmem %s7, %s409
        %p411 = scmp.lt.s32.totalorder %s24, 1
        %s412 = scalar_select %p411, %s24, 1
        %p413 = scmp.lt.s32.totalorder %s25, 0
        %s414 = scalar_select %p413, %s25, 0
        %s415 = sadd.s32 %s414, %s412
        %s416 = smul.addr %s415, 8
        %s417 = scalar_lea.vmem %s0, %s416
        %s418 = ssub.s32 %s25, 1
        %p419 = scmp.gt.s32.totalorder %s418, 0
        %s420 = scalar_select %p419, %s418, 0
        %p421 = scmp.lt.s32.totalorder %s24, 1
        %s422 = scalar_select %p421, %s24, 1
        %p423 = scmp.lt.s32.totalorder %s420, 0
        %s424 = scalar_select %p423, %s420, 0
        %s425 = sadd.s32 %s424, %s422
        %s426 = smul.addr %s425, 8
        %s427 = scalar_lea.vmem %s1, %s426
        %s428 = ssub.s32 %s25, 1
        %p429 = scmp.gt.s32.totalorder %s428, 0
        %s430 = scalar_select %p429, %s428, 0
        %s431 = sadd.s32 %s25, 1
        %p432 = scmp.lt.s32.totalorder %s431, 0
        %s433 = scalar_select %p432, %s431, 0
        %p434 = scmp.lt.s32.totalorder %s24, 1
        %s435 = scalar_select %p434, %s24, 1
        %p436 = scmp.lt.s32.totalorder %s433, 0
        %s437 = scalar_select %p436, %s433, 0
        %s438 = sadd.s32 %s437, %s435
        %s439 = smul.addr %s438, 8
        %s440 = scalar_lea.vmem %s2, %s439
        %s441 = sadd.s32 %s25, 1
        %p442 = scmp.lt.s32.totalorder %s441, 0
        %s443 = scalar_select %p442, %s441, 0
        %p444 = scmp.lt.s32.totalorder %s24, 1
        %s445 = scalar_select %p444, %s24, 1
        %p446 = scmp.lt.s32.totalorder %s25, 0
        %s447 = scalar_select %p446, %s25, 0
        %s448 = sadd.s32 %s447, %s445
        %s449 = smul.addr %s448, 8
        %s450 = scalar_lea.vmem %s7, %s449
        %v451 = vld [vmem:[%s417] sm:$0xff]
        %v452 = vmax.f32 %v451, 0.0
        %vm453 = vcmask 261120
        %454 = vst.msk [vmem:[#allocation2 + $0x1] sm:$0xff] %vm453, %v452
        %vm455 = vcmask 253952
        %456 = vst.msk [vmem:[#allocation2] sm:$0x1] %vm455, 0.0
        %457 = vst.msk [vmem:[#allocation2 + $0x9] sm:$0x1] %vm455, 0.0
        %p458 = scmp.gt.s32.totalorder %s25, 0
        // Predicated region
        $region61: #{decoder_forward.14} parent=47 // pred_check
          %p459 = pneg %p458
        $region62: #{decoder_forward.14} parent=47 // pred_check_branch
          %461 = sbr.rel (%p459) target = $region64
        $region63: #{decoder_forward.14} parent=47 // pred_region
          %v462 = vld [vmem:[%s427 + $0x7] sm:$0x1]
          %v463 = vmax.f32 %v462, 0.0
          %464 = vst.msk [vmem:[#allocation2] sm:$0x1] %vm455, %v463
        $region64: #{decoder_forward.14} parent=47 // pred_fallthru
          _
        %p465 = scmp.lt.s32.totalorder %s25, 0
        // Predicated region
        $region65: #{decoder_forward.14} parent=47 // pred_check
          %p466 = pneg %p465
        $region66: #{decoder_forward.14} parent=47 // pred_check_branch
          %468 = sbr.rel (%p466) target = $region68
        $region67: #{decoder_forward.14} parent=47 // pred_region
          %v469 = vld [vmem:[%s440] sm:$0x1]
          %v470 = vmax.f32 %v469, 0.0
          %471 = vst.msk [vmem:[#allocation2 + $0x9] sm:$0x1] %vm455, %v470
        $region68: #{decoder_forward.14} parent=47 // pred_fallthru
          _
        %v472 = vld [vmem:[#allocation2] sm:$0xff]
        %v473 = vld [vmem:[#allocation2 + $0x8] sm:$0x3]
        %v474 = vld [vmem:[#allocation3] sm:$0xff]
        %v475 = vld [vmem:[#allocation3 + $0x8] sm:$0xff]
        %v476 = vld [vmem:[#allocation3 + $0x10] sm:$0xff]
        %v477 = vld [vmem:[#allocation3 + $0x18] sm:$0xff]
        %s478 = scalar_lea.vmem [#allocation3], 32
        %v479 = vld [vmem:[%s478] sm:$0xff]
        %v480 = vld [vmem:[%s478 + $0x8] sm:$0xff]
        %v481 = vld [vmem:[%s478 + $0x10] sm:$0xff]
        %v482 = vld [vmem:[%s478 + $0x18] sm:$0xff]
        %vm485 = vcmask 1046528
        %v486 = vrot.slane %v472, 1
        %v487 = vrot.slane %v473, 1
        %v488 = vsel %vm485, %v486, %v487
        %v489 = vsel %vm453, %v488, 0
        %491 = vmatpush.msra.mxu0 0.0
        %492 = vmatpush.msra.mxu0 0.0
        %493 = vmatpush.msra.mxu0 0.0
        %494 = vmatpush.msra.mxu0 0.0
        %495 = vmatpush.msra.mxu0 0.0
        %496 = vmatpush.msra.mxu0 0.0
        %497 = vmatpush.msra.mxu0 0.0
        %498 = vmatpush.msra.mxu0 0.0
        %499 = vmatpush.msra.mxu0 0.0
        %500 = vmatpush.msra.mxu0 0.0
        %501 = vmatpush.msra.mxu0 0.0
        %502 = vmatpush.msra.mxu0 0.0
        %503 = vmatpush.msra.mxu0 %v482
        %504 = vmatpush.msra.mxu0 %v481
        %505 = vmatpush.msra.mxu0 %v480
        %506 = vmatpush.msra.mxu0 %v479
        %507 = vmatmul.f32.gmra.mxu0 %v489
        %v508 = vpop.f32.mrf.mxu0
        %v509 = vadd.f32 0.0, %v508
        %510 = vdwg.mxu0
        %v511 = vsel %vm453, %v472, 0
        %513 = vmatpush.msra.mxu0 0.0
        %514 = vmatpush.msra.mxu0 0.0
        %515 = vmatpush.msra.mxu0 0.0
        %516 = vmatpush.msra.mxu0 0.0
        %517 = vmatpush.msra.mxu0 0.0
        %518 = vmatpush.msra.mxu0 0.0
        %519 = vmatpush.msra.mxu0 0.0
        %520 = vmatpush.msra.mxu0 0.0
        %521 = vmatpush.msra.mxu0 0.0
        %522 = vmatpush.msra.mxu0 0.0
        %523 = vmatpush.msra.mxu0 0.0
        %524 = vmatpush.msra.mxu0 0.0
        %525 = vmatpush.msra.mxu0 %v477
        %526 = vmatpush.msra.mxu0 %v476
        %527 = vmatpush.msra.mxu0 %v475
        %528 = vmatpush.msra.mxu0 %v474
        %529 = vmatmul.f32.gmra.mxu0 %v511
        %v530 = vpop.f32.mrf.mxu0
        %v531 = vadd.f32 %v509, %v530
        %532 = vdwg.mxu0
        %s533 = scalar_lea.vmem [#allocation3], 64
        %v534 = vld [vmem:[%s533] sm:$0xff]
        %v535 = vld [vmem:[%s533 + $0x8] sm:$0xff]
        %v536 = vld [vmem:[%s533 + $0x10] sm:$0xff]
        %v537 = vld [vmem:[%s533 + $0x18] sm:$0xff]
        %vm538 = vcmask 1045504
        %v539 = vrot.slane %v472, 2
        %v540 = vrot.slane %v473, 2
        %v541 = vsel %vm538, %v539, %v540
        %v542 = vsel %vm453, %v541, 0
        %544 = vmatpush.msra.mxu0 0.0
        %545 = vmatpush.msra.mxu0 0.0
        %546 = vmatpush.msra.mxu0 0.0
        %547 = vmatpush.msra.mxu0 0.0
        %548 = vmatpush.msra.mxu0 0.0
        %549 = vmatpush.msra.mxu0 0.0
        %550 = vmatpush.msra.mxu0 0.0
        %551 = vmatpush.msra.mxu0 0.0
        %552 = vmatpush.msra.mxu0 0.0
        %553 = vmatpush.msra.mxu0 0.0
        %554 = vmatpush.msra.mxu0 0.0
        %555 = vmatpush.msra.mxu0 0.0
        %556 = vmatpush.msra.mxu0 %v537
        %557 = vmatpush.msra.mxu0 %v536
        %558 = vmatpush.msra.mxu0 %v535
        %559 = vmatpush.msra.mxu0 %v534
        %560 = vmatmul.f32.gmra.mxu0 %v542
        %v561 = vpop.f32.mrf.mxu0
        %v562 = vadd.f32 0.0, %v561
        %563 = vdwg.mxu0
        %v564 = vadd.f32 %v531, %v562
        %v565 = vld [vmem:[%s4] sm:$0x1]
        %v567 = vperm.slane %v565, 0
        %v569 = vadd.f32 %v564, %v567
        %v570 = vmax.f32 %v569, 0.0
        %v571 = vld [vmem:[#allocation5] sm:$0xff]
        %v572 = vld [vmem:[#allocation5 + $0x8] sm:$0xff]
        %v573 = vld [vmem:[#allocation5 + $0x10] sm:$0xff]
        %v574 = vld [vmem:[#allocation5 + $0x18] sm:$0xff]
        %v575 = vld [vmem:[#allocation7] sm:$0x1]
        %v577 = vperm.slane %v575, 0
        %v580 = vsel %vm453, %v570, 0
        %582 = vmatpush.msra.mxu0 0.0
        %583 = vmatpush.msra.mxu0 0.0
        %584 = vmatpush.msra.mxu0 0.0
        %585 = vmatpush.msra.mxu0 0.0
        %586 = vmatpush.msra.mxu0 0.0
        %587 = vmatpush.msra.mxu0 0.0
        %588 = vmatpush.msra.mxu0 0.0
        %589 = vmatpush.msra.mxu0 0.0
        %590 = vmatpush.msra.mxu0 0.0
        %591 = vmatpush.msra.mxu0 0.0
        %592 = vmatpush.msra.mxu0 0.0
        %593 = vmatpush.msra.mxu0 0.0
        %594 = vmatpush.msra.mxu0 %v574
        %595 = vmatpush.msra.mxu0 %v573
        %596 = vmatpush.msra.mxu0 %v572
        %597 = vmatpush.msra.mxu0 %v571
        %598 = vmatmul.f32.gmra.mxu0 %v580
        %v599 = vpop.f32.mrf.mxu0
        %v600 = vadd.f32 %v577, %v599
        %601 = vdwg.mxu0
        %v602 = vadd.f32 %v600, %v451
        %603 = vst.msk [vmem:[%s450] sm:$0xff] %vm453, %v602
        %p604 = scmp.lt.s32.totalorder %s24, 1
        %s605 = scalar_select %p604, %s24, 1
        %p606 = scmp.lt.s32.totalorder %s25, 0
        %s607 = scalar_select %p606, %s25, 0
        %s608 = sadd.s32 %s607, %s605
        %s609 = smul.addr %s608, 8
        %s610 = scalar_lea.vmem %s7, %s609
        // Predicated region
        $region69: #{decoder_forward.14} parent=47 // pred_check
          %p611 = pneg %p232
        $region70: #{decoder_forward.14} parent=47 // pred_check_branch
          %613 = sbr.rel (%p611) target = $region72
        $region71: #{decoder_forward.14} parent=47 // pred_region
          _
        $region72: #{decoder_forward.14} parent=47 // pred_fallthru
          _
      $region48: #{decoder_forward.14} parent=5 // pred_fallthru
        _
      %p614 = scmp.le.s32.totalorder 2, %s15
      // Predicated region
      $region73: #{decoder_forward.14} parent=5 // pred_check
        %p615 = pneg %p614
      $region74: #{decoder_forward.14} parent=5 // pred_check_branch
        %617 = sbr.rel (%p615) target = $region76
      $region75: #{decoder_forward.14} parent=5 // pred_region
        %s618 = ssub.s32 %s15, 2
        // Predicated region
        $region77: #{decoder_forward.14} parent=75 // pred_check
          %p619 = pneg %p238
        $region78: #{decoder_forward.14} parent=75 // pred_check_branch
          %621 = sbr.rel (%p619) target = $region80
        $region79: #{decoder_forward.14} parent=75 // pred_region
          %p622 = scmp.lt.s32.totalorder %s26, 1
          %s623 = scalar_select %p622, %s26, 1
          %p624 = scmp.lt.s32.totalorder %s27, 0
          %s625 = scalar_select %p624, %s27, 0
          %s626 = sadd.s32 %s625, %s623
          %s627 = smul.addr %s626, 8
          %s628 = scalar_lea.vmem %s7, %s627
        $region80: #{decoder_forward.14} parent=75 // pred_fallthru
          _
      $region76: #{decoder_forward.14} parent=5 // pred_fallthru
        _
    $region6: #{decoder_forward.14} parent=1 // loop_footer
      %s19 = sadd.s32 1, %s15
    $region7: #{decoder_forward.14} parent=1 // loop_footer_branch
      %14 = sbr.rel target = $region3
    $region8: #{decoder_forward.14} parent=1 // loop_exit
      _
    %629 = vsyncpa [#allocation4], 1
    %s630 = scalar_lea.sflag [#allocation4], 1
    %631 = vsyncpa %s630, 1
    %632 = vsyncpa [#allocation6], 1

// kernel: decoder_forward.21
$region0: #{decoder_forward.21}
  #allocation0 [shape = 'u32[]', space=smem, size = 0x4, offset = 0x4, fixed_abs, tag = 'smem constant byte address 0x4 - core index']
  #allocation1 [shape = 'u32[72,128]{1,0:T(1,128)}', space=vmem, size = 0x9000, scoped, tag = 'internal scratch']
  #allocation2 [shape = 'f32[10,32]{1,0:T(8,128)}', space=vmem, size = 0x2000, scoped, tag = 'scratch operand']
  %s0 = inlined_call_operand.vmem [shape: f32[2,16,32], index: 0, kind: input, shape index: {}, may-alias: {0,1,2}]
  %s1 = inlined_call_operand.vmem [shape: f32[2,16,32], index: 1, kind: input, shape index: {}, may-alias: {0,1,2}]
  %s2 = inlined_call_operand.vmem [shape: f32[2,16,32], index: 2, kind: input, shape index: {}, may-alias: {0,1,2}]
  %s3 = inlined_call_operand.vmem [shape: f32[4,32,32], index: 3, kind: input, shape index: {}]
  %s4 = inlined_call_operand.vmem [shape: f32[1,32], index: 4, kind: input, shape index: {}]
  %s5 = inlined_call_operand.vmem [shape: f32[2,16,64], index: 5, kind: output, shape index: {}]
  %s6 = sld [smem:[#allocation0]]
  $region61: #{decoder_forward.21} parent=0
    _
  %s8 = ssub.s32 1, %s6
  %s9 = scalar_select 0, %s8, %s6
  loop: start=0, step=1, limit=6
  $region2: #{decoder_forward.21} parent=0 // loop_pre_header
    _
  $region3: #{decoder_forward.21} parent=0 // loop_header
    %s11 = sphi 0, %s15
    %p12 = scmp.ge.s32.totalorder %s11, 6
    %s18 = sphi 0, %s30
    %s19 = sphi 0, %s26
    %s20 = sphi 0, %s18
    %s21 = sphi 0, %s19
    %s22 = sphi 0, %s20
    %s23 = sphi 0, %s21
    %s35 = sphi 0, %s37
    %s38 = sphi 0, %s35
    %s39 = sphi 0, %s38
    %s55 = sphi 0, %s39
    %s69 = sphi 0, %s71
    %s72 = sphi 0, %s69
    %s73 = sphi 0, %s72
    %s89 = sphi 0, %s73
    %s103 = sphi 0, %s105
    %s106 = sphi 0, %s103
    %s107 = sphi 0, %s106
    %s123 = sphi 0, %s107
    %s127 = sphi 0, %s127
    %s129 = sphi 0, %s127
    %s130 = sphi 0, %s129
    %s144 = sphi 0, %s130
    %s148 = sphi 0, %s148
    %s150 = sphi 0, %s148
    %s151 = sphi 0, %s150
    %s165 = sphi 0, %s151
    %s173 = sphi 0, %s175
    %s176 = sphi 0, %s173
    %s177 = sphi 0, %s176
    %s193 = sphi 0, %s177
  $region4: #{decoder_forward.21} parent=0 // loop_header_branch
    %14 = sbr.rel (%p12) target = $region8
  $region5: #{decoder_forward.21} parent=0 // loop_body
    %s16 = ssub.s32 %s11, 1
    %s17 = ssub.s32 %s11, 2
    %s24 = sadd.s32 1, %s19
    %p25 = scmp.ge.s32.totalorder %s24, 2
    %s26 = scalar_select %p25, 0, %s24
    %s27 = sadd.s32 1, %s18
    %s28 = scalar_select %p25, %s27, %s18
    %p29 = scmp.ge.s32.totalorder %s28, 2
    %s30 = scalar_select %p29, 0, %s28
    %s31 = ssub.s32 %s18, %s30
    %s32 = ssub.s32 %s19, %s26
    %s33 = sor.u32 %s31, %s32
    %p34 = scmp.eq.s32.totalorder %s33, 0
    %s36 = sadd.s32 %s35, 1
    %s37 = scalar_select %p34, %s35, %s36
    %p40 = pneg %p34
    %p41 = scmp.eq.s32.totalorder %s11, 3
    %p42 = por %p40, %p41
    %p43 = scmp.ne.s32.totalorder %s35, %s38
    %p44 = scmp.eq.s32.totalorder %s11, 0
    %p45 = por %p43, %p44
    %p46 = scmp.ne.s32.totalorder %s35, %s38
    %p47 = scmp.eq.s32.totalorder %s16, 3
    %p48 = por %p46, %p47
    %p49 = scmp.ne.s32.totalorder %s38, %s39
    %p50 = scmp.eq.s32.totalorder %s16, 0
    %p51 = por %p49, %p50
    %p52 = scmp.ne.s32.totalorder %s38, %s39
    %p53 = scmp.eq.s32.totalorder %s17, 3
    %p54 = por %p52, %p53
    %p56 = scmp.ne.s32.totalorder %s39, %s55
    %p57 = scmp.eq.s32.totalorder %s17, 0
    %p58 = por %p56, %p57
    %s59 = ssub.s32 %s19, 1
    %p60 = scmp.gt.s32.totalorder %s59, 0
    %s61 = scalar_select %p60, %s59, 0
    %s62 = ssub.s32 %s26, 1
    %p63 = scmp.gt.s32.totalorder %s62, 0
    %s64 = scalar_select %p63, %s62, 0
    %s65 = ssub.s32 %s18, %s30
    %s66 = ssub.s32 %s61, %s64
    %s67 = sor.u32 %s65, %s66
    %p68 = scmp.eq.s32.totalorder %s67, 0
    %s70 = sadd.s32 %s69, 1
    %s71 = scalar_select %p68, %s69, %s70
    %p74 = pneg %p68
    %p75 = scmp.eq.s32.totalorder %s11, 3
    %p76 = por %p74, %p75
    %p77 = scmp.ne.s32.totalorder %s69, %s72
    %p78 = scmp.eq.s32.totalorder %s11, 0
    %p79 = por %p77, %p78
    %p80 = scmp.ne.s32.totalorder %s69, %s72
    %p81 = scmp.eq.s32.totalorder %s16, 3
    %p82 = por %p80, %p81
    %p83 = scmp.ne.s32.totalorder %s72, %s73
    %p84 = scmp.eq.s32.totalorder %s16, 0
    %p85 = por %p83, %p84
    %p86 = scmp.ne.s32.totalorder %s72, %s73
    %p87 = scmp.eq.s32.totalorder %s17, 3
    %p88 = por %p86, %p87
    %p90 = scmp.ne.s32.totalorder %s73, %s89
    %p91 = scmp.eq.s32.totalorder %s17, 0
    %p92 = por %p90, %p91
    %s93 = sadd.s32 %s19, 1
    %p94 = scmp.lt.s32.totalorder %s93, 1
    %s95 = scalar_select %p94, %s93, 1
    %s96 = sadd.s32 %s26, 1
    %p97 = scmp.lt.s32.totalorder %s96, 1
    %s98 = scalar_select %p97, %s96, 1
    %s99 = ssub.s32 %s18, %s30
    %s100 = ssub.s32 %s95, %s98
    %s101 = sor.u32 %s99, %s100
    %p102 = scmp.eq.s32.totalorder %s101, 0
    %s104 = sadd.s32 %s103, 1
    %s105 = scalar_select %p102, %s103, %s104
    %p108 = pneg %p102
    %p109 = scmp.eq.s32.totalorder %s11, 3
    %p110 = por %p108, %p109
    %p111 = scmp.ne.s32.totalorder %s103, %s106
    %p112 = scmp.eq.s32.totalorder %s11, 0
    %p113 = por %p111, %p112
    %p114 = scmp.ne.s32.totalorder %s103, %s106
    %p115 = scmp.eq.s32.totalorder %s16, 3
    %p116 = por %p114, %p115
    %p117 = scmp.ne.s32.totalorder %s106, %s107
    %p118 = scmp.eq.s32.totalorder %s16, 0
    %p119 = por %p117, %p118
    %p120 = scmp.ne.s32.totalorder %s106, %s107
    %p121 = scmp.eq.s32.totalorder %s17, 3
    %p122 = por %p120, %p121
    %p124 = scmp.ne.s32.totalorder %s107, %s123
    %p125 = scmp.eq.s32.totalorder %s17, 0
    %p126 = por %p124, %p125
    %s128 = sadd.s32 %s127, 1
    %p131 = scmp.eq.s32.totalorder %s11, 3
    %p132 = scmp.ne.s32.totalorder %s127, %s129
    %p133 = scmp.eq.s32.totalorder %s11, 0
    %p134 = por %p132, %p133
    %p135 = scmp.ne.s32.totalorder %s127, %s129
    %p136 = scmp.eq.s32.totalorder %s16, 3
    %p137 = por %p135, %p136
    %p138 = scmp.ne.s32.totalorder %s129, %s130
    %p139 = scmp.eq.s32.totalorder %s16, 0
    %p140 = por %p138, %p139
    %p141 = scmp.ne.s32.totalorder %s129, %s130
    %p142 = scmp.eq.s32.totalorder %s17, 3
    %p143 = por %p141, %p142
    %p145 = scmp.ne.s32.totalorder %s130, %s144
    %p146 = scmp.eq.s32.totalorder %s17, 0
    %p147 = por %p145, %p146
    %s149 = sadd.s32 %s148, 1
    %p152 = scmp.eq.s32.totalorder %s11, 3
    %p153 = scmp.ne.s32.totalorder %s148, %s150
    %p154 = scmp.eq.s32.totalorder %s11, 0
    %p155 = por %p153, %p154
    %p156 = scmp.ne.s32.totalorder %s148, %s150
    %p157 = scmp.eq.s32.totalorder %s16, 3
    %p158 = por %p156, %p157
    %p159 = scmp.ne.s32.totalorder %s150, %s151
    %p160 = scmp.eq.s32.totalorder %s16, 0
    %p161 = por %p159, %p160
    %p162 = scmp.ne.s32.totalorder %s150, %s151
    %p163 = scmp.eq.s32.totalorder %s17, 3
    %p164 = por %p162, %p163
    %p166 = scmp.ne.s32.totalorder %s151, %s165
    %p167 = scmp.eq.s32.totalorder %s17, 0
    %p168 = por %p166, %p167
    %s169 = ssub.s32 %s18, %s30
    %s170 = ssub.s32 %s19, %s26
    %s171 = sor.u32 %s169, %s170
    %p172 = scmp.eq.s32.totalorder %s171, 0
    %s174 = sadd.s32 %s173, 1
    %s175 = scalar_select %p172, %s173, %s174
    %p178 = pneg %p172
    %p179 = scmp.eq.s32.totalorder %s11, 3
    %p180 = por %p178, %p179
    %p181 = scmp.ne.s32.totalorder %s173, %s176
    %p182 = scmp.eq.s32.totalorder %s11, 0
    %p183 = por %p181, %p182
    %p184 = scmp.ne.s32.totalorder %s173, %s176
    %p185 = scmp.eq.s32.totalorder %s16, 3
    %p186 = por %p184, %p185
    %p187 = scmp.ne.s32.totalorder %s176, %s177
    %p188 = scmp.eq.s32.totalorder %s16, 0
    %p189 = por %p187, %p188
    %p190 = scmp.ne.s32.totalorder %s176, %s177
    %p191 = scmp.eq.s32.totalorder %s17, 3
    %p192 = por %p190, %p191
    %p194 = scmp.ne.s32.totalorder %s177, %s193
    %p195 = scmp.eq.s32.totalorder %s17, 0
    %p196 = por %p194, %p195
    %p197 = scmp.le.s32.totalorder 1, %s11
    %p198 = scmp.lt.s32.totalorder %s11, 5
    %p199 = pnand %p197, %p198
    %p200 = pneg %p199
    // Predicated region
    $region9: #{decoder_forward.21} parent=5 // pred_check
      _
    $region10: #{decoder_forward.21} parent=5 // pred_check_branch
      %202 = sbr.rel (%p199) target = $region12
    $region11: #{decoder_forward.21} parent=5 // pred_region
      %s203 = ssub.s32 %s11, 1
      // Predicated region
      $region13: #{decoder_forward.21} parent=11 // pred_check
        %p204 = pneg %p140
      $region14: #{decoder_forward.21} parent=11 // pred_check_branch
        %206 = sbr.rel (%p204) target = $region16
      $region15: #{decoder_forward.21} parent=11 // pred_region
        _
      $region16: #{decoder_forward.21} parent=11 // pred_fallthru
        _
      // Predicated region
      $region17: #{decoder_forward.21} parent=11 // pred_check
        %p207 = pneg %p161
      $region18: #{decoder_forward.21} parent=11 // pred_check_branch
        %209 = sbr.rel (%p207) target = $region20
      $region19: #{decoder_forward.21} parent=11 // pred_region
        _
      $region20: #{decoder_forward.21} parent=11 // pred_fallthru
        _
    $region12: #{decoder_forward.21} parent=5 // pred_fallthru
      _
    %p210 = scmp.lt.s32.totalorder %s11, 4
    // Predicated region
    $region21: #{decoder_forward.21} parent=5 // pred_check
      %p211 = pneg %p210
    $region22: #{decoder_forward.21} parent=5 // pred_check_branch
      %213 = sbr.rel (%p211) target = $region24
    $region23: #{decoder_forward.21} parent=5 // pred_region
      // Predicated region
      $region25: #{decoder_forward.21} parent=23 // pred_check
        %p214 = pneg %p45
      $region26: #{decoder_forward.21} parent=23 // pred_check_branch
        %216 = sbr.rel (%p214) target = $region28
      $region27: #{decoder_forward.21} parent=23 // pred_region
        %p217 = scmp.lt.s32.totalorder %s18, 1
        %s218 = scalar_select %p217, %s18, 1
        %p219 = scmp.lt.s32.totalorder %s19, 1
        %s220 = scalar_select %p219, %s19, 1
        %s221 = smul.addr %s218, 2
        %s222 = sadd.s32 %s220, %s221
        %s223 = smul.addr %s222, 8
        %s224 = scalar_lea.vmem %s0, %s223
      $region28: #{decoder_forward.21} parent=23 // pred_fallthru
        _
      // Predicated region
      $region29: #{decoder_forward.21} parent=23 // pred_check
        %p225 = pneg %p79
      $region30: #{decoder_forward.21} parent=23 // pred_check_branch
        %227 = sbr.rel (%p225) target = $region32
      $region31: #{decoder_forward.21} parent=23 // pred_region
        %s228 = ssub.s32 %s19, 1
        %p229 = scmp.gt.s32.totalorder %s228, 0
        %s230 = scalar_select %p229, %s228, 0
        %p231 = scmp.lt.s32.totalorder %s18, 1
        %s232 = scalar_select %p231, %s18, 1
        %p233 = scmp.lt.s32.totalorder %s230, 1
        %s234 = scalar_select %p233, %s230, 1
        %s235 = smul.addr %s232, 2
        %s236 = sadd.s32 %s234, %s235
        %s237 = smul.addr %s236, 8
        %s238 = scalar_lea.vmem %s1, %s237
        %s239 = ssub.s32 %s19, 1
        %p240 = scmp.gt.s32.totalorder %s239, 0
        %s241 = scalar_select %p240, %s239, 0
      $region32: #{decoder_forward.21} parent=23 // pred_fallthru
        _
      // Predicated region
      $region33: #{decoder_forward.21} parent=23 // pred_check
        %p242 = pneg %p113
      $region34: #{decoder_forward.21} parent=23 // pred_check_branch
        %244 = sbr.rel (%p242) target = $region36
      $region35: #{decoder_forward.21} parent=23 // pred_region
        %s245 = sadd.s32 %s19, 1
        %p246 = scmp.lt.s32.totalorder %s245, 1
        %s247 = scalar_select %p246, %s245, 1
        %p248 = scmp.lt.s32.totalorder %s18, 1
        %s249 = scalar_select %p248, %s18, 1
        %p250 = scmp.lt.s32.totalorder %s247, 1
        %s251 = scalar_select %p250, %s247, 1
        %s252 = smul.addr %s249, 2
        %s253 = sadd.s32 %s251, %s252
        %s254 = smul.addr %s253, 8
        %s255 = scalar_lea.vmem %s2, %s254
        %s256 = sadd.s32 %s19, 1
        %p257 = scmp.lt.s32.totalorder %s256, 1
        %s258 = scalar_select %p257, %s256, 1
      $region36: #{decoder_forward.21} parent=23 // pred_fallthru
        _
    $region24: #{decoder_forward.21} parent=5 // pred_fallthru
      _
    %p259 = scmp.le.s32.totalorder 1, %s11
    %p260 = scmp.lt.s32.totalorder %s11, 5
    %p261 = pnand %p259, %p260
    %p262 = pneg %p261
    // Predicated region
    $region37: #{decoder_forward.21} parent=5 // pred_check
      _
    $region38: #{decoder_forward.21} parent=5 // pred_check_branch
      %264 = sbr.rel (%p261) target = $region40
    $region39: #{decoder_forward.21} parent=5 // pred_region
      %s265 = ssub.s32 %s11, 1
      %p266 = scmp.lt.s32.totalorder %s20, 1
      %s267 = scalar_select %p266, %s20, 1
      %p268 = scmp.lt.s32.totalorder %s21, 1
      %s269 = scalar_select %p268, %s21, 1
      %s270 = smul.addr %s267, 2
      %s271 = sadd.s32 %s269, %s270
      %s272 = smul.addr %s271, 8
      %s273 = scalar_lea.vmem %s0, %s272
      %p274 = pneg %p51
      %p275 = pneg %p48
      %s276 = ssub.s32 %s21, 1
      %p277 = scmp.gt.s32.totalorder %s276, 0
      %s278 = scalar_select %p277, %s276, 0
      %p279 = scmp.lt.s32.totalorder %s20, 1
      %s280 = scalar_select %p279, %s20, 1
      %p281 = scmp.lt.s32.totalorder %s278, 1
      %s282 = scalar_select %p281, %s278, 1
      %s283 = smul.addr %s280, 2
      %s284 = sadd.s32 %s282, %s283
      %s285 = smul.addr %s284, 8
      %s286 = scalar_lea.vmem %s1, %s285
      %p287 = pneg %p85
      %p288 = pneg %p82
      %s289 = sadd.s32 %s21, 1
      %p290 = scmp.lt.s32.totalorder %s289, 1
      %s291 = scalar_select %p290, %s289, 1
      %p292 = scmp.lt.s32.totalorder %s20, 1
      %s293 = scalar_select %p292, %s20, 1
      %p294 = scmp.lt.s32.totalorder %s291, 1
      %s295 = scalar_select %p294, %s291, 1
      %s296 = smul.addr %s293, 2
      %s297 = sadd.s32 %s295, %s296
      %s298 = smul.addr %s297, 8
      %s299 = scalar_lea.vmem %s2, %s298
      %p300 = pneg %p119
      %p301 = pneg %p116
      %p302 = pneg %p140
      %p303 = pneg %p137
      %p304 = pneg %p161
      %p305 = pneg %p158
      %p306 = pneg %p189
      %p307 = pneg %p186
      %p308 = scmp.lt.s32.totalorder %s20, 1
      %s309 = scalar_select %p308, %s20, 1
      %p310 = scmp.lt.s32.totalorder %s21, 1
      %s311 = scalar_select %p310, %s21, 1
      %s312 = smul.addr %s309, 2
      %s313 = sadd.s32 %s311, %s312
      %s314 = smul.addr %s313, 8
      %s315 = scalar_lea.vmem %s5, %s314
      %p316 = scmp.lt.s32.totalorder %s20, 1
      %s317 = scalar_select %p316, %s20, 1
      %p318 = scmp.lt.s32.totalorder %s21, 1
      %s319 = scalar_select %p318, %s21, 1
      %s320 = smul.addr %s317, 2
      %s321 = sadd.s32 %s319, %s320
      %s322 = smul.addr %s321, 8
      %s323 = scalar_lea.vmem %s0, %s322
      %s324 = ssub.s32 %s21, 1
      %p325 = scmp.gt.s32.totalorder %s324, 0
      %s326 = scalar_select %p325, %s324, 0
      %p327 = scmp.lt.s32.totalorder %s20, 1
      %s328 = scalar_select %p327, %s20, 1
      %p329 = scmp.lt.s32.totalorder %s326, 1
      %s330 = scalar_select %p329, %s326, 1
      %s331 = smul.addr %s328, 2
      %s332 = sadd.s32 %s330, %s331
      %s333 = smul.addr %s332, 8
      %s334 = scalar_lea.vmem %s1, %s333
      %s335 = ssub.s32 %s21, 1
      %p336 = scmp.gt.s32.totalorder %s335, 0
      %s337 = scalar_select %p336, %s335, 0
      %s338 = sadd.s32 %s21, 1
      %p339 = scmp.lt.s32.totalorder %s338, 1
      %s340 = scalar_select %p339, %s338, 1
      %p341 = scmp.lt.s32.totalorder %s20, 1
      %s342 = scalar_select %p341, %s20, 1
      %p343 = scmp.lt.s32.totalorder %s340, 1
      %s344 = scalar_select %p343, %s340, 1
      %s345 = smul.addr %s342, 2
      %s346 = sadd.s32 %s344, %s345
      %s347 = smul.addr %s346, 8
      %s348 = scalar_lea.vmem %s2, %s347
      %s349 = sadd.s32 %s21, 1
      %p350 = scmp.lt.s32.totalorder %s349, 1
      %s351 = scalar_select %p350, %s349, 1
      %p352 = scmp.lt.s32.totalorder %s20, 1
      %s353 = scalar_select %p352, %s20, 1
      %p354 = scmp.lt.s32.totalorder %s21, 1
      %s355 = scalar_select %p354, %s21, 1
      %s356 = smul.addr %s353, 2
      %s357 = sadd.s32 %s355, %s356
      %s358 = smul.addr %s357, 8
      %s359 = scalar_lea.vmem %s5, %s358
      %v360 = vld [vmem:[%s323] sm:$0xff]
      %vm361 = vcmask 261120
      %362 = vst.msk [vmem:[#allocation2 + $0x1] sm:$0xff] %vm361, %v360
      %vm363 = vcmask 253952
      %364 = vst.msk [vmem:[#allocation2] sm:$0x1] %vm363, 0.0
      %365 = vst.msk [vmem:[#allocation2 + $0x9] sm:$0x1] %vm363, 0.0
      %p366 = scmp.gt.s32.totalorder %s21, 0
      // Predicated region
      $region41: #{decoder_forward.21} parent=39 // pred_check
        %p367 = pneg %p366
      $region42: #{decoder_forward.21} parent=39 // pred_check_branch
        %369 = sbr.rel (%p367) target = $region44
      $region43: #{decoder_forward.21} parent=39 // pred_region
        %v370 = vld [vmem:[%s334 + $0x7] sm:$0x1]
        %371 = vst.msk [vmem:[#allocation2] sm:$0x1] %vm363, %v370
      $region44: #{decoder_forward.21} parent=39 // pred_fallthru
        _
      %p372 = scmp.lt.s32.totalorder %s21, 1
      // Predicated region
      $region45: #{decoder_forward.21} parent=39 // pred_check
        %p373 = pneg %p372
      $region46: #{decoder_forward.21} parent=39 // pred_check_branch
        %375 = sbr.rel (%p373) target = $region48
      $region47: #{decoder_forward.21} parent=39 // pred_region
        %v376 = vld [vmem:[%s348] sm:$0x1]
        %377 = vst.msk [vmem:[#allocation2 + $0x9] sm:$0x1] %vm363, %v376
      $region48: #{decoder_forward.21} parent=39 // pred_fallthru
        _
      %v378 = vld [vmem:[#allocation2] sm:$0xff]
      %v379 = vld [vmem:[#allocation2 + $0x8] sm:$0x3]
      %v380 = vld [vmem:[%s4] sm:$0x1]
      %s381 = scalar_lea.vmem %s3, 96
      %v382 = vld [vmem:[%s381] sm:$0xff]
      %v383 = vld [vmem:[%s381 + $0x8] sm:$0xff]
      %v384 = vld [vmem:[%s381 + $0x10] sm:$0xff]
      %v385 = vld [vmem:[%s381 + $0x18] sm:$0xff]
      %s386 = scalar_lea.vmem %s3, 32
      %v387 = vld [vmem:[%s386] sm:$0xff]
      %v388 = vld [vmem:[%s386 + $0x8] sm:$0xff]
      %v389 = vld [vmem:[%s386 + $0x10] sm:$0xff]
      %v390 = vld [vmem:[%s386 + $0x18] sm:$0xff]
      %vm393 = vcmask 1046528
      %v394 = vrot.slane %v378, 1
      %v395 = vrot.slane %v379, 1
      %v396 = vsel %vm393, %v394, %v395
      %v397 = vsel %vm361, %v396, 0
      %399 = vmatpush.msra.mxu0 0.0
      %400 = vmatpush.msra.mxu0 0.0
      %401 = vmatpush.msra.mxu0 0.0
      %402 = vmatpush.msra.mxu0 0.0
      %403 = vmatpush.msra.mxu0 0.0
      %404 = vmatpush.msra.mxu0 0.0
      %405 = vmatpush.msra.mxu0 0.0
      %406 = vmatpush.msra.mxu0 0.0
      %407 = vmatpush.msra.mxu0 0.0
      %408 = vmatpush.msra.mxu0 0.0
      %409 = vmatpush.msra.mxu0 0.0
      %410 = vmatpush.msra.mxu0 0.0
      %411 = vmatpush.msra.mxu0 %v390
      %412 = vmatpush.msra.mxu0 %v389
      %413 = vmatpush.msra.mxu0 %v388
      %414 = vmatpush.msra.mxu0 %v387
      %415 = vmatmul.f32.gmra.mxu0 %v397
      %v416 = vpop.f32.mrf.mxu0
      %v417 = vadd.f32 0.0, %v416
      %418 = vdwg.mxu0
      %v419 = vsel %vm361, %v378, 0
      %421 = vmatpush.msra.mxu0 0.0
      %422 = vmatpush.msra.mxu0 0.0
      %423 = vmatpush.msra.mxu0 0.0
      %424 = vmatpush.msra.mxu0 0.0
      %425 = vmatpush.msra.mxu0 0.0
      %426 = vmatpush.msra.mxu0 0.0
      %427 = vmatpush.msra.mxu0 0.0
      %428 = vmatpush.msra.mxu0 0.0
      %429 = vmatpush.msra.mxu0 0.0
      %430 = vmatpush.msra.mxu0 0.0
      %431 = vmatpush.msra.mxu0 0.0
      %432 = vmatpush.msra.mxu0 0.0
      %433 = vmatpush.msra.mxu0 %v385
      %434 = vmatpush.msra.mxu0 %v384
      %435 = vmatpush.msra.mxu0 %v383
      %436 = vmatpush.msra.mxu0 %v382
      %437 = vmatmul.f32.gmra.mxu0 %v419
      %v438 = vpop.f32.mrf.mxu0
      %v439 = vadd.f32 %v417, %v438
      %440 = vdwg.mxu0
      %v442 = vperm.slane %v380, 0
      %v444 = vadd.f32 %v439, %v442
      %s445 = scalar_lea.vmem %s3, 64
      %v446 = vld [vmem:[%s445] sm:$0xff]
      %v447 = vld [vmem:[%s445 + $0x8] sm:$0xff]
      %v448 = vld [vmem:[%s445 + $0x10] sm:$0xff]
      %v449 = vld [vmem:[%s445 + $0x18] sm:$0xff]
      %v450 = vld [vmem:[%s3] sm:$0xff]
      %v451 = vld [vmem:[%s3 + $0x8] sm:$0xff]
      %v452 = vld [vmem:[%s3 + $0x10] sm:$0xff]
      %v453 = vld [vmem:[%s3 + $0x18] sm:$0xff]
      %vm454 = vcmask 1045504
      %v455 = vrot.slane %v378, 2
      %v456 = vrot.slane %v379, 2
      %v457 = vsel %vm454, %v455, %v456
      %v458 = vsel %vm361, %v457, 0
      %460 = vmatpush.msra.mxu0 0.0
      %461 = vmatpush.msra.mxu0 0.0
      %462 = vmatpush.msra.mxu0 0.0
      %463 = vmatpush.msra.mxu0 0.0
      %464 = vmatpush.msra.mxu0 0.0
      %465 = vmatpush.msra.mxu0 0.0
      %466 = vmatpush.msra.mxu0 0.0
      %467 = vmatpush.msra.mxu0 0.0
      %468 = vmatpush.msra.mxu0 0.0
      %469 = vmatpush.msra.mxu0 0.0
      %470 = vmatpush.msra.mxu0 0.0
      %471 = vmatpush.msra.mxu0 0.0
      %472 = vmatpush.msra.mxu0 %v453
      %473 = vmatpush.msra.mxu0 %v452
      %474 = vmatpush.msra.mxu0 %v451
      %475 = vmatpush.msra.mxu0 %v450
      %476 = vmatmul.f32.gmra.mxu0 %v458
      %v477 = vpop.f32.mrf.mxu0
      %v478 = vadd.f32 0.0, %v477
      %479 = vdwg.mxu0
      %480 = vmatpush.msra.mxu0 0.0
      %481 = vmatpush.msra.mxu0 0.0
      %482 = vmatpush.msra.mxu0 0.0
      %483 = vmatpush.msra.mxu0 0.0
      %484 = vmatpush.msra.mxu0 0.0
      %485 = vmatpush.msra.mxu0 0.0
      %486 = vmatpush.msra.mxu0 0.0
      %487 = vmatpush.msra.mxu0 0.0
      %488 = vmatpush.msra.mxu0 0.0
      %489 = vmatpush.msra.mxu0 0.0
      %490 = vmatpush.msra.mxu0 0.0
      %491 = vmatpush.msra.mxu0 0.0
      %492 = vmatpush.msra.mxu0 %v449
      %493 = vmatpush.msra.mxu0 %v448
      %494 = vmatpush.msra.mxu0 %v447
      %495 = vmatpush.msra.mxu0 %v446
      %496 = vmatmul.f32.gmra.mxu0 %v397
      %v497 = vpop.f32.mrf.mxu0
      %v498 = vadd.f32 %v478, %v497
      %499 = vdwg.mxu0
      %v500 = vadd.f32 %v498, %v442
      %501 = vst.msk [vmem:[%s359] sm:$0xff] %vm361, %v444
      %503 = vrot.lane.b32.xlu0 %v500, 32
      %v504 = vpop.permute.xlu0 %503
      %vm506 = vcmask 523520
      %507 = vst.msk [vmem:[%s359] sm:$0xff] %vm506, %v504
      %p508 = scmp.lt.s32.totalorder %s20, 1
      %s509 = scalar_select %p508, %s20, 1
      %p510 = scmp.lt.s32.totalorder %s21, 1
      %s511 = scalar_select %p510, %s21, 1
      %s512 = smul.addr %s509, 2
      %s513 = sadd.s32 %s511, %s512
      %s514 = smul.addr %s513, 8
      %s515 = scalar_lea.vmem %s5, %s514
      // Predicated region
      $region49: #{decoder_forward.21} parent=39 // pred_check
        %p516 = pneg %p186
      $region50: #{decoder_forward.21} parent=39 // pred_check_branch
        %518 = sbr.rel (%p516) target = $region52
      $region51: #{decoder_forward.21} parent=39 // pred_region
        _
      $region52: #{decoder_forward.21} parent=39 // pred_fallthru
        _
    $region40: #{decoder_forward.21} parent=5 // pred_fallthru
      _
    %p519 = scmp.le.s32.totalorder 2, %s11
    // Predicated region
    $region53: #{decoder_forward.21} parent=5 // pred_check
      %p520 = pneg %p519
    $region54: #{decoder_forward.21} parent=5 // pred_check_branch
      %522 = sbr.rel (%p520) target = $region56
    $region55: #{decoder_forward.21} parent=5 // pred_region
      %s523 = ssub.s32 %s11, 2
      // Predicated region
      $region57: #{decoder_forward.21} parent=55 // pred_check
        %p524 = pneg %p192
      $region58: #{decoder_forward.21} parent=55 // pred_check_branch
        %526 = sbr.rel (%p524) target = $region60
      $region59: #{decoder_forward.21} parent=55 // pred_region
        %p527 = scmp.lt.s32.totalorder %s22, 1
        %s528 = scalar_select %p527, %s22, 1
        %p529 = scmp.lt.s32.totalorder %s23, 1
        %s530 = scalar_select %p529, %s23, 1
        %s531 = smul.addr %s528, 2
        %s532 = sadd.s32 %s530, %s531
        %s533 = smul.addr %s532, 8
        %s534 = scalar_lea.vmem %s5, %s533
      $region60: #{decoder_forward.21} parent=55 // pred_fallthru
        _
    $region56: #{decoder_forward.21} parent=5 // pred_fallthru
      _
  $region6: #{decoder_forward.21} parent=0 // loop_footer
    %s15 = sadd.s32 1, %s11
  $region7: #{decoder_forward.21} parent=0 // loop_footer_branch
    %10 = sbr.rel target = $region3
  $region8: #{decoder_forward.21} parent=0 // loop_exit
    _

// kernel: decoder_forward.18
$region0: #{decoder_forward.18}
  #allocation0 [shape = 'u32[]', space=smem, size = 0x4, offset = 0x4, fixed_abs, tag = 'smem constant byte address 0x4 - core index']
  #allocation1 [shape = 'u32[72,128]{1,0:T(1,128)}', space=vmem, size = 0x9000, scoped, tag = 'internal scratch']
  #allocation2 [shape = 'f32[10,32]{1,0:T(8,128)}', space=vmem, size = 0x2000, scoped, tag = 'scratch operand']
  %s0 = inlined_call_operand.vmem [shape: f32[2,16,32], index: 0, kind: input, shape index: {}, may-alias: {0,1,2}]
  %s1 = inlined_call_operand.vmem [shape: f32[2,16,32], index: 1, kind: input, shape index: {}, may-alias: {0,1,2}]
  %s2 = inlined_call_operand.vmem [shape: f32[2,16,32], index: 2, kind: input, shape index: {}, may-alias: {0,1,2}]
  %s3 = inlined_call_operand.vmem [shape: f32[3,32,32], index: 3, kind: input, shape index: {}]
  %s4 = inlined_call_operand.vmem [shape: f32[1,32], index: 4, kind: input, shape index: {}]
  %s5 = inlined_call_operand.vmem [shape: f32[1,32,32], index: 5, kind: input, shape index: {}]
  %s6 = inlined_call_operand.vmem [shape: f32[1,32], index: 6, kind: input, shape index: {}]
  %s7 = inlined_call_operand.vmem [shape: f32[2,16,32], index: 7, kind: output, shape index: {}]
  %s8 = sld [smem:[#allocation0]]
  $region69: #{decoder_forward.18} parent=0
    _
  %s10 = ssub.s32 1, %s8
  %s11 = scalar_select 0, %s10, %s8
  loop: start=0, step=1, limit=6
  $region2: #{decoder_forward.18} parent=0 // loop_pre_header
    _
  $region3: #{decoder_forward.18} parent=0 // loop_header
    %s13 = sphi 0, %s17
    %p14 = scmp.ge.s32.totalorder %s13, 6
    %s20 = sphi 0, %s32
    %s21 = sphi 0, %s28
    %s22 = sphi 0, %s20
    %s23 = sphi 0, %s21
    %s24 = sphi 0, %s22
    %s25 = sphi 0, %s23
    %s37 = sphi 0, %s39
    %s40 = sphi 0, %s37
    %s41 = sphi 0, %s40
    %s57 = sphi 0, %s41
    %s71 = sphi 0, %s73
    %s74 = sphi 0, %s71
    %s75 = sphi 0, %s74
    %s91 = sphi 0, %s75
    %s105 = sphi 0, %s107
    %s108 = sphi 0, %s105
    %s109 = sphi 0, %s108
    %s125 = sphi 0, %s109
    %s129 = sphi 0, %s129
    %s131 = sphi 0, %s129
    %s132 = sphi 0, %s131
    %s146 = sphi 0, %s132
    %s150 = sphi 0, %s150
    %s152 = sphi 0, %s150
    %s153 = sphi 0, %s152
    %s167 = sphi 0, %s153
    %s171 = sphi 0, %s171
    %s173 = sphi 0, %s171
    %s174 = sphi 0, %s173
    %s188 = sphi 0, %s174
    %s192 = sphi 0, %s192
    %s194 = sphi 0, %s192
    %s195 = sphi 0, %s194
    %s209 = sphi 0, %s195
    %s217 = sphi 0, %s219
    %s220 = sphi 0, %s217
    %s221 = sphi 0, %s220
    %s237 = sphi 0, %s221
  $region4: #{decoder_forward.18} parent=0 // loop_header_branch
    %16 = sbr.rel (%p14) target = $region8
  $region5: #{decoder_forward.18} parent=0 // loop_body
    %s18 = ssub.s32 %s13, 1
    %s19 = ssub.s32 %s13, 2
    %s26 = sadd.s32 1, %s21
    %p27 = scmp.ge.s32.totalorder %s26, 2
    %s28 = scalar_select %p27, 0, %s26
    %s29 = sadd.s32 1, %s20
    %s30 = scalar_select %p27, %s29, %s20
    %p31 = scmp.ge.s32.totalorder %s30, 2
    %s32 = scalar_select %p31, 0, %s30
    %s33 = ssub.s32 %s20, %s32
    %s34 = ssub.s32 %s21, %s28
    %s35 = sor.u32 %s33, %s34
    %p36 = scmp.eq.s32.totalorder %s35, 0
    %s38 = sadd.s32 %s37, 1
    %s39 = scalar_select %p36, %s37, %s38
    %p42 = pneg %p36
    %p43 = scmp.eq.s32.totalorder %s13, 3
    %p44 = por %p42, %p43
    %p45 = scmp.ne.s32.totalorder %s37, %s40
    %p46 = scmp.eq.s32.totalorder %s13, 0
    %p47 = por %p45, %p46
    %p48 = scmp.ne.s32.totalorder %s37, %s40
    %p49 = scmp.eq.s32.totalorder %s18, 3
    %p50 = por %p48, %p49
    %p51 = scmp.ne.s32.totalorder %s40, %s41
    %p52 = scmp.eq.s32.totalorder %s18, 0
    %p53 = por %p51, %p52
    %p54 = scmp.ne.s32.totalorder %s40, %s41
    %p55 = scmp.eq.s32.totalorder %s19, 3
    %p56 = por %p54, %p55
    %p58 = scmp.ne.s32.totalorder %s41, %s57
    %p59 = scmp.eq.s32.totalorder %s19, 0
    %p60 = por %p58, %p59
    %s61 = ssub.s32 %s21, 1
    %p62 = scmp.gt.s32.totalorder %s61, 0
    %s63 = scalar_select %p62, %s61, 0
    %s64 = ssub.s32 %s28, 1
    %p65 = scmp.gt.s32.totalorder %s64, 0
    %s66 = scalar_select %p65, %s64, 0
    %s67 = ssub.s32 %s20, %s32
    %s68 = ssub.s32 %s63, %s66
    %s69 = sor.u32 %s67, %s68
    %p70 = scmp.eq.s32.totalorder %s69, 0
    %s72 = sadd.s32 %s71, 1
    %s73 = scalar_select %p70, %s71, %s72
    %p76 = pneg %p70
    %p77 = scmp.eq.s32.totalorder %s13, 3
    %p78 = por %p76, %p77
    %p79 = scmp.ne.s32.totalorder %s71, %s74
    %p80 = scmp.eq.s32.totalorder %s13, 0
    %p81 = por %p79, %p80
    %p82 = scmp.ne.s32.totalorder %s71, %s74
    %p83 = scmp.eq.s32.totalorder %s18, 3
    %p84 = por %p82, %p83
    %p85 = scmp.ne.s32.totalorder %s74, %s75
    %p86 = scmp.eq.s32.totalorder %s18, 0
    %p87 = por %p85, %p86
    %p88 = scmp.ne.s32.totalorder %s74, %s75
    %p89 = scmp.eq.s32.totalorder %s19, 3
    %p90 = por %p88, %p89
    %p92 = scmp.ne.s32.totalorder %s75, %s91
    %p93 = scmp.eq.s32.totalorder %s19, 0
    %p94 = por %p92, %p93
    %s95 = sadd.s32 %s21, 1
    %p96 = scmp.lt.s32.totalorder %s95, 1
    %s97 = scalar_select %p96, %s95, 1
    %s98 = sadd.s32 %s28, 1
    %p99 = scmp.lt.s32.totalorder %s98, 1
    %s100 = scalar_select %p99, %s98, 1
    %s101 = ssub.s32 %s20, %s32
    %s102 = ssub.s32 %s97, %s100
    %s103 = sor.u32 %s101, %s102
    %p104 = scmp.eq.s32.totalorder %s103, 0
    %s106 = sadd.s32 %s105, 1
    %s107 = scalar_select %p104, %s105, %s106
    %p110 = pneg %p104
    %p111 = scmp.eq.s32.totalorder %s13, 3
    %p112 = por %p110, %p111
    %p113 = scmp.ne.s32.totalorder %s105, %s108
    %p114 = scmp.eq.s32.totalorder %s13, 0
    %p115 = por %p113, %p114
    %p116 = scmp.ne.s32.totalorder %s105, %s108
    %p117 = scmp.eq.s32.totalorder %s18, 3
    %p118 = por %p116, %p117
    %p119 = scmp.ne.s32.totalorder %s108, %s109
    %p120 = scmp.eq.s32.totalorder %s18, 0
    %p121 = por %p119, %p120
    %p122 = scmp.ne.s32.totalorder %s108, %s109
    %p123 = scmp.eq.s32.totalorder %s19, 3
    %p124 = por %p122, %p123
    %p126 = scmp.ne.s32.totalorder %s109, %s125
    %p127 = scmp.eq.s32.totalorder %s19, 0
    %p128 = por %p126, %p127
    %s130 = sadd.s32 %s129, 1
    %p133 = scmp.eq.s32.totalorder %s13, 3
    %p134 = scmp.ne.s32.totalorder %s129, %s131
    %p135 = scmp.eq.s32.totalorder %s13, 0
    %p136 = por %p134, %p135
    %p137 = scmp.ne.s32.totalorder %s129, %s131
    %p138 = scmp.eq.s32.totalorder %s18, 3
    %p139 = por %p137, %p138
    %p140 = scmp.ne.s32.totalorder %s131, %s132
    %p141 = scmp.eq.s32.totalorder %s18, 0
    %p142 = por %p140, %p141
    %p143 = scmp.ne.s32.totalorder %s131, %s132
    %p144 = scmp.eq.s32.totalorder %s19, 3
    %p145 = por %p143, %p144
    %p147 = scmp.ne.s32.totalorder %s132, %s146
    %p148 = scmp.eq.s32.totalorder %s19, 0
    %p149 = por %p147, %p148
    %s151 = sadd.s32 %s150, 1
    %p154 = scmp.eq.s32.totalorder %s13, 3
    %p155 = scmp.ne.s32.totalorder %s150, %s152
    %p156 = scmp.eq.s32.totalorder %s13, 0
    %p157 = por %p155, %p156
    %p158 = scmp.ne.s32.totalorder %s150, %s152
    %p159 = scmp.eq.s32.totalorder %s18, 3
    %p160 = por %p158, %p159
    %p161 = scmp.ne.s32.totalorder %s152, %s153
    %p162 = scmp.eq.s32.totalorder %s18, 0
    %p163 = por %p161, %p162
    %p164 = scmp.ne.s32.totalorder %s152, %s153
    %p165 = scmp.eq.s32.totalorder %s19, 3
    %p166 = por %p164, %p165
    %p168 = scmp.ne.s32.totalorder %s153, %s167
    %p169 = scmp.eq.s32.totalorder %s19, 0
    %p170 = por %p168, %p169
    %s172 = sadd.s32 %s171, 1
    %p175 = scmp.eq.s32.totalorder %s13, 3
    %p176 = scmp.ne.s32.totalorder %s171, %s173
    %p177 = scmp.eq.s32.totalorder %s13, 0
    %p178 = por %p176, %p177
    %p179 = scmp.ne.s32.totalorder %s171, %s173
    %p180 = scmp.eq.s32.totalorder %s18, 3
    %p181 = por %p179, %p180
    %p182 = scmp.ne.s32.totalorder %s173, %s174
    %p183 = scmp.eq.s32.totalorder %s18, 0
    %p184 = por %p182, %p183
    %p185 = scmp.ne.s32.totalorder %s173, %s174
    %p186 = scmp.eq.s32.totalorder %s19, 3
    %p187 = por %p185, %p186
    %p189 = scmp.ne.s32.totalorder %s174, %s188
    %p190 = scmp.eq.s32.totalorder %s19, 0
    %p191 = por %p189, %p190
    %s193 = sadd.s32 %s192, 1
    %p196 = scmp.eq.s32.totalorder %s13, 3
    %p197 = scmp.ne.s32.totalorder %s192, %s194
    %p198 = scmp.eq.s32.totalorder %s13, 0
    %p199 = por %p197, %p198
    %p200 = scmp.ne.s32.totalorder %s192, %s194
    %p201 = scmp.eq.s32.totalorder %s18, 3
    %p202 = por %p200, %p201
    %p203 = scmp.ne.s32.totalorder %s194, %s195
    %p204 = scmp.eq.s32.totalorder %s18, 0
    %p205 = por %p203, %p204
    %p206 = scmp.ne.s32.totalorder %s194, %s195
    %p207 = scmp.eq.s32.totalorder %s19, 3
    %p208 = por %p206, %p207
    %p210 = scmp.ne.s32.totalorder %s195, %s209
    %p211 = scmp.eq.s32.totalorder %s19, 0
    %p212 = por %p210, %p211
    %s213 = ssub.s32 %s20, %s32
    %s214 = ssub.s32 %s21, %s28
    %s215 = sor.u32 %s213, %s214
    %p216 = scmp.eq.s32.totalorder %s215, 0
    %s218 = sadd.s32 %s217, 1
    %s219 = scalar_select %p216, %s217, %s218
    %p222 = pneg %p216
    %p223 = scmp.eq.s32.totalorder %s13, 3
    %p224 = por %p222, %p223
    %p225 = scmp.ne.s32.totalorder %s217, %s220
    %p226 = scmp.eq.s32.totalorder %s13, 0
    %p227 = por %p225, %p226
    %p228 = scmp.ne.s32.totalorder %s217, %s220
    %p229 = scmp.eq.s32.totalorder %s18, 3
    %p230 = por %p228, %p229
    %p231 = scmp.ne.s32.totalorder %s220, %s221
    %p232 = scmp.eq.s32.totalorder %s18, 0
    %p233 = por %p231, %p232
    %p234 = scmp.ne.s32.totalorder %s220, %s221
    %p235 = scmp.eq.s32.totalorder %s19, 3
    %p236 = por %p234, %p235
    %p238 = scmp.ne.s32.totalorder %s221, %s237
    %p239 = scmp.eq.s32.totalorder %s19, 0
    %p240 = por %p238, %p239
    %p241 = scmp.le.s32.totalorder 1, %s13
    %p242 = scmp.lt.s32.totalorder %s13, 5
    %p243 = pnand %p241, %p242
    %p244 = pneg %p243
    // Predicated region
    $region9: #{decoder_forward.18} parent=5 // pred_check
      _
    $region10: #{decoder_forward.18} parent=5 // pred_check_branch
      %246 = sbr.rel (%p243) target = $region12
    $region11: #{decoder_forward.18} parent=5 // pred_region
      %s247 = ssub.s32 %s13, 1
      // Predicated region
      $region13: #{decoder_forward.18} parent=11 // pred_check
        %p248 = pneg %p142
      $region14: #{decoder_forward.18} parent=11 // pred_check_branch
        %250 = sbr.rel (%p248) target = $region16
      $region15: #{decoder_forward.18} parent=11 // pred_region
        _
      $region16: #{decoder_forward.18} parent=11 // pred_fallthru
        _
      // Predicated region
      $region17: #{decoder_forward.18} parent=11 // pred_check
        %p251 = pneg %p163
      $region18: #{decoder_forward.18} parent=11 // pred_check_branch
        %253 = sbr.rel (%p251) target = $region20
      $region19: #{decoder_forward.18} parent=11 // pred_region
        _
      $region20: #{decoder_forward.18} parent=11 // pred_fallthru
        _
      // Predicated region
      $region21: #{decoder_forward.18} parent=11 // pred_check
        %p254 = pneg %p184
      $region22: #{decoder_forward.18} parent=11 // pred_check_branch
        %256 = sbr.rel (%p254) target = $region24
      $region23: #{decoder_forward.18} parent=11 // pred_region
        _
      $region24: #{decoder_forward.18} parent=11 // pred_fallthru
        _
      // Predicated region
      $region25: #{decoder_forward.18} parent=11 // pred_check
        %p257 = pneg %p205
      $region26: #{decoder_forward.18} parent=11 // pred_check_branch
        %259 = sbr.rel (%p257) target = $region28
      $region27: #{decoder_forward.18} parent=11 // pred_region
        _
      $region28: #{decoder_forward.18} parent=11 // pred_fallthru
        _
    $region12: #{decoder_forward.18} parent=5 // pred_fallthru
      _
    %p260 = scmp.lt.s32.totalorder %s13, 4
    // Predicated region
    $region29: #{decoder_forward.18} parent=5 // pred_check
      %p261 = pneg %p260
    $region30: #{decoder_forward.18} parent=5 // pred_check_branch
      %263 = sbr.rel (%p261) target = $region32
    $region31: #{decoder_forward.18} parent=5 // pred_region
      // Predicated region
      $region33: #{decoder_forward.18} parent=31 // pred_check
        %p264 = pneg %p47
      $region34: #{decoder_forward.18} parent=31 // pred_check_branch
        %266 = sbr.rel (%p264) target = $region36
      $region35: #{decoder_forward.18} parent=31 // pred_region
        %p267 = scmp.lt.s32.totalorder %s20, 1
        %s268 = scalar_select %p267, %s20, 1
        %p269 = scmp.lt.s32.totalorder %s21, 1
        %s270 = scalar_select %p269, %s21, 1
        %s271 = smul.addr %s268, 2
        %s272 = sadd.s32 %s270, %s271
        %s273 = smul.addr %s272, 8
        %s274 = scalar_lea.vmem %s0, %s273
      $region36: #{decoder_forward.18} parent=31 // pred_fallthru
        _
      // Predicated region
      $region37: #{decoder_forward.18} parent=31 // pred_check
        %p275 = pneg %p81
      $region38: #{decoder_forward.18} parent=31 // pred_check_branch
        %277 = sbr.rel (%p275) target = $region40
      $region39: #{decoder_forward.18} parent=31 // pred_region
        %s278 = ssub.s32 %s21, 1
        %p279 = scmp.gt.s32.totalorder %s278, 0
        %s280 = scalar_select %p279, %s278, 0
        %p281 = scmp.lt.s32.totalorder %s20, 1
        %s282 = scalar_select %p281, %s20, 1
        %p283 = scmp.lt.s32.totalorder %s280, 1
        %s284 = scalar_select %p283, %s280, 1
        %s285 = smul.addr %s282, 2
        %s286 = sadd.s32 %s284, %s285
        %s287 = smul.addr %s286, 8
        %s288 = scalar_lea.vmem %s1, %s287
        %s289 = ssub.s32 %s21, 1
        %p290 = scmp.gt.s32.totalorder %s289, 0
        %s291 = scalar_select %p290, %s289, 0
      $region40: #{decoder_forward.18} parent=31 // pred_fallthru
        _
      // Predicated region
      $region41: #{decoder_forward.18} parent=31 // pred_check
        %p292 = pneg %p115
      $region42: #{decoder_forward.18} parent=31 // pred_check_branch
        %294 = sbr.rel (%p292) target = $region44
      $region43: #{decoder_forward.18} parent=31 // pred_region
        %s295 = sadd.s32 %s21, 1
        %p296 = scmp.lt.s32.totalorder %s295, 1
        %s297 = scalar_select %p296, %s295, 1
        %p298 = scmp.lt.s32.totalorder %s20, 1
        %s299 = scalar_select %p298, %s20, 1
        %p300 = scmp.lt.s32.totalorder %s297, 1
        %s301 = scalar_select %p300, %s297, 1
        %s302 = smul.addr %s299, 2
        %s303 = sadd.s32 %s301, %s302
        %s304 = smul.addr %s303, 8
        %s305 = scalar_lea.vmem %s2, %s304
        %s306 = sadd.s32 %s21, 1
        %p307 = scmp.lt.s32.totalorder %s306, 1
        %s308 = scalar_select %p307, %s306, 1
      $region44: #{decoder_forward.18} parent=31 // pred_fallthru
        _
    $region32: #{decoder_forward.18} parent=5 // pred_fallthru
      _
    %p309 = scmp.le.s32.totalorder 1, %s13
    %p310 = scmp.lt.s32.totalorder %s13, 5
    %p311 = pnand %p309, %p310
    %p312 = pneg %p311
    // Predicated region
    $region45: #{decoder_forward.18} parent=5 // pred_check
      _
    $region46: #{decoder_forward.18} parent=5 // pred_check_branch
      %314 = sbr.rel (%p311) target = $region48
    $region47: #{decoder_forward.18} parent=5 // pred_region
      %s315 = ssub.s32 %s13, 1
      %p316 = scmp.lt.s32.totalorder %s22, 1
      %s317 = scalar_select %p316, %s22, 1
      %p318 = scmp.lt.s32.totalorder %s23, 1
      %s319 = scalar_select %p318, %s23, 1
      %s320 = smul.addr %s317, 2
      %s321 = sadd.s32 %s319, %s320
      %s322 = smul.addr %s321, 8
      %s323 = scalar_lea.vmem %s0, %s322
      %p324 = pneg %p53
      %p325 = pneg %p50
      %s326 = ssub.s32 %s23, 1
      %p327 = scmp.gt.s32.totalorder %s326, 0
      %s328 = scalar_select %p327, %s326, 0
      %p329 = scmp.lt.s32.totalorder %s22, 1
      %s330 = scalar_select %p329, %s22, 1
      %p331 = scmp.lt.s32.totalorder %s328, 1
      %s332 = scalar_select %p331, %s328, 1
      %s333 = smul.addr %s330, 2
      %s334 = sadd.s32 %s332, %s333
      %s335 = smul.addr %s334, 8
      %s336 = scalar_lea.vmem %s1, %s335
      %p337 = pneg %p87
      %p338 = pneg %p84
      %s339 = sadd.s32 %s23, 1
      %p340 = scmp.lt.s32.totalorder %s339, 1
      %s341 = scalar_select %p340, %s339, 1
      %p342 = scmp.lt.s32.totalorder %s22, 1
      %s343 = scalar_select %p342, %s22, 1
      %p344 = scmp.lt.s32.totalorder %s341, 1
      %s345 = scalar_select %p344, %s341, 1
      %s346 = smul.addr %s343, 2
      %s347 = sadd.s32 %s345, %s346
      %s348 = smul.addr %s347, 8
      %s349 = scalar_lea.vmem %s2, %s348
      %p350 = pneg %p121
      %p351 = pneg %p118
      %p352 = pneg %p142
      %p353 = pneg %p139
      %p354 = pneg %p163
      %p355 = pneg %p160
      %p356 = pneg %p184
      %p357 = pneg %p181
      %p358 = pneg %p205
      %p359 = pneg %p202
      %p360 = pneg %p233
      %p361 = pneg %p230
      %p362 = scmp.lt.s32.totalorder %s22, 1
      %s363 = scalar_select %p362, %s22, 1
      %p364 = scmp.lt.s32.totalorder %s23, 1
      %s365 = scalar_select %p364, %s23, 1
      %s366 = smul.addr %s363, 2
      %s367 = sadd.s32 %s365, %s366
      %s368 = smul.addr %s367, 8
      %s369 = scalar_lea.vmem %s7, %s368
      %p370 = scmp.lt.s32.totalorder %s22, 1
      %s371 = scalar_select %p370, %s22, 1
      %p372 = scmp.lt.s32.totalorder %s23, 1
      %s373 = scalar_select %p372, %s23, 1
      %s374 = smul.addr %s371, 2
      %s375 = sadd.s32 %s373, %s374
      %s376 = smul.addr %s375, 8
      %s377 = scalar_lea.vmem %s0, %s376
      %s378 = ssub.s32 %s23, 1
      %p379 = scmp.gt.s32.totalorder %s378, 0
      %s380 = scalar_select %p379, %s378, 0
      %p381 = scmp.lt.s32.totalorder %s22, 1
      %s382 = scalar_select %p381, %s22, 1
      %p383 = scmp.lt.s32.totalorder %s380, 1
      %s384 = scalar_select %p383, %s380, 1
      %s385 = smul.addr %s382, 2
      %s386 = sadd.s32 %s384, %s385
      %s387 = smul.addr %s386, 8
      %s388 = scalar_lea.vmem %s1, %s387
      %s389 = ssub.s32 %s23, 1
      %p390 = scmp.gt.s32.totalorder %s389, 0
      %s391 = scalar_select %p390, %s389, 0
      %s392 = sadd.s32 %s23, 1
      %p393 = scmp.lt.s32.totalorder %s392, 1
      %s394 = scalar_select %p393, %s392, 1
      %p395 = scmp.lt.s32.totalorder %s22, 1
      %s396 = scalar_select %p395, %s22, 1
      %p397 = scmp.lt.s32.totalorder %s394, 1
      %s398 = scalar_select %p397, %s394, 1
      %s399 = smul.addr %s396, 2
      %s400 = sadd.s32 %s398, %s399
      %s401 = smul.addr %s400, 8
      %s402 = scalar_lea.vmem %s2, %s401
      %s403 = sadd.s32 %s23, 1
      %p404 = scmp.lt.s32.totalorder %s403, 1
      %s405 = scalar_select %p404, %s403, 1
      %p406 = scmp.lt.s32.totalorder %s22, 1
      %s407 = scalar_select %p406, %s22, 1
      %p408 = scmp.lt.s32.totalorder %s23, 1
      %s409 = scalar_select %p408, %s23, 1
      %s410 = smul.addr %s407, 2
      %s411 = sadd.s32 %s409, %s410
      %s412 = smul.addr %s411, 8
      %s413 = scalar_lea.vmem %s7, %s412
      %v414 = vld [vmem:[%s377] sm:$0xff]
      %v415 = vmax.f32 %v414, 0.0
      %vm416 = vcmask 261120
      %417 = vst.msk [vmem:[#allocation2 + $0x1] sm:$0xff] %vm416, %v415
      %vm418 = vcmask 253952
      %419 = vst.msk [vmem:[#allocation2] sm:$0x1] %vm418, 0.0
      %420 = vst.msk [vmem:[#allocation2 + $0x9] sm:$0x1] %vm418, 0.0
      %p421 = scmp.gt.s32.totalorder %s23, 0
      // Predicated region
      $region49: #{decoder_forward.18} parent=47 // pred_check
        %p422 = pneg %p421
      $region50: #{decoder_forward.18} parent=47 // pred_check_branch
        %424 = sbr.rel (%p422) target = $region52
      $region51: #{decoder_forward.18} parent=47 // pred_region
        %v425 = vld [vmem:[%s388 + $0x7] sm:$0x1]
        %v426 = vmax.f32 %v425, 0.0
        %427 = vst.msk [vmem:[#allocation2] sm:$0x1] %vm418, %v426
      $region52: #{decoder_forward.18} parent=47 // pred_fallthru
        _
      %p428 = scmp.lt.s32.totalorder %s23, 1
      // Predicated region
      $region53: #{decoder_forward.18} parent=47 // pred_check
        %p429 = pneg %p428
      $region54: #{decoder_forward.18} parent=47 // pred_check_branch
        %431 = sbr.rel (%p429) target = $region56
      $region55: #{decoder_forward.18} parent=47 // pred_region
        %v432 = vld [vmem:[%s402] sm:$0x1]
        %v433 = vmax.f32 %v432, 0.0
        %434 = vst.msk [vmem:[#allocation2 + $0x9] sm:$0x1] %vm418, %v433
      $region56: #{decoder_forward.18} parent=47 // pred_fallthru
        _
      %v435 = vld [vmem:[#allocation2] sm:$0xff]
      %v436 = vld [vmem:[#allocation2 + $0x8] sm:$0x3]
      %v437 = vld [vmem:[%s3] sm:$0xff]
      %v438 = vld [vmem:[%s3 + $0x8] sm:$0xff]
      %v439 = vld [vmem:[%s3 + $0x10] sm:$0xff]
      %v440 = vld [vmem:[%s3 + $0x18] sm:$0xff]
      %s441 = scalar_lea.vmem %s3, 32
      %v442 = vld [vmem:[%s441] sm:$0xff]
      %v443 = vld [vmem:[%s441 + $0x8] sm:$0xff]
      %v444 = vld [vmem:[%s441 + $0x10] sm:$0xff]
      %v445 = vld [vmem:[%s441 + $0x18] sm:$0xff]
      %vm448 = vcmask 1046528
      %v449 = vrot.slane %v435, 1
      %v450 = vrot.slane %v436, 1
      %v451 = vsel %vm448, %v449, %v450
      %v452 = vsel %vm416, %v451, 0
      %454 = vmatpush.msra.mxu0 0.0
      %455 = vmatpush.msra.mxu0 0.0
      %456 = vmatpush.msra.mxu0 0.0
      %457 = vmatpush.msra.mxu0 0.0
      %458 = vmatpush.msra.mxu0 0.0
      %459 = vmatpush.msra.mxu0 0.0
      %460 = vmatpush.msra.mxu0 0.0
      %461 = vmatpush.msra.mxu0 0.0
      %462 = vmatpush.msra.mxu0 0.0
      %463 = vmatpush.msra.mxu0 0.0
      %464 = vmatpush.msra.mxu0 0.0
      %465 = vmatpush.msra.mxu0 0.0
      %466 = vmatpush.msra.mxu0 %v445
      %467 = vmatpush.msra.mxu0 %v444
      %468 = vmatpush.msra.mxu0 %v443
      %469 = vmatpush.msra.mxu0 %v442
      %470 = vmatmul.f32.gmra.mxu0 %v452
      %v471 = vpop.f32.mrf.mxu0
      %v472 = vadd.f32 0.0, %v471
      %473 = vdwg.mxu0
      %v474 = vsel %vm416, %v435, 0
      %476 = vmatpush.msra.mxu0 0.0
      %477 = vmatpush.msra.mxu0 0.0
      %478 = vmatpush.msra.mxu0 0.0
      %479 = vmatpush.msra.mxu0 0.0
      %480 = vmatpush.msra.mxu0 0.0
      %481 = vmatpush.msra.mxu0 0.0
      %482 = vmatpush.msra.mxu0 0.0
      %483 = vmatpush.msra.mxu0 0.0
      %484 = vmatpush.msra.mxu0 0.0
      %485 = vmatpush.msra.mxu0 0.0
      %486 = vmatpush.msra.mxu0 0.0
      %487 = vmatpush.msra.mxu0 0.0
      %488 = vmatpush.msra.mxu0 %v440
      %489 = vmatpush.msra.mxu0 %v439
      %490 = vmatpush.msra.mxu0 %v438
      %491 = vmatpush.msra.mxu0 %v437
      %492 = vmatmul.f32.gmra.mxu0 %v474
      %v493 = vpop.f32.mrf.mxu0
      %v494 = vadd.f32 %v472, %v493
      %495 = vdwg.mxu0
      %s496 = scalar_lea.vmem %s3, 64
      %v497 = vld [vmem:[%s496] sm:$0xff]
      %v498 = vld [vmem:[%s496 + $0x8] sm:$0xff]
      %v499 = vld [vmem:[%s496 + $0x10] sm:$0xff]
      %v500 = vld [vmem:[%s496 + $0x18] sm:$0xff]
      %vm501 = vcmask 1045504
      %v502 = vrot.slane %v435, 2
      %v503 = vrot.slane %v436, 2
      %v504 = vsel %vm501, %v502, %v503
      %v505 = vsel %vm416, %v504, 0
      %507 = vmatpush.msra.mxu0 0.0
      %508 = vmatpush.msra.mxu0 0.0
      %509 = vmatpush.msra.mxu0 0.0
      %510 = vmatpush.msra.mxu0 0.0
      %511 = vmatpush.msra.mxu0 0.0
      %512 = vmatpush.msra.mxu0 0.0
      %513 = vmatpush.msra.mxu0 0.0
      %514 = vmatpush.msra.mxu0 0.0
      %515 = vmatpush.msra.mxu0 0.0
      %516 = vmatpush.msra.mxu0 0.0
      %517 = vmatpush.msra.mxu0 0.0
      %518 = vmatpush.msra.mxu0 0.0
      %519 = vmatpush.msra.mxu0 %v500
      %520 = vmatpush.msra.mxu0 %v499
      %521 = vmatpush.msra.mxu0 %v498
      %522 = vmatpush.msra.mxu0 %v497
      %523 = vmatmul.f32.gmra.mxu0 %v505
      %v524 = vpop.f32.mrf.mxu0
      %v525 = vadd.f32 0.0, %v524
      %526 = vdwg.mxu0
      %v527 = vadd.f32 %v494, %v525
      %v528 = vld [vmem:[%s4] sm:$0x1]
      %v530 = vperm.slane %v528, 0
      %v532 = vadd.f32 %v527, %v530
      %v533 = vmax.f32 %v532, 0.0
      %v534 = vld [vmem:[%s5] sm:$0xff]
      %v535 = vld [vmem:[%s5 + $0x8] sm:$0xff]
      %v536 = vld [vmem:[%s5 + $0x10] sm:$0xff]
      %v537 = vld [vmem:[%s5 + $0x18] sm:$0xff]
      %v538 = vld [vmem:[%s6] sm:$0x1]
      %v540 = vperm.slane %v538, 0
      %v543 = vsel %vm416, %v533, 0
      %545 = vmatpush.msra.mxu0 0.0
      %546 = vmatpush.msra.mxu0 0.0
      %547 = vmatpush.msra.mxu0 0.0
      %548 = vmatpush.msra.mxu0 0.0
      %549 = vmatpush.msra.mxu0 0.0
      %550 = vmatpush.msra.mxu0 0.0
      %551 = vmatpush.msra.mxu0 0.0
      %552 = vmatpush.msra.mxu0 0.0
      %553 = vmatpush.msra.mxu0 0.0
      %554 = vmatpush.msra.mxu0 0.0
      %555 = vmatpush.msra.mxu0 0.0
      %556 = vmatpush.msra.mxu0 0.0
      %557 = vmatpush.msra.mxu0 %v537
      %558 = vmatpush.msra.mxu0 %v536
      %559 = vmatpush.msra.mxu0 %v535
      %560 = vmatpush.msra.mxu0 %v534
      %561 = vmatmul.f32.gmra.mxu0 %v543
      %v562 = vpop.f32.mrf.mxu0
      %v563 = vadd.f32 %v540, %v562
      %564 = vdwg.mxu0
      %v565 = vadd.f32 %v563, %v414
      %566 = vst.msk [vmem:[%s413] sm:$0xff] %vm416, %v565
      %p567 = scmp.lt.s32.totalorder %s22, 1
      %s568 = scalar_select %p567, %s22, 1
      %p569 = scmp.lt.s32.totalorder %s23, 1
      %s570 = scalar_select %p569, %s23, 1
      %s571 = smul.addr %s568, 2
      %s572 = sadd.s32 %s570, %s571
      %s573 = smul.addr %s572, 8
      %s574 = scalar_lea.vmem %s7, %s573
      // Predicated region
      $region57: #{decoder_forward.18} parent=47 // pred_check
        %p575 = pneg %p230
      $region58: #{decoder_forward.18} parent=47 // pred_check_branch
        %577 = sbr.rel (%p575) target = $region60
      $region59: #{decoder_forward.18} parent=47 // pred_region
        _
      $region60: #{decoder_forward.18} parent=47 // pred_fallthru
        _
    $region48: #{decoder_forward.18} parent=5 // pred_fallthru
      _
    %p578 = scmp.le.s32.totalorder 2, %s13
    // Predicated region
    $region61: #{decoder_forward.18} parent=5 // pred_check
      %p579 = pneg %p578
    $region62: #{decoder_forward.18} parent=5 // pred_check_branch
      %581 = sbr.rel (%p579) target = $region64
    $region63: #{decoder_forward.18} parent=5 // pred_region
      %s582 = ssub.s32 %s13, 2
      // Predicated region
      $region65: #{decoder_forward.18} parent=63 // pred_check
        %p583 = pneg %p236
      $region66: #{decoder_forward.18} parent=63 // pred_check_branch
        %585 = sbr.rel (%p583) target = $region68
      $region67: #{decoder_forward.18} parent=63 // pred_region
        %p586 = scmp.lt.s32.totalorder %s24, 1
        %s587 = scalar_select %p586, %s24, 1
        %p588 = scmp.lt.s32.totalorder %s25, 1
        %s589 = scalar_select %p588, %s25, 1
        %s590 = smul.addr %s587, 2
        %s591 = sadd.s32 %s589, %s590
        %s592 = smul.addr %s591, 8
        %s593 = scalar_lea.vmem %s7, %s592
      $region68: #{decoder_forward.18} parent=63 // pred_fallthru
        _
    $region64: #{decoder_forward.18} parent=5 // pred_fallthru
      _
  $region6: #{decoder_forward.18} parent=0 // loop_footer
    %s17 = sadd.s32 1, %s13
  $region7: #{decoder_forward.18} parent=0 // loop_footer_branch
    %12 = sbr.rel target = $region3
  $region8: #{decoder_forward.18} parent=0 // loop_exit
    _

// kernel: decoder_forward.19
$region0: #{decoder_forward.19}
  #allocation0 [shape = 'u32[]', space=smem, size = 0x4, offset = 0x4, fixed_abs, tag = 'smem constant byte address 0x4 - core index']
  #allocation1 [shape = 'u32[72,128]{1,0:T(1,128)}', space=vmem, size = 0x9000, scoped, tag = 'internal scratch']
  #allocation2 [shape = 'f32[10,32]{1,0:T(8,128)}', space=vmem, size = 0x2000, scoped, tag = 'scratch operand']
  %s0 = inlined_call_operand.vmem [shape: f32[2,16,32], index: 0, kind: input, shape index: {}, may-alias: {0,1,2}]
  %s1 = inlined_call_operand.vmem [shape: f32[2,16,32], index: 1, kind: input, shape index: {}, may-alias: {0,1,2}]
  %s2 = inlined_call_operand.vmem [shape: f32[2,16,32], index: 2, kind: input, shape index: {}, may-alias: {0,1,2}]
  %s3 = inlined_call_operand.hbm [shape: f32[3,32,32], index: 3, kind: input, shape index: {}]
  %s4 = inlined_call_operand.vmem [shape: f32[1,32], index: 4, kind: input, shape index: {}]
  %s5 = inlined_call_operand.hbm [shape: f32[1,32,32], index: 5, kind: input, shape index: {}]
  %s6 = inlined_call_operand.vmem [shape: f32[1,32], index: 6, kind: input, shape index: {}]
  %s7 = inlined_call_operand.vmem [shape: f32[2,16,32], index: 7, kind: output, shape index: {}]
  %s8 = sld [smem:[#allocation0]]
  $region77: #{decoder_forward.19} parent=0
    _
  %s10 = ssub.s32 1, %s8
  %s11 = scalar_select 0, %s10, %s8
  $region1: #{decoder_forward.19} parent=0
    #allocation3 [shape = 'u8[49152]{0}', space=vmem, size = 0xc000, scoped, tag = 'input window, operand 3, single buffered']
    #allocation4 [shape = 's32[2]{0}', space=sflag, size = 0x8, scoped, tag = 'scoped memory for decoder_forward.19']
    #allocation5 [shape = 'u8[16384]{0}', space=vmem, size = 0x4000, scoped, tag = 'input window, operand 5, single buffered']
    #allocation6 [shape = 's32[1]{0}', space=sflag, size = 0x4, scoped, tag = 'scoped memory for decoder_forward.19']
    %12 = vsyncpa [#allocation4], 0
    %13 = vsyncpa [#allocation6], 0
    loop: start=0, step=1, limit=6
    $region2: #{decoder_forward.19} parent=1 // loop_pre_header
      _
    $region3: #{decoder_forward.19} parent=1 // loop_header
      %s15 = sphi 0, %s19
      %p16 = scmp.ge.s32.totalorder %s15, 6
      %s22 = sphi 0, %s34
      %s23 = sphi 0, %s30
      %s24 = sphi 0, %s22
      %s25 = sphi 0, %s23
      %s26 = sphi 0, %s24
      %s27 = sphi 0, %s25
      %s39 = sphi 0, %s41
      %s42 = sphi 0, %s39
      %s43 = sphi 0, %s42
      %s59 = sphi 0, %s43
      %s73 = sphi 0, %s75
      %s76 = sphi 0, %s73
      %s77 = sphi 0, %s76
      %s93 = sphi 0, %s77
      %s107 = sphi 0, %s109
      %s110 = sphi 0, %s107
      %s111 = sphi 0, %s110
      %s127 = sphi 0, %s111
      %s131 = sphi 0, %s131
      %s133 = sphi 0, %s131
      %s134 = sphi 0, %s133
      %s148 = sphi 0, %s134
      %s152 = sphi 0, %s152
      %s154 = sphi 0, %s152
      %s155 = sphi 0, %s154
      %s169 = sphi 0, %s155
      %s173 = sphi 0, %s173
      %s175 = sphi 0, %s173
      %s176 = sphi 0, %s175
      %s190 = sphi 0, %s176
      %s194 = sphi 0, %s194
      %s196 = sphi 0, %s194
      %s197 = sphi 0, %s196
      %s211 = sphi 0, %s197
      %s219 = sphi 0, %s221
      %s222 = sphi 0, %s219
      %s223 = sphi 0, %s222
      %s239 = sphi 0, %s223
    $region4: #{decoder_forward.19} parent=1 // loop_header_branch
      %18 = sbr.rel (%p16) target = $region8
    $region5: #{decoder_forward.19} parent=1 // loop_body
      %s20 = ssub.s32 %s15, 1
      %s21 = ssub.s32 %s15, 2
      %s28 = sadd.s32 1, %s23
      %p29 = scmp.ge.s32.totalorder %s28, 2
      %s30 = scalar_select %p29, 0, %s28
      %s31 = sadd.s32 1, %s22
      %s32 = scalar_select %p29, %s31, %s22
      %p33 = scmp.ge.s32.totalorder %s32, 2
      %s34 = scalar_select %p33, 0, %s32
      %s35 = ssub.s32 %s22, %s34
      %s36 = ssub.s32 %s23, %s30
      %s37 = sor.u32 %s35, %s36
      %p38 = scmp.eq.s32.totalorder %s37, 0
      %s40 = sadd.s32 %s39, 1
      %s41 = scalar_select %p38, %s39, %s40
      %p44 = pneg %p38
      %p45 = scmp.eq.s32.totalorder %s15, 3
      %p46 = por %p44, %p45
      %p47 = scmp.ne.s32.totalorder %s39, %s42
      %p48 = scmp.eq.s32.totalorder %s15, 0
      %p49 = por %p47, %p48
      %p50 = scmp.ne.s32.totalorder %s39, %s42
      %p51 = scmp.eq.s32.totalorder %s20, 3
      %p52 = por %p50, %p51
      %p53 = scmp.ne.s32.totalorder %s42, %s43
      %p54 = scmp.eq.s32.totalorder %s20, 0
      %p55 = por %p53, %p54
      %p56 = scmp.ne.s32.totalorder %s42, %s43
      %p57 = scmp.eq.s32.totalorder %s21, 3
      %p58 = por %p56, %p57
      %p60 = scmp.ne.s32.totalorder %s43, %s59
      %p61 = scmp.eq.s32.totalorder %s21, 0
      %p62 = por %p60, %p61
      %s63 = ssub.s32 %s23, 1
      %p64 = scmp.gt.s32.totalorder %s63, 0
      %s65 = scalar_select %p64, %s63, 0
      %s66 = ssub.s32 %s30, 1
      %p67 = scmp.gt.s32.totalorder %s66, 0
      %s68 = scalar_select %p67, %s66, 0
      %s69 = ssub.s32 %s22, %s34
      %s70 = ssub.s32 %s65, %s68
      %s71 = sor.u32 %s69, %s70
      %p72 = scmp.eq.s32.totalorder %s71, 0
      %s74 = sadd.s32 %s73, 1
      %s75 = scalar_select %p72, %s73, %s74
      %p78 = pneg %p72
      %p79 = scmp.eq.s32.totalorder %s15, 3
      %p80 = por %p78, %p79
      %p81 = scmp.ne.s32.totalorder %s73, %s76
      %p82 = scmp.eq.s32.totalorder %s15, 0
      %p83 = por %p81, %p82
      %p84 = scmp.ne.s32.totalorder %s73, %s76
      %p85 = scmp.eq.s32.totalorder %s20, 3
      %p86 = por %p84, %p85
      %p87 = scmp.ne.s32.totalorder %s76, %s77
      %p88 = scmp.eq.s32.totalorder %s20, 0
      %p89 = por %p87, %p88
      %p90 = scmp.ne.s32.totalorder %s76, %s77
      %p91 = scmp.eq.s32.totalorder %s21, 3
      %p92 = por %p90, %p91
      %p94 = scmp.ne.s32.totalorder %s77, %s93
      %p95 = scmp.eq.s32.totalorder %s21, 0
      %p96 = por %p94, %p95
      %s97 = sadd.s32 %s23, 1
      %p98 = scmp.lt.s32.totalorder %s97, 1
      %s99 = scalar_select %p98, %s97, 1
      %s100 = sadd.s32 %s30, 1
      %p101 = scmp.lt.s32.totalorder %s100, 1
      %s102 = scalar_select %p101, %s100, 1
      %s103 = ssub.s32 %s22, %s34
      %s104 = ssub.s32 %s99, %s102
      %s105 = sor.u32 %s103, %s104
      %p106 = scmp.eq.s32.totalorder %s105, 0
      %s108 = sadd.s32 %s107, 1
      %s109 = scalar_select %p106, %s107, %s108
      %p112 = pneg %p106
      %p113 = scmp.eq.s32.totalorder %s15, 3
      %p114 = por %p112, %p113
      %p115 = scmp.ne.s32.totalorder %s107, %s110
      %p116 = scmp.eq.s32.totalorder %s15, 0
      %p117 = por %p115, %p116
      %p118 = scmp.ne.s32.totalorder %s107, %s110
      %p119 = scmp.eq.s32.totalorder %s20, 3
      %p120 = por %p118, %p119
      %p121 = scmp.ne.s32.totalorder %s110, %s111
      %p122 = scmp.eq.s32.totalorder %s20, 0
      %p123 = por %p121, %p122
      %p124 = scmp.ne.s32.totalorder %s110, %s111
      %p125 = scmp.eq.s32.totalorder %s21, 3
      %p126 = por %p124, %p125
      %p128 = scmp.ne.s32.totalorder %s111, %s127
      %p129 = scmp.eq.s32.totalorder %s21, 0
      %p130 = por %p128, %p129
      %s132 = sadd.s32 %s131, 1
      %p135 = scmp.eq.s32.totalorder %s15, 3
      %p136 = scmp.ne.s32.totalorder %s131, %s133
      %p137 = scmp.eq.s32.totalorder %s15, 0
      %p138 = por %p136, %p137
      %p139 = scmp.ne.s32.totalorder %s131, %s133
      %p140 = scmp.eq.s32.totalorder %s20, 3
      %p141 = por %p139, %p140
      %p142 = scmp.ne.s32.totalorder %s133, %s134
      %p143 = scmp.eq.s32.totalorder %s20, 0
      %p144 = por %p142, %p143
      %p145 = scmp.ne.s32.totalorder %s133, %s134
      %p146 = scmp.eq.s32.totalorder %s21, 3
      %p147 = por %p145, %p146
      %p149 = scmp.ne.s32.totalorder %s134, %s148
      %p150 = scmp.eq.s32.totalorder %s21, 0
      %p151 = por %p149, %p150
      %s153 = sadd.s32 %s152, 1
      %p156 = scmp.eq.s32.totalorder %s15, 3
      %p157 = scmp.ne.s32.totalorder %s152, %s154
      %p158 = scmp.eq.s32.totalorder %s15, 0
      %p159 = por %p157, %p158
      %p160 = scmp.ne.s32.totalorder %s152, %s154
      %p161 = scmp.eq.s32.totalorder %s20, 3
      %p162 = por %p160, %p161
      %p163 = scmp.ne.s32.totalorder %s154, %s155
      %p164 = scmp.eq.s32.totalorder %s20, 0
      %p165 = por %p163, %p164
      %p166 = scmp.ne.s32.totalorder %s154, %s155
      %p167 = scmp.eq.s32.totalorder %s21, 3
      %p168 = por %p166, %p167
      %p170 = scmp.ne.s32.totalorder %s155, %s169
      %p171 = scmp.eq.s32.totalorder %s21, 0
      %p172 = por %p170, %p171
      %s174 = sadd.s32 %s173, 1
      %p177 = scmp.eq.s32.totalorder %s15, 3
      %p178 = scmp.ne.s32.totalorder %s173, %s175
      %p179 = scmp.eq.s32.totalorder %s15, 0
      %p180 = por %p178, %p179
      %p181 = scmp.ne.s32.totalorder %s173, %s175
      %p182 = scmp.eq.s32.totalorder %s20, 3
      %p183 = por %p181, %p182
      %p184 = scmp.ne.s32.totalorder %s175, %s176
      %p185 = scmp.eq.s32.totalorder %s20, 0
      %p186 = por %p184, %p185
      %p187 = scmp.ne.s32.totalorder %s175, %s176
      %p188 = scmp.eq.s32.totalorder %s21, 3
      %p189 = por %p187, %p188
      %p191 = scmp.ne.s32.totalorder %s176, %s190
      %p192 = scmp.eq.s32.totalorder %s21, 0
      %p193 = por %p191, %p192
      %s195 = sadd.s32 %s194, 1
      %p198 = scmp.eq.s32.totalorder %s15, 3
      %p199 = scmp.ne.s32.totalorder %s194, %s196
      %p200 = scmp.eq.s32.totalorder %s15, 0
      %p201 = por %p199, %p200
      %p202 = scmp.ne.s32.totalorder %s194, %s196
      %p203 = scmp.eq.s32.totalorder %s20, 3
      %p204 = por %p202, %p203
      %p205 = scmp.ne.s32.totalorder %s196, %s197
      %p206 = scmp.eq.s32.totalorder %s20, 0
      %p207 = por %p205, %p206
      %p208 = scmp.ne.s32.totalorder %s196, %s197
      %p209 = scmp.eq.s32.totalorder %s21, 3
      %p210 = por %p208, %p209
      %p212 = scmp.ne.s32.totalorder %s197, %s211
      %p213 = scmp.eq.s32.totalorder %s21, 0
      %p214 = por %p212, %p213
      %s215 = ssub.s32 %s22, %s34
      %s216 = ssub.s32 %s23, %s30
      %s217 = sor.u32 %s215, %s216
      %p218 = scmp.eq.s32.totalorder %s217, 0
      %s220 = sadd.s32 %s219, 1
      %s221 = scalar_select %p218, %s219, %s220
      %p224 = pneg %p218
      %p225 = scmp.eq.s32.totalorder %s15, 3
      %p226 = por %p224, %p225
      %p227 = scmp.ne.s32.totalorder %s219, %s222
      %p228 = scmp.eq.s32.totalorder %s15, 0
      %p229 = por %p227, %p228
      %p230 = scmp.ne.s32.totalorder %s219, %s222
      %p231 = scmp.eq.s32.totalorder %s20, 3
      %p232 = por %p230, %p231
      %p233 = scmp.ne.s32.totalorder %s222, %s223
      %p234 = scmp.eq.s32.totalorder %s20, 0
      %p235 = por %p233, %p234
      %p236 = scmp.ne.s32.totalorder %s222, %s223
      %p237 = scmp.eq.s32.totalorder %s21, 3
      %p238 = por %p236, %p237
      %p240 = scmp.ne.s32.totalorder %s223, %s239
      %p241 = scmp.eq.s32.totalorder %s21, 0
      %p242 = por %p240, %p241
      %p243 = scmp.le.s32.totalorder 1, %s15
      %p244 = scmp.lt.s32.totalorder %s15, 5
      %p245 = pnand %p243, %p244
      %p246 = pneg %p245
      // Predicated region
      $region9: #{decoder_forward.19} parent=5 // pred_check
        _
      $region10: #{decoder_forward.19} parent=5 // pred_check_branch
        %248 = sbr.rel (%p245) target = $region12
      $region11: #{decoder_forward.19} parent=5 // pred_region
        %s249 = ssub.s32 %s15, 1
        // Predicated region
        $region13: #{decoder_forward.19} parent=11 // pred_check
          %p250 = pneg %p144
        $region14: #{decoder_forward.19} parent=11 // pred_check_branch
          %252 = sbr.rel (%p250) target = $region16
        $region15: #{decoder_forward.19} parent=11 // pred_region
          %254 = vsyncadd [#allocation4], 0
          %s255 = sshll.u32 %s3, 4
          %s256 = int_to_ptr.hbm [resolvable:$true] %s255
          %s257 = sshll.u32 [#allocation3], 4
          %s258 = int_to_ptr.vmem [resolvable:$true] %s257
          %263 = dma.hbm_to_vmem [thread:$0]  %s256, 1536, %s258, [#allocation4], 128, 128, 8
        $region16: #{decoder_forward.19} parent=11 // pred_fallthru
          _
        // Predicated region
        $region17: #{decoder_forward.19} parent=11 // pred_check
          %p264 = pneg %p165
        $region18: #{decoder_forward.19} parent=11 // pred_check_branch
          %266 = sbr.rel (%p264) target = $region20
        $region19: #{decoder_forward.19} parent=11 // pred_region
          _
        $region20: #{decoder_forward.19} parent=11 // pred_fallthru
          _
        // Predicated region
        $region21: #{decoder_forward.19} parent=11 // pred_check
          %p267 = pneg %p186
        $region22: #{decoder_forward.19} parent=11 // pred_check_branch
          %269 = sbr.rel (%p267) target = $region24
        $region23: #{decoder_forward.19} parent=11 // pred_region
          %271 = vsyncadd [#allocation6], 0
          %s272 = sshll.u32 %s5, 4
          %s273 = int_to_ptr.hbm [resolvable:$true] %s272
          %s274 = sshll.u32 [#allocation5], 4
          %s275 = int_to_ptr.vmem [resolvable:$true] %s274
          %280 = dma.hbm_to_vmem [thread:$0]  %s273, 512, %s275, [#allocation6], 128, 128, 8
        $region24: #{decoder_forward.19} parent=11 // pred_fallthru
          _
        // Predicated region
        $region25: #{decoder_forward.19} parent=11 // pred_check
          %p281 = pneg %p207
        $region26: #{decoder_forward.19} parent=11 // pred_check_branch
          %283 = sbr.rel (%p281) target = $region28
        $region27: #{decoder_forward.19} parent=11 // pred_region
          _
        $region28: #{decoder_forward.19} parent=11 // pred_fallthru
          _
      $region12: #{decoder_forward.19} parent=5 // pred_fallthru
        _
      %p284 = scmp.lt.s32.totalorder %s15, 4
      // Predicated region
      $region29: #{decoder_forward.19} parent=5 // pred_check
        %p285 = pneg %p284
      $region30: #{decoder_forward.19} parent=5 // pred_check_branch
        %287 = sbr.rel (%p285) target = $region32
      $region31: #{decoder_forward.19} parent=5 // pred_region
        // Predicated region
        $region33: #{decoder_forward.19} parent=31 // pred_check
          %p288 = pneg %p49
        $region34: #{decoder_forward.19} parent=31 // pred_check_branch
          %290 = sbr.rel (%p288) target = $region36
        $region35: #{decoder_forward.19} parent=31 // pred_region
          %p291 = scmp.lt.s32.totalorder %s22, 1
          %s292 = scalar_select %p291, %s22, 1
          %p293 = scmp.lt.s32.totalorder %s23, 1
          %s294 = scalar_select %p293, %s23, 1
          %s295 = smul.addr %s292, 2
          %s296 = sadd.s32 %s294, %s295
          %s297 = smul.addr %s296, 8
          %s298 = scalar_lea.vmem %s0, %s297
        $region36: #{decoder_forward.19} parent=31 // pred_fallthru
          _
        // Predicated region
        $region37: #{decoder_forward.19} parent=31 // pred_check
          %p299 = pneg %p83
        $region38: #{decoder_forward.19} parent=31 // pred_check_branch
          %301 = sbr.rel (%p299) target = $region40
        $region39: #{decoder_forward.19} parent=31 // pred_region
          %s302 = ssub.s32 %s23, 1
          %p303 = scmp.gt.s32.totalorder %s302, 0
          %s304 = scalar_select %p303, %s302, 0
          %p305 = scmp.lt.s32.totalorder %s22, 1
          %s306 = scalar_select %p305, %s22, 1
          %p307 = scmp.lt.s32.totalorder %s304, 1
          %s308 = scalar_select %p307, %s304, 1
          %s309 = smul.addr %s306, 2
          %s310 = sadd.s32 %s308, %s309
          %s311 = smul.addr %s310, 8
          %s312 = scalar_lea.vmem %s1, %s311
          %s313 = ssub.s32 %s23, 1
          %p314 = scmp.gt.s32.totalorder %s313, 0
          %s315 = scalar_select %p314, %s313, 0
        $region40: #{decoder_forward.19} parent=31 // pred_fallthru
          _
        // Predicated region
        $region41: #{decoder_forward.19} parent=31 // pred_check
          %p316 = pneg %p117
        $region42: #{decoder_forward.19} parent=31 // pred_check_branch
          %318 = sbr.rel (%p316) target = $region44
        $region43: #{decoder_forward.19} parent=31 // pred_region
          %s319 = sadd.s32 %s23, 1
          %p320 = scmp.lt.s32.totalorder %s319, 1
          %s321 = scalar_select %p320, %s319, 1
          %p322 = scmp.lt.s32.totalorder %s22, 1
          %s323 = scalar_select %p322, %s22, 1
          %p324 = scmp.lt.s32.totalorder %s321, 1
          %s325 = scalar_select %p324, %s321, 1
          %s326 = smul.addr %s323, 2
          %s327 = sadd.s32 %s325, %s326
          %s328 = smul.addr %s327, 8
          %s329 = scalar_lea.vmem %s2, %s328
          %s330 = sadd.s32 %s23, 1
          %p331 = scmp.lt.s32.totalorder %s330, 1
          %s332 = scalar_select %p331, %s330, 1
        $region44: #{decoder_forward.19} parent=31 // pred_fallthru
          _
      $region32: #{decoder_forward.19} parent=5 // pred_fallthru
        _
      %p333 = scmp.le.s32.totalorder 1, %s15
      %p334 = scmp.lt.s32.totalorder %s15, 5
      %p335 = pnand %p333, %p334
      %p336 = pneg %p335
      // Predicated region
      $region45: #{decoder_forward.19} parent=5 // pred_check
        _
      $region46: #{decoder_forward.19} parent=5 // pred_check_branch
        %338 = sbr.rel (%p335) target = $region48
      $region47: #{decoder_forward.19} parent=5 // pred_region
        %s339 = ssub.s32 %s15, 1
        // Predicated region
        $region49: #{decoder_forward.19} parent=47 // pred_check
          %p340 = pneg %p144
        $region50: #{decoder_forward.19} parent=47 // pred_check_branch
          %342 = sbr.rel (%p340) target = $region52
        $region51: #{decoder_forward.19} parent=47 // pred_region
          %344 = dma.done [#allocation4], 1536
        $region52: #{decoder_forward.19} parent=47 // pred_fallthru
          _
        // Predicated region
        $region53: #{decoder_forward.19} parent=47 // pred_check
          %p345 = pneg %p186
        $region54: #{decoder_forward.19} parent=47 // pred_check_branch
          %347 = sbr.rel (%p345) target = $region56
        $region55: #{decoder_forward.19} parent=47 // pred_region
          %349 = dma.done [#allocation6], 512
        $region56: #{decoder_forward.19} parent=47 // pred_fallthru
          _
        %p350 = scmp.lt.s32.totalorder %s24, 1
        %s351 = scalar_select %p350, %s24, 1
        %p352 = scmp.lt.s32.totalorder %s25, 1
        %s353 = scalar_select %p352, %s25, 1
        %s354 = smul.addr %s351, 2
        %s355 = sadd.s32 %s353, %s354
        %s356 = smul.addr %s355, 8
        %s357 = scalar_lea.vmem %s0, %s356
        %p358 = pneg %p55
        %p359 = pneg %p52
        %s360 = ssub.s32 %s25, 1
        %p361 = scmp.gt.s32.totalorder %s360, 0
        %s362 = scalar_select %p361, %s360, 0
        %p363 = scmp.lt.s32.totalorder %s24, 1
        %s364 = scalar_select %p363, %s24, 1
        %p365 = scmp.lt.s32.totalorder %s362, 1
        %s366 = scalar_select %p365, %s362, 1
        %s367 = smul.addr %s364, 2
        %s368 = sadd.s32 %s366, %s367
        %s369 = smul.addr %s368, 8
        %s370 = scalar_lea.vmem %s1, %s369
        %p371 = pneg %p89
        %p372 = pneg %p86
        %s373 = sadd.s32 %s25, 1
        %p374 = scmp.lt.s32.totalorder %s373, 1
        %s375 = scalar_select %p374, %s373, 1
        %p376 = scmp.lt.s32.totalorder %s24, 1
        %s377 = scalar_select %p376, %s24, 1
        %p378 = scmp.lt.s32.totalorder %s375, 1
        %s379 = scalar_select %p378, %s375, 1
        %s380 = smul.addr %s377, 2
        %s381 = sadd.s32 %s379, %s380
        %s382 = smul.addr %s381, 8
        %s383 = scalar_lea.vmem %s2, %s382
        %p384 = pneg %p123
        %p385 = pneg %p120
        %p386 = pneg %p144
        %p387 = pneg %p141
        %p388 = pneg %p165
        %p389 = pneg %p162
        %p390 = pneg %p186
        %p391 = pneg %p183
        %p392 = pneg %p207
        %p393 = pneg %p204
        %p394 = pneg %p235
        %p395 = pneg %p232
        %p396 = scmp.lt.s32.totalorder %s24, 1
        %s397 = scalar_select %p396, %s24, 1
        %p398 = scmp.lt.s32.totalorder %s25, 1
        %s399 = scalar_select %p398, %s25, 1
        %s400 = smul.addr %s397, 2
        %s401 = sadd.s32 %s399, %s400
        %s402 = smul.addr %s401, 8
        %s403 = scalar_lea.vmem %s7, %s402
        %p404 = scmp.lt.s32.totalorder %s24, 1
        %s405 = scalar_select %p404, %s24, 1
        %p406 = scmp.lt.s32.totalorder %s25, 1
        %s407 = scalar_select %p406, %s25, 1
        %s408 = smul.addr %s405, 2
        %s409 = sadd.s32 %s407, %s408
        %s410 = smul.addr %s409, 8
        %s411 = scalar_lea.vmem %s0, %s410
        %s412 = ssub.s32 %s25, 1
        %p413 = scmp.gt.s32.totalorder %s412, 0
        %s414 = scalar_select %p413, %s412, 0
        %p415 = scmp.lt.s32.totalorder %s24, 1
        %s416 = scalar_select %p415, %s24, 1
        %p417 = scmp.lt.s32.totalorder %s414, 1
        %s418 = scalar_select %p417, %s414, 1
        %s419 = smul.addr %s416, 2
        %s420 = sadd.s32 %s418, %s419
        %s421 = smul.addr %s420, 8
        %s422 = scalar_lea.vmem %s1, %s421
        %s423 = ssub.s32 %s25, 1
        %p424 = scmp.gt.s32.totalorder %s423, 0
        %s425 = scalar_select %p424, %s423, 0
        %s426 = sadd.s32 %s25, 1
        %p427 = scmp.lt.s32.totalorder %s426, 1
        %s428 = scalar_select %p427, %s426, 1
        %p429 = scmp.lt.s32.totalorder %s24, 1
        %s430 = scalar_select %p429, %s24, 1
        %p431 = scmp.lt.s32.totalorder %s428, 1
        %s432 = scalar_select %p431, %s428, 1
        %s433 = smul.addr %s430, 2
        %s434 = sadd.s32 %s432, %s433
        %s435 = smul.addr %s434, 8
        %s436 = scalar_lea.vmem %s2, %s435
        %s437 = sadd.s32 %s25, 1
        %p438 = scmp.lt.s32.totalorder %s437, 1
        %s439 = scalar_select %p438, %s437, 1
        %p440 = scmp.lt.s32.totalorder %s24, 1
        %s441 = scalar_select %p440, %s24, 1
        %p442 = scmp.lt.s32.totalorder %s25, 1
        %s443 = scalar_select %p442, %s25, 1
        %s444 = smul.addr %s441, 2
        %s445 = sadd.s32 %s443, %s444
        %s446 = smul.addr %s445, 8
        %s447 = scalar_lea.vmem %s7, %s446
        %v448 = vld [vmem:[%s411] sm:$0xff]
        %v449 = vmax.f32 %v448, 0.0
        %vm450 = vcmask 261120
        %451 = vst.msk [vmem:[#allocation2 + $0x1] sm:$0xff] %vm450, %v449
        %vm452 = vcmask 253952
        %453 = vst.msk [vmem:[#allocation2] sm:$0x1] %vm452, 0.0
        %454 = vst.msk [vmem:[#allocation2 + $0x9] sm:$0x1] %vm452, 0.0
        %p455 = scmp.gt.s32.totalorder %s25, 0
        // Predicated region
        $region57: #{decoder_forward.19} parent=47 // pred_check
          %p456 = pneg %p455
        $region58: #{decoder_forward.19} parent=47 // pred_check_branch
          %458 = sbr.rel (%p456) target = $region60
        $region59: #{decoder_forward.19} parent=47 // pred_region
          %v459 = vld [vmem:[%s422 + $0x7] sm:$0x1]
          %v460 = vmax.f32 %v459, 0.0
          %461 = vst.msk [vmem:[#allocation2] sm:$0x1] %vm452, %v460
        $region60: #{decoder_forward.19} parent=47 // pred_fallthru
          _
        %p462 = scmp.lt.s32.totalorder %s25, 1
        // Predicated region
        $region61: #{decoder_forward.19} parent=47 // pred_check
          %p463 = pneg %p462
        $region62: #{decoder_forward.19} parent=47 // pred_check_branch
          %465 = sbr.rel (%p463) target = $region64
        $region63: #{decoder_forward.19} parent=47 // pred_region
          %v466 = vld [vmem:[%s436] sm:$0x1]
          %v467 = vmax.f32 %v466, 0.0
          %468 = vst.msk [vmem:[#allocation2 + $0x9] sm:$0x1] %vm452, %v467
        $region64: #{decoder_forward.19} parent=47 // pred_fallthru
          _
        %v469 = vld [vmem:[#allocation2] sm:$0xff]
        %v470 = vld [vmem:[#allocation2 + $0x8] sm:$0x3]
        %v471 = vld [vmem:[#allocation3] sm:$0xff]
        %v472 = vld [vmem:[#allocation3 + $0x8] sm:$0xff]
        %v473 = vld [vmem:[#allocation3 + $0x10] sm:$0xff]
        %v474 = vld [vmem:[#allocation3 + $0x18] sm:$0xff]
        %s475 = scalar_lea.vmem [#allocation3], 32
        %v476 = vld [vmem:[%s475] sm:$0xff]
        %v477 = vld [vmem:[%s475 + $0x8] sm:$0xff]
        %v478 = vld [vmem:[%s475 + $0x10] sm:$0xff]
        %v479 = vld [vmem:[%s475 + $0x18] sm:$0xff]
        %vm482 = vcmask 1046528
        %v483 = vrot.slane %v469, 1
        %v484 = vrot.slane %v470, 1
        %v485 = vsel %vm482, %v483, %v484
        %v486 = vsel %vm450, %v485, 0
        %488 = vmatpush.msra.mxu0 0.0
        %489 = vmatpush.msra.mxu0 0.0
        %490 = vmatpush.msra.mxu0 0.0
        %491 = vmatpush.msra.mxu0 0.0
        %492 = vmatpush.msra.mxu0 0.0
        %493 = vmatpush.msra.mxu0 0.0
        %494 = vmatpush.msra.mxu0 0.0
        %495 = vmatpush.msra.mxu0 0.0
        %496 = vmatpush.msra.mxu0 0.0
        %497 = vmatpush.msra.mxu0 0.0
        %498 = vmatpush.msra.mxu0 0.0
        %499 = vmatpush.msra.mxu0 0.0
        %500 = vmatpush.msra.mxu0 %v479
        %501 = vmatpush.msra.mxu0 %v478
        %502 = vmatpush.msra.mxu0 %v477
        %503 = vmatpush.msra.mxu0 %v476
        %504 = vmatmul.f32.gmra.mxu0 %v486
        %v505 = vpop.f32.mrf.mxu0
        %v506 = vadd.f32 0.0, %v505
        %507 = vdwg.mxu0
        %v508 = vsel %vm450, %v469, 0
        %510 = vmatpush.msra.mxu0 0.0
        %511 = vmatpush.msra.mxu0 0.0
        %512 = vmatpush.msra.mxu0 0.0
        %513 = vmatpush.msra.mxu0 0.0
        %514 = vmatpush.msra.mxu0 0.0
        %515 = vmatpush.msra.mxu0 0.0
        %516 = vmatpush.msra.mxu0 0.0
        %517 = vmatpush.msra.mxu0 0.0
        %518 = vmatpush.msra.mxu0 0.0
        %519 = vmatpush.msra.mxu0 0.0
        %520 = vmatpush.msra.mxu0 0.0
        %521 = vmatpush.msra.mxu0 0.0
        %522 = vmatpush.msra.mxu0 %v474
        %523 = vmatpush.msra.mxu0 %v473
        %524 = vmatpush.msra.mxu0 %v472
        %525 = vmatpush.msra.mxu0 %v471
        %526 = vmatmul.f32.gmra.mxu0 %v508
        %v527 = vpop.f32.mrf.mxu0
        %v528 = vadd.f32 %v506, %v527
        %529 = vdwg.mxu0
        %s530 = scalar_lea.vmem [#allocation3], 64
        %v531 = vld [vmem:[%s530] sm:$0xff]
        %v532 = vld [vmem:[%s530 + $0x8] sm:$0xff]
        %v533 = vld [vmem:[%s530 + $0x10] sm:$0xff]
        %v534 = vld [vmem:[%s530 + $0x18] sm:$0xff]
        %vm535 = vcmask 1045504
        %v536 = vrot.slane %v469, 2
        %v537 = vrot.slane %v470, 2
        %v538 = vsel %vm535, %v536, %v537
        %v539 = vsel %vm450, %v538, 0
        %541 = vmatpush.msra.mxu0 0.0
        %542 = vmatpush.msra.mxu0 0.0
        %543 = vmatpush.msra.mxu0 0.0
        %544 = vmatpush.msra.mxu0 0.0
        %545 = vmatpush.msra.mxu0 0.0
        %546 = vmatpush.msra.mxu0 0.0
        %547 = vmatpush.msra.mxu0 0.0
        %548 = vmatpush.msra.mxu0 0.0
        %549 = vmatpush.msra.mxu0 0.0
        %550 = vmatpush.msra.mxu0 0.0
        %551 = vmatpush.msra.mxu0 0.0
        %552 = vmatpush.msra.mxu0 0.0
        %553 = vmatpush.msra.mxu0 %v534
        %554 = vmatpush.msra.mxu0 %v533
        %555 = vmatpush.msra.mxu0 %v532
        %556 = vmatpush.msra.mxu0 %v531
        %557 = vmatmul.f32.gmra.mxu0 %v539
        %v558 = vpop.f32.mrf.mxu0
        %v559 = vadd.f32 0.0, %v558
        %560 = vdwg.mxu0
        %v561 = vadd.f32 %v528, %v559
        %v562 = vld [vmem:[%s4] sm:$0x1]
        %v564 = vperm.slane %v562, 0
        %v566 = vadd.f32 %v561, %v564
        %v567 = vmax.f32 %v566, 0.0
        %v568 = vld [vmem:[#allocation5] sm:$0xff]
        %v569 = vld [vmem:[#allocation5 + $0x8] sm:$0xff]
        %v570 = vld [vmem:[#allocation5 + $0x10] sm:$0xff]
        %v571 = vld [vmem:[#allocation5 + $0x18] sm:$0xff]
        %v572 = vld [vmem:[%s6] sm:$0x1]
        %v574 = vperm.slane %v572, 0
        %v577 = vsel %vm450, %v567, 0
        %579 = vmatpush.msra.mxu0 0.0
        %580 = vmatpush.msra.mxu0 0.0
        %581 = vmatpush.msra.mxu0 0.0
        %582 = vmatpush.msra.mxu0 0.0
        %583 = vmatpush.msra.mxu0 0.0
        %584 = vmatpush.msra.mxu0 0.0
        %585 = vmatpush.msra.mxu0 0.0
        %586 = vmatpush.msra.mxu0 0.0
        %587 = vmatpush.msra.mxu0 0.0
        %588 = vmatpush.msra.mxu0 0.0
        %589 = vmatpush.msra.mxu0 0.0
        %590 = vmatpush.msra.mxu0 0.0
        %591 = vmatpush.msra.mxu0 %v571
        %592 = vmatpush.msra.mxu0 %v570
        %593 = vmatpush.msra.mxu0 %v569
        %594 = vmatpush.msra.mxu0 %v568
        %595 = vmatmul.f32.gmra.mxu0 %v577
        %v596 = vpop.f32.mrf.mxu0
        %v597 = vadd.f32 %v574, %v596
        %598 = vdwg.mxu0
        %v599 = vadd.f32 %v597, %v448
        %600 = vst.msk [vmem:[%s447] sm:$0xff] %vm450, %v599
        %p601 = scmp.lt.s32.totalorder %s24, 1
        %s602 = scalar_select %p601, %s24, 1
        %p603 = scmp.lt.s32.totalorder %s25, 1
        %s604 = scalar_select %p603, %s25, 1
        %s605 = smul.addr %s602, 2
        %s606 = sadd.s32 %s604, %s605
        %s607 = smul.addr %s606, 8
        %s608 = scalar_lea.vmem %s7, %s607
        // Predicated region
        $region65: #{decoder_forward.19} parent=47 // pred_check
          %p609 = pneg %p232
        $region66: #{decoder_forward.19} parent=47 // pred_check_branch
          %611 = sbr.rel (%p609) target = $region68
        $region67: #{decoder_forward.19} parent=47 // pred_region
          _
        $region68: #{decoder_forward.19} parent=47 // pred_fallthru
          _
      $region48: #{decoder_forward.19} parent=5 // pred_fallthru
        _
      %p612 = scmp.le.s32.totalorder 2, %s15
      // Predicated region
      $region69: #{decoder_forward.19} parent=5 // pred_check
        %p613 = pneg %p612
      $region70: #{decoder_forward.19} parent=5 // pred_check_branch
        %615 = sbr.rel (%p613) target = $region72
      $region71: #{decoder_forward.19} parent=5 // pred_region
        %s616 = ssub.s32 %s15, 2
        // Predicated region
        $region73: #{decoder_forward.19} parent=71 // pred_check
          %p617 = pneg %p238
        $region74: #{decoder_forward.19} parent=71 // pred_check_branch
          %619 = sbr.rel (%p617) target = $region76
        $region75: #{decoder_forward.19} parent=71 // pred_region
          %p620 = scmp.lt.s32.totalorder %s26, 1
          %s621 = scalar_select %p620, %s26, 1
          %p622 = scmp.lt.s32.totalorder %s27, 1
          %s623 = scalar_select %p622, %s27, 1
          %s624 = smul.addr %s621, 2
          %s625 = sadd.s32 %s623, %s624
          %s626 = smul.addr %s625, 8
          %s627 = scalar_lea.vmem %s7, %s626
        $region76: #{decoder_forward.19} parent=71 // pred_fallthru
          _
      $region72: #{decoder_forward.19} parent=5 // pred_fallthru
        _
    $region6: #{decoder_forward.19} parent=1 // loop_footer
      %s19 = sadd.s32 1, %s15
    $region7: #{decoder_forward.19} parent=1 // loop_footer_branch
      %14 = sbr.rel target = $region3
    $region8: #{decoder_forward.19} parent=1 // loop_exit
      _
    %628 = vsyncpa [#allocation4], 1
    %s629 = scalar_lea.sflag [#allocation4], 1
    %630 = vsyncpa %s629, 1
    %631 = vsyncpa [#allocation6], 1

// kernel: decoder_forward.22
$region0: #{decoder_forward.22}
  #allocation0 [shape = 'u32[]', space=smem, size = 0x4, offset = 0x4, fixed_abs, tag = 'smem constant byte address 0x4 - core index']
  #allocation1 [shape = 'u32[72,128]{1,0:T(1,128)}', space=vmem, size = 0x9000, scoped, tag = 'internal scratch']
  #allocation2 [shape = 'f32[10,32]{1,0:T(8,128)}', space=vmem, size = 0x2000, scoped, tag = 'scratch operand']
  %s0 = inlined_call_operand.vmem [shape: f32[2,32,32], index: 0, kind: input, shape index: {}, may-alias: {0,1,2}]
  %s1 = inlined_call_operand.vmem [shape: f32[2,32,32], index: 1, kind: input, shape index: {}, may-alias: {0,1,2}]
  %s2 = inlined_call_operand.vmem [shape: f32[2,32,32], index: 2, kind: input, shape index: {}, may-alias: {0,1,2}]
  %s3 = inlined_call_operand.vmem [shape: f32[3,32,32], index: 3, kind: input, shape index: {}]
  %s4 = inlined_call_operand.vmem [shape: f32[1,32], index: 4, kind: input, shape index: {}]
  %s5 = inlined_call_operand.vmem [shape: f32[1,32,32], index: 5, kind: input, shape index: {}]
  %s6 = inlined_call_operand.vmem [shape: f32[1,32], index: 6, kind: input, shape index: {}]
  %s7 = inlined_call_operand.vmem [shape: f32[2,32,32], index: 7, kind: output, shape index: {}]
  %s8 = sld [smem:[#allocation0]]
  $region69: #{decoder_forward.22} parent=0
    _
  %s10 = ssub.s32 1, %s8
  %s11 = scalar_select 0, %s10, %s8
  loop: start=0, step=1, limit=10
  $region2: #{decoder_forward.22} parent=0 // loop_pre_header
    _
  $region3: #{decoder_forward.22} parent=0 // loop_header
    %s13 = sphi 0, %s17
    %p14 = scmp.ge.s32.totalorder %s13, 10
    %s20 = sphi 0, %s32
    %s21 = sphi 0, %s28
    %s22 = sphi 0, %s20
    %s23 = sphi 0, %s21
    %s24 = sphi 0, %s22
    %s25 = sphi 0, %s23
    %s37 = sphi 0, %s39
    %s40 = sphi 0, %s37
    %s41 = sphi 0, %s40
    %s57 = sphi 0, %s41
    %s71 = sphi 0, %s73
    %s74 = sphi 0, %s71
    %s75 = sphi 0, %s74
    %s91 = sphi 0, %s75
    %s105 = sphi 0, %s107
    %s108 = sphi 0, %s105
    %s109 = sphi 0, %s108
    %s125 = sphi 0, %s109
    %s129 = sphi 0, %s129
    %s131 = sphi 0, %s129
    %s132 = sphi 0, %s131
    %s146 = sphi 0, %s132
    %s150 = sphi 0, %s150
    %s152 = sphi 0, %s150
    %s153 = sphi 0, %s152
    %s167 = sphi 0, %s153
    %s171 = sphi 0, %s171
    %s173 = sphi 0, %s171
    %s174 = sphi 0, %s173
    %s188 = sphi 0, %s174
    %s192 = sphi 0, %s192
    %s194 = sphi 0, %s192
    %s195 = sphi 0, %s194
    %s209 = sphi 0, %s195
    %s217 = sphi 0, %s219
    %s220 = sphi 0, %s217
    %s221 = sphi 0, %s220
    %s237 = sphi 0, %s221
  $region4: #{decoder_forward.22} parent=0 // loop_header_branch
    %16 = sbr.rel (%p14) target = $region8
  $region5: #{decoder_forward.22} parent=0 // loop_body
    %s18 = ssub.s32 %s13, 1
    %s19 = ssub.s32 %s13, 2
    %s26 = sadd.s32 1, %s21
    %p27 = scmp.ge.s32.totalorder %s26, 4
    %s28 = scalar_select %p27, 0, %s26
    %s29 = sadd.s32 1, %s20
    %s30 = scalar_select %p27, %s29, %s20
    %p31 = scmp.ge.s32.totalorder %s30, 2
    %s32 = scalar_select %p31, 0, %s30
    %s33 = ssub.s32 %s20, %s32
    %s34 = ssub.s32 %s21, %s28
    %s35 = sor.u32 %s33, %s34
    %p36 = scmp.eq.s32.totalorder %s35, 0
    %s38 = sadd.s32 %s37, 1
    %s39 = scalar_select %p36, %s37, %s38
    %p42 = pneg %p36
    %p43 = scmp.eq.s32.totalorder %s13, 7
    %p44 = por %p42, %p43
    %p45 = scmp.ne.s32.totalorder %s37, %s40
    %p46 = scmp.eq.s32.totalorder %s13, 0
    %p47 = por %p45, %p46
    %p48 = scmp.ne.s32.totalorder %s37, %s40
    %p49 = scmp.eq.s32.totalorder %s18, 7
    %p50 = por %p48, %p49
    %p51 = scmp.ne.s32.totalorder %s40, %s41
    %p52 = scmp.eq.s32.totalorder %s18, 0
    %p53 = por %p51, %p52
    %p54 = scmp.ne.s32.totalorder %s40, %s41
    %p55 = scmp.eq.s32.totalorder %s19, 7
    %p56 = por %p54, %p55
    %p58 = scmp.ne.s32.totalorder %s41, %s57
    %p59 = scmp.eq.s32.totalorder %s19, 0
    %p60 = por %p58, %p59
    %s61 = ssub.s32 %s21, 1
    %p62 = scmp.gt.s32.totalorder %s61, 0
    %s63 = scalar_select %p62, %s61, 0
    %s64 = ssub.s32 %s28, 1
    %p65 = scmp.gt.s32.totalorder %s64, 0
    %s66 = scalar_select %p65, %s64, 0
    %s67 = ssub.s32 %s20, %s32
    %s68 = ssub.s32 %s63, %s66
    %s69 = sor.u32 %s67, %s68
    %p70 = scmp.eq.s32.totalorder %s69, 0
    %s72 = sadd.s32 %s71, 1
    %s73 = scalar_select %p70, %s71, %s72
    %p76 = pneg %p70
    %p77 = scmp.eq.s32.totalorder %s13, 7
    %p78 = por %p76, %p77
    %p79 = scmp.ne.s32.totalorder %s71, %s74
    %p80 = scmp.eq.s32.totalorder %s13, 0
    %p81 = por %p79, %p80
    %p82 = scmp.ne.s32.totalorder %s71, %s74
    %p83 = scmp.eq.s32.totalorder %s18, 7
    %p84 = por %p82, %p83
    %p85 = scmp.ne.s32.totalorder %s74, %s75
    %p86 = scmp.eq.s32.totalorder %s18, 0
    %p87 = por %p85, %p86
    %p88 = scmp.ne.s32.totalorder %s74, %s75
    %p89 = scmp.eq.s32.totalorder %s19, 7
    %p90 = por %p88, %p89
    %p92 = scmp.ne.s32.totalorder %s75, %s91
    %p93 = scmp.eq.s32.totalorder %s19, 0
    %p94 = por %p92, %p93
    %s95 = sadd.s32 %s21, 1
    %p96 = scmp.lt.s32.totalorder %s95, 3
    %s97 = scalar_select %p96, %s95, 3
    %s98 = sadd.s32 %s28, 1
    %p99 = scmp.lt.s32.totalorder %s98, 3
    %s100 = scalar_select %p99, %s98, 3
    %s101 = ssub.s32 %s20, %s32
    %s102 = ssub.s32 %s97, %s100
    %s103 = sor.u32 %s101, %s102
    %p104 = scmp.eq.s32.totalorder %s103, 0
    %s106 = sadd.s32 %s105, 1
    %s107 = scalar_select %p104, %s105, %s106
    %p110 = pneg %p104
    %p111 = scmp.eq.s32.totalorder %s13, 7
    %p112 = por %p110, %p111
    %p113 = scmp.ne.s32.totalorder %s105, %s108
    %p114 = scmp.eq.s32.totalorder %s13, 0
    %p115 = por %p113, %p114
    %p116 = scmp.ne.s32.totalorder %s105, %s108
    %p117 = scmp.eq.s32.totalorder %s18, 7
    %p118 = por %p116, %p117
    %p119 = scmp.ne.s32.totalorder %s108, %s109
    %p120 = scmp.eq.s32.totalorder %s18, 0
    %p121 = por %p119, %p120
    %p122 = scmp.ne.s32.totalorder %s108, %s109
    %p123 = scmp.eq.s32.totalorder %s19, 7
    %p124 = por %p122, %p123
    %p126 = scmp.ne.s32.totalorder %s109, %s125
    %p127 = scmp.eq.s32.totalorder %s19, 0
    %p128 = por %p126, %p127
    %s130 = sadd.s32 %s129, 1
    %p133 = scmp.eq.s32.totalorder %s13, 7
    %p134 = scmp.ne.s32.totalorder %s129, %s131
    %p135 = scmp.eq.s32.totalorder %s13, 0
    %p136 = por %p134, %p135
    %p137 = scmp.ne.s32.totalorder %s129, %s131
    %p138 = scmp.eq.s32.totalorder %s18, 7
    %p139 = por %p137, %p138
    %p140 = scmp.ne.s32.totalorder %s131, %s132
    %p141 = scmp.eq.s32.totalorder %s18, 0
    %p142 = por %p140, %p141
    %p143 = scmp.ne.s32.totalorder %s131, %s132
    %p144 = scmp.eq.s32.totalorder %s19, 7
    %p145 = por %p143, %p144
    %p147 = scmp.ne.s32.totalorder %s132, %s146
    %p148 = scmp.eq.s32.totalorder %s19, 0
    %p149 = por %p147, %p148
    %s151 = sadd.s32 %s150, 1
    %p154 = scmp.eq.s32.totalorder %s13, 7
    %p155 = scmp.ne.s32.totalorder %s150, %s152
    %p156 = scmp.eq.s32.totalorder %s13, 0
    %p157 = por %p155, %p156
    %p158 = scmp.ne.s32.totalorder %s150, %s152
    %p159 = scmp.eq.s32.totalorder %s18, 7
    %p160 = por %p158, %p159
    %p161 = scmp.ne.s32.totalorder %s152, %s153
    %p162 = scmp.eq.s32.totalorder %s18, 0
    %p163 = por %p161, %p162
    %p164 = scmp.ne.s32.totalorder %s152, %s153
    %p165 = scmp.eq.s32.totalorder %s19, 7
    %p166 = por %p164, %p165
    %p168 = scmp.ne.s32.totalorder %s153, %s167
    %p169 = scmp.eq.s32.totalorder %s19, 0
    %p170 = por %p168, %p169
    %s172 = sadd.s32 %s171, 1
    %p175 = scmp.eq.s32.totalorder %s13, 7
    %p176 = scmp.ne.s32.totalorder %s171, %s173
    %p177 = scmp.eq.s32.totalorder %s13, 0
    %p178 = por %p176, %p177
    %p179 = scmp.ne.s32.totalorder %s171, %s173
    %p180 = scmp.eq.s32.totalorder %s18, 7
    %p181 = por %p179, %p180
    %p182 = scmp.ne.s32.totalorder %s173, %s174
    %p183 = scmp.eq.s32.totalorder %s18, 0
    %p184 = por %p182, %p183
    %p185 = scmp.ne.s32.totalorder %s173, %s174
    %p186 = scmp.eq.s32.totalorder %s19, 7
    %p187 = por %p185, %p186
    %p189 = scmp.ne.s32.totalorder %s174, %s188
    %p190 = scmp.eq.s32.totalorder %s19, 0
    %p191 = por %p189, %p190
    %s193 = sadd.s32 %s192, 1
    %p196 = scmp.eq.s32.totalorder %s13, 7
    %p197 = scmp.ne.s32.totalorder %s192, %s194
    %p198 = scmp.eq.s32.totalorder %s13, 0
    %p199 = por %p197, %p198
    %p200 = scmp.ne.s32.totalorder %s192, %s194
    %p201 = scmp.eq.s32.totalorder %s18, 7
    %p202 = por %p200, %p201
    %p203 = scmp.ne.s32.totalorder %s194, %s195
    %p204 = scmp.eq.s32.totalorder %s18, 0
    %p205 = por %p203, %p204
    %p206 = scmp.ne.s32.totalorder %s194, %s195
    %p207 = scmp.eq.s32.totalorder %s19, 7
    %p208 = por %p206, %p207
    %p210 = scmp.ne.s32.totalorder %s195, %s209
    %p211 = scmp.eq.s32.totalorder %s19, 0
    %p212 = por %p210, %p211
    %s213 = ssub.s32 %s20, %s32
    %s214 = ssub.s32 %s21, %s28
    %s215 = sor.u32 %s213, %s214
    %p216 = scmp.eq.s32.totalorder %s215, 0
    %s218 = sadd.s32 %s217, 1
    %s219 = scalar_select %p216, %s217, %s218
    %p222 = pneg %p216
    %p223 = scmp.eq.s32.totalorder %s13, 7
    %p224 = por %p222, %p223
    %p225 = scmp.ne.s32.totalorder %s217, %s220
    %p226 = scmp.eq.s32.totalorder %s13, 0
    %p227 = por %p225, %p226
    %p228 = scmp.ne.s32.totalorder %s217, %s220
    %p229 = scmp.eq.s32.totalorder %s18, 7
    %p230 = por %p228, %p229
    %p231 = scmp.ne.s32.totalorder %s220, %s221
    %p232 = scmp.eq.s32.totalorder %s18, 0
    %p233 = por %p231, %p232
    %p234 = scmp.ne.s32.totalorder %s220, %s221
    %p235 = scmp.eq.s32.totalorder %s19, 7
    %p236 = por %p234, %p235
    %p238 = scmp.ne.s32.totalorder %s221, %s237
    %p239 = scmp.eq.s32.totalorder %s19, 0
    %p240 = por %p238, %p239
    %p241 = scmp.le.s32.totalorder 1, %s13
    %p242 = scmp.lt.s32.totalorder %s13, 9
    %p243 = pnand %p241, %p242
    %p244 = pneg %p243
    // Predicated region
    $region9: #{decoder_forward.22} parent=5 // pred_check
      _
    $region10: #{decoder_forward.22} parent=5 // pred_check_branch
      %246 = sbr.rel (%p243) target = $region12
    $region11: #{decoder_forward.22} parent=5 // pred_region
      %s247 = ssub.s32 %s13, 1
      // Predicated region
      $region13: #{decoder_forward.22} parent=11 // pred_check
        %p248 = pneg %p142
      $region14: #{decoder_forward.22} parent=11 // pred_check_branch
        %250 = sbr.rel (%p248) target = $region16
      $region15: #{decoder_forward.22} parent=11 // pred_region
        _
      $region16: #{decoder_forward.22} parent=11 // pred_fallthru
        _
      // Predicated region
      $region17: #{decoder_forward.22} parent=11 // pred_check
        %p251 = pneg %p163
      $region18: #{decoder_forward.22} parent=11 // pred_check_branch
        %253 = sbr.rel (%p251) target = $region20
      $region19: #{decoder_forward.22} parent=11 // pred_region
        _
      $region20: #{decoder_forward.22} parent=11 // pred_fallthru
        _
      // Predicated region
      $region21: #{decoder_forward.22} parent=11 // pred_check
        %p254 = pneg %p184
      $region22: #{decoder_forward.22} parent=11 // pred_check_branch
        %256 = sbr.rel (%p254) target = $region24
      $region23: #{decoder_forward.22} parent=11 // pred_region
        _
      $region24: #{decoder_forward.22} parent=11 // pred_fallthru
        _
      // Predicated region
      $region25: #{decoder_forward.22} parent=11 // pred_check
        %p257 = pneg %p205
      $region26: #{decoder_forward.22} parent=11 // pred_check_branch
        %259 = sbr.rel (%p257) target = $region28
      $region27: #{decoder_forward.22} parent=11 // pred_region
        _
      $region28: #{decoder_forward.22} parent=11 // pred_fallthru
        _
    $region12: #{decoder_forward.22} parent=5 // pred_fallthru
      _
    %p260 = scmp.lt.s32.totalorder %s13, 8
    // Predicated region
    $region29: #{decoder_forward.22} parent=5 // pred_check
      %p261 = pneg %p260
    $region30: #{decoder_forward.22} parent=5 // pred_check_branch
      %263 = sbr.rel (%p261) target = $region32
    $region31: #{decoder_forward.22} parent=5 // pred_region
      // Predicated region
      $region33: #{decoder_forward.22} parent=31 // pred_check
        %p264 = pneg %p47
      $region34: #{decoder_forward.22} parent=31 // pred_check_branch
        %266 = sbr.rel (%p264) target = $region36
      $region35: #{decoder_forward.22} parent=31 // pred_region
        %p267 = scmp.lt.s32.totalorder %s20, 1
        %s268 = scalar_select %p267, %s20, 1
        %p269 = scmp.lt.s32.totalorder %s21, 3
        %s270 = scalar_select %p269, %s21, 3
        %s271 = smul.addr %s268, 4
        %s272 = sadd.s32 %s270, %s271
        %s273 = smul.addr %s272, 8
        %s274 = scalar_lea.vmem %s0, %s273
      $region36: #{decoder_forward.22} parent=31 // pred_fallthru
        _
      // Predicated region
      $region37: #{decoder_forward.22} parent=31 // pred_check
        %p275 = pneg %p81
      $region38: #{decoder_forward.22} parent=31 // pred_check_branch
        %277 = sbr.rel (%p275) target = $region40
      $region39: #{decoder_forward.22} parent=31 // pred_region
        %s278 = ssub.s32 %s21, 1
        %p279 = scmp.gt.s32.totalorder %s278, 0
        %s280 = scalar_select %p279, %s278, 0
        %p281 = scmp.lt.s32.totalorder %s20, 1
        %s282 = scalar_select %p281, %s20, 1
        %p283 = scmp.lt.s32.totalorder %s280, 3
        %s284 = scalar_select %p283, %s280, 3
        %s285 = smul.addr %s282, 4
        %s286 = sadd.s32 %s284, %s285
        %s287 = smul.addr %s286, 8
        %s288 = scalar_lea.vmem %s1, %s287
        %s289 = ssub.s32 %s21, 1
        %p290 = scmp.gt.s32.totalorder %s289, 0
        %s291 = scalar_select %p290, %s289, 0
      $region40: #{decoder_forward.22} parent=31 // pred_fallthru
        _
      // Predicated region
      $region41: #{decoder_forward.22} parent=31 // pred_check
        %p292 = pneg %p115
      $region42: #{decoder_forward.22} parent=31 // pred_check_branch
        %294 = sbr.rel (%p292) target = $region44
      $region43: #{decoder_forward.22} parent=31 // pred_region
        %s295 = sadd.s32 %s21, 1
        %p296 = scmp.lt.s32.totalorder %s295, 3
        %s297 = scalar_select %p296, %s295, 3
        %p298 = scmp.lt.s32.totalorder %s20, 1
        %s299 = scalar_select %p298, %s20, 1
        %p300 = scmp.lt.s32.totalorder %s297, 3
        %s301 = scalar_select %p300, %s297, 3
        %s302 = smul.addr %s299, 4
        %s303 = sadd.s32 %s301, %s302
        %s304 = smul.addr %s303, 8
        %s305 = scalar_lea.vmem %s2, %s304
        %s306 = sadd.s32 %s21, 1
        %p307 = scmp.lt.s32.totalorder %s306, 3
        %s308 = scalar_select %p307, %s306, 3
      $region44: #{decoder_forward.22} parent=31 // pred_fallthru
        _
    $region32: #{decoder_forward.22} parent=5 // pred_fallthru
      _
    %p309 = scmp.le.s32.totalorder 1, %s13
    %p310 = scmp.lt.s32.totalorder %s13, 9
    %p311 = pnand %p309, %p310
    %p312 = pneg %p311
    // Predicated region
    $region45: #{decoder_forward.22} parent=5 // pred_check
      _
    $region46: #{decoder_forward.22} parent=5 // pred_check_branch
      %314 = sbr.rel (%p311) target = $region48
    $region47: #{decoder_forward.22} parent=5 // pred_region
      %s315 = ssub.s32 %s13, 1
      %p316 = scmp.lt.s32.totalorder %s22, 1
      %s317 = scalar_select %p316, %s22, 1
      %p318 = scmp.lt.s32.totalorder %s23, 3
      %s319 = scalar_select %p318, %s23, 3
      %s320 = smul.addr %s317, 4
      %s321 = sadd.s32 %s319, %s320
      %s322 = smul.addr %s321, 8
      %s323 = scalar_lea.vmem %s0, %s322
      %p324 = pneg %p53
      %p325 = pneg %p50
      %s326 = ssub.s32 %s23, 1
      %p327 = scmp.gt.s32.totalorder %s326, 0
      %s328 = scalar_select %p327, %s326, 0
      %p329 = scmp.lt.s32.totalorder %s22, 1
      %s330 = scalar_select %p329, %s22, 1
      %p331 = scmp.lt.s32.totalorder %s328, 3
      %s332 = scalar_select %p331, %s328, 3
      %s333 = smul.addr %s330, 4
      %s334 = sadd.s32 %s332, %s333
      %s335 = smul.addr %s334, 8
      %s336 = scalar_lea.vmem %s1, %s335
      %p337 = pneg %p87
      %p338 = pneg %p84
      %s339 = sadd.s32 %s23, 1
      %p340 = scmp.lt.s32.totalorder %s339, 3
      %s341 = scalar_select %p340, %s339, 3
      %p342 = scmp.lt.s32.totalorder %s22, 1
      %s343 = scalar_select %p342, %s22, 1
      %p344 = scmp.lt.s32.totalorder %s341, 3
      %s345 = scalar_select %p344, %s341, 3
      %s346 = smul.addr %s343, 4
      %s347 = sadd.s32 %s345, %s346
      %s348 = smul.addr %s347, 8
      %s349 = scalar_lea.vmem %s2, %s348
      %p350 = pneg %p121
      %p351 = pneg %p118
      %p352 = pneg %p142
      %p353 = pneg %p139
      %p354 = pneg %p163
      %p355 = pneg %p160
      %p356 = pneg %p184
      %p357 = pneg %p181
      %p358 = pneg %p205
      %p359 = pneg %p202
      %p360 = pneg %p233
      %p361 = pneg %p230
      %p362 = scmp.lt.s32.totalorder %s22, 1
      %s363 = scalar_select %p362, %s22, 1
      %p364 = scmp.lt.s32.totalorder %s23, 3
      %s365 = scalar_select %p364, %s23, 3
      %s366 = smul.addr %s363, 4
      %s367 = sadd.s32 %s365, %s366
      %s368 = smul.addr %s367, 8
      %s369 = scalar_lea.vmem %s7, %s368
      %p370 = scmp.lt.s32.totalorder %s22, 1
      %s371 = scalar_select %p370, %s22, 1
      %p372 = scmp.lt.s32.totalorder %s23, 3
      %s373 = scalar_select %p372, %s23, 3
      %s374 = smul.addr %s371, 4
      %s375 = sadd.s32 %s373, %s374
      %s376 = smul.addr %s375, 8
      %s377 = scalar_lea.vmem %s0, %s376
      %s378 = ssub.s32 %s23, 1
      %p379 = scmp.gt.s32.totalorder %s378, 0
      %s380 = scalar_select %p379, %s378, 0
      %p381 = scmp.lt.s32.totalorder %s22, 1
      %s382 = scalar_select %p381, %s22, 1
      %p383 = scmp.lt.s32.totalorder %s380, 3
      %s384 = scalar_select %p383, %s380, 3
      %s385 = smul.addr %s382, 4
      %s386 = sadd.s32 %s384, %s385
      %s387 = smul.addr %s386, 8
      %s388 = scalar_lea.vmem %s1, %s387
      %s389 = ssub.s32 %s23, 1
      %p390 = scmp.gt.s32.totalorder %s389, 0
      %s391 = scalar_select %p390, %s389, 0
      %s392 = sadd.s32 %s23, 1
      %p393 = scmp.lt.s32.totalorder %s392, 3
      %s394 = scalar_select %p393, %s392, 3
      %p395 = scmp.lt.s32.totalorder %s22, 1
      %s396 = scalar_select %p395, %s22, 1
      %p397 = scmp.lt.s32.totalorder %s394, 3
      %s398 = scalar_select %p397, %s394, 3
      %s399 = smul.addr %s396, 4
      %s400 = sadd.s32 %s398, %s399
      %s401 = smul.addr %s400, 8
      %s402 = scalar_lea.vmem %s2, %s401
      %s403 = sadd.s32 %s23, 1
      %p404 = scmp.lt.s32.totalorder %s403, 3
      %s405 = scalar_select %p404, %s403, 3
      %p406 = scmp.lt.s32.totalorder %s22, 1
      %s407 = scalar_select %p406, %s22, 1
      %p408 = scmp.lt.s32.totalorder %s23, 3
      %s409 = scalar_select %p408, %s23, 3
      %s410 = smul.addr %s407, 4
      %s411 = sadd.s32 %s409, %s410
      %s412 = smul.addr %s411, 8
      %s413 = scalar_lea.vmem %s7, %s412
      %v414 = vld [vmem:[%s377] sm:$0xff]
      %v415 = vmax.f32 %v414, 0.0
      %vm416 = vcmask 261120
      %417 = vst.msk [vmem:[#allocation2 + $0x1] sm:$0xff] %vm416, %v415
      %vm418 = vcmask 253952
      %419 = vst.msk [vmem:[#allocation2] sm:$0x1] %vm418, 0.0
      %420 = vst.msk [vmem:[#allocation2 + $0x9] sm:$0x1] %vm418, 0.0
      %p421 = scmp.gt.s32.totalorder %s23, 0
      // Predicated region
      $region49: #{decoder_forward.22} parent=47 // pred_check
        %p422 = pneg %p421
      $region50: #{decoder_forward.22} parent=47 // pred_check_branch
        %424 = sbr.rel (%p422) target = $region52
      $region51: #{decoder_forward.22} parent=47 // pred_region
        %v425 = vld [vmem:[%s388 + $0x7] sm:$0x1]
        %v426 = vmax.f32 %v425, 0.0
        %427 = vst.msk [vmem:[#allocation2] sm:$0x1] %vm418, %v426
      $region52: #{decoder_forward.22} parent=47 // pred_fallthru
        _
      %p428 = scmp.lt.s32.totalorder %s23, 3
      // Predicated region
      $region53: #{decoder_forward.22} parent=47 // pred_check
        %p429 = pneg %p428
      $region54: #{decoder_forward.22} parent=47 // pred_check_branch
        %431 = sbr.rel (%p429) target = $region56
      $region55: #{decoder_forward.22} parent=47 // pred_region
        %v432 = vld [vmem:[%s402] sm:$0x1]
        %v433 = vmax.f32 %v432, 0.0
        %434 = vst.msk [vmem:[#allocation2 + $0x9] sm:$0x1] %vm418, %v433
      $region56: #{decoder_forward.22} parent=47 // pred_fallthru
        _
      %v435 = vld [vmem:[#allocation2] sm:$0xff]
      %v436 = vld [vmem:[#allocation2 + $0x8] sm:$0x3]
      %v437 = vld [vmem:[%s3] sm:$0xff]
      %v438 = vld [vmem:[%s3 + $0x8] sm:$0xff]
      %v439 = vld [vmem:[%s3 + $0x10] sm:$0xff]
      %v440 = vld [vmem:[%s3 + $0x18] sm:$0xff]
      %s441 = scalar_lea.vmem %s3, 32
      %v442 = vld [vmem:[%s441] sm:$0xff]
      %v443 = vld [vmem:[%s441 + $0x8] sm:$0xff]
      %v444 = vld [vmem:[%s441 + $0x10] sm:$0xff]
      %v445 = vld [vmem:[%s441 + $0x18] sm:$0xff]
      %vm448 = vcmask 1046528
      %v449 = vrot.slane %v435, 1
      %v450 = vrot.slane %v436, 1
      %v451 = vsel %vm448, %v449, %v450
      %v452 = vsel %vm416, %v451, 0
      %454 = vmatpush.msra.mxu0 0.0
      %455 = vmatpush.msra.mxu0 0.0
      %456 = vmatpush.msra.mxu0 0.0
      %457 = vmatpush.msra.mxu0 0.0
      %458 = vmatpush.msra.mxu0 0.0
      %459 = vmatpush.msra.mxu0 0.0
      %460 = vmatpush.msra.mxu0 0.0
      %461 = vmatpush.msra.mxu0 0.0
      %462 = vmatpush.msra.mxu0 0.0
      %463 = vmatpush.msra.mxu0 0.0
      %464 = vmatpush.msra.mxu0 0.0
      %465 = vmatpush.msra.mxu0 0.0
      %466 = vmatpush.msra.mxu0 %v445
      %467 = vmatpush.msra.mxu0 %v444
      %468 = vmatpush.msra.mxu0 %v443
      %469 = vmatpush.msra.mxu0 %v442
      %470 = vmatmul.f32.gmra.mxu0 %v452
      %v471 = vpop.f32.mrf.mxu0
      %v472 = vadd.f32 0.0, %v471
      %473 = vdwg.mxu0
      %v474 = vsel %vm416, %v435, 0
      %476 = vmatpush.msra.mxu0 0.0
      %477 = vmatpush.msra.mxu0 0.0
      %478 = vmatpush.msra.mxu0 0.0
      %479 = vmatpush.msra.mxu0 0.0
      %480 = vmatpush.msra.mxu0 0.0
      %481 = vmatpush.msra.mxu0 0.0
      %482 = vmatpush.msra.mxu0 0.0
      %483 = vmatpush.msra.mxu0 0.0
      %484 = vmatpush.msra.mxu0 0.0
      %485 = vmatpush.msra.mxu0 0.0
      %486 = vmatpush.msra.mxu0 0.0
      %487 = vmatpush.msra.mxu0 0.0
      %488 = vmatpush.msra.mxu0 %v440
      %489 = vmatpush.msra.mxu0 %v439
      %490 = vmatpush.msra.mxu0 %v438
      %491 = vmatpush.msra.mxu0 %v437
      %492 = vmatmul.f32.gmra.mxu0 %v474
      %v493 = vpop.f32.mrf.mxu0
      %v494 = vadd.f32 %v472, %v493
      %495 = vdwg.mxu0
      %s496 = scalar_lea.vmem %s3, 64
      %v497 = vld [vmem:[%s496] sm:$0xff]
      %v498 = vld [vmem:[%s496 + $0x8] sm:$0xff]
      %v499 = vld [vmem:[%s496 + $0x10] sm:$0xff]
      %v500 = vld [vmem:[%s496 + $0x18] sm:$0xff]
      %vm501 = vcmask 1045504
      %v502 = vrot.slane %v435, 2
      %v503 = vrot.slane %v436, 2
      %v504 = vsel %vm501, %v502, %v503
      %v505 = vsel %vm416, %v504, 0
      %507 = vmatpush.msra.mxu0 0.0
      %508 = vmatpush.msra.mxu0 0.0
      %509 = vmatpush.msra.mxu0 0.0
      %510 = vmatpush.msra.mxu0 0.0
      %511 = vmatpush.msra.mxu0 0.0
      %512 = vmatpush.msra.mxu0 0.0
      %513 = vmatpush.msra.mxu0 0.0
      %514 = vmatpush.msra.mxu0 0.0
      %515 = vmatpush.msra.mxu0 0.0
      %516 = vmatpush.msra.mxu0 0.0
      %517 = vmatpush.msra.mxu0 0.0
      %518 = vmatpush.msra.mxu0 0.0
      %519 = vmatpush.msra.mxu0 %v500
      %520 = vmatpush.msra.mxu0 %v499
      %521 = vmatpush.msra.mxu0 %v498
      %522 = vmatpush.msra.mxu0 %v497
      %523 = vmatmul.f32.gmra.mxu0 %v505
      %v524 = vpop.f32.mrf.mxu0
      %v525 = vadd.f32 0.0, %v524
      %526 = vdwg.mxu0
      %v527 = vadd.f32 %v494, %v525
      %v528 = vld [vmem:[%s4] sm:$0x1]
      %v530 = vperm.slane %v528, 0
      %v532 = vadd.f32 %v527, %v530
      %v533 = vmax.f32 %v532, 0.0
      %v534 = vld [vmem:[%s5] sm:$0xff]
      %v535 = vld [vmem:[%s5 + $0x8] sm:$0xff]
      %v536 = vld [vmem:[%s5 + $0x10] sm:$0xff]
      %v537 = vld [vmem:[%s5 + $0x18] sm:$0xff]
      %v538 = vld [vmem:[%s6] sm:$0x1]
      %v540 = vperm.slane %v538, 0
      %v543 = vsel %vm416, %v533, 0
      %545 = vmatpush.msra.mxu0 0.0
      %546 = vmatpush.msra.mxu0 0.0
      %547 = vmatpush.msra.mxu0 0.0
      %548 = vmatpush.msra.mxu0 0.0
      %549 = vmatpush.msra.mxu0 0.0
      %550 = vmatpush.msra.mxu0 0.0
      %551 = vmatpush.msra.mxu0 0.0
      %552 = vmatpush.msra.mxu0 0.0
      %553 = vmatpush.msra.mxu0 0.0
      %554 = vmatpush.msra.mxu0 0.0
      %555 = vmatpush.msra.mxu0 0.0
      %556 = vmatpush.msra.mxu0 0.0
      %557 = vmatpush.msra.mxu0 %v537
      %558 = vmatpush.msra.mxu0 %v536
      %559 = vmatpush.msra.mxu0 %v535
      %560 = vmatpush.msra.mxu0 %v534
      %561 = vmatmul.f32.gmra.mxu0 %v543
      %v562 = vpop.f32.mrf.mxu0
      %v563 = vadd.f32 %v540, %v562
      %564 = vdwg.mxu0
      %v565 = vadd.f32 %v563, %v414
      %566 = vst.msk [vmem:[%s413] sm:$0xff] %vm416, %v565
      %p567 = scmp.lt.s32.totalorder %s22, 1
      %s568 = scalar_select %p567, %s22, 1
      %p569 = scmp.lt.s32.totalorder %s23, 3
      %s570 = scalar_select %p569, %s23, 3
      %s571 = smul.addr %s568, 4
      %s572 = sadd.s32 %s570, %s571
      %s573 = smul.addr %s572, 8
      %s574 = scalar_lea.vmem %s7, %s573
      // Predicated region
      $region57: #{decoder_forward.22} parent=47 // pred_check
        %p575 = pneg %p230
      $region58: #{decoder_forward.22} parent=47 // pred_check_branch
        %577 = sbr.rel (%p575) target = $region60
      $region59: #{decoder_forward.22} parent=47 // pred_region
        _
      $region60: #{decoder_forward.22} parent=47 // pred_fallthru
        _
    $region48: #{decoder_forward.22} parent=5 // pred_fallthru
      _
    %p578 = scmp.le.s32.totalorder 2, %s13
    // Predicated region
    $region61: #{decoder_forward.22} parent=5 // pred_check
      %p579 = pneg %p578
    $region62: #{decoder_forward.22} parent=5 // pred_check_branch
      %581 = sbr.rel (%p579) target = $region64
    $region63: #{decoder_forward.22} parent=5 // pred_region
      %s582 = ssub.s32 %s13, 2
      // Predicated region
      $region65: #{decoder_forward.22} parent=63 // pred_check
        %p583 = pneg %p236
      $region66: #{decoder_forward.22} parent=63 // pred_check_branch
        %585 = sbr.rel (%p583) target = $region68
      $region67: #{decoder_forward.22} parent=63 // pred_region
        %p586 = scmp.lt.s32.totalorder %s24, 1
        %s587 = scalar_select %p586, %s24, 1
        %p588 = scmp.lt.s32.totalorder %s25, 3
        %s589 = scalar_select %p588, %s25, 3
        %s590 = smul.addr %s587, 4
        %s591 = sadd.s32 %s589, %s590
        %s592 = smul.addr %s591, 8
        %s593 = scalar_lea.vmem %s7, %s592
      $region68: #{decoder_forward.22} parent=63 // pred_fallthru
        _
    $region64: #{decoder_forward.22} parent=5 // pred_fallthru
      _
  $region6: #{decoder_forward.22} parent=0 // loop_footer
    %s17 = sadd.s32 1, %s13
  $region7: #{decoder_forward.22} parent=0 // loop_footer_branch
    %12 = sbr.rel target = $region3
  $region8: #{decoder_forward.22} parent=0 // loop_exit
    _

// kernel: decoder_forward.23
$region0: #{decoder_forward.23}
  #allocation0 [shape = 'u32[]', space=smem, size = 0x4, offset = 0x4, fixed_abs, tag = 'smem constant byte address 0x4 - core index']
  #allocation1 [shape = 'u32[72,128]{1,0:T(1,128)}', space=vmem, size = 0x9000, scoped, tag = 'internal scratch']
  #allocation2 [shape = 'f32[10,32]{1,0:T(8,128)}', space=vmem, size = 0x2000, scoped, tag = 'scratch operand']
  %s0 = inlined_call_operand.vmem [shape: f32[2,32,32], index: 0, kind: input, shape index: {}, may-alias: {0,1,2}]
  %s1 = inlined_call_operand.vmem [shape: f32[2,32,32], index: 1, kind: input, shape index: {}, may-alias: {0,1,2}]
  %s2 = inlined_call_operand.vmem [shape: f32[2,32,32], index: 2, kind: input, shape index: {}, may-alias: {0,1,2}]
  %s3 = inlined_call_operand.vmem [shape: f32[3,32,32], index: 3, kind: input, shape index: {}]
  %s4 = inlined_call_operand.vmem [shape: f32[1,32], index: 4, kind: input, shape index: {}]
  %s5 = inlined_call_operand.hbm [shape: f32[1,32,32], index: 5, kind: input, shape index: {}]
  %s6 = inlined_call_operand.vmem [shape: f32[1,32], index: 6, kind: input, shape index: {}]
  %s7 = inlined_call_operand.vmem [shape: f32[2,32,32], index: 7, kind: output, shape index: {}]
  %s8 = sld [smem:[#allocation0]]
  $region73: #{decoder_forward.23} parent=0
    _
  %s10 = ssub.s32 1, %s8
  %s11 = scalar_select 0, %s10, %s8
  $region1: #{decoder_forward.23} parent=0
    #allocation3 [shape = 'u8[16384]{0}', space=vmem, size = 0x4000, scoped, tag = 'input window, operand 5, single buffered']
    #allocation4 [shape = 's32[2]{0}', space=sflag, size = 0x8, scoped, tag = 'scoped memory for decoder_forward.23']
    %12 = vsyncpa [#allocation4], 0
    loop: start=0, step=1, limit=10
    $region2: #{decoder_forward.23} parent=1 // loop_pre_header
      _
    $region3: #{decoder_forward.23} parent=1 // loop_header
      %s14 = sphi 0, %s18
      %p15 = scmp.ge.s32.totalorder %s14, 10
      %s21 = sphi 0, %s33
      %s22 = sphi 0, %s29
      %s23 = sphi 0, %s21
      %s24 = sphi 0, %s22
      %s25 = sphi 0, %s23
      %s26 = sphi 0, %s24
      %s38 = sphi 0, %s40
      %s41 = sphi 0, %s38
      %s42 = sphi 0, %s41
      %s58 = sphi 0, %s42
      %s72 = sphi 0, %s74
      %s75 = sphi 0, %s72
      %s76 = sphi 0, %s75
      %s92 = sphi 0, %s76
      %s106 = sphi 0, %s108
      %s109 = sphi 0, %s106
      %s110 = sphi 0, %s109
      %s126 = sphi 0, %s110
      %s130 = sphi 0, %s130
      %s132 = sphi 0, %s130
      %s133 = sphi 0, %s132
      %s147 = sphi 0, %s133
      %s151 = sphi 0, %s151
      %s153 = sphi 0, %s151
      %s154 = sphi 0, %s153
      %s168 = sphi 0, %s154
      %s172 = sphi 0, %s172
      %s174 = sphi 0, %s172
      %s175 = sphi 0, %s174
      %s189 = sphi 0, %s175
      %s193 = sphi 0, %s193
      %s195 = sphi 0, %s193
      %s196 = sphi 0, %s195
      %s210 = sphi 0, %s196
      %s218 = sphi 0, %s220
      %s221 = sphi 0, %s218
      %s222 = sphi 0, %s221
      %s238 = sphi 0, %s222
    $region4: #{decoder_forward.23} parent=1 // loop_header_branch
      %17 = sbr.rel (%p15) target = $region8
    $region5: #{decoder_forward.23} parent=1 // loop_body
      %s19 = ssub.s32 %s14, 1
      %s20 = ssub.s32 %s14, 2
      %s27 = sadd.s32 1, %s22
      %p28 = scmp.ge.s32.totalorder %s27, 4
      %s29 = scalar_select %p28, 0, %s27
      %s30 = sadd.s32 1, %s21
      %s31 = scalar_select %p28, %s30, %s21
      %p32 = scmp.ge.s32.totalorder %s31, 2
      %s33 = scalar_select %p32, 0, %s31
      %s34 = ssub.s32 %s21, %s33
      %s35 = ssub.s32 %s22, %s29
      %s36 = sor.u32 %s34, %s35
      %p37 = scmp.eq.s32.totalorder %s36, 0
      %s39 = sadd.s32 %s38, 1
      %s40 = scalar_select %p37, %s38, %s39
      %p43 = pneg %p37
      %p44 = scmp.eq.s32.totalorder %s14, 7
      %p45 = por %p43, %p44
      %p46 = scmp.ne.s32.totalorder %s38, %s41
      %p47 = scmp.eq.s32.totalorder %s14, 0
      %p48 = por %p46, %p47
      %p49 = scmp.ne.s32.totalorder %s38, %s41
      %p50 = scmp.eq.s32.totalorder %s19, 7
      %p51 = por %p49, %p50
      %p52 = scmp.ne.s32.totalorder %s41, %s42
      %p53 = scmp.eq.s32.totalorder %s19, 0
      %p54 = por %p52, %p53
      %p55 = scmp.ne.s32.totalorder %s41, %s42
      %p56 = scmp.eq.s32.totalorder %s20, 7
      %p57 = por %p55, %p56
      %p59 = scmp.ne.s32.totalorder %s42, %s58
      %p60 = scmp.eq.s32.totalorder %s20, 0
      %p61 = por %p59, %p60
      %s62 = ssub.s32 %s22, 1
      %p63 = scmp.gt.s32.totalorder %s62, 0
      %s64 = scalar_select %p63, %s62, 0
      %s65 = ssub.s32 %s29, 1
      %p66 = scmp.gt.s32.totalorder %s65, 0
      %s67 = scalar_select %p66, %s65, 0
      %s68 = ssub.s32 %s21, %s33
      %s69 = ssub.s32 %s64, %s67
      %s70 = sor.u32 %s68, %s69
      %p71 = scmp.eq.s32.totalorder %s70, 0
      %s73 = sadd.s32 %s72, 1
      %s74 = scalar_select %p71, %s72, %s73
      %p77 = pneg %p71
      %p78 = scmp.eq.s32.totalorder %s14, 7
      %p79 = por %p77, %p78
      %p80 = scmp.ne.s32.totalorder %s72, %s75
      %p81 = scmp.eq.s32.totalorder %s14, 0
      %p82 = por %p80, %p81
      %p83 = scmp.ne.s32.totalorder %s72, %s75
      %p84 = scmp.eq.s32.totalorder %s19, 7
      %p85 = por %p83, %p84
      %p86 = scmp.ne.s32.totalorder %s75, %s76
      %p87 = scmp.eq.s32.totalorder %s19, 0
      %p88 = por %p86, %p87
      %p89 = scmp.ne.s32.totalorder %s75, %s76
      %p90 = scmp.eq.s32.totalorder %s20, 7
      %p91 = por %p89, %p90
      %p93 = scmp.ne.s32.totalorder %s76, %s92
      %p94 = scmp.eq.s32.totalorder %s20, 0
      %p95 = por %p93, %p94
      %s96 = sadd.s32 %s22, 1
      %p97 = scmp.lt.s32.totalorder %s96, 3
      %s98 = scalar_select %p97, %s96, 3
      %s99 = sadd.s32 %s29, 1
      %p100 = scmp.lt.s32.totalorder %s99, 3
      %s101 = scalar_select %p100, %s99, 3
      %s102 = ssub.s32 %s21, %s33
      %s103 = ssub.s32 %s98, %s101
      %s104 = sor.u32 %s102, %s103
      %p105 = scmp.eq.s32.totalorder %s104, 0
      %s107 = sadd.s32 %s106, 1
      %s108 = scalar_select %p105, %s106, %s107
      %p111 = pneg %p105
      %p112 = scmp.eq.s32.totalorder %s14, 7
      %p113 = por %p111, %p112
      %p114 = scmp.ne.s32.totalorder %s106, %s109
      %p115 = scmp.eq.s32.totalorder %s14, 0
      %p116 = por %p114, %p115
      %p117 = scmp.ne.s32.totalorder %s106, %s109
      %p118 = scmp.eq.s32.totalorder %s19, 7
      %p119 = por %p117, %p118
      %p120 = scmp.ne.s32.totalorder %s109, %s110
      %p121 = scmp.eq.s32.totalorder %s19, 0
      %p122 = por %p120, %p121
      %p123 = scmp.ne.s32.totalorder %s109, %s110
      %p124 = scmp.eq.s32.totalorder %s20, 7
      %p125 = por %p123, %p124
      %p127 = scmp.ne.s32.totalorder %s110, %s126
      %p128 = scmp.eq.s32.totalorder %s20, 0
      %p129 = por %p127, %p128
      %s131 = sadd.s32 %s130, 1
      %p134 = scmp.eq.s32.totalorder %s14, 7
      %p135 = scmp.ne.s32.totalorder %s130, %s132
      %p136 = scmp.eq.s32.totalorder %s14, 0
      %p137 = por %p135, %p136
      %p138 = scmp.ne.s32.totalorder %s130, %s132
      %p139 = scmp.eq.s32.totalorder %s19, 7
      %p140 = por %p138, %p139
      %p141 = scmp.ne.s32.totalorder %s132, %s133
      %p142 = scmp.eq.s32.totalorder %s19, 0
      %p143 = por %p141, %p142
      %p144 = scmp.ne.s32.totalorder %s132, %s133
      %p145 = scmp.eq.s32.totalorder %s20, 7
      %p146 = por %p144, %p145
      %p148 = scmp.ne.s32.totalorder %s133, %s147
      %p149 = scmp.eq.s32.totalorder %s20, 0
      %p150 = por %p148, %p149
      %s152 = sadd.s32 %s151, 1
      %p155 = scmp.eq.s32.totalorder %s14, 7
      %p156 = scmp.ne.s32.totalorder %s151, %s153
      %p157 = scmp.eq.s32.totalorder %s14, 0
      %p158 = por %p156, %p157
      %p159 = scmp.ne.s32.totalorder %s151, %s153
      %p160 = scmp.eq.s32.totalorder %s19, 7
      %p161 = por %p159, %p160
      %p162 = scmp.ne.s32.totalorder %s153, %s154
      %p163 = scmp.eq.s32.totalorder %s19, 0
      %p164 = por %p162, %p163
      %p165 = scmp.ne.s32.totalorder %s153, %s154
      %p166 = scmp.eq.s32.totalorder %s20, 7
      %p167 = por %p165, %p166
      %p169 = scmp.ne.s32.totalorder %s154, %s168
      %p170 = scmp.eq.s32.totalorder %s20, 0
      %p171 = por %p169, %p170
      %s173 = sadd.s32 %s172, 1
      %p176 = scmp.eq.s32.totalorder %s14, 7
      %p177 = scmp.ne.s32.totalorder %s172, %s174
      %p178 = scmp.eq.s32.totalorder %s14, 0
      %p179 = por %p177, %p178
      %p180 = scmp.ne.s32.totalorder %s172, %s174
      %p181 = scmp.eq.s32.totalorder %s19, 7
      %p182 = por %p180, %p181
      %p183 = scmp.ne.s32.totalorder %s174, %s175
      %p184 = scmp.eq.s32.totalorder %s19, 0
      %p185 = por %p183, %p184
      %p186 = scmp.ne.s32.totalorder %s174, %s175
      %p187 = scmp.eq.s32.totalorder %s20, 7
      %p188 = por %p186, %p187
      %p190 = scmp.ne.s32.totalorder %s175, %s189
      %p191 = scmp.eq.s32.totalorder %s20, 0
      %p192 = por %p190, %p191
      %s194 = sadd.s32 %s193, 1
      %p197 = scmp.eq.s32.totalorder %s14, 7
      %p198 = scmp.ne.s32.totalorder %s193, %s195
      %p199 = scmp.eq.s32.totalorder %s14, 0
      %p200 = por %p198, %p199
      %p201 = scmp.ne.s32.totalorder %s193, %s195
      %p202 = scmp.eq.s32.totalorder %s19, 7
      %p203 = por %p201, %p202
      %p204 = scmp.ne.s32.totalorder %s195, %s196
      %p205 = scmp.eq.s32.totalorder %s19, 0
      %p206 = por %p204, %p205
      %p207 = scmp.ne.s32.totalorder %s195, %s196
      %p208 = scmp.eq.s32.totalorder %s20, 7
      %p209 = por %p207, %p208
      %p211 = scmp.ne.s32.totalorder %s196, %s210
      %p212 = scmp.eq.s32.totalorder %s20, 0
      %p213 = por %p211, %p212
      %s214 = ssub.s32 %s21, %s33
      %s215 = ssub.s32 %s22, %s29
      %s216 = sor.u32 %s214, %s215
      %p217 = scmp.eq.s32.totalorder %s216, 0
      %s219 = sadd.s32 %s218, 1
      %s220 = scalar_select %p217, %s218, %s219
      %p223 = pneg %p217
      %p224 = scmp.eq.s32.totalorder %s14, 7
      %p225 = por %p223, %p224
      %p226 = scmp.ne.s32.totalorder %s218, %s221
      %p227 = scmp.eq.s32.totalorder %s14, 0
      %p228 = por %p226, %p227
      %p229 = scmp.ne.s32.totalorder %s218, %s221
      %p230 = scmp.eq.s32.totalorder %s19, 7
      %p231 = por %p229, %p230
      %p232 = scmp.ne.s32.totalorder %s221, %s222
      %p233 = scmp.eq.s32.totalorder %s19, 0
      %p234 = por %p232, %p233
      %p235 = scmp.ne.s32.totalorder %s221, %s222
      %p236 = scmp.eq.s32.totalorder %s20, 7
      %p237 = por %p235, %p236
      %p239 = scmp.ne.s32.totalorder %s222, %s238
      %p240 = scmp.eq.s32.totalorder %s20, 0
      %p241 = por %p239, %p240
      %p242 = scmp.le.s32.totalorder 1, %s14
      %p243 = scmp.lt.s32.totalorder %s14, 9
      %p244 = pnand %p242, %p243
      %p245 = pneg %p244
      // Predicated region
      $region9: #{decoder_forward.23} parent=5 // pred_check
        _
      $region10: #{decoder_forward.23} parent=5 // pred_check_branch
        %247 = sbr.rel (%p244) target = $region12
      $region11: #{decoder_forward.23} parent=5 // pred_region
        %s248 = ssub.s32 %s14, 1
        // Predicated region
        $region13: #{decoder_forward.23} parent=11 // pred_check
          %p249 = pneg %p143
        $region14: #{decoder_forward.23} parent=11 // pred_check_branch
          %251 = sbr.rel (%p249) target = $region16
        $region15: #{decoder_forward.23} parent=11 // pred_region
          _
        $region16: #{decoder_forward.23} parent=11 // pred_fallthru
          _
        // Predicated region
        $region17: #{decoder_forward.23} parent=11 // pred_check
          %p252 = pneg %p164
        $region18: #{decoder_forward.23} parent=11 // pred_check_branch
          %254 = sbr.rel (%p252) target = $region20
        $region19: #{decoder_forward.23} parent=11 // pred_region
          _
        $region20: #{decoder_forward.23} parent=11 // pred_fallthru
          _
        // Predicated region
        $region21: #{decoder_forward.23} parent=11 // pred_check
          %p255 = pneg %p185
        $region22: #{decoder_forward.23} parent=11 // pred_check_branch
          %257 = sbr.rel (%p255) target = $region24
        $region23: #{decoder_forward.23} parent=11 // pred_region
          %259 = vsyncadd [#allocation4], 0
          %s260 = sshll.u32 %s5, 4
          %s261 = int_to_ptr.hbm [resolvable:$true] %s260
          %s262 = sshll.u32 [#allocation3], 4
          %s263 = int_to_ptr.vmem [resolvable:$true] %s262
          %268 = dma.hbm_to_vmem [thread:$0]  %s261, 512, %s263, [#allocation4], 128, 128, 8
        $region24: #{decoder_forward.23} parent=11 // pred_fallthru
          _
        // Predicated region
        $region25: #{decoder_forward.23} parent=11 // pred_check
          %p269 = pneg %p206
        $region26: #{decoder_forward.23} parent=11 // pred_check_branch
          %271 = sbr.rel (%p269) target = $region28
        $region27: #{decoder_forward.23} parent=11 // pred_region
          _
        $region28: #{decoder_forward.23} parent=11 // pred_fallthru
          _
      $region12: #{decoder_forward.23} parent=5 // pred_fallthru
        _
      %p272 = scmp.lt.s32.totalorder %s14, 8
      // Predicated region
      $region29: #{decoder_forward.23} parent=5 // pred_check
        %p273 = pneg %p272
      $region30: #{decoder_forward.23} parent=5 // pred_check_branch
        %275 = sbr.rel (%p273) target = $region32
      $region31: #{decoder_forward.23} parent=5 // pred_region
        // Predicated region
        $region33: #{decoder_forward.23} parent=31 // pred_check
          %p276 = pneg %p48
        $region34: #{decoder_forward.23} parent=31 // pred_check_branch
          %278 = sbr.rel (%p276) target = $region36
        $region35: #{decoder_forward.23} parent=31 // pred_region
          %p279 = scmp.lt.s32.totalorder %s21, 1
          %s280 = scalar_select %p279, %s21, 1
          %p281 = scmp.lt.s32.totalorder %s22, 3
          %s282 = scalar_select %p281, %s22, 3
          %s283 = smul.addr %s280, 4
          %s284 = sadd.s32 %s282, %s283
          %s285 = smul.addr %s284, 8
          %s286 = scalar_lea.vmem %s0, %s285
        $region36: #{decoder_forward.23} parent=31 // pred_fallthru
          _
        // Predicated region
        $region37: #{decoder_forward.23} parent=31 // pred_check
          %p287 = pneg %p82
        $region38: #{decoder_forward.23} parent=31 // pred_check_branch
          %289 = sbr.rel (%p287) target = $region40
        $region39: #{decoder_forward.23} parent=31 // pred_region
          %s290 = ssub.s32 %s22, 1
          %p291 = scmp.gt.s32.totalorder %s290, 0
          %s292 = scalar_select %p291, %s290, 0
          %p293 = scmp.lt.s32.totalorder %s21, 1
          %s294 = scalar_select %p293, %s21, 1
          %p295 = scmp.lt.s32.totalorder %s292, 3
          %s296 = scalar_select %p295, %s292, 3
          %s297 = smul.addr %s294, 4
          %s298 = sadd.s32 %s296, %s297
          %s299 = smul.addr %s298, 8
          %s300 = scalar_lea.vmem %s1, %s299
          %s301 = ssub.s32 %s22, 1
          %p302 = scmp.gt.s32.totalorder %s301, 0
          %s303 = scalar_select %p302, %s301, 0
        $region40: #{decoder_forward.23} parent=31 // pred_fallthru
          _
        // Predicated region
        $region41: #{decoder_forward.23} parent=31 // pred_check
          %p304 = pneg %p116
        $region42: #{decoder_forward.23} parent=31 // pred_check_branch
          %306 = sbr.rel (%p304) target = $region44
        $region43: #{decoder_forward.23} parent=31 // pred_region
          %s307 = sadd.s32 %s22, 1
          %p308 = scmp.lt.s32.totalorder %s307, 3
          %s309 = scalar_select %p308, %s307, 3
          %p310 = scmp.lt.s32.totalorder %s21, 1
          %s311 = scalar_select %p310, %s21, 1
          %p312 = scmp.lt.s32.totalorder %s309, 3
          %s313 = scalar_select %p312, %s309, 3
          %s314 = smul.addr %s311, 4
          %s315 = sadd.s32 %s313, %s314
          %s316 = smul.addr %s315, 8
          %s317 = scalar_lea.vmem %s2, %s316
          %s318 = sadd.s32 %s22, 1
          %p319 = scmp.lt.s32.totalorder %s318, 3
          %s320 = scalar_select %p319, %s318, 3
        $region44: #{decoder_forward.23} parent=31 // pred_fallthru
          _
      $region32: #{decoder_forward.23} parent=5 // pred_fallthru
        _
      %p321 = scmp.le.s32.totalorder 1, %s14
      %p322 = scmp.lt.s32.totalorder %s14, 9
      %p323 = pnand %p321, %p322
      %p324 = pneg %p323
      // Predicated region
      $region45: #{decoder_forward.23} parent=5 // pred_check
        _
      $region46: #{decoder_forward.23} parent=5 // pred_check_branch
        %326 = sbr.rel (%p323) target = $region48
      $region47: #{decoder_forward.23} parent=5 // pred_region
        %s327 = ssub.s32 %s14, 1
        // Predicated region
        $region49: #{decoder_forward.23} parent=47 // pred_check
          %p328 = pneg %p185
        $region50: #{decoder_forward.23} parent=47 // pred_check_branch
          %330 = sbr.rel (%p328) target = $region52
        $region51: #{decoder_forward.23} parent=47 // pred_region
          %332 = dma.done [#allocation4], 512
        $region52: #{decoder_forward.23} parent=47 // pred_fallthru
          _
        %p333 = scmp.lt.s32.totalorder %s23, 1
        %s334 = scalar_select %p333, %s23, 1
        %p335 = scmp.lt.s32.totalorder %s24, 3
        %s336 = scalar_select %p335, %s24, 3
        %s337 = smul.addr %s334, 4
        %s338 = sadd.s32 %s336, %s337
        %s339 = smul.addr %s338, 8
        %s340 = scalar_lea.vmem %s0, %s339
        %p341 = pneg %p54
        %p342 = pneg %p51
        %s343 = ssub.s32 %s24, 1
        %p344 = scmp.gt.s32.totalorder %s343, 0
        %s345 = scalar_select %p344, %s343, 0
        %p346 = scmp.lt.s32.totalorder %s23, 1
        %s347 = scalar_select %p346, %s23, 1
        %p348 = scmp.lt.s32.totalorder %s345, 3
        %s349 = scalar_select %p348, %s345, 3
        %s350 = smul.addr %s347, 4
        %s351 = sadd.s32 %s349, %s350
        %s352 = smul.addr %s351, 8
        %s353 = scalar_lea.vmem %s1, %s352
        %p354 = pneg %p88
        %p355 = pneg %p85
        %s356 = sadd.s32 %s24, 1
        %p357 = scmp.lt.s32.totalorder %s356, 3
        %s358 = scalar_select %p357, %s356, 3
        %p359 = scmp.lt.s32.totalorder %s23, 1
        %s360 = scalar_select %p359, %s23, 1
        %p361 = scmp.lt.s32.totalorder %s358, 3
        %s362 = scalar_select %p361, %s358, 3
        %s363 = smul.addr %s360, 4
        %s364 = sadd.s32 %s362, %s363
        %s365 = smul.addr %s364, 8
        %s366 = scalar_lea.vmem %s2, %s365
        %p367 = pneg %p122
        %p368 = pneg %p119
        %p369 = pneg %p143
        %p370 = pneg %p140
        %p371 = pneg %p164
        %p372 = pneg %p161
        %p373 = pneg %p185
        %p374 = pneg %p182
        %p375 = pneg %p206
        %p376 = pneg %p203
        %p377 = pneg %p234
        %p378 = pneg %p231
        %p379 = scmp.lt.s32.totalorder %s23, 1
        %s380 = scalar_select %p379, %s23, 1
        %p381 = scmp.lt.s32.totalorder %s24, 3
        %s382 = scalar_select %p381, %s24, 3
        %s383 = smul.addr %s380, 4
        %s384 = sadd.s32 %s382, %s383
        %s385 = smul.addr %s384, 8
        %s386 = scalar_lea.vmem %s7, %s385
        %p387 = scmp.lt.s32.totalorder %s23, 1
        %s388 = scalar_select %p387, %s23, 1
        %p389 = scmp.lt.s32.totalorder %s24, 3
        %s390 = scalar_select %p389, %s24, 3
        %s391 = smul.addr %s388, 4
        %s392 = sadd.s32 %s390, %s391
        %s393 = smul.addr %s392, 8
        %s394 = scalar_lea.vmem %s0, %s393
        %s395 = ssub.s32 %s24, 1
        %p396 = scmp.gt.s32.totalorder %s395, 0
        %s397 = scalar_select %p396, %s395, 0
        %p398 = scmp.lt.s32.totalorder %s23, 1
        %s399 = scalar_select %p398, %s23, 1
        %p400 = scmp.lt.s32.totalorder %s397, 3
        %s401 = scalar_select %p400, %s397, 3
        %s402 = smul.addr %s399, 4
        %s403 = sadd.s32 %s401, %s402
        %s404 = smul.addr %s403, 8
        %s405 = scalar_lea.vmem %s1, %s404
        %s406 = ssub.s32 %s24, 1
        %p407 = scmp.gt.s32.totalorder %s406, 0
        %s408 = scalar_select %p407, %s406, 0
        %s409 = sadd.s32 %s24, 1
        %p410 = scmp.lt.s32.totalorder %s409, 3
        %s411 = scalar_select %p410, %s409, 3
        %p412 = scmp.lt.s32.totalorder %s23, 1
        %s413 = scalar_select %p412, %s23, 1
        %p414 = scmp.lt.s32.totalorder %s411, 3
        %s415 = scalar_select %p414, %s411, 3
        %s416 = smul.addr %s413, 4
        %s417 = sadd.s32 %s415, %s416
        %s418 = smul.addr %s417, 8
        %s419 = scalar_lea.vmem %s2, %s418
        %s420 = sadd.s32 %s24, 1
        %p421 = scmp.lt.s32.totalorder %s420, 3
        %s422 = scalar_select %p421, %s420, 3
        %p423 = scmp.lt.s32.totalorder %s23, 1
        %s424 = scalar_select %p423, %s23, 1
        %p425 = scmp.lt.s32.totalorder %s24, 3
        %s426 = scalar_select %p425, %s24, 3
        %s427 = smul.addr %s424, 4
        %s428 = sadd.s32 %s426, %s427
        %s429 = smul.addr %s428, 8
        %s430 = scalar_lea.vmem %s7, %s429
        %v431 = vld [vmem:[%s394] sm:$0xff]
        %v432 = vmax.f32 %v431, 0.0
        %vm433 = vcmask 261120
        %434 = vst.msk [vmem:[#allocation2 + $0x1] sm:$0xff] %vm433, %v432
        %vm435 = vcmask 253952
        %436 = vst.msk [vmem:[#allocation2] sm:$0x1] %vm435, 0.0
        %437 = vst.msk [vmem:[#allocation2 + $0x9] sm:$0x1] %vm435, 0.0
        %p438 = scmp.gt.s32.totalorder %s24, 0
        // Predicated region
        $region53: #{decoder_forward.23} parent=47 // pred_check
          %p439 = pneg %p438
        $region54: #{decoder_forward.23} parent=47 // pred_check_branch
          %441 = sbr.rel (%p439) target = $region56
        $region55: #{decoder_forward.23} parent=47 // pred_region
          %v442 = vld [vmem:[%s405 + $0x7] sm:$0x1]
          %v443 = vmax.f32 %v442, 0.0
          %444 = vst.msk [vmem:[#allocation2] sm:$0x1] %vm435, %v443
        $region56: #{decoder_forward.23} parent=47 // pred_fallthru
          _
        %p445 = scmp.lt.s32.totalorder %s24, 3
        // Predicated region
        $region57: #{decoder_forward.23} parent=47 // pred_check
          %p446 = pneg %p445
        $region58: #{decoder_forward.23} parent=47 // pred_check_branch
          %448 = sbr.rel (%p446) target = $region60
        $region59: #{decoder_forward.23} parent=47 // pred_region
          %v449 = vld [vmem:[%s419] sm:$0x1]
          %v450 = vmax.f32 %v449, 0.0
          %451 = vst.msk [vmem:[#allocation2 + $0x9] sm:$0x1] %vm435, %v450
        $region60: #{decoder_forward.23} parent=47 // pred_fallthru
          _
        %v452 = vld [vmem:[#allocation2] sm:$0xff]
        %v453 = vld [vmem:[#allocation2 + $0x8] sm:$0x3]
        %v454 = vld [vmem:[%s3] sm:$0xff]
        %v455 = vld [vmem:[%s3 + $0x8] sm:$0xff]
        %v456 = vld [vmem:[%s3 + $0x10] sm:$0xff]
        %v457 = vld [vmem:[%s3 + $0x18] sm:$0xff]
        %s458 = scalar_lea.vmem %s3, 32
        %v459 = vld [vmem:[%s458] sm:$0xff]
        %v460 = vld [vmem:[%s458 + $0x8] sm:$0xff]
        %v461 = vld [vmem:[%s458 + $0x10] sm:$0xff]
        %v462 = vld [vmem:[%s458 + $0x18] sm:$0xff]
        %vm465 = vcmask 1046528
        %v466 = vrot.slane %v452, 1
        %v467 = vrot.slane %v453, 1
        %v468 = vsel %vm465, %v466, %v467
        %v469 = vsel %vm433, %v468, 0
        %471 = vmatpush.msra.mxu0 0.0
        %472 = vmatpush.msra.mxu0 0.0
        %473 = vmatpush.msra.mxu0 0.0
        %474 = vmatpush.msra.mxu0 0.0
        %475 = vmatpush.msra.mxu0 0.0
        %476 = vmatpush.msra.mxu0 0.0
        %477 = vmatpush.msra.mxu0 0.0
        %478 = vmatpush.msra.mxu0 0.0
        %479 = vmatpush.msra.mxu0 0.0
        %480 = vmatpush.msra.mxu0 0.0
        %481 = vmatpush.msra.mxu0 0.0
        %482 = vmatpush.msra.mxu0 0.0
        %483 = vmatpush.msra.mxu0 %v462
        %484 = vmatpush.msra.mxu0 %v461
        %485 = vmatpush.msra.mxu0 %v460
        %486 = vmatpush.msra.mxu0 %v459
        %487 = vmatmul.f32.gmra.mxu0 %v469
        %v488 = vpop.f32.mrf.mxu0
        %v489 = vadd.f32 0.0, %v488
        %490 = vdwg.mxu0
        %v491 = vsel %vm433, %v452, 0
        %493 = vmatpush.msra.mxu0 0.0
        %494 = vmatpush.msra.mxu0 0.0
        %495 = vmatpush.msra.mxu0 0.0
        %496 = vmatpush.msra.mxu0 0.0
        %497 = vmatpush.msra.mxu0 0.0
        %498 = vmatpush.msra.mxu0 0.0
        %499 = vmatpush.msra.mxu0 0.0
        %500 = vmatpush.msra.mxu0 0.0
        %501 = vmatpush.msra.mxu0 0.0
        %502 = vmatpush.msra.mxu0 0.0
        %503 = vmatpush.msra.mxu0 0.0
        %504 = vmatpush.msra.mxu0 0.0
        %505 = vmatpush.msra.mxu0 %v457
        %506 = vmatpush.msra.mxu0 %v456
        %507 = vmatpush.msra.mxu0 %v455
        %508 = vmatpush.msra.mxu0 %v454
        %509 = vmatmul.f32.gmra.mxu0 %v491
        %v510 = vpop.f32.mrf.mxu0
        %v511 = vadd.f32 %v489, %v510
        %512 = vdwg.mxu0
        %s513 = scalar_lea.vmem %s3, 64
        %v514 = vld [vmem:[%s513] sm:$0xff]
        %v515 = vld [vmem:[%s513 + $0x8] sm:$0xff]
        %v516 = vld [vmem:[%s513 + $0x10] sm:$0xff]
        %v517 = vld [vmem:[%s513 + $0x18] sm:$0xff]
        %vm518 = vcmask 1045504
        %v519 = vrot.slane %v452, 2
        %v520 = vrot.slane %v453, 2
        %v521 = vsel %vm518, %v519, %v520
        %v522 = vsel %vm433, %v521, 0
        %524 = vmatpush.msra.mxu0 0.0
        %525 = vmatpush.msra.mxu0 0.0
        %526 = vmatpush.msra.mxu0 0.0
        %527 = vmatpush.msra.mxu0 0.0
        %528 = vmatpush.msra.mxu0 0.0
        %529 = vmatpush.msra.mxu0 0.0
        %530 = vmatpush.msra.mxu0 0.0
        %531 = vmatpush.msra.mxu0 0.0
        %532 = vmatpush.msra.mxu0 0.0
        %533 = vmatpush.msra.mxu0 0.0
        %534 = vmatpush.msra.mxu0 0.0
        %535 = vmatpush.msra.mxu0 0.0
        %536 = vmatpush.msra.mxu0 %v517
        %537 = vmatpush.msra.mxu0 %v516
        %538 = vmatpush.msra.mxu0 %v515
        %539 = vmatpush.msra.mxu0 %v514
        %540 = vmatmul.f32.gmra.mxu0 %v522
        %v541 = vpop.f32.mrf.mxu0
        %v542 = vadd.f32 0.0, %v541
        %543 = vdwg.mxu0
        %v544 = vadd.f32 %v511, %v542
        %v545 = vld [vmem:[%s4] sm:$0x1]
        %v547 = vperm.slane %v545, 0
        %v549 = vadd.f32 %v544, %v547
        %v550 = vmax.f32 %v549, 0.0
        %v551 = vld [vmem:[#allocation3] sm:$0xff]
        %v552 = vld [vmem:[#allocation3 + $0x8] sm:$0xff]
        %v553 = vld [vmem:[#allocation3 + $0x10] sm:$0xff]
        %v554 = vld [vmem:[#allocation3 + $0x18] sm:$0xff]
        %v555 = vld [vmem:[%s6] sm:$0x1]
        %v557 = vperm.slane %v555, 0
        %v560 = vsel %vm433, %v550, 0
        %562 = vmatpush.msra.mxu0 0.0
        %563 = vmatpush.msra.mxu0 0.0
        %564 = vmatpush.msra.mxu0 0.0
        %565 = vmatpush.msra.mxu0 0.0
        %566 = vmatpush.msra.mxu0 0.0
        %567 = vmatpush.msra.mxu0 0.0
        %568 = vmatpush.msra.mxu0 0.0
        %569 = vmatpush.msra.mxu0 0.0
        %570 = vmatpush.msra.mxu0 0.0
        %571 = vmatpush.msra.mxu0 0.0
        %572 = vmatpush.msra.mxu0 0.0
        %573 = vmatpush.msra.mxu0 0.0
        %574 = vmatpush.msra.mxu0 %v554
        %575 = vmatpush.msra.mxu0 %v553
        %576 = vmatpush.msra.mxu0 %v552
        %577 = vmatpush.msra.mxu0 %v551
        %578 = vmatmul.f32.gmra.mxu0 %v560
        %v579 = vpop.f32.mrf.mxu0
        %v580 = vadd.f32 %v557, %v579
        %581 = vdwg.mxu0
        %v582 = vadd.f32 %v580, %v431
        %583 = vst.msk [vmem:[%s430] sm:$0xff] %vm433, %v582
        %p584 = scmp.lt.s32.totalorder %s23, 1
        %s585 = scalar_select %p584, %s23, 1
        %p586 = scmp.lt.s32.totalorder %s24, 3
        %s587 = scalar_select %p586, %s24, 3
        %s588 = smul.addr %s585, 4
        %s589 = sadd.s32 %s587, %s588
        %s590 = smul.addr %s589, 8
        %s591 = scalar_lea.vmem %s7, %s590
        // Predicated region
        $region61: #{decoder_forward.23} parent=47 // pred_check
          %p592 = pneg %p231
        $region62: #{decoder_forward.23} parent=47 // pred_check_branch
          %594 = sbr.rel (%p592) target = $region64
        $region63: #{decoder_forward.23} parent=47 // pred_region
          _
        $region64: #{decoder_forward.23} parent=47 // pred_fallthru
          _
      $region48: #{decoder_forward.23} parent=5 // pred_fallthru
        _
      %p595 = scmp.le.s32.totalorder 2, %s14
      // Predicated region
      $region65: #{decoder_forward.23} parent=5 // pred_check
        %p596 = pneg %p595
      $region66: #{decoder_forward.23} parent=5 // pred_check_branch
        %598 = sbr.rel (%p596) target = $region68
      $region67: #{decoder_forward.23} parent=5 // pred_region
        %s599 = ssub.s32 %s14, 2
        // Predicated region
        $region69: #{decoder_forward.23} parent=67 // pred_check
          %p600 = pneg %p237
        $region70: #{decoder_forward.23} parent=67 // pred_check_branch
          %602 = sbr.rel (%p600) target = $region72
        $region71: #{decoder_forward.23} parent=67 // pred_region
          %p603 = scmp.lt.s32.totalorder %s25, 1
          %s604 = scalar_select %p603, %s25, 1
          %p605 = scmp.lt.s32.totalorder %s26, 3
          %s606 = scalar_select %p605, %s26, 3
          %s607 = smul.addr %s604, 4
          %s608 = sadd.s32 %s606, %s607
          %s609 = smul.addr %s608, 8
          %s610 = scalar_lea.vmem %s7, %s609
        $region72: #{decoder_forward.23} parent=67 // pred_fallthru
          _
      $region68: #{decoder_forward.23} parent=5 // pred_fallthru
        _
    $region6: #{decoder_forward.23} parent=1 // loop_footer
      %s18 = sadd.s32 1, %s14
    $region7: #{decoder_forward.23} parent=1 // loop_footer_branch
      %13 = sbr.rel target = $region3
    $region8: #{decoder_forward.23} parent=1 // loop_exit
      _
    %611 = vsyncpa [#allocation4], 1
    %s612 = scalar_lea.sflag [#allocation4], 1
    %613 = vsyncpa %s612, 1

// kernel: decoder_forward.24
$region0: #{decoder_forward.24}
  #allocation0 [shape = 'u32[]', space=smem, size = 0x4, offset = 0x4, fixed_abs, tag = 'smem constant byte address 0x4 - core index']
  #allocation1 [shape = 'u32[72,128]{1,0:T(1,128)}', space=vmem, size = 0x9000, scoped, tag = 'internal scratch']
  #allocation2 [shape = 'f32[10,32]{1,0:T(8,128)}', space=vmem, size = 0x2000, scoped, tag = 'scratch operand']
  %s0 = inlined_call_operand.vmem [shape: f32[2,32,32], index: 0, kind: input, shape index: {}, may-alias: {0,1,2}]
  %s1 = inlined_call_operand.vmem [shape: f32[2,32,32], index: 1, kind: input, shape index: {}, may-alias: {0,1,2}]
  %s2 = inlined_call_operand.vmem [shape: f32[2,32,32], index: 2, kind: input, shape index: {}, may-alias: {0,1,2}]
  %s3 = inlined_call_operand.hbm [shape: f32[3,32,32], index: 3, kind: input, shape index: {}]
  %s4 = inlined_call_operand.vmem [shape: f32[1,32], index: 4, kind: input, shape index: {}]
  %s5 = inlined_call_operand.hbm [shape: f32[1,32,32], index: 5, kind: input, shape index: {}]
  %s6 = inlined_call_operand.vmem [shape: f32[1,32], index: 6, kind: input, shape index: {}]
  %s7 = inlined_call_operand.vmem [shape: f32[2,32,32], index: 7, kind: output, shape index: {}]
  %s8 = sld [smem:[#allocation0]]
  $region77: #{decoder_forward.24} parent=0
    _
  %s10 = ssub.s32 1, %s8
  %s11 = scalar_select 0, %s10, %s8
  $region1: #{decoder_forward.24} parent=0
    #allocation3 [shape = 'u8[49152]{0}', space=vmem, size = 0xc000, scoped, tag = 'input window, operand 3, single buffered']
    #allocation4 [shape = 's32[2]{0}', space=sflag, size = 0x8, scoped, tag = 'scoped memory for decoder_forward.24']
    #allocation5 [shape = 'u8[16384]{0}', space=vmem, size = 0x4000, scoped, tag = 'input window, operand 5, single buffered']
    #allocation6 [shape = 's32[1]{0}', space=sflag, size = 0x4, scoped, tag = 'scoped memory for decoder_forward.24']
    %12 = vsyncpa [#allocation4], 0
    %13 = vsyncpa [#allocation6], 0
    loop: start=0, step=1, limit=10
    $region2: #{decoder_forward.24} parent=1 // loop_pre_header
      _
    $region3: #{decoder_forward.24} parent=1 // loop_header
      %s15 = sphi 0, %s19
      %p16 = scmp.ge.s32.totalorder %s15, 10
      %s22 = sphi 0, %s34
      %s23 = sphi 0, %s30
      %s24 = sphi 0, %s22
      %s25 = sphi 0, %s23
      %s26 = sphi 0, %s24
      %s27 = sphi 0, %s25
      %s39 = sphi 0, %s41
      %s42 = sphi 0, %s39
      %s43 = sphi 0, %s42
      %s59 = sphi 0, %s43
      %s73 = sphi 0, %s75
      %s76 = sphi 0, %s73
      %s77 = sphi 0, %s76
      %s93 = sphi 0, %s77
      %s107 = sphi 0, %s109
      %s110 = sphi 0, %s107
      %s111 = sphi 0, %s110
      %s127 = sphi 0, %s111
      %s131 = sphi 0, %s131
      %s133 = sphi 0, %s131
      %s134 = sphi 0, %s133
      %s148 = sphi 0, %s134
      %s152 = sphi 0, %s152
      %s154 = sphi 0, %s152
      %s155 = sphi 0, %s154
      %s169 = sphi 0, %s155
      %s173 = sphi 0, %s173
      %s175 = sphi 0, %s173
      %s176 = sphi 0, %s175
      %s190 = sphi 0, %s176
      %s194 = sphi 0, %s194
      %s196 = sphi 0, %s194
      %s197 = sphi 0, %s196
      %s211 = sphi 0, %s197
      %s219 = sphi 0, %s221
      %s222 = sphi 0, %s219
      %s223 = sphi 0, %s222
      %s239 = sphi 0, %s223
    $region4: #{decoder_forward.24} parent=1 // loop_header_branch
      %18 = sbr.rel (%p16) target = $region8
    $region5: #{decoder_forward.24} parent=1 // loop_body
      %s20 = ssub.s32 %s15, 1
      %s21 = ssub.s32 %s15, 2
      %s28 = sadd.s32 1, %s23
      %p29 = scmp.ge.s32.totalorder %s28, 4
      %s30 = scalar_select %p29, 0, %s28
      %s31 = sadd.s32 1, %s22
      %s32 = scalar_select %p29, %s31, %s22
      %p33 = scmp.ge.s32.totalorder %s32, 2
      %s34 = scalar_select %p33, 0, %s32
      %s35 = ssub.s32 %s22, %s34
      %s36 = ssub.s32 %s23, %s30
      %s37 = sor.u32 %s35, %s36
      %p38 = scmp.eq.s32.totalorder %s37, 0
      %s40 = sadd.s32 %s39, 1
      %s41 = scalar_select %p38, %s39, %s40
      %p44 = pneg %p38
      %p45 = scmp.eq.s32.totalorder %s15, 7
      %p46 = por %p44, %p45
      %p47 = scmp.ne.s32.totalorder %s39, %s42
      %p48 = scmp.eq.s32.totalorder %s15, 0
      %p49 = por %p47, %p48
      %p50 = scmp.ne.s32.totalorder %s39, %s42
      %p51 = scmp.eq.s32.totalorder %s20, 7
      %p52 = por %p50, %p51
      %p53 = scmp.ne.s32.totalorder %s42, %s43
      %p54 = scmp.eq.s32.totalorder %s20, 0
      %p55 = por %p53, %p54
      %p56 = scmp.ne.s32.totalorder %s42, %s43
      %p57 = scmp.eq.s32.totalorder %s21, 7
      %p58 = por %p56, %p57
      %p60 = scmp.ne.s32.totalorder %s43, %s59
      %p61 = scmp.eq.s32.totalorder %s21, 0
      %p62 = por %p60, %p61
      %s63 = ssub.s32 %s23, 1
      %p64 = scmp.gt.s32.totalorder %s63, 0
      %s65 = scalar_select %p64, %s63, 0
      %s66 = ssub.s32 %s30, 1
      %p67 = scmp.gt.s32.totalorder %s66, 0
      %s68 = scalar_select %p67, %s66, 0
      %s69 = ssub.s32 %s22, %s34
      %s70 = ssub.s32 %s65, %s68
      %s71 = sor.u32 %s69, %s70
      %p72 = scmp.eq.s32.totalorder %s71, 0
      %s74 = sadd.s32 %s73, 1
      %s75 = scalar_select %p72, %s73, %s74
      %p78 = pneg %p72
      %p79 = scmp.eq.s32.totalorder %s15, 7
      %p80 = por %p78, %p79
      %p81 = scmp.ne.s32.totalorder %s73, %s76
      %p82 = scmp.eq.s32.totalorder %s15, 0
      %p83 = por %p81, %p82
      %p84 = scmp.ne.s32.totalorder %s73, %s76
      %p85 = scmp.eq.s32.totalorder %s20, 7
      %p86 = por %p84, %p85
      %p87 = scmp.ne.s32.totalorder %s76, %s77
      %p88 = scmp.eq.s32.totalorder %s20, 0
      %p89 = por %p87, %p88
      %p90 = scmp.ne.s32.totalorder %s76, %s77
      %p91 = scmp.eq.s32.totalorder %s21, 7
      %p92 = por %p90, %p91
      %p94 = scmp.ne.s32.totalorder %s77, %s93
      %p95 = scmp.eq.s32.totalorder %s21, 0
      %p96 = por %p94, %p95
      %s97 = sadd.s32 %s23, 1
      %p98 = scmp.lt.s32.totalorder %s97, 3
      %s99 = scalar_select %p98, %s97, 3
      %s100 = sadd.s32 %s30, 1
      %p101 = scmp.lt.s32.totalorder %s100, 3
      %s102 = scalar_select %p101, %s100, 3
      %s103 = ssub.s32 %s22, %s34
      %s104 = ssub.s32 %s99, %s102
      %s105 = sor.u32 %s103, %s104
      %p106 = scmp.eq.s32.totalorder %s105, 0
      %s108 = sadd.s32 %s107, 1
      %s109 = scalar_select %p106, %s107, %s108
      %p112 = pneg %p106
      %p113 = scmp.eq.s32.totalorder %s15, 7
      %p114 = por %p112, %p113
      %p115 = scmp.ne.s32.totalorder %s107, %s110
      %p116 = scmp.eq.s32.totalorder %s15, 0
      %p117 = por %p115, %p116
      %p118 = scmp.ne.s32.totalorder %s107, %s110
      %p119 = scmp.eq.s32.totalorder %s20, 7
      %p120 = por %p118, %p119
      %p121 = scmp.ne.s32.totalorder %s110, %s111
      %p122 = scmp.eq.s32.totalorder %s20, 0
      %p123 = por %p121, %p122
      %p124 = scmp.ne.s32.totalorder %s110, %s111
      %p125 = scmp.eq.s32.totalorder %s21, 7
      %p126 = por %p124, %p125
      %p128 = scmp.ne.s32.totalorder %s111, %s127
      %p129 = scmp.eq.s32.totalorder %s21, 0
      %p130 = por %p128, %p129
      %s132 = sadd.s32 %s131, 1
      %p135 = scmp.eq.s32.totalorder %s15, 7
      %p136 = scmp.ne.s32.totalorder %s131, %s133
      %p137 = scmp.eq.s32.totalorder %s15, 0
      %p138 = por %p136, %p137
      %p139 = scmp.ne.s32.totalorder %s131, %s133
      %p140 = scmp.eq.s32.totalorder %s20, 7
      %p141 = por %p139, %p140
      %p142 = scmp.ne.s32.totalorder %s133, %s134
      %p143 = scmp.eq.s32.totalorder %s20, 0
      %p144 = por %p142, %p143
      %p145 = scmp.ne.s32.totalorder %s133, %s134
      %p146 = scmp.eq.s32.totalorder %s21, 7
      %p147 = por %p145, %p146
      %p149 = scmp.ne.s32.totalorder %s134, %s148
      %p150 = scmp.eq.s32.totalorder %s21, 0
      %p151 = por %p149, %p150
      %s153 = sadd.s32 %s152, 1
      %p156 = scmp.eq.s32.totalorder %s15, 7
      %p157 = scmp.ne.s32.totalorder %s152, %s154
      %p158 = scmp.eq.s32.totalorder %s15, 0
      %p159 = por %p157, %p158
      %p160 = scmp.ne.s32.totalorder %s152, %s154
      %p161 = scmp.eq.s32.totalorder %s20, 7
      %p162 = por %p160, %p161
      %p163 = scmp.ne.s32.totalorder %s154, %s155
      %p164 = scmp.eq.s32.totalorder %s20, 0
      %p165 = por %p163, %p164
      %p166 = scmp.ne.s32.totalorder %s154, %s155
      %p167 = scmp.eq.s32.totalorder %s21, 7
      %p168 = por %p166, %p167
      %p170 = scmp.ne.s32.totalorder %s155, %s169
      %p171 = scmp.eq.s32.totalorder %s21, 0
      %p172 = por %p170, %p171
      %s174 = sadd.s32 %s173, 1
      %p177 = scmp.eq.s32.totalorder %s15, 7
      %p178 = scmp.ne.s32.totalorder %s173, %s175
      %p179 = scmp.eq.s32.totalorder %s15, 0
      %p180 = por %p178, %p179
      %p181 = scmp.ne.s32.totalorder %s173, %s175
      %p182 = scmp.eq.s32.totalorder %s20, 7
      %p183 = por %p181, %p182
      %p184 = scmp.ne.s32.totalorder %s175, %s176
      %p185 = scmp.eq.s32.totalorder %s20, 0
      %p186 = por %p184, %p185
      %p187 = scmp.ne.s32.totalorder %s175, %s176
      %p188 = scmp.eq.s32.totalorder %s21, 7
      %p189 = por %p187, %p188
      %p191 = scmp.ne.s32.totalorder %s176, %s190
      %p192 = scmp.eq.s32.totalorder %s21, 0
      %p193 = por %p191, %p192
      %s195 = sadd.s32 %s194, 1
      %p198 = scmp.eq.s32.totalorder %s15, 7
      %p199 = scmp.ne.s32.totalorder %s194, %s196
      %p200 = scmp.eq.s32.totalorder %s15, 0
      %p201 = por %p199, %p200
      %p202 = scmp.ne.s32.totalorder %s194, %s196
      %p203 = scmp.eq.s32.totalorder %s20, 7
      %p204 = por %p202, %p203
      %p205 = scmp.ne.s32.totalorder %s196, %s197
      %p206 = scmp.eq.s32.totalorder %s20, 0
      %p207 = por %p205, %p206
      %p208 = scmp.ne.s32.totalorder %s196, %s197
      %p209 = scmp.eq.s32.totalorder %s21, 7
      %p210 = por %p208, %p209
      %p212 = scmp.ne.s32.totalorder %s197, %s211
      %p213 = scmp.eq.s32.totalorder %s21, 0
      %p214 = por %p212, %p213
      %s215 = ssub.s32 %s22, %s34
      %s216 = ssub.s32 %s23, %s30
      %s217 = sor.u32 %s215, %s216
      %p218 = scmp.eq.s32.totalorder %s217, 0
      %s220 = sadd.s32 %s219, 1
      %s221 = scalar_select %p218, %s219, %s220
      %p224 = pneg %p218
      %p225 = scmp.eq.s32.totalorder %s15, 7
      %p226 = por %p224, %p225
      %p227 = scmp.ne.s32.totalorder %s219, %s222
      %p228 = scmp.eq.s32.totalorder %s15, 0
      %p229 = por %p227, %p228
      %p230 = scmp.ne.s32.totalorder %s219, %s222
      %p231 = scmp.eq.s32.totalorder %s20, 7
      %p232 = por %p230, %p231
      %p233 = scmp.ne.s32.totalorder %s222, %s223
      %p234 = scmp.eq.s32.totalorder %s20, 0
      %p235 = por %p233, %p234
      %p236 = scmp.ne.s32.totalorder %s222, %s223
      %p237 = scmp.eq.s32.totalorder %s21, 7
      %p238 = por %p236, %p237
      %p240 = scmp.ne.s32.totalorder %s223, %s239
      %p241 = scmp.eq.s32.totalorder %s21, 0
      %p242 = por %p240, %p241
      %p243 = scmp.le.s32.totalorder 1, %s15
      %p244 = scmp.lt.s32.totalorder %s15, 9
      %p245 = pnand %p243, %p244
      %p246 = pneg %p245
      // Predicated region
      $region9: #{decoder_forward.24} parent=5 // pred_check
        _
      $region10: #{decoder_forward.24} parent=5 // pred_check_branch
        %248 = sbr.rel (%p245) target = $region12
      $region11: #{decoder_forward.24} parent=5 // pred_region
        %s249 = ssub.s32 %s15, 1
        // Predicated region
        $region13: #{decoder_forward.24} parent=11 // pred_check
          %p250 = pneg %p144
        $region14: #{decoder_forward.24} parent=11 // pred_check_branch
          %252 = sbr.rel (%p250) target = $region16
        $region15: #{decoder_forward.24} parent=11 // pred_region
          %254 = vsyncadd [#allocation4], 0
          %s255 = sshll.u32 %s3, 4
          %s256 = int_to_ptr.hbm [resolvable:$true] %s255
          %s257 = sshll.u32 [#allocation3], 4
          %s258 = int_to_ptr.vmem [resolvable:$true] %s257
          %263 = dma.hbm_to_vmem [thread:$0]  %s256, 1536, %s258, [#allocation4], 128, 128, 8
        $region16: #{decoder_forward.24} parent=11 // pred_fallthru
          _
        // Predicated region
        $region17: #{decoder_forward.24} parent=11 // pred_check
          %p264 = pneg %p165
        $region18: #{decoder_forward.24} parent=11 // pred_check_branch
          %266 = sbr.rel (%p264) target = $region20
        $region19: #{decoder_forward.24} parent=11 // pred_region
          _
        $region20: #{decoder_forward.24} parent=11 // pred_fallthru
          _
        // Predicated region
        $region21: #{decoder_forward.24} parent=11 // pred_check
          %p267 = pneg %p186
        $region22: #{decoder_forward.24} parent=11 // pred_check_branch
          %269 = sbr.rel (%p267) target = $region24
        $region23: #{decoder_forward.24} parent=11 // pred_region
          %271 = vsyncadd [#allocation6], 0
          %s272 = sshll.u32 %s5, 4
          %s273 = int_to_ptr.hbm [resolvable:$true] %s272
          %s274 = sshll.u32 [#allocation5], 4
          %s275 = int_to_ptr.vmem [resolvable:$true] %s274
          %280 = dma.hbm_to_vmem [thread:$0]  %s273, 512, %s275, [#allocation6], 128, 128, 8
        $region24: #{decoder_forward.24} parent=11 // pred_fallthru
          _
        // Predicated region
        $region25: #{decoder_forward.24} parent=11 // pred_check
          %p281 = pneg %p207
        $region26: #{decoder_forward.24} parent=11 // pred_check_branch
          %283 = sbr.rel (%p281) target = $region28
        $region27: #{decoder_forward.24} parent=11 // pred_region
          _
        $region28: #{decoder_forward.24} parent=11 // pred_fallthru
          _
      $region12: #{decoder_forward.24} parent=5 // pred_fallthru
        _
      %p284 = scmp.lt.s32.totalorder %s15, 8
      // Predicated region
      $region29: #{decoder_forward.24} parent=5 // pred_check
        %p285 = pneg %p284
      $region30: #{decoder_forward.24} parent=5 // pred_check_branch
        %287 = sbr.rel (%p285) target = $region32
      $region31: #{decoder_forward.24} parent=5 // pred_region
        // Predicated region
        $region33: #{decoder_forward.24} parent=31 // pred_check
          %p288 = pneg %p49
        $region34: #{decoder_forward.24} parent=31 // pred_check_branch
          %290 = sbr.rel (%p288) target = $region36
        $region35: #{decoder_forward.24} parent=31 // pred_region
          %p291 = scmp.lt.s32.totalorder %s22, 1
          %s292 = scalar_select %p291, %s22, 1
          %p293 = scmp.lt.s32.totalorder %s23, 3
          %s294 = scalar_select %p293, %s23, 3
          %s295 = smul.addr %s292, 4
          %s296 = sadd.s32 %s294, %s295
          %s297 = smul.addr %s296, 8
          %s298 = scalar_lea.vmem %s0, %s297
        $region36: #{decoder_forward.24} parent=31 // pred_fallthru
          _
        // Predicated region
        $region37: #{decoder_forward.24} parent=31 // pred_check
          %p299 = pneg %p83
        $region38: #{decoder_forward.24} parent=31 // pred_check_branch
          %301 = sbr.rel (%p299) target = $region40
        $region39: #{decoder_forward.24} parent=31 // pred_region
          %s302 = ssub.s32 %s23, 1
          %p303 = scmp.gt.s32.totalorder %s302, 0
          %s304 = scalar_select %p303, %s302, 0
          %p305 = scmp.lt.s32.totalorder %s22, 1
          %s306 = scalar_select %p305, %s22, 1
          %p307 = scmp.lt.s32.totalorder %s304, 3
          %s308 = scalar_select %p307, %s304, 3
          %s309 = smul.addr %s306, 4
          %s310 = sadd.s32 %s308, %s309
          %s311 = smul.addr %s310, 8
          %s312 = scalar_lea.vmem %s1, %s311
          %s313 = ssub.s32 %s23, 1
          %p314 = scmp.gt.s32.totalorder %s313, 0
          %s315 = scalar_select %p314, %s313, 0
        $region40: #{decoder_forward.24} parent=31 // pred_fallthru
          _
        // Predicated region
        $region41: #{decoder_forward.24} parent=31 // pred_check
          %p316 = pneg %p117
        $region42: #{decoder_forward.24} parent=31 // pred_check_branch
          %318 = sbr.rel (%p316) target = $region44
        $region43: #{decoder_forward.24} parent=31 // pred_region
          %s319 = sadd.s32 %s23, 1
          %p320 = scmp.lt.s32.totalorder %s319, 3
          %s321 = scalar_select %p320, %s319, 3
          %p322 = scmp.lt.s32.totalorder %s22, 1
          %s323 = scalar_select %p322, %s22, 1
          %p324 = scmp.lt.s32.totalorder %s321, 3
          %s325 = scalar_select %p324, %s321, 3
          %s326 = smul.addr %s323, 4
          %s327 = sadd.s32 %s325, %s326
          %s328 = smul.addr %s327, 8
          %s329 = scalar_lea.vmem %s2, %s328
          %s330 = sadd.s32 %s23, 1
          %p331 = scmp.lt.s32.totalorder %s330, 3
          %s332 = scalar_select %p331, %s330, 3
        $region44: #{decoder_forward.24} parent=31 // pred_fallthru
          _
      $region32: #{decoder_forward.24} parent=5 // pred_fallthru
        _
      %p333 = scmp.le.s32.totalorder 1, %s15
      %p334 = scmp.lt.s32.totalorder %s15, 9
      %p335 = pnand %p333, %p334
      %p336 = pneg %p335
      // Predicated region
      $region45: #{decoder_forward.24} parent=5 // pred_check
        _
      $region46: #{decoder_forward.24} parent=5 // pred_check_branch
        %338 = sbr.rel (%p335) target = $region48
      $region47: #{decoder_forward.24} parent=5 // pred_region
        %s339 = ssub.s32 %s15, 1
        // Predicated region
        $region49: #{decoder_forward.24} parent=47 // pred_check
          %p340 = pneg %p144
        $region50: #{decoder_forward.24} parent=47 // pred_check_branch
          %342 = sbr.rel (%p340) target = $region52
        $region51: #{decoder_forward.24} parent=47 // pred_region
          %344 = dma.done [#allocation4], 1536
        $region52: #{decoder_forward.24} parent=47 // pred_fallthru
          _
        // Predicated region
        $region53: #{decoder_forward.24} parent=47 // pred_check
          %p345 = pneg %p186
        $region54: #{decoder_forward.24} parent=47 // pred_check_branch
          %347 = sbr.rel (%p345) target = $region56
        $region55: #{decoder_forward.24} parent=47 // pred_region
          %349 = dma.done [#allocation6], 512
        $region56: #{decoder_forward.24} parent=47 // pred_fallthru
          _
        %p350 = scmp.lt.s32.totalorder %s24, 1
        %s351 = scalar_select %p350, %s24, 1
        %p352 = scmp.lt.s32.totalorder %s25, 3
        %s353 = scalar_select %p352, %s25, 3
        %s354 = smul.addr %s351, 4
        %s355 = sadd.s32 %s353, %s354
        %s356 = smul.addr %s355, 8
        %s357 = scalar_lea.vmem %s0, %s356
        %p358 = pneg %p55
        %p359 = pneg %p52
        %s360 = ssub.s32 %s25, 1
        %p361 = scmp.gt.s32.totalorder %s360, 0
        %s362 = scalar_select %p361, %s360, 0
        %p363 = scmp.lt.s32.totalorder %s24, 1
        %s364 = scalar_select %p363, %s24, 1
        %p365 = scmp.lt.s32.totalorder %s362, 3
        %s366 = scalar_select %p365, %s362, 3
        %s367 = smul.addr %s364, 4
        %s368 = sadd.s32 %s366, %s367
        %s369 = smul.addr %s368, 8
        %s370 = scalar_lea.vmem %s1, %s369
        %p371 = pneg %p89
        %p372 = pneg %p86
        %s373 = sadd.s32 %s25, 1
        %p374 = scmp.lt.s32.totalorder %s373, 3
        %s375 = scalar_select %p374, %s373, 3
        %p376 = scmp.lt.s32.totalorder %s24, 1
        %s377 = scalar_select %p376, %s24, 1
        %p378 = scmp.lt.s32.totalorder %s375, 3
        %s379 = scalar_select %p378, %s375, 3
        %s380 = smul.addr %s377, 4
        %s381 = sadd.s32 %s379, %s380
        %s382 = smul.addr %s381, 8
        %s383 = scalar_lea.vmem %s2, %s382
        %p384 = pneg %p123
        %p385 = pneg %p120
        %p386 = pneg %p144
        %p387 = pneg %p141
        %p388 = pneg %p165
        %p389 = pneg %p162
        %p390 = pneg %p186
        %p391 = pneg %p183
        %p392 = pneg %p207
        %p393 = pneg %p204
        %p394 = pneg %p235
        %p395 = pneg %p232
        %p396 = scmp.lt.s32.totalorder %s24, 1
        %s397 = scalar_select %p396, %s24, 1
        %p398 = scmp.lt.s32.totalorder %s25, 3
        %s399 = scalar_select %p398, %s25, 3
        %s400 = smul.addr %s397, 4
        %s401 = sadd.s32 %s399, %s400
        %s402 = smul.addr %s401, 8
        %s403 = scalar_lea.vmem %s7, %s402
        %p404 = scmp.lt.s32.totalorder %s24, 1
        %s405 = scalar_select %p404, %s24, 1
        %p406 = scmp.lt.s32.totalorder %s25, 3
        %s407 = scalar_select %p406, %s25, 3
        %s408 = smul.addr %s405, 4
        %s409 = sadd.s32 %s407, %s408
        %s410 = smul.addr %s409, 8
        %s411 = scalar_lea.vmem %s0, %s410
        %s412 = ssub.s32 %s25, 1
        %p413 = scmp.gt.s32.totalorder %s412, 0
        %s414 = scalar_select %p413, %s412, 0
        %p415 = scmp.lt.s32.totalorder %s24, 1
        %s416 = scalar_select %p415, %s24, 1
        %p417 = scmp.lt.s32.totalorder %s414, 3
        %s418 = scalar_select %p417, %s414, 3
        %s419 = smul.addr %s416, 4
        %s420 = sadd.s32 %s418, %s419
        %s421 = smul.addr %s420, 8
        %s422 = scalar_lea.vmem %s1, %s421
        %s423 = ssub.s32 %s25, 1
        %p424 = scmp.gt.s32.totalorder %s423, 0
        %s425 = scalar_select %p424, %s423, 0
        %s426 = sadd.s32 %s25, 1
        %p427 = scmp.lt.s32.totalorder %s426, 3
        %s428 = scalar_select %p427, %s426, 3
        %p429 = scmp.lt.s32.totalorder %s24, 1
        %s430 = scalar_select %p429, %s24, 1
        %p431 = scmp.lt.s32.totalorder %s428, 3
        %s432 = scalar_select %p431, %s428, 3
        %s433 = smul.addr %s430, 4
        %s434 = sadd.s32 %s432, %s433
        %s435 = smul.addr %s434, 8
        %s436 = scalar_lea.vmem %s2, %s435
        %s437 = sadd.s32 %s25, 1
        %p438 = scmp.lt.s32.totalorder %s437, 3
        %s439 = scalar_select %p438, %s437, 3
        %p440 = scmp.lt.s32.totalorder %s24, 1
        %s441 = scalar_select %p440, %s24, 1
        %p442 = scmp.lt.s32.totalorder %s25, 3
        %s443 = scalar_select %p442, %s25, 3
        %s444 = smul.addr %s441, 4
        %s445 = sadd.s32 %s443, %s444
        %s446 = smul.addr %s445, 8
        %s447 = scalar_lea.vmem %s7, %s446
        %v448 = vld [vmem:[%s411] sm:$0xff]
        %v449 = vmax.f32 %v448, 0.0
        %vm450 = vcmask 261120
        %451 = vst.msk [vmem:[#allocation2 + $0x1] sm:$0xff] %vm450, %v449
        %vm452 = vcmask 253952
        %453 = vst.msk [vmem:[#allocation2] sm:$0x1] %vm452, 0.0
        %454 = vst.msk [vmem:[#allocation2 + $0x9] sm:$0x1] %vm452, 0.0
        %p455 = scmp.gt.s32.totalorder %s25, 0
        // Predicated region
        $region57: #{decoder_forward.24} parent=47 // pred_check
          %p456 = pneg %p455
        $region58: #{decoder_forward.24} parent=47 // pred_check_branch
          %458 = sbr.rel (%p456) target = $region60
        $region59: #{decoder_forward.24} parent=47 // pred_region
          %v459 = vld [vmem:[%s422 + $0x7] sm:$0x1]
          %v460 = vmax.f32 %v459, 0.0
          %461 = vst.msk [vmem:[#allocation2] sm:$0x1] %vm452, %v460
        $region60: #{decoder_forward.24} parent=47 // pred_fallthru
          _
        %p462 = scmp.lt.s32.totalorder %s25, 3
        // Predicated region
        $region61: #{decoder_forward.24} parent=47 // pred_check
          %p463 = pneg %p462
        $region62: #{decoder_forward.24} parent=47 // pred_check_branch
          %465 = sbr.rel (%p463) target = $region64
        $region63: #{decoder_forward.24} parent=47 // pred_region
          %v466 = vld [vmem:[%s436] sm:$0x1]
          %v467 = vmax.f32 %v466, 0.0
          %468 = vst.msk [vmem:[#allocation2 + $0x9] sm:$0x1] %vm452, %v467
        $region64: #{decoder_forward.24} parent=47 // pred_fallthru
          _
        %v469 = vld [vmem:[#allocation2] sm:$0xff]
        %v470 = vld [vmem:[#allocation2 + $0x8] sm:$0x3]
        %v471 = vld [vmem:[#allocation3] sm:$0xff]
        %v472 = vld [vmem:[#allocation3 + $0x8] sm:$0xff]
        %v473 = vld [vmem:[#allocation3 + $0x10] sm:$0xff]
        %v474 = vld [vmem:[#allocation3 + $0x18] sm:$0xff]
        %s475 = scalar_lea.vmem [#allocation3], 32
        %v476 = vld [vmem:[%s475] sm:$0xff]
        %v477 = vld [vmem:[%s475 + $0x8] sm:$0xff]
        %v478 = vld [vmem:[%s475 + $0x10] sm:$0xff]
        %v479 = vld [vmem:[%s475 + $0x18] sm:$0xff]
        %vm482 = vcmask 1046528
        %v483 = vrot.slane %v469, 1
        %v484 = vrot.slane %v470, 1
        %v485 = vsel %vm482, %v483, %v484
        %v486 = vsel %vm450, %v485, 0
        %488 = vmatpush.msra.mxu0 0.0
        %489 = vmatpush.msra.mxu0 0.0
        %490 = vmatpush.msra.mxu0 0.0
        %491 = vmatpush.msra.mxu0 0.0
        %492 = vmatpush.msra.mxu0 0.0
        %493 = vmatpush.msra.mxu0 0.0
        %494 = vmatpush.msra.mxu0 0.0
        %495 = vmatpush.msra.mxu0 0.0
        %496 = vmatpush.msra.mxu0 0.0
        %497 = vmatpush.msra.mxu0 0.0
        %498 = vmatpush.msra.mxu0 0.0
        %499 = vmatpush.msra.mxu0 0.0
        %500 = vmatpush.msra.mxu0 %v479
        %501 = vmatpush.msra.mxu0 %v478
        %502 = vmatpush.msra.mxu0 %v477
        %503 = vmatpush.msra.mxu0 %v476
        %504 = vmatmul.f32.gmra.mxu0 %v486
        %v505 = vpop.f32.mrf.mxu0
        %v506 = vadd.f32 0.0, %v505
        %507 = vdwg.mxu0
        %v508 = vsel %vm450, %v469, 0
        %510 = vmatpush.msra.mxu0 0.0
        %511 = vmatpush.msra.mxu0 0.0
        %512 = vmatpush.msra.mxu0 0.0
        %513 = vmatpush.msra.mxu0 0.0
        %514 = vmatpush.msra.mxu0 0.0
        %515 = vmatpush.msra.mxu0 0.0
        %516 = vmatpush.msra.mxu0 0.0
        %517 = vmatpush.msra.mxu0 0.0
        %518 = vmatpush.msra.mxu0 0.0
        %519 = vmatpush.msra.mxu0 0.0
        %520 = vmatpush.msra.mxu0 0.0
        %521 = vmatpush.msra.mxu0 0.0
        %522 = vmatpush.msra.mxu0 %v474
        %523 = vmatpush.msra.mxu0 %v473
        %524 = vmatpush.msra.mxu0 %v472
        %525 = vmatpush.msra.mxu0 %v471
        %526 = vmatmul.f32.gmra.mxu0 %v508
        %v527 = vpop.f32.mrf.mxu0
        %v528 = vadd.f32 %v506, %v527
        %529 = vdwg.mxu0
        %s530 = scalar_lea.vmem [#allocation3], 64
        %v531 = vld [vmem:[%s530] sm:$0xff]
        %v532 = vld [vmem:[%s530 + $0x8] sm:$0xff]
        %v533 = vld [vmem:[%s530 + $0x10] sm:$0xff]
        %v534 = vld [vmem:[%s530 + $0x18] sm:$0xff]
        %vm535 = vcmask 1045504
        %v536 = vrot.slane %v469, 2
        %v537 = vrot.slane %v470, 2
        %v538 = vsel %vm535, %v536, %v537
        %v539 = vsel %vm450, %v538, 0
        %541 = vmatpush.msra.mxu0 0.0
        %542 = vmatpush.msra.mxu0 0.0
        %543 = vmatpush.msra.mxu0 0.0
        %544 = vmatpush.msra.mxu0 0.0
        %545 = vmatpush.msra.mxu0 0.0
        %546 = vmatpush.msra.mxu0 0.0
        %547 = vmatpush.msra.mxu0 0.0
        %548 = vmatpush.msra.mxu0 0.0
        %549 = vmatpush.msra.mxu0 0.0
        %550 = vmatpush.msra.mxu0 0.0
        %551 = vmatpush.msra.mxu0 0.0
        %552 = vmatpush.msra.mxu0 0.0
        %553 = vmatpush.msra.mxu0 %v534
        %554 = vmatpush.msra.mxu0 %v533
        %555 = vmatpush.msra.mxu0 %v532
        %556 = vmatpush.msra.mxu0 %v531
        %557 = vmatmul.f32.gmra.mxu0 %v539
        %v558 = vpop.f32.mrf.mxu0
        %v559 = vadd.f32 0.0, %v558
        %560 = vdwg.mxu0
        %v561 = vadd.f32 %v528, %v559
        %v562 = vld [vmem:[%s4] sm:$0x1]
        %v564 = vperm.slane %v562, 0
        %v566 = vadd.f32 %v561, %v564
        %v567 = vmax.f32 %v566, 0.0
        %v568 = vld [vmem:[#allocation5] sm:$0xff]
        %v569 = vld [vmem:[#allocation5 + $0x8] sm:$0xff]
        %v570 = vld [vmem:[#allocation5 + $0x10] sm:$0xff]
        %v571 = vld [vmem:[#allocation5 + $0x18] sm:$0xff]
        %v572 = vld [vmem:[%s6] sm:$0x1]
        %v574 = vperm.slane %v572, 0
        %v577 = vsel %vm450, %v567, 0
        %579 = vmatpush.msra.mxu0 0.0
        %580 = vmatpush.msra.mxu0 0.0
        %581 = vmatpush.msra.mxu0 0.0
        %582 = vmatpush.msra.mxu0 0.0
        %583 = vmatpush.msra.mxu0 0.0
        %584 = vmatpush.msra.mxu0 0.0
        %585 = vmatpush.msra.mxu0 0.0
        %586 = vmatpush.msra.mxu0 0.0
        %587 = vmatpush.msra.mxu0 0.0
        %588 = vmatpush.msra.mxu0 0.0
        %589 = vmatpush.msra.mxu0 0.0
        %590 = vmatpush.msra.mxu0 0.0
        %591 = vmatpush.msra.mxu0 %v571
        %592 = vmatpush.msra.mxu0 %v570
        %593 = vmatpush.msra.mxu0 %v569
        %594 = vmatpush.msra.mxu0 %v568
        %595 = vmatmul.f32.gmra.mxu0 %v577
        %v596 = vpop.f32.mrf.mxu0
        %v597 = vadd.f32 %v574, %v596
        %598 = vdwg.mxu0
        %v599 = vadd.f32 %v597, %v448
        %600 = vst.msk [vmem:[%s447] sm:$0xff] %vm450, %v599
        %p601 = scmp.lt.s32.totalorder %s24, 1
        %s602 = scalar_select %p601, %s24, 1
        %p603 = scmp.lt.s32.totalorder %s25, 3
        %s604 = scalar_select %p603, %s25, 3
        %s605 = smul.addr %s602, 4
        %s606 = sadd.s32 %s604, %s605
        %s607 = smul.addr %s606, 8
        %s608 = scalar_lea.vmem %s7, %s607
        // Predicated region
        $region65: #{decoder_forward.24} parent=47 // pred_check
          %p609 = pneg %p232
        $region66: #{decoder_forward.24} parent=47 // pred_check_branch
          %611 = sbr.rel (%p609) target = $region68
        $region67: #{decoder_forward.24} parent=47 // pred_region
          _
        $region68: #{decoder_forward.24} parent=47 // pred_fallthru
          _
      $region48: #{decoder_forward.24} parent=5 // pred_fallthru
        _
      %p612 = scmp.le.s32.totalorder 2, %s15
      // Predicated region
      $region69: #{decoder_forward.24} parent=5 // pred_check
        %p613 = pneg %p612
      $region70: #{decoder_forward.24} parent=5 // pred_check_branch
        %615 = sbr.rel (%p613) target = $region72
      $region71: #{decoder_forward.24} parent=5 // pred_region
        %s616 = ssub.s32 %s15, 2
        // Predicated region
        $region73: #{decoder_forward.24} parent=71 // pred_check
          %p617 = pneg %p238
        $region74: #{decoder_forward.24} parent=71 // pred_check_branch
          %619 = sbr.rel (%p617) target = $region76
        $region75: #{decoder_forward.24} parent=71 // pred_region
          %p620 = scmp.lt.s32.totalorder %s26, 1
          %s621 = scalar_select %p620, %s26, 1
          %p622 = scmp.lt.s32.totalorder %s27, 3
          %s623 = scalar_select %p622, %s27, 3
          %s624 = smul.addr %s621, 4
          %s625 = sadd.s32 %s623, %s624
          %s626 = smul.addr %s625, 8
          %s627 = scalar_lea.vmem %s7, %s626
        $region76: #{decoder_forward.24} parent=71 // pred_fallthru
          _
      $region72: #{decoder_forward.24} parent=5 // pred_fallthru
        _
    $region6: #{decoder_forward.24} parent=1 // loop_footer
      %s19 = sadd.s32 1, %s15
    $region7: #{decoder_forward.24} parent=1 // loop_footer_branch
      %14 = sbr.rel target = $region3
    $region8: #{decoder_forward.24} parent=1 // loop_exit
      _
    %628 = vsyncpa [#allocation4], 1
    %s629 = scalar_lea.sflag [#allocation4], 1
    %630 = vsyncpa %s629, 1
    %631 = vsyncpa [#allocation6], 1

// kernel: decoder_forward.25
$region0: #{decoder_forward.25}
  #allocation0 [shape = 'u32[]', space=smem, size = 0x4, offset = 0x4, fixed_abs, tag = 'smem constant byte address 0x4 - core index']
  #allocation1 [shape = 'u32[72,128]{1,0:T(1,128)}', space=vmem, size = 0x9000, scoped, tag = 'internal scratch']
  #allocation2 [shape = 'f32[10,32]{1,0:T(8,128)}', space=vmem, size = 0x2000, scoped, tag = 'scratch operand']
  %s0 = inlined_call_operand.vmem [shape: f32[2,32,32], index: 0, kind: input, shape index: {}, may-alias: {0,1,2}]
  %s1 = inlined_call_operand.vmem [shape: f32[2,32,32], index: 1, kind: input, shape index: {}, may-alias: {0,1,2}]
  %s2 = inlined_call_operand.vmem [shape: f32[2,32,32], index: 2, kind: input, shape index: {}, may-alias: {0,1,2}]
  %s3 = inlined_call_operand.vmem [shape: f32[4,32,32], index: 3, kind: input, shape index: {}]
  %s4 = inlined_call_operand.vmem [shape: f32[1,32], index: 4, kind: input, shape index: {}]
  %s5 = inlined_call_operand.vmem [shape: f32[2,32,64], index: 5, kind: output, shape index: {}]
  %s6 = sld [smem:[#allocation0]]
  $region61: #{decoder_forward.25} parent=0
    _
  %s8 = ssub.s32 1, %s6
  %s9 = scalar_select 0, %s8, %s6
  loop: start=0, step=1, limit=10
  $region2: #{decoder_forward.25} parent=0 // loop_pre_header
    _
  $region3: #{decoder_forward.25} parent=0 // loop_header
    %s11 = sphi 0, %s15
    %p12 = scmp.ge.s32.totalorder %s11, 10
    %s18 = sphi 0, %s30
    %s19 = sphi 0, %s26
    %s20 = sphi 0, %s18
    %s21 = sphi 0, %s19
    %s22 = sphi 0, %s20
    %s23 = sphi 0, %s21
    %s35 = sphi 0, %s37
    %s38 = sphi 0, %s35
    %s39 = sphi 0, %s38
    %s55 = sphi 0, %s39
    %s69 = sphi 0, %s71
    %s72 = sphi 0, %s69
    %s73 = sphi 0, %s72
    %s89 = sphi 0, %s73
    %s103 = sphi 0, %s105
    %s106 = sphi 0, %s103
    %s107 = sphi 0, %s106
    %s123 = sphi 0, %s107
    %s127 = sphi 0, %s127
    %s129 = sphi 0, %s127
    %s130 = sphi 0, %s129
    %s144 = sphi 0, %s130
    %s148 = sphi 0, %s148
    %s150 = sphi 0, %s148
    %s151 = sphi 0, %s150
    %s165 = sphi 0, %s151
    %s173 = sphi 0, %s175
    %s176 = sphi 0, %s173
    %s177 = sphi 0, %s176
    %s193 = sphi 0, %s177
  $region4: #{decoder_forward.25} parent=0 // loop_header_branch
    %14 = sbr.rel (%p12) target = $region8
  $region5: #{decoder_forward.25} parent=0 // loop_body
    %s16 = ssub.s32 %s11, 1
    %s17 = ssub.s32 %s11, 2
    %s24 = sadd.s32 1, %s19
    %p25 = scmp.ge.s32.totalorder %s24, 4
    %s26 = scalar_select %p25, 0, %s24
    %s27 = sadd.s32 1, %s18
    %s28 = scalar_select %p25, %s27, %s18
    %p29 = scmp.ge.s32.totalorder %s28, 2
    %s30 = scalar_select %p29, 0, %s28
    %s31 = ssub.s32 %s18, %s30
    %s32 = ssub.s32 %s19, %s26
    %s33 = sor.u32 %s31, %s32
    %p34 = scmp.eq.s32.totalorder %s33, 0
    %s36 = sadd.s32 %s35, 1
    %s37 = scalar_select %p34, %s35, %s36
    %p40 = pneg %p34
    %p41 = scmp.eq.s32.totalorder %s11, 7
    %p42 = por %p40, %p41
    %p43 = scmp.ne.s32.totalorder %s35, %s38
    %p44 = scmp.eq.s32.totalorder %s11, 0
    %p45 = por %p43, %p44
    %p46 = scmp.ne.s32.totalorder %s35, %s38
    %p47 = scmp.eq.s32.totalorder %s16, 7
    %p48 = por %p46, %p47
    %p49 = scmp.ne.s32.totalorder %s38, %s39
    %p50 = scmp.eq.s32.totalorder %s16, 0
    %p51 = por %p49, %p50
    %p52 = scmp.ne.s32.totalorder %s38, %s39
    %p53 = scmp.eq.s32.totalorder %s17, 7
    %p54 = por %p52, %p53
    %p56 = scmp.ne.s32.totalorder %s39, %s55
    %p57 = scmp.eq.s32.totalorder %s17, 0
    %p58 = por %p56, %p57
    %s59 = ssub.s32 %s19, 1
    %p60 = scmp.gt.s32.totalorder %s59, 0
    %s61 = scalar_select %p60, %s59, 0
    %s62 = ssub.s32 %s26, 1
    %p63 = scmp.gt.s32.totalorder %s62, 0
    %s64 = scalar_select %p63, %s62, 0
    %s65 = ssub.s32 %s18, %s30
    %s66 = ssub.s32 %s61, %s64
    %s67 = sor.u32 %s65, %s66
    %p68 = scmp.eq.s32.totalorder %s67, 0
    %s70 = sadd.s32 %s69, 1
    %s71 = scalar_select %p68, %s69, %s70
    %p74 = pneg %p68
    %p75 = scmp.eq.s32.totalorder %s11, 7
    %p76 = por %p74, %p75
    %p77 = scmp.ne.s32.totalorder %s69, %s72
    %p78 = scmp.eq.s32.totalorder %s11, 0
    %p79 = por %p77, %p78
    %p80 = scmp.ne.s32.totalorder %s69, %s72
    %p81 = scmp.eq.s32.totalorder %s16, 7
    %p82 = por %p80, %p81
    %p83 = scmp.ne.s32.totalorder %s72, %s73
    %p84 = scmp.eq.s32.totalorder %s16, 0
    %p85 = por %p83, %p84
    %p86 = scmp.ne.s32.totalorder %s72, %s73
    %p87 = scmp.eq.s32.totalorder %s17, 7
    %p88 = por %p86, %p87
    %p90 = scmp.ne.s32.totalorder %s73, %s89
    %p91 = scmp.eq.s32.totalorder %s17, 0
    %p92 = por %p90, %p91
    %s93 = sadd.s32 %s19, 1
    %p94 = scmp.lt.s32.totalorder %s93, 3
    %s95 = scalar_select %p94, %s93, 3
    %s96 = sadd.s32 %s26, 1
    %p97 = scmp.lt.s32.totalorder %s96, 3
    %s98 = scalar_select %p97, %s96, 3
    %s99 = ssub.s32 %s18, %s30
    %s100 = ssub.s32 %s95, %s98
    %s101 = sor.u32 %s99, %s100
    %p102 = scmp.eq.s32.totalorder %s101, 0
    %s104 = sadd.s32 %s103, 1
    %s105 = scalar_select %p102, %s103, %s104
    %p108 = pneg %p102
    %p109 = scmp.eq.s32.totalorder %s11, 7
    %p110 = por %p108, %p109
    %p111 = scmp.ne.s32.totalorder %s103, %s106
    %p112 = scmp.eq.s32.totalorder %s11, 0
    %p113 = por %p111, %p112
    %p114 = scmp.ne.s32.totalorder %s103, %s106
    %p115 = scmp.eq.s32.totalorder %s16, 7
    %p116 = por %p114, %p115
    %p117 = scmp.ne.s32.totalorder %s106, %s107
    %p118 = scmp.eq.s32.totalorder %s16, 0
    %p119 = por %p117, %p118
    %p120 = scmp.ne.s32.totalorder %s106, %s107
    %p121 = scmp.eq.s32.totalorder %s17, 7
    %p122 = por %p120, %p121
    %p124 = scmp.ne.s32.totalorder %s107, %s123
    %p125 = scmp.eq.s32.totalorder %s17, 0
    %p126 = por %p124, %p125
    %s128 = sadd.s32 %s127, 1
    %p131 = scmp.eq.s32.totalorder %s11, 7
    %p132 = scmp.ne.s32.totalorder %s127, %s129
    %p133 = scmp.eq.s32.totalorder %s11, 0
    %p134 = por %p132, %p133
    %p135 = scmp.ne.s32.totalorder %s127, %s129
    %p136 = scmp.eq.s32.totalorder %s16, 7
    %p137 = por %p135, %p136
    %p138 = scmp.ne.s32.totalorder %s129, %s130
    %p139 = scmp.eq.s32.totalorder %s16, 0
    %p140 = por %p138, %p139
    %p141 = scmp.ne.s32.totalorder %s129, %s130
    %p142 = scmp.eq.s32.totalorder %s17, 7
    %p143 = por %p141, %p142
    %p145 = scmp.ne.s32.totalorder %s130, %s144
    %p146 = scmp.eq.s32.totalorder %s17, 0
    %p147 = por %p145, %p146
    %s149 = sadd.s32 %s148, 1
    %p152 = scmp.eq.s32.totalorder %s11, 7
    %p153 = scmp.ne.s32.totalorder %s148, %s150
    %p154 = scmp.eq.s32.totalorder %s11, 0
    %p155 = por %p153, %p154
    %p156 = scmp.ne.s32.totalorder %s148, %s150
    %p157 = scmp.eq.s32.totalorder %s16, 7
    %p158 = por %p156, %p157
    %p159 = scmp.ne.s32.totalorder %s150, %s151
    %p160 = scmp.eq.s32.totalorder %s16, 0
    %p161 = por %p159, %p160
    %p162 = scmp.ne.s32.totalorder %s150, %s151
    %p163 = scmp.eq.s32.totalorder %s17, 7
    %p164 = por %p162, %p163
    %p166 = scmp.ne.s32.totalorder %s151, %s165
    %p167 = scmp.eq.s32.totalorder %s17, 0
    %p168 = por %p166, %p167
    %s169 = ssub.s32 %s18, %s30
    %s170 = ssub.s32 %s19, %s26
    %s171 = sor.u32 %s169, %s170
    %p172 = scmp.eq.s32.totalorder %s171, 0
    %s174 = sadd.s32 %s173, 1
    %s175 = scalar_select %p172, %s173, %s174
    %p178 = pneg %p172
    %p179 = scmp.eq.s32.totalorder %s11, 7
    %p180 = por %p178, %p179
    %p181 = scmp.ne.s32.totalorder %s173, %s176
    %p182 = scmp.eq.s32.totalorder %s11, 0
    %p183 = por %p181, %p182
    %p184 = scmp.ne.s32.totalorder %s173, %s176
    %p185 = scmp.eq.s32.totalorder %s16, 7
    %p186 = por %p184, %p185
    %p187 = scmp.ne.s32.totalorder %s176, %s177
    %p188 = scmp.eq.s32.totalorder %s16, 0
    %p189 = por %p187, %p188
    %p190 = scmp.ne.s32.totalorder %s176, %s177
    %p191 = scmp.eq.s32.totalorder %s17, 7
    %p192 = por %p190, %p191
    %p194 = scmp.ne.s32.totalorder %s177, %s193
    %p195 = scmp.eq.s32.totalorder %s17, 0
    %p196 = por %p194, %p195
    %p197 = scmp.le.s32.totalorder 1, %s11
    %p198 = scmp.lt.s32.totalorder %s11, 9
    %p199 = pnand %p197, %p198
    %p200 = pneg %p199
    // Predicated region
    $region9: #{decoder_forward.25} parent=5 // pred_check
      _
    $region10: #{decoder_forward.25} parent=5 // pred_check_branch
      %202 = sbr.rel (%p199) target = $region12
    $region11: #{decoder_forward.25} parent=5 // pred_region
      %s203 = ssub.s32 %s11, 1
      // Predicated region
      $region13: #{decoder_forward.25} parent=11 // pred_check
        %p204 = pneg %p140
      $region14: #{decoder_forward.25} parent=11 // pred_check_branch
        %206 = sbr.rel (%p204) target = $region16
      $region15: #{decoder_forward.25} parent=11 // pred_region
        _
      $region16: #{decoder_forward.25} parent=11 // pred_fallthru
        _
      // Predicated region
      $region17: #{decoder_forward.25} parent=11 // pred_check
        %p207 = pneg %p161
      $region18: #{decoder_forward.25} parent=11 // pred_check_branch
        %209 = sbr.rel (%p207) target = $region20
      $region19: #{decoder_forward.25} parent=11 // pred_region
        _
      $region20: #{decoder_forward.25} parent=11 // pred_fallthru
        _
    $region12: #{decoder_forward.25} parent=5 // pred_fallthru
      _
    %p210 = scmp.lt.s32.totalorder %s11, 8
    // Predicated region
    $region21: #{decoder_forward.25} parent=5 // pred_check
      %p211 = pneg %p210
    $region22: #{decoder_forward.25} parent=5 // pred_check_branch
      %213 = sbr.rel (%p211) target = $region24
    $region23: #{decoder_forward.25} parent=5 // pred_region
      // Predicated region
      $region25: #{decoder_forward.25} parent=23 // pred_check
        %p214 = pneg %p45
      $region26: #{decoder_forward.25} parent=23 // pred_check_branch
        %216 = sbr.rel (%p214) target = $region28
      $region27: #{decoder_forward.25} parent=23 // pred_region
        %p217 = scmp.lt.s32.totalorder %s18, 1
        %s218 = scalar_select %p217, %s18, 1
        %p219 = scmp.lt.s32.totalorder %s19, 3
        %s220 = scalar_select %p219, %s19, 3
        %s221 = smul.addr %s218, 4
        %s222 = sadd.s32 %s220, %s221
        %s223 = smul.addr %s222, 8
        %s224 = scalar_lea.vmem %s0, %s223
      $region28: #{decoder_forward.25} parent=23 // pred_fallthru
        _
      // Predicated region
      $region29: #{decoder_forward.25} parent=23 // pred_check
        %p225 = pneg %p79
      $region30: #{decoder_forward.25} parent=23 // pred_check_branch
        %227 = sbr.rel (%p225) target = $region32
      $region31: #{decoder_forward.25} parent=23 // pred_region
        %s228 = ssub.s32 %s19, 1
        %p229 = scmp.gt.s32.totalorder %s228, 0
        %s230 = scalar_select %p229, %s228, 0
        %p231 = scmp.lt.s32.totalorder %s18, 1
        %s232 = scalar_select %p231, %s18, 1
        %p233 = scmp.lt.s32.totalorder %s230, 3
        %s234 = scalar_select %p233, %s230, 3
        %s235 = smul.addr %s232, 4
        %s236 = sadd.s32 %s234, %s235
        %s237 = smul.addr %s236, 8
        %s238 = scalar_lea.vmem %s1, %s237
        %s239 = ssub.s32 %s19, 1
        %p240 = scmp.gt.s32.totalorder %s239, 0
        %s241 = scalar_select %p240, %s239, 0
      $region32: #{decoder_forward.25} parent=23 // pred_fallthru
        _
      // Predicated region
      $region33: #{decoder_forward.25} parent=23 // pred_check
        %p242 = pneg %p113
      $region34: #{decoder_forward.25} parent=23 // pred_check_branch
        %244 = sbr.rel (%p242) target = $region36
      $region35: #{decoder_forward.25} parent=23 // pred_region
        %s245 = sadd.s32 %s19, 1
        %p246 = scmp.lt.s32.totalorder %s245, 3
        %s247 = scalar_select %p246, %s245, 3
        %p248 = scmp.lt.s32.totalorder %s18, 1
        %s249 = scalar_select %p248, %s18, 1
        %p250 = scmp.lt.s32.totalorder %s247, 3
        %s251 = scalar_select %p250, %s247, 3
        %s252 = smul.addr %s249, 4
        %s253 = sadd.s32 %s251, %s252
        %s254 = smul.addr %s253, 8
        %s255 = scalar_lea.vmem %s2, %s254
        %s256 = sadd.s32 %s19, 1
        %p257 = scmp.lt.s32.totalorder %s256, 3
        %s258 = scalar_select %p257, %s256, 3
      $region36: #{decoder_forward.25} parent=23 // pred_fallthru
        _
    $region24: #{decoder_forward.25} parent=5 // pred_fallthru
      _
    %p259 = scmp.le.s32.totalorder 1, %s11
    %p260 = scmp.lt.s32.totalorder %s11, 9
    %p261 = pnand %p259, %p260
    %p262 = pneg %p261
    // Predicated region
    $region37: #{decoder_forward.25} parent=5 // pred_check
      _
    $region38: #{decoder_forward.25} parent=5 // pred_check_branch
      %264 = sbr.rel (%p261) target = $region40
    $region39: #{decoder_forward.25} parent=5 // pred_region
      %s265 = ssub.s32 %s11, 1
      %p266 = scmp.lt.s32.totalorder %s20, 1
      %s267 = scalar_select %p266, %s20, 1
      %p268 = scmp.lt.s32.totalorder %s21, 3
      %s269 = scalar_select %p268, %s21, 3
      %s270 = smul.addr %s267, 4
      %s271 = sadd.s32 %s269, %s270
      %s272 = smul.addr %s271, 8
      %s273 = scalar_lea.vmem %s0, %s272
      %p274 = pneg %p51
      %p275 = pneg %p48
      %s276 = ssub.s32 %s21, 1
      %p277 = scmp.gt.s32.totalorder %s276, 0
      %s278 = scalar_select %p277, %s276, 0
      %p279 = scmp.lt.s32.totalorder %s20, 1
      %s280 = scalar_select %p279, %s20, 1
      %p281 = scmp.lt.s32.totalorder %s278, 3
      %s282 = scalar_select %p281, %s278, 3
      %s283 = smul.addr %s280, 4
      %s284 = sadd.s32 %s282, %s283
      %s285 = smul.addr %s284, 8
      %s286 = scalar_lea.vmem %s1, %s285
      %p287 = pneg %p85
      %p288 = pneg %p82
      %s289 = sadd.s32 %s21, 1
      %p290 = scmp.lt.s32.totalorder %s289, 3
      %s291 = scalar_select %p290, %s289, 3
      %p292 = scmp.lt.s32.totalorder %s20, 1
      %s293 = scalar_select %p292, %s20, 1
      %p294 = scmp.lt.s32.totalorder %s291, 3
      %s295 = scalar_select %p294, %s291, 3
      %s296 = smul.addr %s293, 4
      %s297 = sadd.s32 %s295, %s296
      %s298 = smul.addr %s297, 8
      %s299 = scalar_lea.vmem %s2, %s298
      %p300 = pneg %p119
      %p301 = pneg %p116
      %p302 = pneg %p140
      %p303 = pneg %p137
      %p304 = pneg %p161
      %p305 = pneg %p158
      %p306 = pneg %p189
      %p307 = pneg %p186
      %p308 = scmp.lt.s32.totalorder %s20, 1
      %s309 = scalar_select %p308, %s20, 1
      %p310 = scmp.lt.s32.totalorder %s21, 3
      %s311 = scalar_select %p310, %s21, 3
      %s312 = smul.addr %s309, 4
      %s313 = sadd.s32 %s311, %s312
      %s314 = smul.addr %s313, 8
      %s315 = scalar_lea.vmem %s5, %s314
      %p316 = scmp.lt.s32.totalorder %s20, 1
      %s317 = scalar_select %p316, %s20, 1
      %p318 = scmp.lt.s32.totalorder %s21, 3
      %s319 = scalar_select %p318, %s21, 3
      %s320 = smul.addr %s317, 4
      %s321 = sadd.s32 %s319, %s320
      %s322 = smul.addr %s321, 8
      %s323 = scalar_lea.vmem %s0, %s322
      %s324 = ssub.s32 %s21, 1
      %p325 = scmp.gt.s32.totalorder %s324, 0
      %s326 = scalar_select %p325, %s324, 0
      %p327 = scmp.lt.s32.totalorder %s20, 1
      %s328 = scalar_select %p327, %s20, 1
      %p329 = scmp.lt.s32.totalorder %s326, 3
      %s330 = scalar_select %p329, %s326, 3
      %s331 = smul.addr %s328, 4
      %s332 = sadd.s32 %s330, %s331
      %s333 = smul.addr %s332, 8
      %s334 = scalar_lea.vmem %s1, %s333
      %s335 = ssub.s32 %s21, 1
      %p336 = scmp.gt.s32.totalorder %s335, 0
      %s337 = scalar_select %p336, %s335, 0
      %s338 = sadd.s32 %s21, 1
      %p339 = scmp.lt.s32.totalorder %s338, 3
      %s340 = scalar_select %p339, %s338, 3
      %p341 = scmp.lt.s32.totalorder %s20, 1
      %s342 = scalar_select %p341, %s20, 1
      %p343 = scmp.lt.s32.totalorder %s340, 3
      %s344 = scalar_select %p343, %s340, 3
      %s345 = smul.addr %s342, 4
      %s346 = sadd.s32 %s344, %s345
      %s347 = smul.addr %s346, 8
      %s348 = scalar_lea.vmem %s2, %s347
      %s349 = sadd.s32 %s21, 1
      %p350 = scmp.lt.s32.totalorder %s349, 3
      %s351 = scalar_select %p350, %s349, 3
      %p352 = scmp.lt.s32.totalorder %s20, 1
      %s353 = scalar_select %p352, %s20, 1
      %p354 = scmp.lt.s32.totalorder %s21, 3
      %s355 = scalar_select %p354, %s21, 3
      %s356 = smul.addr %s353, 4
      %s357 = sadd.s32 %s355, %s356
      %s358 = smul.addr %s357, 8
      %s359 = scalar_lea.vmem %s5, %s358
      %v360 = vld [vmem:[%s323] sm:$0xff]
      %vm361 = vcmask 261120
      %362 = vst.msk [vmem:[#allocation2 + $0x1] sm:$0xff] %vm361, %v360
      %vm363 = vcmask 253952
      %364 = vst.msk [vmem:[#allocation2] sm:$0x1] %vm363, 0.0
      %365 = vst.msk [vmem:[#allocation2 + $0x9] sm:$0x1] %vm363, 0.0
      %p366 = scmp.gt.s32.totalorder %s21, 0
      // Predicated region
      $region41: #{decoder_forward.25} parent=39 // pred_check
        %p367 = pneg %p366
      $region42: #{decoder_forward.25} parent=39 // pred_check_branch
        %369 = sbr.rel (%p367) target = $region44
      $region43: #{decoder_forward.25} parent=39 // pred_region
        %v370 = vld [vmem:[%s334 + $0x7] sm:$0x1]
        %371 = vst.msk [vmem:[#allocation2] sm:$0x1] %vm363, %v370
      $region44: #{decoder_forward.25} parent=39 // pred_fallthru
        _
      %p372 = scmp.lt.s32.totalorder %s21, 3
      // Predicated region
      $region45: #{decoder_forward.25} parent=39 // pred_check
        %p373 = pneg %p372
      $region46: #{decoder_forward.25} parent=39 // pred_check_branch
        %375 = sbr.rel (%p373) target = $region48
      $region47: #{decoder_forward.25} parent=39 // pred_region
        %v376 = vld [vmem:[%s348] sm:$0x1]
        %377 = vst.msk [vmem:[#allocation2 + $0x9] sm:$0x1] %vm363, %v376
      $region48: #{decoder_forward.25} parent=39 // pred_fallthru
        _
      %v378 = vld [vmem:[#allocation2] sm:$0xff]
      %v379 = vld [vmem:[#allocation2 + $0x8] sm:$0x3]
      %v380 = vld [vmem:[%s4] sm:$0x1]
      %s381 = scalar_lea.vmem %s3, 96
      %v382 = vld [vmem:[%s381] sm:$0xff]
      %v383 = vld [vmem:[%s381 + $0x8] sm:$0xff]
      %v384 = vld [vmem:[%s381 + $0x10] sm:$0xff]
      %v385 = vld [vmem:[%s381 + $0x18] sm:$0xff]
      %s386 = scalar_lea.vmem %s3, 32
      %v387 = vld [vmem:[%s386] sm:$0xff]
      %v388 = vld [vmem:[%s386 + $0x8] sm:$0xff]
      %v389 = vld [vmem:[%s386 + $0x10] sm:$0xff]
      %v390 = vld [vmem:[%s386 + $0x18] sm:$0xff]
      %vm393 = vcmask 1046528
      %v394 = vrot.slane %v378, 1
      %v395 = vrot.slane %v379, 1
      %v396 = vsel %vm393, %v394, %v395
      %v397 = vsel %vm361, %v396, 0
      %399 = vmatpush.msra.mxu0 0.0
      %400 = vmatpush.msra.mxu0 0.0
      %401 = vmatpush.msra.mxu0 0.0
      %402 = vmatpush.msra.mxu0 0.0
      %403 = vmatpush.msra.mxu0 0.0
      %404 = vmatpush.msra.mxu0 0.0
      %405 = vmatpush.msra.mxu0 0.0
      %406 = vmatpush.msra.mxu0 0.0
      %407 = vmatpush.msra.mxu0 0.0
      %408 = vmatpush.msra.mxu0 0.0
      %409 = vmatpush.msra.mxu0 0.0
      %410 = vmatpush.msra.mxu0 0.0
      %411 = vmatpush.msra.mxu0 %v390
      %412 = vmatpush.msra.mxu0 %v389
      %413 = vmatpush.msra.mxu0 %v388
      %414 = vmatpush.msra.mxu0 %v387
      %415 = vmatmul.f32.gmra.mxu0 %v397
      %v416 = vpop.f32.mrf.mxu0
      %v417 = vadd.f32 0.0, %v416
      %418 = vdwg.mxu0
      %v419 = vsel %vm361, %v378, 0
      %421 = vmatpush.msra.mxu0 0.0
      %422 = vmatpush.msra.mxu0 0.0
      %423 = vmatpush.msra.mxu0 0.0
      %424 = vmatpush.msra.mxu0 0.0
      %425 = vmatpush.msra.mxu0 0.0
      %426 = vmatpush.msra.mxu0 0.0
      %427 = vmatpush.msra.mxu0 0.0
      %428 = vmatpush.msra.mxu0 0.0
      %429 = vmatpush.msra.mxu0 0.0
      %430 = vmatpush.msra.mxu0 0.0
      %431 = vmatpush.msra.mxu0 0.0
      %432 = vmatpush.msra.mxu0 0.0
      %433 = vmatpush.msra.mxu0 %v385
      %434 = vmatpush.msra.mxu0 %v384
      %435 = vmatpush.msra.mxu0 %v383
      %436 = vmatpush.msra.mxu0 %v382
      %437 = vmatmul.f32.gmra.mxu0 %v419
      %v438 = vpop.f32.mrf.mxu0
      %v439 = vadd.f32 %v417, %v438
      %440 = vdwg.mxu0
      %v442 = vperm.slane %v380, 0
      %v444 = vadd.f32 %v439, %v442
      %s445 = scalar_lea.vmem %s3, 64
      %v446 = vld [vmem:[%s445] sm:$0xff]
      %v447 = vld [vmem:[%s445 + $0x8] sm:$0xff]
      %v448 = vld [vmem:[%s445 + $0x10] sm:$0xff]
      %v449 = vld [vmem:[%s445 + $0x18] sm:$0xff]
      %v450 = vld [vmem:[%s3] sm:$0xff]
      %v451 = vld [vmem:[%s3 + $0x8] sm:$0xff]
      %v452 = vld [vmem:[%s3 + $0x10] sm:$0xff]
      %v453 = vld [vmem:[%s3 + $0x18] sm:$0xff]
      %vm454 = vcmask 1045504
      %v455 = vrot.slane %v378, 2
      %v456 = vrot.slane %v379, 2
      %v457 = vsel %vm454, %v455, %v456
      %v458 = vsel %vm361, %v457, 0
      %460 = vmatpush.msra.mxu0 0.0
      %461 = vmatpush.msra.mxu0 0.0
      %462 = vmatpush.msra.mxu0 0.0
      %463 = vmatpush.msra.mxu0 0.0
      %464 = vmatpush.msra.mxu0 0.0
      %465 = vmatpush.msra.mxu0 0.0
      %466 = vmatpush.msra.mxu0 0.0
      %467 = vmatpush.msra.mxu0 0.0
      %468 = vmatpush.msra.mxu0 0.0
      %469 = vmatpush.msra.mxu0 0.0
      %470 = vmatpush.msra.mxu0 0.0
      %471 = vmatpush.msra.mxu0 0.0
      %472 = vmatpush.msra.mxu0 %v453
      %473 = vmatpush.msra.mxu0 %v452
      %474 = vmatpush.msra.mxu0 %v451
      %475 = vmatpush.msra.mxu0 %v450
      %476 = vmatmul.f32.gmra.mxu0 %v458
      %v477 = vpop.f32.mrf.mxu0
      %v478 = vadd.f32 0.0, %v477
      %479 = vdwg.mxu0
      %480 = vmatpush.msra.mxu0 0.0
      %481 = vmatpush.msra.mxu0 0.0
      %482 = vmatpush.msra.mxu0 0.0
      %483 = vmatpush.msra.mxu0 0.0
      %484 = vmatpush.msra.mxu0 0.0
      %485 = vmatpush.msra.mxu0 0.0
      %486 = vmatpush.msra.mxu0 0.0
      %487 = vmatpush.msra.mxu0 0.0
      %488 = vmatpush.msra.mxu0 0.0
      %489 = vmatpush.msra.mxu0 0.0
      %490 = vmatpush.msra.mxu0 0.0
      %491 = vmatpush.msra.mxu0 0.0
      %492 = vmatpush.msra.mxu0 %v449
      %493 = vmatpush.msra.mxu0 %v448
      %494 = vmatpush.msra.mxu0 %v447
      %495 = vmatpush.msra.mxu0 %v446
      %496 = vmatmul.f32.gmra.mxu0 %v397
      %v497 = vpop.f32.mrf.mxu0
      %v498 = vadd.f32 %v478, %v497
      %499 = vdwg.mxu0
      %v500 = vadd.f32 %v498, %v442
      %501 = vst.msk [vmem:[%s359] sm:$0xff] %vm361, %v444
      %503 = vrot.lane.b32.xlu0 %v500, 32
      %v504 = vpop.permute.xlu0 %503
      %vm506 = vcmask 523520
      %507 = vst.msk [vmem:[%s359] sm:$0xff] %vm506, %v504
      %p508 = scmp.lt.s32.totalorder %s20, 1
      %s509 = scalar_select %p508, %s20, 1
      %p510 = scmp.lt.s32.totalorder %s21, 3
      %s511 = scalar_select %p510, %s21, 3
      %s512 = smul.addr %s509, 4
      %s513 = sadd.s32 %s511, %s512
      %s514 = smul.addr %s513, 8
      %s515 = scalar_lea.vmem %s5, %s514
      // Predicated region
      $region49: #{decoder_forward.25} parent=39 // pred_check
        %p516 = pneg %p186
      $region50: #{decoder_forward.25} parent=39 // pred_check_branch
        %518 = sbr.rel (%p516) target = $region52
      $region51: #{decoder_forward.25} parent=39 // pred_region
        _
      $region52: #{decoder_forward.25} parent=39 // pred_fallthru
        _
    $region40: #{decoder_forward.25} parent=5 // pred_fallthru
      _
    %p519 = scmp.le.s32.totalorder 2, %s11
    // Predicated region
    $region53: #{decoder_forward.25} parent=5 // pred_check
      %p520 = pneg %p519
    $region54: #{decoder_forward.25} parent=5 // pred_check_branch
      %522 = sbr.rel (%p520) target = $region56
    $region55: #{decoder_forward.25} parent=5 // pred_region
      %s523 = ssub.s32 %s11, 2
      // Predicated region
      $region57: #{decoder_forward.25} parent=55 // pred_check
        %p524 = pneg %p192
      $region58: #{decoder_forward.25} parent=55 // pred_check_branch
        %526 = sbr.rel (%p524) target = $region60
      $region59: #{decoder_forward.25} parent=55 // pred_region
        %p527 = scmp.lt.s32.totalorder %s22, 1
        %s528 = scalar_select %p527, %s22, 1
        %p529 = scmp.lt.s32.totalorder %s23, 3
        %s530 = scalar_select %p529, %s23, 3
        %s531 = smul.addr %s528, 4
        %s532 = sadd.s32 %s530, %s531
        %s533 = smul.addr %s532, 8
        %s534 = scalar_lea.vmem %s5, %s533
      $region60: #{decoder_forward.25} parent=55 // pred_fallthru
        _
    $region56: #{decoder_forward.25} parent=5 // pred_fallthru
      _
  $region6: #{decoder_forward.25} parent=0 // loop_footer
    %s15 = sadd.s32 1, %s11
  $region7: #{decoder_forward.25} parent=0 // loop_footer_branch
    %10 = sbr.rel target = $region3
  $region8: #{decoder_forward.25} parent=0 // loop_exit
    _

</llo_original>
